<compile_context>
chip_gen: v5e
topology: v5e:2x2
jax: 0.10.0
libtpu: 0.0.40
codegen_flags: <defaults>
</compile_context>

<pallas_src>
import functools

import jax
import jax.numpy as jnp
from jax.experimental import pallas as pl
from jax.experimental.pallas import tpu as pltpu


# ------------------------------ fused kernel --------------------------------
def _decoupling_block2_kernel(x_ref, w1_ref, b1_ref, mask_ref, w2_ref, b2_ref,
                              o_ref, *, mode):
    bsz, _, _, cin = x_ref.shape            # x: (B, H+4, W+4, Cin) input padded by 2
    _, hext, wext, _ = mask_ref.shape       # mask: (1, H+4, W+3, 1)
    _, hout, wout, cout = o_ref.shape       # out: (B, H, W, Cout)
    hc2, wc2 = hext - 1, wext               # conv2 output extent: (H+3, W+3)

    x = x_ref[...]
    w1 = w1_ref[...]                        # (2, Cin, Cout)  conv1 taps, bn1 scale folded
    w2 = w2_ref[...]                        # (2, Cout, Cout) conv2 taps, bn2 scale folded
    b1 = b1_ref[...]                        # (1, Cout) bn1 bias
    b2 = b2_ref[...]                        # (1, Cout) bn2 bias
    mask = mask_ref[...]                    # 1.0 inside, 0.0 on the 1-wide border

    # conv1 (1x2) + bn1 + relu on the over-padded domain; masking the border
    # reproduces conv2's zero-padded input exactly.
    a1 = jnp.zeros((bsz, hext, wext, cout), jnp.float32)
    for kj in range(2):
        xs = x[:, :, kj:kj + wext, :]
        for c in range(cin):
            a1 = a1 + xs[:, :, :, c:c + 1] * w1[kj, c:c + 1, :]
    a1 = jnp.maximum(a1 + b1, 0.0) * mask

    # conv2 (2x1) + bn2
    y2 = jnp.zeros((bsz, hc2, wc2, cout), jnp.float32)
    for ki in range(2):
        a1s = a1[:, ki:ki + hc2, :, :]
        for c in range(cout):
            y2 = y2 + a1s[:, :, :, c:c + 1] * w2[ki, c:c + 1, :]
    y2 = y2 + b2

    # 4x4 pooling with stride 1 (separable: columns then rows), then final relu.
    if mode == 'avg':
        cm = y2[:, :, 0:wout, :]
        for dj in range(1, 4):
            cm = cm + y2[:, :, dj:dj + wout, :]
        pooled = cm[:, 0:hout, :, :]
        for di in range(1, 4):
            pooled = pooled + cm[:, di:di + hout, :, :]
        pooled = pooled * 0.0625
    else:                                   # 'max' (module default)
        cm = y2[:, :, 0:wout, :]
        for dj in range(1, 4):
            cm = jnp.maximum(cm, y2[:, :, dj:dj + wout, :])
        pooled = cm[:, 0:hout, :, :]
        for di in range(1, 4):
            pooled = jnp.maximum(pooled, cm[:, di:di + hout, :, :])

    o_ref[...] = jnp.maximum(pooled, 0.0)


# ------------------------------ host wrapper ---------------------------------
def decoupling_block2_forward(x_nchw, params, *, mode='max', eps=1e-5):
    """Forward of Decoupling_Block2 (inference-mode BN). x: (B, Cin, H, W)."""
    B, Cin, H, W = x_nchw.shape
    w1 = params['conv1_w']                  # (Cout, Cin, 1, 2)
    w2 = params['conv2_w']                  # (Cout, Cout, 2, 1)
    Cout = w1.shape[0]

    # Fold BN (running stats) into per-output-channel scale + additive bias.
    s1 = params['bn1_gamma'] * jax.lax.rsqrt(params['bn1_var'] + eps)
    b1 = params['bn1_beta'] - params['bn1_mean'] * s1
    s2 = params['bn2_gamma'] * jax.lax.rsqrt(params['bn2_var'] + eps)
    b2 = params['bn2_beta'] - params['bn2_mean'] * s2

    # Per-tap weights in (tap, in_ch, out_ch) layout with BN scale folded.
    w1t = jnp.transpose(w1[:, :, 0, :], (2, 1, 0)) * s1      # (2, Cin, Cout)
    w2t = jnp.transpose(w2[:, :, :, 0], (2, 1, 0)) * s2      # (2, Cout, Cout)

    # NCHW -> NHWC and over-pad by 2 so conv1's extended output covers conv2's
    # zero-padded input domain directly.
    x_nhwc = jnp.transpose(x_nchw, (0, 2, 3, 1)).astype(jnp.float32)
    xpad2 = jnp.pad(x_nhwc, ((0, 0), (2, 2), (2, 2), (0, 0)))

    Hext, Wext = H + 4, W + 3               # conv1 output extent on padded domain
    row = jnp.arange(Hext)
    col = jnp.arange(Wext)
    interior = ((row[:, None] >= 1) & (row[:, None] <= H + 2)
                & (col[None, :] >= 1) & (col[None, :] <= W + 1))
    mask = interior.astype(jnp.float32)[None, :, :, None]    # (1, Hext, Wext, 1)

    out_nhwc = pl.pallas_call(
        functools.partial(_decoupling_block2_kernel, mode=mode),
        out_shape=jax.ShapeDtypeStruct((B, H, W, Cout), jnp.float32),
        in_specs=[pl.BlockSpec(memory_space=pltpu.MemorySpace.VMEM)] * 6,
        out_specs=pl.BlockSpec(memory_space=pltpu.MemorySpace.VMEM),
    )(xpad2,
      w1t.astype(jnp.float32), b1.reshape(1, Cout).astype(jnp.float32),
      mask,
      w2t.astype(jnp.float32), b2.reshape(1, Cout).astype(jnp.float32))

    return jnp.transpose(out_nhwc, (0, 3, 1, 2))             # back to NCHW


# ------------------------- pure-JAX reference (check) ------------------------
def reference_forward(x_nchw, params, *, mode='max', eps=1e-5):
    def bn(y, g, b, m, v):
        inv = jax.lax.rsqrt(v + eps)
        return ((y - m[None, :, None, None]) * inv[None, :, None, None]
                * g[None, :, None, None] + b[None, :, None, None])

    y = jax.lax.conv_general_dilated(
        x_nchw, params['conv1_w'], (1, 1), ((1, 1), (1, 1)),
        dimension_numbers=('NCHW', 'OIHW', 'NCHW'))
    y = jnp.maximum(bn(y, params['bn1_gamma'], params['bn1_beta'],
                       params['bn1_mean'], params['bn1_var']), 0.0)
    y = jax.lax.conv_general_dilated(
        y, params['conv2_w'], (1, 1), ((1, 1), (1, 1)),
        dimension_numbers=('NCHW', 'OIHW', 'NCHW'))
    y = bn(y, params['bn2_gamma'], params['bn2_beta'],
           params['bn2_mean'], params['bn2_var'])
    if mode == 'avg':
        y = jax.lax.reduce_window(y, 0.0, jax.lax.add, (1, 1, 4, 4),
                                  (1, 1, 1, 1), 'VALID') / 16.0
    else:
        y = jax.lax.reduce_window(y, -jnp.inf, jax.lax.max, (1, 1, 4, 4),
                                  (1, 1, 1, 1), 'VALID')
    return jnp.maximum(y, 0.0)


# ----------------------------- parameter init --------------------------------
def init_params(key, in_channels, out_channels):
    ks = jax.random.split(key, 10)

    def u(k, shape, fan_in):
        bound = 1.0 / (fan_in ** 0.5)
        return jax.random.uniform(k, shape, jnp.float32, -bound, bound)

    return {
        'conv1_w': u(ks[0], (out_channels, in_channels, 1, 2), in_channels * 2),
        'conv2_w': u(ks[1], (out_channels, out_channels, 2, 1), out_channels * 2),
        'bn1_gamma': jax.random.uniform(ks[2], (out_channels,), jnp.float32, 0.5, 1.5),
        'bn1_beta': 0.1 * jax.random.normal(ks[3], (out_channels,), jnp.float32),
        'bn1_mean': 0.1 * jax.random.normal(ks[4], (out_channels,), jnp.float32),
        'bn1_var': jax.random.uniform(ks[5], (out_channels,), jnp.float32, 0.5, 1.5),
        'bn2_gamma': jax.random.uniform(ks[6], (out_channels,), jnp.float32, 0.5, 1.5),
        'bn2_beta': 0.1 * jax.random.normal(ks[7], (out_channels,), jnp.float32),
        'bn2_mean': 0.1 * jax.random.normal(ks[8], (out_channels,), jnp.float32),
        'bn2_var': jax.random.uniform(ks[9], (out_channels,), jnp.float32, 0.5, 1.5),
    }


if __name__ == "__main__":
    key = jax.random.PRNGKey(0)
    pkey, xkey = jax.random.split(key)

    B, Cin, Cout, H, W = 2, 8, 16, 8, 8
    params = init_params(pkey, Cin, Cout)
    x = jax.random.normal(xkey, (B, Cin, H, W), jnp.float32)   # NCHW

    fwd = jax.jit(decoupling_block2_forward, static_argnames=("mode",))
    out = jax.block_until_ready(fwd(x, params, mode='max'))
    assert out.shape == (B, Cout, H, W) and out.dtype == jnp.float32

    ref = jax.block_until_ready(reference_forward(x, params, mode='max'))
    assert jnp.allclose(out, ref, rtol=1e-4, atol=1e-4), float(jnp.max(jnp.abs(out - ref)))

    print("KERNEL_OK")
</pallas_src>

<mosaic_0001>
module attributes {stable_mosaic.version = 11 : i64} {
  func.func @_decoupling_block2_kernel(%arg0: memref<2x12x12x8xf32, #tpu.memory_space<vmem>>, %arg1: memref<2x8x16xf32, #tpu.memory_space<vmem>>, %arg2: memref<1x16xf32, #tpu.memory_space<vmem>>, %arg3: memref<1x12x11x1xf32, #tpu.memory_space<vmem>>, %arg4: memref<2x16x16xf32, #tpu.memory_space<vmem>>, %arg5: memref<1x16xf32, #tpu.memory_space<vmem>>, %arg6: memref<2x8x8x16xf32, #tpu.memory_space<vmem>>) attributes {dimension_semantics = [], scalar_prefetch = 0 : i64, scratch_operands = 0 : i64, tpu.core_type = #tpu.core_type<tc>} {
    %c0 = arith.constant 0 : index
    %c0_0 = arith.constant 0 : index
    %c0_1 = arith.constant 0 : index
    %c0_2 = arith.constant 0 : index
    %0 = vector.load %arg0[%c0, %c0_0, %c0_1, %c0_2] : memref<2x12x12x8xf32, #tpu.memory_space<vmem>>, vector<2x12x12x8xf32>
    %c0_3 = arith.constant 0 : index
    %c0_4 = arith.constant 0 : index
    %c0_5 = arith.constant 0 : index
    %1 = vector.load %arg1[%c0_3, %c0_4, %c0_5] : memref<2x8x16xf32, #tpu.memory_space<vmem>>, vector<2x8x16xf32>
    %c0_6 = arith.constant 0 : index
    %c0_7 = arith.constant 0 : index
    %c0_8 = arith.constant 0 : index
    %2 = vector.load %arg4[%c0_6, %c0_7, %c0_8] : memref<2x16x16xf32, #tpu.memory_space<vmem>>, vector<2x16x16xf32>
    %c0_9 = arith.constant 0 : index
    %c0_10 = arith.constant 0 : index
    %3 = vector.load %arg2[%c0_9, %c0_10] : memref<1x16xf32, #tpu.memory_space<vmem>>, vector<1x16xf32>
    %c0_11 = arith.constant 0 : index
    %c0_12 = arith.constant 0 : index
    %4 = vector.load %arg5[%c0_11, %c0_12] : memref<1x16xf32, #tpu.memory_space<vmem>>, vector<1x16xf32>
    %c0_13 = arith.constant 0 : index
    %c0_14 = arith.constant 0 : index
    %c0_15 = arith.constant 0 : index
    %c0_16 = arith.constant 0 : index
    %5 = vector.load %arg3[%c0_13, %c0_14, %c0_15, %c0_16] : memref<1x12x11x1xf32, #tpu.memory_space<vmem>>, vector<1x12x11x1xf32>
    %cst = arith.constant 0.000000e+00 : f32
    %6 = vector.broadcast %cst : f32 to vector<2x12x11x16xf32>
    %7 = vector.extract_strided_slice %0 {offsets = [0, 0, 0, 0], sizes = [2, 12, 11, 8], strides = [1, 1, 1, 1]} : vector<2x12x12x8xf32> to vector<2x12x11x8xf32>
    %8 = vector.extract_strided_slice %7 {offsets = [0, 0, 0, 0], sizes = [2, 12, 11, 1], strides = [1, 1, 1, 1]} : vector<2x12x11x8xf32> to vector<2x12x11x1xf32>
    %9 = vector.extract_strided_slice %1 {offsets = [0, 0, 0], sizes = [1, 1, 16], strides = [1, 1, 1]} : vector<2x8x16xf32> to vector<1x1x16xf32>
    %10 = vector.shape_cast %9 : vector<1x1x16xf32> to vector<1x16xf32>
    %11 = vector.shape_cast %10 : vector<1x16xf32> to vector<1x1x1x16xf32>
    %12 = vector.broadcast %8 : vector<2x12x11x1xf32> to vector<2x12x11x16xf32>
    %13 = vector.broadcast %11 : vector<1x1x1x16xf32> to vector<2x12x11x16xf32>
    %14 = arith.mulf %12, %13 : vector<2x12x11x16xf32>
    %15 = arith.addf %6, %14 : vector<2x12x11x16xf32>
    %16 = vector.extract_strided_slice %7 {offsets = [0, 0, 0, 1], sizes = [2, 12, 11, 1], strides = [1, 1, 1, 1]} : vector<2x12x11x8xf32> to vector<2x12x11x1xf32>
    %17 = vector.extract_strided_slice %1 {offsets = [0, 1, 0], sizes = [1, 1, 16], strides = [1, 1, 1]} : vector<2x8x16xf32> to vector<1x1x16xf32>
    %18 = vector.shape_cast %17 : vector<1x1x16xf32> to vector<1x16xf32>
    %19 = vector.shape_cast %18 : vector<1x16xf32> to vector<1x1x1x16xf32>
    %20 = vector.broadcast %16 : vector<2x12x11x1xf32> to vector<2x12x11x16xf32>
    %21 = vector.broadcast %19 : vector<1x1x1x16xf32> to vector<2x12x11x16xf32>
    %22 = arith.mulf %20, %21 : vector<2x12x11x16xf32>
    %23 = arith.addf %15, %22 : vector<2x12x11x16xf32>
    %24 = vector.extract_strided_slice %7 {offsets = [0, 0, 0, 2], sizes = [2, 12, 11, 1], strides = [1, 1, 1, 1]} : vector<2x12x11x8xf32> to vector<2x12x11x1xf32>
    %25 = vector.extract_strided_slice %1 {offsets = [0, 2, 0], sizes = [1, 1, 16], strides = [1, 1, 1]} : vector<2x8x16xf32> to vector<1x1x16xf32>
    %26 = vector.shape_cast %25 : vector<1x1x16xf32> to vector<1x16xf32>
    %27 = vector.shape_cast %26 : vector<1x16xf32> to vector<1x1x1x16xf32>
    %28 = vector.broadcast %24 : vector<2x12x11x1xf32> to vector<2x12x11x16xf32>
    %29 = vector.broadcast %27 : vector<1x1x1x16xf32> to vector<2x12x11x16xf32>
    %30 = arith.mulf %28, %29 : vector<2x12x11x16xf32>
    %31 = arith.addf %23, %30 : vector<2x12x11x16xf32>
    %32 = vector.extract_strided_slice %7 {offsets = [0, 0, 0, 3], sizes = [2, 12, 11, 1], strides = [1, 1, 1, 1]} : vector<2x12x11x8xf32> to vector<2x12x11x1xf32>
    %33 = vector.extract_strided_slice %1 {offsets = [0, 3, 0], sizes = [1, 1, 16], strides = [1, 1, 1]} : vector<2x8x16xf32> to vector<1x1x16xf32>
    %34 = vector.shape_cast %33 : vector<1x1x16xf32> to vector<1x16xf32>
    %35 = vector.shape_cast %34 : vector<1x16xf32> to vector<1x1x1x16xf32>
    %36 = vector.broadcast %32 : vector<2x12x11x1xf32> to vector<2x12x11x16xf32>
    %37 = vector.broadcast %35 : vector<1x1x1x16xf32> to vector<2x12x11x16xf32>
    %38 = arith.mulf %36, %37 : vector<2x12x11x16xf32>
    %39 = arith.addf %31, %38 : vector<2x12x11x16xf32>
    %40 = vector.extract_strided_slice %7 {offsets = [0, 0, 0, 4], sizes = [2, 12, 11, 1], strides = [1, 1, 1, 1]} : vector<2x12x11x8xf32> to vector<2x12x11x1xf32>
    %41 = vector.extract_strided_slice %1 {offsets = [0, 4, 0], sizes = [1, 1, 16], strides = [1, 1, 1]} : vector<2x8x16xf32> to vector<1x1x16xf32>
    %42 = vector.shape_cast %41 : vector<1x1x16xf32> to vector<1x16xf32>
    %43 = vector.shape_cast %42 : vector<1x16xf32> to vector<1x1x1x16xf32>
    %44 = vector.broadcast %40 : vector<2x12x11x1xf32> to vector<2x12x11x16xf32>
    %45 = vector.broadcast %43 : vector<1x1x1x16xf32> to vector<2x12x11x16xf32>
    %46 = arith.mulf %44, %45 : vector<2x12x11x16xf32>
    %47 = arith.addf %39, %46 : vector<2x12x11x16xf32>
    %48 = vector.extract_strided_slice %7 {offsets = [0, 0, 0, 5], sizes = [2, 12, 11, 1], strides = [1, 1, 1, 1]} : vector<2x12x11x8xf32> to vector<2x12x11x1xf32>
    %49 = vector.extract_strided_slice %1 {offsets = [0, 5, 0], sizes = [1, 1, 16], strides = [1, 1, 1]} : vector<2x8x16xf32> to vector<1x1x16xf32>
    %50 = vector.shape_cast %49 : vector<1x1x16xf32> to vector<1x16xf32>
    %51 = vector.shape_cast %50 : vector<1x16xf32> to vector<1x1x1x16xf32>
    %52 = vector.broadcast %48 : vector<2x12x11x1xf32> to vector<2x12x11x16xf32>
    %53 = vector.broadcast %51 : vector<1x1x1x16xf32> to vector<2x12x11x16xf32>
    %54 = arith.mulf %52, %53 : vector<2x12x11x16xf32>
    %55 = arith.addf %47, %54 : vector<2x12x11x16xf32>
    %56 = vector.extract_strided_slice %7 {offsets = [0, 0, 0, 6], sizes = [2, 12, 11, 1], strides = [1, 1, 1, 1]} : vector<2x12x11x8xf32> to vector<2x12x11x1xf32>
    %57 = vector.extract_strided_slice %1 {offsets = [0, 6, 0], sizes = [1, 1, 16], strides = [1, 1, 1]} : vector<2x8x16xf32> to vector<1x1x16xf32>
    %58 = vector.shape_cast %57 : vector<1x1x16xf32> to vector<1x16xf32>
    %59 = vector.shape_cast %58 : vector<1x16xf32> to vector<1x1x1x16xf32>
    %60 = vector.broadcast %56 : vector<2x12x11x1xf32> to vector<2x12x11x16xf32>
    %61 = vector.broadcast %59 : vector<1x1x1x16xf32> to vector<2x12x11x16xf32>
    %62 = arith.mulf %60, %61 : vector<2x12x11x16xf32>
    %63 = arith.addf %55, %62 : vector<2x12x11x16xf32>
    %64 = vector.extract_strided_slice %7 {offsets = [0, 0, 0, 7], sizes = [2, 12, 11, 1], strides = [1, 1, 1, 1]} : vector<2x12x11x8xf32> to vector<2x12x11x1xf32>
    %65 = vector.extract_strided_slice %1 {offsets = [0, 7, 0], sizes = [1, 1, 16], strides = [1, 1, 1]} : vector<2x8x16xf32> to vector<1x1x16xf32>
    %66 = vector.shape_cast %65 : vector<1x1x16xf32> to vector<1x16xf32>
    %67 = vector.shape_cast %66 : vector<1x16xf32> to vector<1x1x1x16xf32>
    %68 = vector.broadcast %64 : vector<2x12x11x1xf32> to vector<2x12x11x16xf32>
    %69 = vector.broadcast %67 : vector<1x1x1x16xf32> to vector<2x12x11x16xf32>
    %70 = arith.mulf %68, %69 : vector<2x12x11x16xf32>
    %71 = arith.addf %63, %70 : vector<2x12x11x16xf32>
    %72 = vector.extract_strided_slice %0 {offsets = [0, 0, 1, 0], sizes = [2, 12, 11, 8], strides = [1, 1, 1, 1]} : vector<2x12x12x8xf32> to vector<2x12x11x8xf32>
    %73 = vector.extract_strided_slice %72 {offsets = [0, 0, 0, 0], sizes = [2, 12, 11, 1], strides = [1, 1, 1, 1]} : vector<2x12x11x8xf32> to vector<2x12x11x1xf32>
    %74 = vector.extract_strided_slice %1 {offsets = [1, 0, 0], sizes = [1, 1, 16], strides = [1, 1, 1]} : vector<2x8x16xf32> to vector<1x1x16xf32>
    %75 = vector.shape_cast %74 : vector<1x1x16xf32> to vector<1x16xf32>
    %76 = vector.shape_cast %75 : vector<1x16xf32> to vector<1x1x1x16xf32>
    %77 = vector.broadcast %73 : vector<2x12x11x1xf32> to vector<2x12x11x16xf32>
    %78 = vector.broadcast %76 : vector<1x1x1x16xf32> to vector<2x12x11x16xf32>
    %79 = arith.mulf %77, %78 : vector<2x12x11x16xf32>
    %80 = arith.addf %71, %79 : vector<2x12x11x16xf32>
    %81 = vector.extract_strided_slice %72 {offsets = [0, 0, 0, 1], sizes = [2, 12, 11, 1], strides = [1, 1, 1, 1]} : vector<2x12x11x8xf32> to vector<2x12x11x1xf32>
    %82 = vector.extract_strided_slice %1 {offsets = [1, 1, 0], sizes = [1, 1, 16], strides = [1, 1, 1]} : vector<2x8x16xf32> to vector<1x1x16xf32>
    %83 = vector.shape_cast %82 : vector<1x1x16xf32> to vector<1x16xf32>
    %84 = vector.shape_cast %83 : vector<1x16xf32> to vector<1x1x1x16xf32>
    %85 = vector.broadcast %81 : vector<2x12x11x1xf32> to vector<2x12x11x16xf32>
    %86 = vector.broadcast %84 : vector<1x1x1x16xf32> to vector<2x12x11x16xf32>
    %87 = arith.mulf %85, %86 : vector<2x12x11x16xf32>
    %88 = arith.addf %80, %87 : vector<2x12x11x16xf32>
    %89 = vector.extract_strided_slice %72 {offsets = [0, 0, 0, 2], sizes = [2, 12, 11, 1], strides = [1, 1, 1, 1]} : vector<2x12x11x8xf32> to vector<2x12x11x1xf32>
    %90 = vector.extract_strided_slice %1 {offsets = [1, 2, 0], sizes = [1, 1, 16], strides = [1, 1, 1]} : vector<2x8x16xf32> to vector<1x1x16xf32>
    %91 = vector.shape_cast %90 : vector<1x1x16xf32> to vector<1x16xf32>
    %92 = vector.shape_cast %91 : vector<1x16xf32> to vector<1x1x1x16xf32>
    %93 = vector.broadcast %89 : vector<2x12x11x1xf32> to vector<2x12x11x16xf32>
    %94 = vector.broadcast %92 : vector<1x1x1x16xf32> to vector<2x12x11x16xf32>
    %95 = arith.mulf %93, %94 : vector<2x12x11x16xf32>
    %96 = arith.addf %88, %95 : vector<2x12x11x16xf32>
    %97 = vector.extract_strided_slice %72 {offsets = [0, 0, 0, 3], sizes = [2, 12, 11, 1], strides = [1, 1, 1, 1]} : vector<2x12x11x8xf32> to vector<2x12x11x1xf32>
    %98 = vector.extract_strided_slice %1 {offsets = [1, 3, 0], sizes = [1, 1, 16], strides = [1, 1, 1]} : vector<2x8x16xf32> to vector<1x1x16xf32>
    %99 = vector.shape_cast %98 : vector<1x1x16xf32> to vector<1x16xf32>
    %100 = vector.shape_cast %99 : vector<1x16xf32> to vector<1x1x1x16xf32>
    %101 = vector.broadcast %97 : vector<2x12x11x1xf32> to vector<2x12x11x16xf32>
    %102 = vector.broadcast %100 : vector<1x1x1x16xf32> to vector<2x12x11x16xf32>
    %103 = arith.mulf %101, %102 : vector<2x12x11x16xf32>
    %104 = arith.addf %96, %103 : vector<2x12x11x16xf32>
    %105 = vector.extract_strided_slice %72 {offsets = [0, 0, 0, 4], sizes = [2, 12, 11, 1], strides = [1, 1, 1, 1]} : vector<2x12x11x8xf32> to vector<2x12x11x1xf32>
    %106 = vector.extract_strided_slice %1 {offsets = [1, 4, 0], sizes = [1, 1, 16], strides = [1, 1, 1]} : vector<2x8x16xf32> to vector<1x1x16xf32>
    %107 = vector.shape_cast %106 : vector<1x1x16xf32> to vector<1x16xf32>
    %108 = vector.shape_cast %107 : vector<1x16xf32> to vector<1x1x1x16xf32>
    %109 = vector.broadcast %105 : vector<2x12x11x1xf32> to vector<2x12x11x16xf32>
    %110 = vector.broadcast %108 : vector<1x1x1x16xf32> to vector<2x12x11x16xf32>
    %111 = arith.mulf %109, %110 : vector<2x12x11x16xf32>
    %112 = arith.addf %104, %111 : vector<2x12x11x16xf32>
    %113 = vector.extract_strided_slice %72 {offsets = [0, 0, 0, 5], sizes = [2, 12, 11, 1], strides = [1, 1, 1, 1]} : vector<2x12x11x8xf32> to vector<2x12x11x1xf32>
    %114 = vector.extract_strided_slice %1 {offsets = [1, 5, 0], sizes = [1, 1, 16], strides = [1, 1, 1]} : vector<2x8x16xf32> to vector<1x1x16xf32>
    %115 = vector.shape_cast %114 : vector<1x1x16xf32> to vector<1x16xf32>
    %116 = vector.shape_cast %115 : vector<1x16xf32> to vector<1x1x1x16xf32>
    %117 = vector.broadcast %113 : vector<2x12x11x1xf32> to vector<2x12x11x16xf32>
    %118 = vector.broadcast %116 : vector<1x1x1x16xf32> to vector<2x12x11x16xf32>
    %119 = arith.mulf %117, %118 : vector<2x12x11x16xf32>
    %120 = arith.addf %112, %119 : vector<2x12x11x16xf32>
    %121 = vector.extract_strided_slice %72 {offsets = [0, 0, 0, 6], sizes = [2, 12, 11, 1], strides = [1, 1, 1, 1]} : vector<2x12x11x8xf32> to vector<2x12x11x1xf32>
    %122 = vector.extract_strided_slice %1 {offsets = [1, 6, 0], sizes = [1, 1, 16], strides = [1, 1, 1]} : vector<2x8x16xf32> to vector<1x1x16xf32>
    %123 = vector.shape_cast %122 : vector<1x1x16xf32> to vector<1x16xf32>
    %124 = vector.shape_cast %123 : vector<1x16xf32> to vector<1x1x1x16xf32>
    %125 = vector.broadcast %121 : vector<2x12x11x1xf32> to vector<2x12x11x16xf32>
    %126 = vector.broadcast %124 : vector<1x1x1x16xf32> to vector<2x12x11x16xf32>
    %127 = arith.mulf %125, %126 : vector<2x12x11x16xf32>
    %128 = arith.addf %120, %127 : vector<2x12x11x16xf32>
    %129 = vector.extract_strided_slice %72 {offsets = [0, 0, 0, 7], sizes = [2, 12, 11, 1], strides = [1, 1, 1, 1]} : vector<2x12x11x8xf32> to vector<2x12x11x1xf32>
    %130 = vector.extract_strided_slice %1 {offsets = [1, 7, 0], sizes = [1, 1, 16], strides = [1, 1, 1]} : vector<2x8x16xf32> to vector<1x1x16xf32>
    %131 = vector.shape_cast %130 : vector<1x1x16xf32> to vector<1x16xf32>
    %132 = vector.shape_cast %131 : vector<1x16xf32> to vector<1x1x1x16xf32>
    %133 = vector.broadcast %129 : vector<2x12x11x1xf32> to vector<2x12x11x16xf32>
    %134 = vector.broadcast %132 : vector<1x1x1x16xf32> to vector<2x12x11x16xf32>
    %135 = arith.mulf %133, %134 : vector<2x12x11x16xf32>
    %136 = arith.addf %128, %135 : vector<2x12x11x16xf32>
    %137 = vector.shape_cast %3 : vector<1x16xf32> to vector<1x1x1x16xf32>
    %138 = vector.broadcast %137 : vector<1x1x1x16xf32> to vector<2x12x11x16xf32>
    %139 = arith.addf %136, %138 : vector<2x12x11x16xf32>
    %cst_17 = arith.constant 0.000000e+00 : f32
    %140 = vector.broadcast %cst_17 : f32 to vector<2x12x11x16xf32>
    %141 = arith.maximumf %139, %140 : vector<2x12x11x16xf32>
    %142 = vector.broadcast %5 : vector<1x12x11x1xf32> to vector<2x12x11x16xf32>
    %143 = arith.mulf %141, %142 : vector<2x12x11x16xf32>
    %cst_18 = arith.constant 0.000000e+00 : f32
    %144 = vector.broadcast %cst_18 : f32 to vector<2x11x11x16xf32>
    %145 = vector.extract_strided_slice %143 {offsets = [0, 0, 0, 0], sizes = [2, 11, 11, 16], strides = [1, 1, 1, 1]} : vector<2x12x11x16xf32> to vector<2x11x11x16xf32>
    %146 = vector.extract_strided_slice %145 {offsets = [0, 0, 0, 0], sizes = [2, 11, 11, 1], strides = [1, 1, 1, 1]} : vector<2x11x11x16xf32> to vector<2x11x11x1xf32>
    %147 = vector.extract_strided_slice %2 {offsets = [0, 0, 0], sizes = [1, 1, 16], strides = [1, 1, 1]} : vector<2x16x16xf32> to vector<1x1x16xf32>
    %148 = vector.shape_cast %147 : vector<1x1x16xf32> to vector<1x16xf32>
    %149 = vector.shape_cast %148 : vector<1x16xf32> to vector<1x1x1x16xf32>
    %150 = vector.broadcast %146 : vector<2x11x11x1xf32> to vector<2x11x11x16xf32>
    %151 = vector.broadcast %149 : vector<1x1x1x16xf32> to vector<2x11x11x16xf32>
    %152 = arith.mulf %150, %151 : vector<2x11x11x16xf32>
    %153 = arith.addf %144, %152 : vector<2x11x11x16xf32>
    %154 = vector.extract_strided_slice %145 {offsets = [0, 0, 0, 1], sizes = [2, 11, 11, 1], strides = [1, 1, 1, 1]} : vector<2x11x11x16xf32> to vector<2x11x11x1xf32>
    %155 = vector.extract_strided_slice %2 {offsets = [0, 1, 0], sizes = [1, 1, 16], strides = [1, 1, 1]} : vector<2x16x16xf32> to vector<1x1x16xf32>
    %156 = vector.shape_cast %155 : vector<1x1x16xf32> to vector<1x16xf32>
    %157 = vector.shape_cast %156 : vector<1x16xf32> to vector<1x1x1x16xf32>
    %158 = vector.broadcast %154 : vector<2x11x11x1xf32> to vector<2x11x11x16xf32>
    %159 = vector.broadcast %157 : vector<1x1x1x16xf32> to vector<2x11x11x16xf32>
    %160 = arith.mulf %158, %159 : vector<2x11x11x16xf32>
    %161 = arith.addf %153, %160 : vector<2x11x11x16xf32>
    %162 = vector.extract_strided_slice %145 {offsets = [0, 0, 0, 2], sizes = [2, 11, 11, 1], strides = [1, 1, 1, 1]} : vector<2x11x11x16xf32> to vector<2x11x11x1xf32>
    %163 = vector.extract_strided_slice %2 {offsets = [0, 2, 0], sizes = [1, 1, 16], strides = [1, 1, 1]} : vector<2x16x16xf32> to vector<1x1x16xf32>
    %164 = vector.shape_cast %163 : vector<1x1x16xf32> to vector<1x16xf32>
    %165 = vector.shape_cast %164 : vector<1x16xf32> to vector<1x1x1x16xf32>
    %166 = vector.broadcast %162 : vector<2x11x11x1xf32> to vector<2x11x11x16xf32>
    %167 = vector.broadcast %165 : vector<1x1x1x16xf32> to vector<2x11x11x16xf32>
    %168 = arith.mulf %166, %167 : vector<2x11x11x16xf32>
    %169 = arith.addf %161, %168 : vector<2x11x11x16xf32>
    %170 = vector.extract_strided_slice %145 {offsets = [0, 0, 0, 3], sizes = [2, 11, 11, 1], strides = [1, 1, 1, 1]} : vector<2x11x11x16xf32> to vector<2x11x11x1xf32>
    %171 = vector.extract_strided_slice %2 {offsets = [0, 3, 0], sizes = [1, 1, 16], strides = [1, 1, 1]} : vector<2x16x16xf32> to vector<1x1x16xf32>
    %172 = vector.shape_cast %171 : vector<1x1x16xf32> to vector<1x16xf32>
    %173 = vector.shape_cast %172 : vector<1x16xf32> to vector<1x1x1x16xf32>
    %174 = vector.broadcast %170 : vector<2x11x11x1xf32> to vector<2x11x11x16xf32>
    %175 = vector.broadcast %173 : vector<1x1x1x16xf32> to vector<2x11x11x16xf32>
    %176 = arith.mulf %174, %175 : vector<2x11x11x16xf32>
    %177 = arith.addf %169, %176 : vector<2x11x11x16xf32>
    %178 = vector.extract_strided_slice %145 {offsets = [0, 0, 0, 4], sizes = [2, 11, 11, 1], strides = [1, 1, 1, 1]} : vector<2x11x11x16xf32> to vector<2x11x11x1xf32>
    %179 = vector.extract_strided_slice %2 {offsets = [0, 4, 0], sizes = [1, 1, 16], strides = [1, 1, 1]} : vector<2x16x16xf32> to vector<1x1x16xf32>
    %180 = vector.shape_cast %179 : vector<1x1x16xf32> to vector<1x16xf32>
    %181 = vector.shape_cast %180 : vector<1x16xf32> to vector<1x1x1x16xf32>
    %182 = vector.broadcast %178 : vector<2x11x11x1xf32> to vector<2x11x11x16xf32>
    %183 = vector.broadcast %181 : vector<1x1x1x16xf32> to vector<2x11x11x16xf32>
    %184 = arith.mulf %182, %183 : vector<2x11x11x16xf32>
    %185 = arith.addf %177, %184 : vector<2x11x11x16xf32>
    %186 = vector.extract_strided_slice %145 {offsets = [0, 0, 0, 5], sizes = [2, 11, 11, 1], strides = [1, 1, 1, 1]} : vector<2x11x11x16xf32> to vector<2x11x11x1xf32>
    %187 = vector.extract_strided_slice %2 {offsets = [0, 5, 0], sizes = [1, 1, 16], strides = [1, 1, 1]} : vector<2x16x16xf32> to vector<1x1x16xf32>
    %188 = vector.shape_cast %187 : vector<1x1x16xf32> to vector<1x16xf32>
    %189 = vector.shape_cast %188 : vector<1x16xf32> to vector<1x1x1x16xf32>
    %190 = vector.broadcast %186 : vector<2x11x11x1xf32> to vector<2x11x11x16xf32>
    %191 = vector.broadcast %189 : vector<1x1x1x16xf32> to vector<2x11x11x16xf32>
    %192 = arith.mulf %190, %191 : vector<2x11x11x16xf32>
    %193 = arith.addf %185, %192 : vector<2x11x11x16xf32>
    %194 = vector.extract_strided_slice %145 {offsets = [0, 0, 0, 6], sizes = [2, 11, 11, 1], strides = [1, 1, 1, 1]} : vector<2x11x11x16xf32> to vector<2x11x11x1xf32>
    %195 = vector.extract_strided_slice %2 {offsets = [0, 6, 0], sizes = [1, 1, 16], strides = [1, 1, 1]} : vector<2x16x16xf32> to vector<1x1x16xf32>
    %196 = vector.shape_cast %195 : vector<1x1x16xf32> to vector<1x16xf32>
    %197 = vector.shape_cast %196 : vector<1x16xf32> to vector<1x1x1x16xf32>
    %198 = vector.broadcast %194 : vector<2x11x11x1xf32> to vector<2x11x11x16xf32>
    %199 = vector.broadcast %197 : vector<1x1x1x16xf32> to vector<2x11x11x16xf32>
    %200 = arith.mulf %198, %199 : vector<2x11x11x16xf32>
    %201 = arith.addf %193, %200 : vector<2x11x11x16xf32>
    %202 = vector.extract_strided_slice %145 {offsets = [0, 0, 0, 7], sizes = [2, 11, 11, 1], strides = [1, 1, 1, 1]} : vector<2x11x11x16xf32> to vector<2x11x11x1xf32>
    %203 = vector.extract_strided_slice %2 {offsets = [0, 7, 0], sizes = [1, 1, 16], strides = [1, 1, 1]} : vector<2x16x16xf32> to vector<1x1x16xf32>
    %204 = vector.shape_cast %203 : vector<1x1x16xf32> to vector<1x16xf32>
    %205 = vector.shape_cast %204 : vector<1x16xf32> to vector<1x1x1x16xf32>
    %206 = vector.broadcast %202 : vector<2x11x11x1xf32> to vector<2x11x11x16xf32>
    %207 = vector.broadcast %205 : vector<1x1x1x16xf32> to vector<2x11x11x16xf32>
    %208 = arith.mulf %206, %207 : vector<2x11x11x16xf32>
    %209 = arith.addf %201, %208 : vector<2x11x11x16xf32>
    %210 = vector.extract_strided_slice %145 {offsets = [0, 0, 0, 8], sizes = [2, 11, 11, 1], strides = [1, 1, 1, 1]} : vector<2x11x11x16xf32> to vector<2x11x11x1xf32>
    %211 = vector.extract_strided_slice %2 {offsets = [0, 8, 0], sizes = [1, 1, 16], strides = [1, 1, 1]} : vector<2x16x16xf32> to vector<1x1x16xf32>
    %212 = vector.shape_cast %211 : vector<1x1x16xf32> to vector<1x16xf32>
    %213 = vector.shape_cast %212 : vector<1x16xf32> to vector<1x1x1x16xf32>
    %214 = vector.broadcast %210 : vector<2x11x11x1xf32> to vector<2x11x11x16xf32>
    %215 = vector.broadcast %213 : vector<1x1x1x16xf32> to vector<2x11x11x16xf32>
    %216 = arith.mulf %214, %215 : vector<2x11x11x16xf32>
    %217 = arith.addf %209, %216 : vector<2x11x11x16xf32>
    %218 = vector.extract_strided_slice %145 {offsets = [0, 0, 0, 9], sizes = [2, 11, 11, 1], strides = [1, 1, 1, 1]} : vector<2x11x11x16xf32> to vector<2x11x11x1xf32>
    %219 = vector.extract_strided_slice %2 {offsets = [0, 9, 0], sizes = [1, 1, 16], strides = [1, 1, 1]} : vector<2x16x16xf32> to vector<1x1x16xf32>
    %220 = vector.shape_cast %219 : vector<1x1x16xf32> to vector<1x16xf32>
    %221 = vector.shape_cast %220 : vector<1x16xf32> to vector<1x1x1x16xf32>
    %222 = vector.broadcast %218 : vector<2x11x11x1xf32> to vector<2x11x11x16xf32>
    %223 = vector.broadcast %221 : vector<1x1x1x16xf32> to vector<2x11x11x16xf32>
    %224 = arith.mulf %222, %223 : vector<2x11x11x16xf32>
    %225 = arith.addf %217, %224 : vector<2x11x11x16xf32>
    %226 = vector.extract_strided_slice %145 {offsets = [0, 0, 0, 10], sizes = [2, 11, 11, 1], strides = [1, 1, 1, 1]} : vector<2x11x11x16xf32> to vector<2x11x11x1xf32>
    %227 = vector.extract_strided_slice %2 {offsets = [0, 10, 0], sizes = [1, 1, 16], strides = [1, 1, 1]} : vector<2x16x16xf32> to vector<1x1x16xf32>
    %228 = vector.shape_cast %227 : vector<1x1x16xf32> to vector<1x16xf32>
    %229 = vector.shape_cast %228 : vector<1x16xf32> to vector<1x1x1x16xf32>
    %230 = vector.broadcast %226 : vector<2x11x11x1xf32> to vector<2x11x11x16xf32>
    %231 = vector.broadcast %229 : vector<1x1x1x16xf32> to vector<2x11x11x16xf32>
    %232 = arith.mulf %230, %231 : vector<2x11x11x16xf32>
    %233 = arith.addf %225, %232 : vector<2x11x11x16xf32>
    %234 = vector.extract_strided_slice %145 {offsets = [0, 0, 0, 11], sizes = [2, 11, 11, 1], strides = [1, 1, 1, 1]} : vector<2x11x11x16xf32> to vector<2x11x11x1xf32>
    %235 = vector.extract_strided_slice %2 {offsets = [0, 11, 0], sizes = [1, 1, 16], strides = [1, 1, 1]} : vector<2x16x16xf32> to vector<1x1x16xf32>
    %236 = vector.shape_cast %235 : vector<1x1x16xf32> to vector<1x16xf32>
    %237 = vector.shape_cast %236 : vector<1x16xf32> to vector<1x1x1x16xf32>
    %238 = vector.broadcast %234 : vector<2x11x11x1xf32> to vector<2x11x11x16xf32>
    %239 = vector.broadcast %237 : vector<1x1x1x16xf32> to vector<2x11x11x16xf32>
    %240 = arith.mulf %238, %239 : vector<2x11x11x16xf32>
    %241 = arith.addf %233, %240 : vector<2x11x11x16xf32>
    %242 = vector.extract_strided_slice %145 {offsets = [0, 0, 0, 12], sizes = [2, 11, 11, 1], strides = [1, 1, 1, 1]} : vector<2x11x11x16xf32> to vector<2x11x11x1xf32>
    %243 = vector.extract_strided_slice %2 {offsets = [0, 12, 0], sizes = [1, 1, 16], strides = [1, 1, 1]} : vector<2x16x16xf32> to vector<1x1x16xf32>
    %244 = vector.shape_cast %243 : vector<1x1x16xf32> to vector<1x16xf32>
    %245 = vector.shape_cast %244 : vector<1x16xf32> to vector<1x1x1x16xf32>
    %246 = vector.broadcast %242 : vector<2x11x11x1xf32> to vector<2x11x11x16xf32>
    %247 = vector.broadcast %245 : vector<1x1x1x16xf32> to vector<2x11x11x16xf32>
    %248 = arith.mulf %246, %247 : vector<2x11x11x16xf32>
    %249 = arith.addf %241, %248 : vector<2x11x11x16xf32>
    %250 = vector.extract_strided_slice %145 {offsets = [0, 0, 0, 13], sizes = [2, 11, 11, 1], strides = [1, 1, 1, 1]} : vector<2x11x11x16xf32> to vector<2x11x11x1xf32>
    %251 = vector.extract_strided_slice %2 {offsets = [0, 13, 0], sizes = [1, 1, 16], strides = [1, 1, 1]} : vector<2x16x16xf32> to vector<1x1x16xf32>
    %252 = vector.shape_cast %251 : vector<1x1x16xf32> to vector<1x16xf32>
    %253 = vector.shape_cast %252 : vector<1x16xf32> to vector<1x1x1x16xf32>
    %254 = vector.broadcast %250 : vector<2x11x11x1xf32> to vector<2x11x11x16xf32>
    %255 = vector.broadcast %253 : vector<1x1x1x16xf32> to vector<2x11x11x16xf32>
    %256 = arith.mulf %254, %255 : vector<2x11x11x16xf32>
    %257 = arith.addf %249, %256 : vector<2x11x11x16xf32>
    %258 = vector.extract_strided_slice %145 {offsets = [0, 0, 0, 14], sizes = [2, 11, 11, 1], strides = [1, 1, 1, 1]} : vector<2x11x11x16xf32> to vector<2x11x11x1xf32>
    %259 = vector.extract_strided_slice %2 {offsets = [0, 14, 0], sizes = [1, 1, 16], strides = [1, 1, 1]} : vector<2x16x16xf32> to vector<1x1x16xf32>
    %260 = vector.shape_cast %259 : vector<1x1x16xf32> to vector<1x16xf32>
    %261 = vector.shape_cast %260 : vector<1x16xf32> to vector<1x1x1x16xf32>
    %262 = vector.broadcast %258 : vector<2x11x11x1xf32> to vector<2x11x11x16xf32>
    %263 = vector.broadcast %261 : vector<1x1x1x16xf32> to vector<2x11x11x16xf32>
    %264 = arith.mulf %262, %263 : vector<2x11x11x16xf32>
    %265 = arith.addf %257, %264 : vector<2x11x11x16xf32>
    %266 = vector.extract_strided_slice %145 {offsets = [0, 0, 0, 15], sizes = [2, 11, 11, 1], strides = [1, 1, 1, 1]} : vector<2x11x11x16xf32> to vector<2x11x11x1xf32>
    %267 = vector.extract_strided_slice %2 {offsets = [0, 15, 0], sizes = [1, 1, 16], strides = [1, 1, 1]} : vector<2x16x16xf32> to vector<1x1x16xf32>
    %268 = vector.shape_cast %267 : vector<1x1x16xf32> to vector<1x16xf32>
    %269 = vector.shape_cast %268 : vector<1x16xf32> to vector<1x1x1x16xf32>
    %270 = vector.broadcast %266 : vector<2x11x11x1xf32> to vector<2x11x11x16xf32>
    %271 = vector.broadcast %269 : vector<1x1x1x16xf32> to vector<2x11x11x16xf32>
    %272 = arith.mulf %270, %271 : vector<2x11x11x16xf32>
    %273 = arith.addf %265, %272 : vector<2x11x11x16xf32>
    %274 = vector.extract_strided_slice %143 {offsets = [0, 1, 0, 0], sizes = [2, 11, 11, 16], strides = [1, 1, 1, 1]} : vector<2x12x11x16xf32> to vector<2x11x11x16xf32>
    %275 = vector.extract_strided_slice %274 {offsets = [0, 0, 0, 0], sizes = [2, 11, 11, 1], strides = [1, 1, 1, 1]} : vector<2x11x11x16xf32> to vector<2x11x11x1xf32>
    %276 = vector.extract_strided_slice %2 {offsets = [1, 0, 0], sizes = [1, 1, 16], strides = [1, 1, 1]} : vector<2x16x16xf32> to vector<1x1x16xf32>
    %277 = vector.shape_cast %276 : vector<1x1x16xf32> to vector<1x16xf32>
    %278 = vector.shape_cast %277 : vector<1x16xf32> to vector<1x1x1x16xf32>
    %279 = vector.broadcast %275 : vector<2x11x11x1xf32> to vector<2x11x11x16xf32>
    %280 = vector.broadcast %278 : vector<1x1x1x16xf32> to vector<2x11x11x16xf32>
    %281 = arith.mulf %279, %280 : vector<2x11x11x16xf32>
    %282 = arith.addf %273, %281 : vector<2x11x11x16xf32>
    %283 = vector.extract_strided_slice %274 {offsets = [0, 0, 0, 1], sizes = [2, 11, 11, 1], strides = [1, 1, 1, 1]} : vector<2x11x11x16xf32> to vector<2x11x11x1xf32>
    %284 = vector.extract_strided_slice %2 {offsets = [1, 1, 0], sizes = [1, 1, 16], strides = [1, 1, 1]} : vector<2x16x16xf32> to vector<1x1x16xf32>
    %285 = vector.shape_cast %284 : vector<1x1x16xf32> to vector<1x16xf32>
    %286 = vector.shape_cast %285 : vector<1x16xf32> to vector<1x1x1x16xf32>
    %287 = vector.broadcast %283 : vector<2x11x11x1xf32> to vector<2x11x11x16xf32>
    %288 = vector.broadcast %286 : vector<1x1x1x16xf32> to vector<2x11x11x16xf32>
    %289 = arith.mulf %287, %288 : vector<2x11x11x16xf32>
    %290 = arith.addf %282, %289 : vector<2x11x11x16xf32>
    %291 = vector.extract_strided_slice %274 {offsets = [0, 0, 0, 2], sizes = [2, 11, 11, 1], strides = [1, 1, 1, 1]} : vector<2x11x11x16xf32> to vector<2x11x11x1xf32>
    %292 = vector.extract_strided_slice %2 {offsets = [1, 2, 0], sizes = [1, 1, 16], strides = [1, 1, 1]} : vector<2x16x16xf32> to vector<1x1x16xf32>
    %293 = vector.shape_cast %292 : vector<1x1x16xf32> to vector<1x16xf32>
    %294 = vector.shape_cast %293 : vector<1x16xf32> to vector<1x1x1x16xf32>
    %295 = vector.broadcast %291 : vector<2x11x11x1xf32> to vector<2x11x11x16xf32>
    %296 = vector.broadcast %294 : vector<1x1x1x16xf32> to vector<2x11x11x16xf32>
    %297 = arith.mulf %295, %296 : vector<2x11x11x16xf32>
    %298 = arith.addf %290, %297 : vector<2x11x11x16xf32>
    %299 = vector.extract_strided_slice %274 {offsets = [0, 0, 0, 3], sizes = [2, 11, 11, 1], strides = [1, 1, 1, 1]} : vector<2x11x11x16xf32> to vector<2x11x11x1xf32>
    %300 = vector.extract_strided_slice %2 {offsets = [1, 3, 0], sizes = [1, 1, 16], strides = [1, 1, 1]} : vector<2x16x16xf32> to vector<1x1x16xf32>
    %301 = vector.shape_cast %300 : vector<1x1x16xf32> to vector<1x16xf32>
    %302 = vector.shape_cast %301 : vector<1x16xf32> to vector<1x1x1x16xf32>
    %303 = vector.broadcast %299 : vector<2x11x11x1xf32> to vector<2x11x11x16xf32>
    %304 = vector.broadcast %302 : vector<1x1x1x16xf32> to vector<2x11x11x16xf32>
    %305 = arith.mulf %303, %304 : vector<2x11x11x16xf32>
    %306 = arith.addf %298, %305 : vector<2x11x11x16xf32>
    %307 = vector.extract_strided_slice %274 {offsets = [0, 0, 0, 4], sizes = [2, 11, 11, 1], strides = [1, 1, 1, 1]} : vector<2x11x11x16xf32> to vector<2x11x11x1xf32>
    %308 = vector.extract_strided_slice %2 {offsets = [1, 4, 0], sizes = [1, 1, 16], strides = [1, 1, 1]} : vector<2x16x16xf32> to vector<1x1x16xf32>
    %309 = vector.shape_cast %308 : vector<1x1x16xf32> to vector<1x16xf32>
    %310 = vector.shape_cast %309 : vector<1x16xf32> to vector<1x1x1x16xf32>
    %311 = vector.broadcast %307 : vector<2x11x11x1xf32> to vector<2x11x11x16xf32>
    %312 = vector.broadcast %310 : vector<1x1x1x16xf32> to vector<2x11x11x16xf32>
    %313 = arith.mulf %311, %312 : vector<2x11x11x16xf32>
    %314 = arith.addf %306, %313 : vector<2x11x11x16xf32>
    %315 = vector.extract_strided_slice %274 {offsets = [0, 0, 0, 5], sizes = [2, 11, 11, 1], strides = [1, 1, 1, 1]} : vector<2x11x11x16xf32> to vector<2x11x11x1xf32>
    %316 = vector.extract_strided_slice %2 {offsets = [1, 5, 0], sizes = [1, 1, 16], strides = [1, 1, 1]} : vector<2x16x16xf32> to vector<1x1x16xf32>
    %317 = vector.shape_cast %316 : vector<1x1x16xf32> to vector<1x16xf32>
    %318 = vector.shape_cast %317 : vector<1x16xf32> to vector<1x1x1x16xf32>
    %319 = vector.broadcast %315 : vector<2x11x11x1xf32> to vector<2x11x11x16xf32>
    %320 = vector.broadcast %318 : vector<1x1x1x16xf32> to vector<2x11x11x16xf32>
    %321 = arith.mulf %319, %320 : vector<2x11x11x16xf32>
    %322 = arith.addf %314, %321 : vector<2x11x11x16xf32>
    %323 = vector.extract_strided_slice %274 {offsets = [0, 0, 0, 6], sizes = [2, 11, 11, 1], strides = [1, 1, 1, 1]} : vector<2x11x11x16xf32> to vector<2x11x11x1xf32>
    %324 = vector.extract_strided_slice %2 {offsets = [1, 6, 0], sizes = [1, 1, 16], strides = [1, 1, 1]} : vector<2x16x16xf32> to vector<1x1x16xf32>
    %325 = vector.shape_cast %324 : vector<1x1x16xf32> to vector<1x16xf32>
    %326 = vector.shape_cast %325 : vector<1x16xf32> to vector<1x1x1x16xf32>
    %327 = vector.broadcast %323 : vector<2x11x11x1xf32> to vector<2x11x11x16xf32>
    %328 = vector.broadcast %326 : vector<1x1x1x16xf32> to vector<2x11x11x16xf32>
    %329 = arith.mulf %327, %328 : vector<2x11x11x16xf32>
    %330 = arith.addf %322, %329 : vector<2x11x11x16xf32>
    %331 = vector.extract_strided_slice %274 {offsets = [0, 0, 0, 7], sizes = [2, 11, 11, 1], strides = [1, 1, 1, 1]} : vector<2x11x11x16xf32> to vector<2x11x11x1xf32>
    %332 = vector.extract_strided_slice %2 {offsets = [1, 7, 0], sizes = [1, 1, 16], strides = [1, 1, 1]} : vector<2x16x16xf32> to vector<1x1x16xf32>
    %333 = vector.shape_cast %332 : vector<1x1x16xf32> to vector<1x16xf32>
    %334 = vector.shape_cast %333 : vector<1x16xf32> to vector<1x1x1x16xf32>
    %335 = vector.broadcast %331 : vector<2x11x11x1xf32> to vector<2x11x11x16xf32>
    %336 = vector.broadcast %334 : vector<1x1x1x16xf32> to vector<2x11x11x16xf32>
    %337 = arith.mulf %335, %336 : vector<2x11x11x16xf32>
    %338 = arith.addf %330, %337 : vector<2x11x11x16xf32>
    %339 = vector.extract_strided_slice %274 {offsets = [0, 0, 0, 8], sizes = [2, 11, 11, 1], strides = [1, 1, 1, 1]} : vector<2x11x11x16xf32> to vector<2x11x11x1xf32>
    %340 = vector.extract_strided_slice %2 {offsets = [1, 8, 0], sizes = [1, 1, 16], strides = [1, 1, 1]} : vector<2x16x16xf32> to vector<1x1x16xf32>
    %341 = vector.shape_cast %340 : vector<1x1x16xf32> to vector<1x16xf32>
    %342 = vector.shape_cast %341 : vector<1x16xf32> to vector<1x1x1x16xf32>
    %343 = vector.broadcast %339 : vector<2x11x11x1xf32> to vector<2x11x11x16xf32>
    %344 = vector.broadcast %342 : vector<1x1x1x16xf32> to vector<2x11x11x16xf32>
    %345 = arith.mulf %343, %344 : vector<2x11x11x16xf32>
    %346 = arith.addf %338, %345 : vector<2x11x11x16xf32>
    %347 = vector.extract_strided_slice %274 {offsets = [0, 0, 0, 9], sizes = [2, 11, 11, 1], strides = [1, 1, 1, 1]} : vector<2x11x11x16xf32> to vector<2x11x11x1xf32>
    %348 = vector.extract_strided_slice %2 {offsets = [1, 9, 0], sizes = [1, 1, 16], strides = [1, 1, 1]} : vector<2x16x16xf32> to vector<1x1x16xf32>
    %349 = vector.shape_cast %348 : vector<1x1x16xf32> to vector<1x16xf32>
    %350 = vector.shape_cast %349 : vector<1x16xf32> to vector<1x1x1x16xf32>
    %351 = vector.broadcast %347 : vector<2x11x11x1xf32> to vector<2x11x11x16xf32>
    %352 = vector.broadcast %350 : vector<1x1x1x16xf32> to vector<2x11x11x16xf32>
    %353 = arith.mulf %351, %352 : vector<2x11x11x16xf32>
    %354 = arith.addf %346, %353 : vector<2x11x11x16xf32>
    %355 = vector.extract_strided_slice %274 {offsets = [0, 0, 0, 10], sizes = [2, 11, 11, 1], strides = [1, 1, 1, 1]} : vector<2x11x11x16xf32> to vector<2x11x11x1xf32>
    %356 = vector.extract_strided_slice %2 {offsets = [1, 10, 0], sizes = [1, 1, 16], strides = [1, 1, 1]} : vector<2x16x16xf32> to vector<1x1x16xf32>
    %357 = vector.shape_cast %356 : vector<1x1x16xf32> to vector<1x16xf32>
    %358 = vector.shape_cast %357 : vector<1x16xf32> to vector<1x1x1x16xf32>
    %359 = vector.broadcast %355 : vector<2x11x11x1xf32> to vector<2x11x11x16xf32>
    %360 = vector.broadcast %358 : vector<1x1x1x16xf32> to vector<2x11x11x16xf32>
    %361 = arith.mulf %359, %360 : vector<2x11x11x16xf32>
    %362 = arith.addf %354, %361 : vector<2x11x11x16xf32>
    %363 = vector.extract_strided_slice %274 {offsets = [0, 0, 0, 11], sizes = [2, 11, 11, 1], strides = [1, 1, 1, 1]} : vector<2x11x11x16xf32> to vector<2x11x11x1xf32>
    %364 = vector.extract_strided_slice %2 {offsets = [1, 11, 0], sizes = [1, 1, 16], strides = [1, 1, 1]} : vector<2x16x16xf32> to vector<1x1x16xf32>
    %365 = vector.shape_cast %364 : vector<1x1x16xf32> to vector<1x16xf32>
    %366 = vector.shape_cast %365 : vector<1x16xf32> to vector<1x1x1x16xf32>
    %367 = vector.broadcast %363 : vector<2x11x11x1xf32> to vector<2x11x11x16xf32>
    %368 = vector.broadcast %366 : vector<1x1x1x16xf32> to vector<2x11x11x16xf32>
    %369 = arith.mulf %367, %368 : vector<2x11x11x16xf32>
    %370 = arith.addf %362, %369 : vector<2x11x11x16xf32>
    %371 = vector.extract_strided_slice %274 {offsets = [0, 0, 0, 12], sizes = [2, 11, 11, 1], strides = [1, 1, 1, 1]} : vector<2x11x11x16xf32> to vector<2x11x11x1xf32>
    %372 = vector.extract_strided_slice %2 {offsets = [1, 12, 0], sizes = [1, 1, 16], strides = [1, 1, 1]} : vector<2x16x16xf32> to vector<1x1x16xf32>
    %373 = vector.shape_cast %372 : vector<1x1x16xf32> to vector<1x16xf32>
    %374 = vector.shape_cast %373 : vector<1x16xf32> to vector<1x1x1x16xf32>
    %375 = vector.broadcast %371 : vector<2x11x11x1xf32> to vector<2x11x11x16xf32>
    %376 = vector.broadcast %374 : vector<1x1x1x16xf32> to vector<2x11x11x16xf32>
    %377 = arith.mulf %375, %376 : vector<2x11x11x16xf32>
    %378 = arith.addf %370, %377 : vector<2x11x11x16xf32>
    %379 = vector.extract_strided_slice %274 {offsets = [0, 0, 0, 13], sizes = [2, 11, 11, 1], strides = [1, 1, 1, 1]} : vector<2x11x11x16xf32> to vector<2x11x11x1xf32>
    %380 = vector.extract_strided_slice %2 {offsets = [1, 13, 0], sizes = [1, 1, 16], strides = [1, 1, 1]} : vector<2x16x16xf32> to vector<1x1x16xf32>
    %381 = vector.shape_cast %380 : vector<1x1x16xf32> to vector<1x16xf32>
    %382 = vector.shape_cast %381 : vector<1x16xf32> to vector<1x1x1x16xf32>
    %383 = vector.broadcast %379 : vector<2x11x11x1xf32> to vector<2x11x11x16xf32>
    %384 = vector.broadcast %382 : vector<1x1x1x16xf32> to vector<2x11x11x16xf32>
    %385 = arith.mulf %383, %384 : vector<2x11x11x16xf32>
    %386 = arith.addf %378, %385 : vector<2x11x11x16xf32>
    %387 = vector.extract_strided_slice %274 {offsets = [0, 0, 0, 14], sizes = [2, 11, 11, 1], strides = [1, 1, 1, 1]} : vector<2x11x11x16xf32> to vector<2x11x11x1xf32>
    %388 = vector.extract_strided_slice %2 {offsets = [1, 14, 0], sizes = [1, 1, 16], strides = [1, 1, 1]} : vector<2x16x16xf32> to vector<1x1x16xf32>
    %389 = vector.shape_cast %388 : vector<1x1x16xf32> to vector<1x16xf32>
    %390 = vector.shape_cast %389 : vector<1x16xf32> to vector<1x1x1x16xf32>
    %391 = vector.broadcast %387 : vector<2x11x11x1xf32> to vector<2x11x11x16xf32>
    %392 = vector.broadcast %390 : vector<1x1x1x16xf32> to vector<2x11x11x16xf32>
    %393 = arith.mulf %391, %392 : vector<2x11x11x16xf32>
    %394 = arith.addf %386, %393 : vector<2x11x11x16xf32>
    %395 = vector.extract_strided_slice %274 {offsets = [0, 0, 0, 15], sizes = [2, 11, 11, 1], strides = [1, 1, 1, 1]} : vector<2x11x11x16xf32> to vector<2x11x11x1xf32>
    %396 = vector.extract_strided_slice %2 {offsets = [1, 15, 0], sizes = [1, 1, 16], strides = [1, 1, 1]} : vector<2x16x16xf32> to vector<1x1x16xf32>
    %397 = vector.shape_cast %396 : vector<1x1x16xf32> to vector<1x16xf32>
    %398 = vector.shape_cast %397 : vector<1x16xf32> to vector<1x1x1x16xf32>
    %399 = vector.broadcast %395 : vector<2x11x11x1xf32> to vector<2x11x11x16xf32>
    %400 = vector.broadcast %398 : vector<1x1x1x16xf32> to vector<2x11x11x16xf32>
    %401 = arith.mulf %399, %400 : vector<2x11x11x16xf32>
    %402 = arith.addf %394, %401 : vector<2x11x11x16xf32>
    %403 = vector.shape_cast %4 : vector<1x16xf32> to vector<1x1x1x16xf32>
    %404 = vector.broadcast %403 : vector<1x1x1x16xf32> to vector<2x11x11x16xf32>
    %405 = arith.addf %402, %404 : vector<2x11x11x16xf32>
    %406 = vector.extract_strided_slice %405 {offsets = [0, 0, 0, 0], sizes = [2, 11, 8, 16], strides = [1, 1, 1, 1]} : vector<2x11x11x16xf32> to vector<2x11x8x16xf32>
    %407 = vector.extract_strided_slice %405 {offsets = [0, 0, 1, 0], sizes = [2, 11, 8, 16], strides = [1, 1, 1, 1]} : vector<2x11x11x16xf32> to vector<2x11x8x16xf32>
    %408 = arith.maximumf %406, %407 : vector<2x11x8x16xf32>
    %409 = vector.extract_strided_slice %405 {offsets = [0, 0, 2, 0], sizes = [2, 11, 8, 16], strides = [1, 1, 1, 1]} : vector<2x11x11x16xf32> to vector<2x11x8x16xf32>
    %410 = arith.maximumf %408, %409 : vector<2x11x8x16xf32>
    %411 = vector.extract_strided_slice %405 {offsets = [0, 0, 3, 0], sizes = [2, 11, 8, 16], strides = [1, 1, 1, 1]} : vector<2x11x11x16xf32> to vector<2x11x8x16xf32>
    %412 = arith.maximumf %410, %411 : vector<2x11x8x16xf32>
    %413 = vector.extract_strided_slice %412 {offsets = [0, 0, 0, 0], sizes = [2, 8, 8, 16], strides = [1, 1, 1, 1]} : vector<2x11x8x16xf32> to vector<2x8x8x16xf32>
    %414 = vector.extract_strided_slice %412 {offsets = [0, 1, 0, 0], sizes = [2, 8, 8, 16], strides = [1, 1, 1, 1]} : vector<2x11x8x16xf32> to vector<2x8x8x16xf32>
    %415 = arith.maximumf %413, %414 : vector<2x8x8x16xf32>
    %416 = vector.extract_strided_slice %412 {offsets = [0, 2, 0, 0], sizes = [2, 8, 8, 16], strides = [1, 1, 1, 1]} : vector<2x11x8x16xf32> to vector<2x8x8x16xf32>
    %417 = arith.maximumf %415, %416 : vector<2x8x8x16xf32>
    %418 = vector.extract_strided_slice %412 {offsets = [0, 3, 0, 0], sizes = [2, 8, 8, 16], strides = [1, 1, 1, 1]} : vector<2x11x8x16xf32> to vector<2x8x8x16xf32>
    %419 = arith.maximumf %417, %418 : vector<2x8x8x16xf32>
    %cst_19 = arith.constant 0.000000e+00 : f32
    %420 = vector.broadcast %cst_19 : f32 to vector<2x8x8x16xf32>
    %421 = arith.maximumf %419, %420 : vector<2x8x8x16xf32>
    %c0_20 = arith.constant 0 : index
    %c0_21 = arith.constant 0 : index
    %c0_22 = arith.constant 0 : index
    %c0_23 = arith.constant 0 : index
    %422 = vector.load %arg6[%c0_20, %c0_21, %c0_22, %c0_23] : memref<2x8x8x16xf32, #tpu.memory_space<vmem>>, vector<2x8x8x16xf32>
    tpu.vector_store %arg6[%c0_20, %c0_21, %c0_22, %c0_23], %421 {strides = array<i32>} : memref<2x8x8x16xf32, #tpu.memory_space<vmem>>, vector<2x8x8x16xf32>,
    return
  }
}

</mosaic_0001>

<llo_original>
// kernel: decoupling_block2_forward.1
$region0: #{decoupling_block2_forward.1}
  #allocation0 [shape = 'u32[]', space=smem, size = 0x4, offset = 0x4, fixed_abs, tag = 'smem constant byte address 0x4 - core index']
  #allocation1 [shape = 'u32[72,128]{1,0:T(1,128)}', space=vmem, size = 0x9000, scoped, tag = 'internal scratch']
  %s0 = inlined_call_operand.vmem [shape: f32[2,12,12,8], index: 0, kind: input, shape index: {}]
  %s1 = inlined_call_operand.vmem [shape: f32[2,8,16], index: 1, kind: input, shape index: {}]
  %s2 = inlined_call_operand.vmem [shape: f32[1,16], index: 2, kind: input, shape index: {}]
  %s3 = inlined_call_operand.vmem [shape: f32[1,12,11,1], index: 3, kind: input, shape index: {}]
  %s4 = inlined_call_operand.vmem [shape: f32[2,16,16], index: 4, kind: input, shape index: {}]
  %s5 = inlined_call_operand.vmem [shape: f32[1,16], index: 5, kind: input, shape index: {}]
  %s6 = inlined_call_operand.hbm [shape: f32[2,8,8,16], index: 6, kind: output, shape index: {}]
  %s7 = sld [smem:[#allocation0]]
  $region34: #{decoupling_block2_forward.1} parent=0
    _
  %s9 = ssub.s32 1, %s7
  %s10 = scalar_select 0, %s9, %s7
  $region1: #{decoupling_block2_forward.1} parent=0
    #allocation2 [shape = 'u8[65536]{0}', space=vmem, size = 0x10000, scoped, tag = 'output window, operand 0, single buffered']
    #allocation3 [shape = 's32[1]{0}', space=sflag, size = 0x4, scoped, tag = 'scoped memory for decoupling_block2_forward.1']
    %11 = vsyncpa [#allocation3], 0
    // Predicated region
    $region2: #{decoupling_block2_forward.1} parent=1 // pred_check
      _
    $region3: #{decoupling_block2_forward.1} parent=1 // pred_check_branch
      %13 = sbr.rel (0) target = $region5
    $region4: #{decoupling_block2_forward.1} parent=1 // pred_region
      _
    $region5: #{decoupling_block2_forward.1} parent=1 // pred_fallthru
      _
    // Predicated region
    $region6: #{decoupling_block2_forward.1} parent=1 // pred_check
      _
    $region7: #{decoupling_block2_forward.1} parent=1 // pred_check_branch
      %15 = sbr.rel (0) target = $region9
    $region8: #{decoupling_block2_forward.1} parent=1 // pred_region
      _
    $region9: #{decoupling_block2_forward.1} parent=1 // pred_fallthru
      _
    // Predicated region
    $region10: #{decoupling_block2_forward.1} parent=1 // pred_check
      _
    $region11: #{decoupling_block2_forward.1} parent=1 // pred_check_branch
      %17 = sbr.rel (0) target = $region13
    $region12: #{decoupling_block2_forward.1} parent=1 // pred_region
      _
    $region13: #{decoupling_block2_forward.1} parent=1 // pred_fallthru
      _
    // Predicated region
    $region14: #{decoupling_block2_forward.1} parent=1 // pred_check
      _
    $region15: #{decoupling_block2_forward.1} parent=1 // pred_check_branch
      %19 = sbr.rel (0) target = $region17
    $region16: #{decoupling_block2_forward.1} parent=1 // pred_region
      _
    $region17: #{decoupling_block2_forward.1} parent=1 // pred_fallthru
      _
    // Predicated region
    $region18: #{decoupling_block2_forward.1} parent=1 // pred_check
      _
    $region19: #{decoupling_block2_forward.1} parent=1 // pred_check_branch
      %21 = sbr.rel (0) target = $region21
    $region20: #{decoupling_block2_forward.1} parent=1 // pred_region
      _
    $region21: #{decoupling_block2_forward.1} parent=1 // pred_fallthru
      _
    // Predicated region
    $region22: #{decoupling_block2_forward.1} parent=1 // pred_check
      _
    $region23: #{decoupling_block2_forward.1} parent=1 // pred_check_branch
      %23 = sbr.rel (0) target = $region25
    $region24: #{decoupling_block2_forward.1} parent=1 // pred_region
      _
    $region25: #{decoupling_block2_forward.1} parent=1 // pred_fallthru
      _
    %v24 = vld [vmem:[%s0] sm:$0xff]
    %v25 = vld [vmem:[%s0 + $0x8] sm:$0xf]
    %v26 = vld [vmem:[%s0 + $0x10] sm:$0xff]
    %v27 = vld [vmem:[%s0 + $0x18] sm:$0xf]
    %v28 = vld [vmem:[%s0 + $0x20] sm:$0xff]
    %v29 = vld [vmem:[%s0 + $0x28] sm:$0xf]
    %v30 = vld [vmem:[%s0 + $0x30] sm:$0xff]
    %v31 = vld [vmem:[%s0 + $0x38] sm:$0xf]
    %v32 = vld [vmem:[%s0 + $0x40] sm:$0xff]
    %v33 = vld [vmem:[%s0 + $0x48] sm:$0xf]
    %v34 = vld [vmem:[%s0 + $0x50] sm:$0xff]
    %v35 = vld [vmem:[%s0 + $0x58] sm:$0xf]
    %v36 = vld [vmem:[%s0 + $0x60] sm:$0xff]
    %v37 = vld [vmem:[%s0 + $0x68] sm:$0xf]
    %v38 = vld [vmem:[%s0 + $0x70] sm:$0xff]
    %v39 = vld [vmem:[%s0 + $0x78] sm:$0xf]
    %v40 = vld [vmem:[%s0 + $0x80] sm:$0xff]
    %v41 = vld [vmem:[%s0 + $0x88] sm:$0xf]
    %v42 = vld [vmem:[%s0 + $0x90] sm:$0xff]
    %v43 = vld [vmem:[%s0 + $0x98] sm:$0xf]
    %v44 = vld [vmem:[%s0 + $0xa0] sm:$0xff]
    %v45 = vld [vmem:[%s0 + $0xa8] sm:$0xf]
    %v46 = vld [vmem:[%s0 + $0xb0] sm:$0xff]
    %v47 = vld [vmem:[%s0 + $0xb8] sm:$0xf]
    %v48 = vld [vmem:[%s0 + $0xc0] sm:$0xff]
    %v49 = vld [vmem:[%s0 + $0xc8] sm:$0xf]
    %v50 = vld [vmem:[%s0 + $0xd0] sm:$0xff]
    %v51 = vld [vmem:[%s0 + $0xd8] sm:$0xf]
    %v52 = vld [vmem:[%s0 + $0xe0] sm:$0xff]
    %v53 = vld [vmem:[%s0 + $0xe8] sm:$0xf]
    %v54 = vld [vmem:[%s0 + $0xf0] sm:$0xff]
    %v55 = vld [vmem:[%s0 + $0xf8] sm:$0xf]
    %v56 = vld [vmem:[%s0 + $0x100] sm:$0xff]
    %v57 = vld [vmem:[%s0 + $0x108] sm:$0xf]
    %v58 = vld [vmem:[%s0 + $0x110] sm:$0xff]
    %v59 = vld [vmem:[%s0 + $0x118] sm:$0xf]
    %v60 = vld [vmem:[%s0 + $0x120] sm:$0xff]
    %v61 = vld [vmem:[%s0 + $0x128] sm:$0xf]
    %v62 = vld [vmem:[%s0 + $0x130] sm:$0xff]
    %v63 = vld [vmem:[%s0 + $0x138] sm:$0xf]
    %v64 = vld [vmem:[%s0 + $0x140] sm:$0xff]
    %v65 = vld [vmem:[%s0 + $0x148] sm:$0xf]
    %v66 = vld [vmem:[%s0 + $0x150] sm:$0xff]
    %v67 = vld [vmem:[%s0 + $0x158] sm:$0xf]
    %v68 = vld [vmem:[%s0 + $0x160] sm:$0xff]
    %v69 = vld [vmem:[%s0 + $0x168] sm:$0xf]
    %v70 = vld [vmem:[%s0 + $0x170] sm:$0xff]
    %v71 = vld [vmem:[%s0 + $0x178] sm:$0xf]
    %v72 = vld [vmem:[%s1] sm:$0xff]
    %v73 = vld [vmem:[%s1 + $0x8] sm:$0xff]
    %v74 = vld [vmem:[%s4] sm:$0xff]
    %v75 = vld [vmem:[%s4 + $0x8] sm:$0xff]
    %v76 = vld [vmem:[%s4 + $0x10] sm:$0xff]
    %v77 = vld [vmem:[%s4 + $0x18] sm:$0xff]
    %v78 = vld [vmem:[%s2] sm:$0x1]
    %v79 = vld [vmem:[%s5] sm:$0x1]
    %v80 = vld [vmem:[%s3] sm:$0xff]
    %v81 = vld [vmem:[%s3 + $0x8] sm:$0x7]
    %v82 = vld [vmem:[%s3 + $0x10] sm:$0xff]
    %v83 = vld [vmem:[%s3 + $0x18] sm:$0x7]
    %v84 = vld [vmem:[%s3 + $0x20] sm:$0xff]
    %v85 = vld [vmem:[%s3 + $0x28] sm:$0x7]
    %v86 = vld [vmem:[%s3 + $0x30] sm:$0xff]
    %v87 = vld [vmem:[%s3 + $0x38] sm:$0x7]
    %v88 = vld [vmem:[%s3 + $0x40] sm:$0xff]
    %v89 = vld [vmem:[%s3 + $0x48] sm:$0x7]
    %v90 = vld [vmem:[%s3 + $0x50] sm:$0xff]
    %v91 = vld [vmem:[%s3 + $0x58] sm:$0x7]
    %v92 = vld [vmem:[%s3 + $0x60] sm:$0xff]
    %v93 = vld [vmem:[%s3 + $0x68] sm:$0x7]
    %v94 = vld [vmem:[%s3 + $0x70] sm:$0xff]
    %v95 = vld [vmem:[%s3 + $0x78] sm:$0x7]
    %v96 = vld [vmem:[%s3 + $0x80] sm:$0xff]
    %v97 = vld [vmem:[%s3 + $0x88] sm:$0x7]
    %v98 = vld [vmem:[%s3 + $0x90] sm:$0xff]
    %v99 = vld [vmem:[%s3 + $0x98] sm:$0x7]
    %v100 = vld [vmem:[%s3 + $0xa0] sm:$0xff]
    %v101 = vld [vmem:[%s3 + $0xa8] sm:$0x7]
    %v102 = vld [vmem:[%s3 + $0xb0] sm:$0xff]
    %v103 = vld [vmem:[%s3 + $0xb8] sm:$0x7]
    %105 = vset.pattern.permute.xlu0 0
    %106 = vperm.xlu0 %105, %v24
    %v107 = vpop.permute.xlu0 %106
    %110 = vset.pattern.permute.xlu0 0
    %111 = vperm.xlu0 %110, %v25
    %v112 = vpop.permute.xlu0 %111
    %115 = vset.pattern.permute.xlu0 0
    %116 = vperm.xlu0 %115, %v26
    %v117 = vpop.permute.xlu0 %116
    %120 = vset.pattern.permute.xlu0 0
    %121 = vperm.xlu0 %120, %v27
    %v122 = vpop.permute.xlu0 %121
    %125 = vset.pattern.permute.xlu0 0
    %126 = vperm.xlu0 %125, %v28
    %v127 = vpop.permute.xlu0 %126
    %130 = vset.pattern.permute.xlu0 0
    %131 = vperm.xlu0 %130, %v29
    %v132 = vpop.permute.xlu0 %131
    %135 = vset.pattern.permute.xlu0 0
    %136 = vperm.xlu0 %135, %v30
    %v137 = vpop.permute.xlu0 %136
    %140 = vset.pattern.permute.xlu0 0
    %141 = vperm.xlu0 %140, %v31
    %v142 = vpop.permute.xlu0 %141
    %145 = vset.pattern.permute.xlu0 0
    %146 = vperm.xlu0 %145, %v32
    %v147 = vpop.permute.xlu0 %146
    %150 = vset.pattern.permute.xlu0 0
    %151 = vperm.xlu0 %150, %v33
    %v152 = vpop.permute.xlu0 %151
    %155 = vset.pattern.permute.xlu0 0
    %156 = vperm.xlu0 %155, %v34
    %v157 = vpop.permute.xlu0 %156
    %160 = vset.pattern.permute.xlu0 0
    %161 = vperm.xlu0 %160, %v35
    %v162 = vpop.permute.xlu0 %161
    %165 = vset.pattern.permute.xlu0 0
    %166 = vperm.xlu0 %165, %v36
    %v167 = vpop.permute.xlu0 %166
    %170 = vset.pattern.permute.xlu0 0
    %171 = vperm.xlu0 %170, %v37
    %v172 = vpop.permute.xlu0 %171
    %175 = vset.pattern.permute.xlu0 0
    %176 = vperm.xlu0 %175, %v38
    %v177 = vpop.permute.xlu0 %176
    %180 = vset.pattern.permute.xlu0 0
    %181 = vperm.xlu0 %180, %v39
    %v182 = vpop.permute.xlu0 %181
    %185 = vset.pattern.permute.xlu0 0
    %186 = vperm.xlu0 %185, %v40
    %v187 = vpop.permute.xlu0 %186
    %190 = vset.pattern.permute.xlu0 0
    %191 = vperm.xlu0 %190, %v41
    %v192 = vpop.permute.xlu0 %191
    %195 = vset.pattern.permute.xlu0 0
    %196 = vperm.xlu0 %195, %v42
    %v197 = vpop.permute.xlu0 %196
    %200 = vset.pattern.permute.xlu0 0
    %201 = vperm.xlu0 %200, %v43
    %v202 = vpop.permute.xlu0 %201
    %205 = vset.pattern.permute.xlu0 0
    %206 = vperm.xlu0 %205, %v44
    %v207 = vpop.permute.xlu0 %206
    %210 = vset.pattern.permute.xlu0 0
    %211 = vperm.xlu0 %210, %v45
    %v212 = vpop.permute.xlu0 %211
    %215 = vset.pattern.permute.xlu0 0
    %216 = vperm.xlu0 %215, %v46
    %v217 = vpop.permute.xlu0 %216
    %220 = vset.pattern.permute.xlu0 0
    %221 = vperm.xlu0 %220, %v47
    %v222 = vpop.permute.xlu0 %221
    %225 = vset.pattern.permute.xlu0 0
    %226 = vperm.xlu0 %225, %v48
    %v227 = vpop.permute.xlu0 %226
    %230 = vset.pattern.permute.xlu0 0
    %231 = vperm.xlu0 %230, %v49
    %v232 = vpop.permute.xlu0 %231
    %235 = vset.pattern.permute.xlu0 0
    %236 = vperm.xlu0 %235, %v50
    %v237 = vpop.permute.xlu0 %236
    %240 = vset.pattern.permute.xlu0 0
    %241 = vperm.xlu0 %240, %v51
    %v242 = vpop.permute.xlu0 %241
    %245 = vset.pattern.permute.xlu0 0
    %246 = vperm.xlu0 %245, %v52
    %v247 = vpop.permute.xlu0 %246
    %250 = vset.pattern.permute.xlu0 0
    %251 = vperm.xlu0 %250, %v53
    %v252 = vpop.permute.xlu0 %251
    %255 = vset.pattern.permute.xlu0 0
    %256 = vperm.xlu0 %255, %v54
    %v257 = vpop.permute.xlu0 %256
    %260 = vset.pattern.permute.xlu0 0
    %261 = vperm.xlu0 %260, %v55
    %v262 = vpop.permute.xlu0 %261
    %265 = vset.pattern.permute.xlu0 0
    %266 = vperm.xlu0 %265, %v56
    %v267 = vpop.permute.xlu0 %266
    %270 = vset.pattern.permute.xlu0 0
    %271 = vperm.xlu0 %270, %v57
    %v272 = vpop.permute.xlu0 %271
    %275 = vset.pattern.permute.xlu0 0
    %276 = vperm.xlu0 %275, %v58
    %v277 = vpop.permute.xlu0 %276
    %280 = vset.pattern.permute.xlu0 0
    %281 = vperm.xlu0 %280, %v59
    %v282 = vpop.permute.xlu0 %281
    %285 = vset.pattern.permute.xlu0 0
    %286 = vperm.xlu0 %285, %v60
    %v287 = vpop.permute.xlu0 %286
    %290 = vset.pattern.permute.xlu0 0
    %291 = vperm.xlu0 %290, %v61
    %v292 = vpop.permute.xlu0 %291
    %295 = vset.pattern.permute.xlu0 0
    %296 = vperm.xlu0 %295, %v62
    %v297 = vpop.permute.xlu0 %296
    %300 = vset.pattern.permute.xlu0 0
    %301 = vperm.xlu0 %300, %v63
    %v302 = vpop.permute.xlu0 %301
    %305 = vset.pattern.permute.xlu0 0
    %306 = vperm.xlu0 %305, %v64
    %v307 = vpop.permute.xlu0 %306
    %310 = vset.pattern.permute.xlu0 0
    %311 = vperm.xlu0 %310, %v65
    %v312 = vpop.permute.xlu0 %311
    %315 = vset.pattern.permute.xlu0 0
    %316 = vperm.xlu0 %315, %v66
    %v317 = vpop.permute.xlu0 %316
    %320 = vset.pattern.permute.xlu0 0
    %321 = vperm.xlu0 %320, %v67
    %v322 = vpop.permute.xlu0 %321
    %325 = vset.pattern.permute.xlu0 0
    %326 = vperm.xlu0 %325, %v68
    %v327 = vpop.permute.xlu0 %326
    %330 = vset.pattern.permute.xlu0 0
    %331 = vperm.xlu0 %330, %v69
    %v332 = vpop.permute.xlu0 %331
    %335 = vset.pattern.permute.xlu0 0
    %336 = vperm.xlu0 %335, %v70
    %v337 = vpop.permute.xlu0 %336
    %340 = vset.pattern.permute.xlu0 0
    %341 = vperm.xlu0 %340, %v71
    %v342 = vpop.permute.xlu0 %341
    %v344 = vperm.slane %v72, 0
    %v345 = vmul.f32 %v107, %v344
    %v346 = vmul.f32 %v112, %v344
    %v347 = vmul.f32 %v117, %v344
    %v348 = vmul.f32 %v122, %v344
    %v349 = vmul.f32 %v127, %v344
    %v350 = vmul.f32 %v132, %v344
    %v351 = vmul.f32 %v137, %v344
    %v352 = vmul.f32 %v142, %v344
    %v353 = vmul.f32 %v147, %v344
    %v354 = vmul.f32 %v152, %v344
    %v355 = vmul.f32 %v157, %v344
    %v356 = vmul.f32 %v162, %v344
    %v357 = vmul.f32 %v167, %v344
    %v358 = vmul.f32 %v172, %v344
    %v359 = vmul.f32 %v177, %v344
    %v360 = vmul.f32 %v182, %v344
    %v361 = vmul.f32 %v187, %v344
    %v362 = vmul.f32 %v192, %v344
    %v363 = vmul.f32 %v197, %v344
    %v364 = vmul.f32 %v202, %v344
    %v365 = vmul.f32 %v207, %v344
    %v366 = vmul.f32 %v212, %v344
    %v367 = vmul.f32 %v217, %v344
    %v368 = vmul.f32 %v222, %v344
    %v369 = vmul.f32 %v227, %v344
    %v370 = vmul.f32 %v232, %v344
    %v371 = vmul.f32 %v237, %v344
    %v372 = vmul.f32 %v242, %v344
    %v373 = vmul.f32 %v247, %v344
    %v374 = vmul.f32 %v252, %v344
    %v375 = vmul.f32 %v257, %v344
    %v376 = vmul.f32 %v262, %v344
    %v377 = vmul.f32 %v267, %v344
    %v378 = vmul.f32 %v272, %v344
    %v379 = vmul.f32 %v277, %v344
    %v380 = vmul.f32 %v282, %v344
    %v381 = vmul.f32 %v287, %v344
    %v382 = vmul.f32 %v292, %v344
    %v383 = vmul.f32 %v297, %v344
    %v384 = vmul.f32 %v302, %v344
    %v385 = vmul.f32 %v307, %v344
    %v386 = vmul.f32 %v312, %v344
    %v387 = vmul.f32 %v317, %v344
    %v388 = vmul.f32 %v322, %v344
    %v389 = vmul.f32 %v327, %v344
    %v390 = vmul.f32 %v332, %v344
    %v391 = vmul.f32 %v337, %v344
    %v392 = vmul.f32 %v342, %v344
    %v393 = vadd.f32 %v345, 0.0
    %v394 = vadd.f32 %v346, 0.0
    %v395 = vadd.f32 %v347, 0.0
    %v396 = vadd.f32 %v348, 0.0
    %v397 = vadd.f32 %v349, 0.0
    %v398 = vadd.f32 %v350, 0.0
    %v399 = vadd.f32 %v351, 0.0
    %v400 = vadd.f32 %v352, 0.0
    %v401 = vadd.f32 %v353, 0.0
    %v402 = vadd.f32 %v354, 0.0
    %v403 = vadd.f32 %v355, 0.0
    %v404 = vadd.f32 %v356, 0.0
    %v405 = vadd.f32 %v357, 0.0
    %v406 = vadd.f32 %v358, 0.0
    %v407 = vadd.f32 %v359, 0.0
    %v408 = vadd.f32 %v360, 0.0
    %v409 = vadd.f32 %v361, 0.0
    %v410 = vadd.f32 %v362, 0.0
    %v411 = vadd.f32 %v363, 0.0
    %v412 = vadd.f32 %v364, 0.0
    %v413 = vadd.f32 %v365, 0.0
    %v414 = vadd.f32 %v366, 0.0
    %v415 = vadd.f32 %v367, 0.0
    %v416 = vadd.f32 %v368, 0.0
    %v417 = vadd.f32 %v369, 0.0
    %v418 = vadd.f32 %v370, 0.0
    %v419 = vadd.f32 %v371, 0.0
    %v420 = vadd.f32 %v372, 0.0
    %v421 = vadd.f32 %v373, 0.0
    %v422 = vadd.f32 %v374, 0.0
    %v423 = vadd.f32 %v375, 0.0
    %v424 = vadd.f32 %v376, 0.0
    %v425 = vadd.f32 %v377, 0.0
    %v426 = vadd.f32 %v378, 0.0
    %v427 = vadd.f32 %v379, 0.0
    %v428 = vadd.f32 %v380, 0.0
    %v429 = vadd.f32 %v381, 0.0
    %v430 = vadd.f32 %v382, 0.0
    %v431 = vadd.f32 %v383, 0.0
    %v432 = vadd.f32 %v384, 0.0
    %v433 = vadd.f32 %v385, 0.0
    %v434 = vadd.f32 %v386, 0.0
    %v435 = vadd.f32 %v387, 0.0
    %v436 = vadd.f32 %v388, 0.0
    %v437 = vadd.f32 %v389, 0.0
    %v438 = vadd.f32 %v390, 0.0
    %v439 = vadd.f32 %v391, 0.0
    %v440 = vadd.f32 %v392, 0.0
    %441 = vset.pattern.permute.xlu0 1
    %442 = vperm.xlu0 %441, %v24
    %v443 = vpop.permute.xlu0 %442
    %445 = vset.pattern.permute.xlu0 1
    %446 = vperm.xlu0 %445, %v25
    %v447 = vpop.permute.xlu0 %446
    %449 = vset.pattern.permute.xlu0 1
    %450 = vperm.xlu0 %449, %v26
    %v451 = vpop.permute.xlu0 %450
    %453 = vset.pattern.permute.xlu0 1
    %454 = vperm.xlu0 %453, %v27
    %v455 = vpop.permute.xlu0 %454
    %457 = vset.pattern.permute.xlu0 1
    %458 = vperm.xlu0 %457, %v28
    %v459 = vpop.permute.xlu0 %458
    %461 = vset.pattern.permute.xlu0 1
    %462 = vperm.xlu0 %461, %v29
    %v463 = vpop.permute.xlu0 %462
    %465 = vset.pattern.permute.xlu0 1
    %466 = vperm.xlu0 %465, %v30
    %v467 = vpop.permute.xlu0 %466
    %469 = vset.pattern.permute.xlu0 1
    %470 = vperm.xlu0 %469, %v31
    %v471 = vpop.permute.xlu0 %470
    %473 = vset.pattern.permute.xlu0 1
    %474 = vperm.xlu0 %473, %v32
    %v475 = vpop.permute.xlu0 %474
    %477 = vset.pattern.permute.xlu0 1
    %478 = vperm.xlu0 %477, %v33
    %v479 = vpop.permute.xlu0 %478
    %481 = vset.pattern.permute.xlu0 1
    %482 = vperm.xlu0 %481, %v34
    %v483 = vpop.permute.xlu0 %482
    %485 = vset.pattern.permute.xlu0 1
    %486 = vperm.xlu0 %485, %v35
    %v487 = vpop.permute.xlu0 %486
    %489 = vset.pattern.permute.xlu0 1
    %490 = vperm.xlu0 %489, %v36
    %v491 = vpop.permute.xlu0 %490
    %493 = vset.pattern.permute.xlu0 1
    %494 = vperm.xlu0 %493, %v37
    %v495 = vpop.permute.xlu0 %494
    %497 = vset.pattern.permute.xlu0 1
    %498 = vperm.xlu0 %497, %v38
    %v499 = vpop.permute.xlu0 %498
    %501 = vset.pattern.permute.xlu0 1
    %502 = vperm.xlu0 %501, %v39
    %v503 = vpop.permute.xlu0 %502
    %505 = vset.pattern.permute.xlu0 1
    %506 = vperm.xlu0 %505, %v40
    %v507 = vpop.permute.xlu0 %506
    %509 = vset.pattern.permute.xlu0 1
    %510 = vperm.xlu0 %509, %v41
    %v511 = vpop.permute.xlu0 %510
    %513 = vset.pattern.permute.xlu0 1
    %514 = vperm.xlu0 %513, %v42
    %v515 = vpop.permute.xlu0 %514
    %517 = vset.pattern.permute.xlu0 1
    %518 = vperm.xlu0 %517, %v43
    %v519 = vpop.permute.xlu0 %518
    %521 = vset.pattern.permute.xlu0 1
    %522 = vperm.xlu0 %521, %v44
    %v523 = vpop.permute.xlu0 %522
    %525 = vset.pattern.permute.xlu0 1
    %526 = vperm.xlu0 %525, %v45
    %v527 = vpop.permute.xlu0 %526
    %529 = vset.pattern.permute.xlu0 1
    %530 = vperm.xlu0 %529, %v46
    %v531 = vpop.permute.xlu0 %530
    %533 = vset.pattern.permute.xlu0 1
    %534 = vperm.xlu0 %533, %v47
    %v535 = vpop.permute.xlu0 %534
    %537 = vset.pattern.permute.xlu0 1
    %538 = vperm.xlu0 %537, %v48
    %v539 = vpop.permute.xlu0 %538
    %541 = vset.pattern.permute.xlu0 1
    %542 = vperm.xlu0 %541, %v49
    %v543 = vpop.permute.xlu0 %542
    %545 = vset.pattern.permute.xlu0 1
    %546 = vperm.xlu0 %545, %v50
    %v547 = vpop.permute.xlu0 %546
    %549 = vset.pattern.permute.xlu0 1
    %550 = vperm.xlu0 %549, %v51
    %v551 = vpop.permute.xlu0 %550
    %553 = vset.pattern.permute.xlu0 1
    %554 = vperm.xlu0 %553, %v52
    %v555 = vpop.permute.xlu0 %554
    %557 = vset.pattern.permute.xlu0 1
    %558 = vperm.xlu0 %557, %v53
    %v559 = vpop.permute.xlu0 %558
    %561 = vset.pattern.permute.xlu0 1
    %562 = vperm.xlu0 %561, %v54
    %v563 = vpop.permute.xlu0 %562
    %565 = vset.pattern.permute.xlu0 1
    %566 = vperm.xlu0 %565, %v55
    %v567 = vpop.permute.xlu0 %566
    %569 = vset.pattern.permute.xlu0 1
    %570 = vperm.xlu0 %569, %v56
    %v571 = vpop.permute.xlu0 %570
    %573 = vset.pattern.permute.xlu0 1
    %574 = vperm.xlu0 %573, %v57
    %v575 = vpop.permute.xlu0 %574
    %577 = vset.pattern.permute.xlu0 1
    %578 = vperm.xlu0 %577, %v58
    %v579 = vpop.permute.xlu0 %578
    %581 = vset.pattern.permute.xlu0 1
    %582 = vperm.xlu0 %581, %v59
    %v583 = vpop.permute.xlu0 %582
    %585 = vset.pattern.permute.xlu0 1
    %586 = vperm.xlu0 %585, %v60
    %v587 = vpop.permute.xlu0 %586
    %589 = vset.pattern.permute.xlu0 1
    %590 = vperm.xlu0 %589, %v61
    %v591 = vpop.permute.xlu0 %590
    %593 = vset.pattern.permute.xlu0 1
    %594 = vperm.xlu0 %593, %v62
    %v595 = vpop.permute.xlu0 %594
    %597 = vset.pattern.permute.xlu0 1
    %598 = vperm.xlu0 %597, %v63
    %v599 = vpop.permute.xlu0 %598
    %601 = vset.pattern.permute.xlu0 1
    %602 = vperm.xlu0 %601, %v64
    %v603 = vpop.permute.xlu0 %602
    %605 = vset.pattern.permute.xlu0 1
    %606 = vperm.xlu0 %605, %v65
    %v607 = vpop.permute.xlu0 %606
    %609 = vset.pattern.permute.xlu0 1
    %610 = vperm.xlu0 %609, %v66
    %v611 = vpop.permute.xlu0 %610
    %613 = vset.pattern.permute.xlu0 1
    %614 = vperm.xlu0 %613, %v67
    %v615 = vpop.permute.xlu0 %614
    %617 = vset.pattern.permute.xlu0 1
    %618 = vperm.xlu0 %617, %v68
    %v619 = vpop.permute.xlu0 %618
    %621 = vset.pattern.permute.xlu0 1
    %622 = vperm.xlu0 %621, %v69
    %v623 = vpop.permute.xlu0 %622
    %625 = vset.pattern.permute.xlu0 1
    %626 = vperm.xlu0 %625, %v70
    %v627 = vpop.permute.xlu0 %626
    %629 = vset.pattern.permute.xlu0 1
    %630 = vperm.xlu0 %629, %v71
    %v631 = vpop.permute.xlu0 %630
    %v633 = vperm.slane %v72, 1
    %v634 = vmul.f32 %v443, %v633
    %v635 = vmul.f32 %v447, %v633
    %v636 = vmul.f32 %v451, %v633
    %v637 = vmul.f32 %v455, %v633
    %v638 = vmul.f32 %v459, %v633
    %v639 = vmul.f32 %v463, %v633
    %v640 = vmul.f32 %v467, %v633
    %v641 = vmul.f32 %v471, %v633
    %v642 = vmul.f32 %v475, %v633
    %v643 = vmul.f32 %v479, %v633
    %v644 = vmul.f32 %v483, %v633
    %v645 = vmul.f32 %v487, %v633
    %v646 = vmul.f32 %v491, %v633
    %v647 = vmul.f32 %v495, %v633
    %v648 = vmul.f32 %v499, %v633
    %v649 = vmul.f32 %v503, %v633
    %v650 = vmul.f32 %v507, %v633
    %v651 = vmul.f32 %v511, %v633
    %v652 = vmul.f32 %v515, %v633
    %v653 = vmul.f32 %v519, %v633
    %v654 = vmul.f32 %v523, %v633
    %v655 = vmul.f32 %v527, %v633
    %v656 = vmul.f32 %v531, %v633
    %v657 = vmul.f32 %v535, %v633
    %v658 = vmul.f32 %v539, %v633
    %v659 = vmul.f32 %v543, %v633
    %v660 = vmul.f32 %v547, %v633
    %v661 = vmul.f32 %v551, %v633
    %v662 = vmul.f32 %v555, %v633
    %v663 = vmul.f32 %v559, %v633
    %v664 = vmul.f32 %v563, %v633
    %v665 = vmul.f32 %v567, %v633
    %v666 = vmul.f32 %v571, %v633
    %v667 = vmul.f32 %v575, %v633
    %v668 = vmul.f32 %v579, %v633
    %v669 = vmul.f32 %v583, %v633
    %v670 = vmul.f32 %v587, %v633
    %v671 = vmul.f32 %v591, %v633
    %v672 = vmul.f32 %v595, %v633
    %v673 = vmul.f32 %v599, %v633
    %v674 = vmul.f32 %v603, %v633
    %v675 = vmul.f32 %v607, %v633
    %v676 = vmul.f32 %v611, %v633
    %v677 = vmul.f32 %v615, %v633
    %v678 = vmul.f32 %v619, %v633
    %v679 = vmul.f32 %v623, %v633
    %v680 = vmul.f32 %v627, %v633
    %v681 = vmul.f32 %v631, %v633
    %v682 = vadd.f32 %v393, %v634
    %v683 = vadd.f32 %v394, %v635
    %v684 = vadd.f32 %v395, %v636
    %v685 = vadd.f32 %v396, %v637
    %v686 = vadd.f32 %v397, %v638
    %v687 = vadd.f32 %v398, %v639
    %v688 = vadd.f32 %v399, %v640
    %v689 = vadd.f32 %v400, %v641
    %v690 = vadd.f32 %v401, %v642
    %v691 = vadd.f32 %v402, %v643
    %v692 = vadd.f32 %v403, %v644
    %v693 = vadd.f32 %v404, %v645
    %v694 = vadd.f32 %v405, %v646
    %v695 = vadd.f32 %v406, %v647
    %v696 = vadd.f32 %v407, %v648
    %v697 = vadd.f32 %v408, %v649
    %v698 = vadd.f32 %v409, %v650
    %v699 = vadd.f32 %v410, %v651
    %v700 = vadd.f32 %v411, %v652
    %v701 = vadd.f32 %v412, %v653
    %v702 = vadd.f32 %v413, %v654
    %v703 = vadd.f32 %v414, %v655
    %v704 = vadd.f32 %v415, %v656
    %v705 = vadd.f32 %v416, %v657
    %v706 = vadd.f32 %v417, %v658
    %v707 = vadd.f32 %v418, %v659
    %v708 = vadd.f32 %v419, %v660
    %v709 = vadd.f32 %v420, %v661
    %v710 = vadd.f32 %v421, %v662
    %v711 = vadd.f32 %v422, %v663
    %v712 = vadd.f32 %v423, %v664
    %v713 = vadd.f32 %v424, %v665
    %v714 = vadd.f32 %v425, %v666
    %v715 = vadd.f32 %v426, %v667
    %v716 = vadd.f32 %v427, %v668
    %v717 = vadd.f32 %v428, %v669
    %v718 = vadd.f32 %v429, %v670
    %v719 = vadd.f32 %v430, %v671
    %v720 = vadd.f32 %v431, %v672
    %v721 = vadd.f32 %v432, %v673
    %v722 = vadd.f32 %v433, %v674
    %v723 = vadd.f32 %v434, %v675
    %v724 = vadd.f32 %v435, %v676
    %v725 = vadd.f32 %v436, %v677
    %v726 = vadd.f32 %v437, %v678
    %v727 = vadd.f32 %v438, %v679
    %v728 = vadd.f32 %v439, %v680
    %v729 = vadd.f32 %v440, %v681
    %730 = vset.pattern.permute.xlu0 2
    %731 = vperm.xlu0 %730, %v24
    %v732 = vpop.permute.xlu0 %731
    %734 = vset.pattern.permute.xlu0 2
    %735 = vperm.xlu0 %734, %v25
    %v736 = vpop.permute.xlu0 %735
    %738 = vset.pattern.permute.xlu0 2
    %739 = vperm.xlu0 %738, %v26
    %v740 = vpop.permute.xlu0 %739
    %742 = vset.pattern.permute.xlu0 2
    %743 = vperm.xlu0 %742, %v27
    %v744 = vpop.permute.xlu0 %743
    %746 = vset.pattern.permute.xlu0 2
    %747 = vperm.xlu0 %746, %v28
    %v748 = vpop.permute.xlu0 %747
    %750 = vset.pattern.permute.xlu0 2
    %751 = vperm.xlu0 %750, %v29
    %v752 = vpop.permute.xlu0 %751
    %754 = vset.pattern.permute.xlu0 2
    %755 = vperm.xlu0 %754, %v30
    %v756 = vpop.permute.xlu0 %755
    %758 = vset.pattern.permute.xlu0 2
    %759 = vperm.xlu0 %758, %v31
    %v760 = vpop.permute.xlu0 %759
    %762 = vset.pattern.permute.xlu0 2
    %763 = vperm.xlu0 %762, %v32
    %v764 = vpop.permute.xlu0 %763
    %766 = vset.pattern.permute.xlu0 2
    %767 = vperm.xlu0 %766, %v33
    %v768 = vpop.permute.xlu0 %767
    %770 = vset.pattern.permute.xlu0 2
    %771 = vperm.xlu0 %770, %v34
    %v772 = vpop.permute.xlu0 %771
    %774 = vset.pattern.permute.xlu0 2
    %775 = vperm.xlu0 %774, %v35
    %v776 = vpop.permute.xlu0 %775
    %778 = vset.pattern.permute.xlu0 2
    %779 = vperm.xlu0 %778, %v36
    %v780 = vpop.permute.xlu0 %779
    %782 = vset.pattern.permute.xlu0 2
    %783 = vperm.xlu0 %782, %v37
    %v784 = vpop.permute.xlu0 %783
    %786 = vset.pattern.permute.xlu0 2
    %787 = vperm.xlu0 %786, %v38
    %v788 = vpop.permute.xlu0 %787
    %790 = vset.pattern.permute.xlu0 2
    %791 = vperm.xlu0 %790, %v39
    %v792 = vpop.permute.xlu0 %791
    %794 = vset.pattern.permute.xlu0 2
    %795 = vperm.xlu0 %794, %v40
    %v796 = vpop.permute.xlu0 %795
    %798 = vset.pattern.permute.xlu0 2
    %799 = vperm.xlu0 %798, %v41
    %v800 = vpop.permute.xlu0 %799
    %802 = vset.pattern.permute.xlu0 2
    %803 = vperm.xlu0 %802, %v42
    %v804 = vpop.permute.xlu0 %803
    %806 = vset.pattern.permute.xlu0 2
    %807 = vperm.xlu0 %806, %v43
    %v808 = vpop.permute.xlu0 %807
    %810 = vset.pattern.permute.xlu0 2
    %811 = vperm.xlu0 %810, %v44
    %v812 = vpop.permute.xlu0 %811
    %814 = vset.pattern.permute.xlu0 2
    %815 = vperm.xlu0 %814, %v45
    %v816 = vpop.permute.xlu0 %815
    %818 = vset.pattern.permute.xlu0 2
    %819 = vperm.xlu0 %818, %v46
    %v820 = vpop.permute.xlu0 %819
    %822 = vset.pattern.permute.xlu0 2
    %823 = vperm.xlu0 %822, %v47
    %v824 = vpop.permute.xlu0 %823
    %826 = vset.pattern.permute.xlu0 2
    %827 = vperm.xlu0 %826, %v48
    %v828 = vpop.permute.xlu0 %827
    %830 = vset.pattern.permute.xlu0 2
    %831 = vperm.xlu0 %830, %v49
    %v832 = vpop.permute.xlu0 %831
    %834 = vset.pattern.permute.xlu0 2
    %835 = vperm.xlu0 %834, %v50
    %v836 = vpop.permute.xlu0 %835
    %838 = vset.pattern.permute.xlu0 2
    %839 = vperm.xlu0 %838, %v51
    %v840 = vpop.permute.xlu0 %839
    %842 = vset.pattern.permute.xlu0 2
    %843 = vperm.xlu0 %842, %v52
    %v844 = vpop.permute.xlu0 %843
    %846 = vset.pattern.permute.xlu0 2
    %847 = vperm.xlu0 %846, %v53
    %v848 = vpop.permute.xlu0 %847
    %850 = vset.pattern.permute.xlu0 2
    %851 = vperm.xlu0 %850, %v54
    %v852 = vpop.permute.xlu0 %851
    %854 = vset.pattern.permute.xlu0 2
    %855 = vperm.xlu0 %854, %v55
    %v856 = vpop.permute.xlu0 %855
    %858 = vset.pattern.permute.xlu0 2
    %859 = vperm.xlu0 %858, %v56
    %v860 = vpop.permute.xlu0 %859
    %862 = vset.pattern.permute.xlu0 2
    %863 = vperm.xlu0 %862, %v57
    %v864 = vpop.permute.xlu0 %863
    %866 = vset.pattern.permute.xlu0 2
    %867 = vperm.xlu0 %866, %v58
    %v868 = vpop.permute.xlu0 %867
    %870 = vset.pattern.permute.xlu0 2
    %871 = vperm.xlu0 %870, %v59
    %v872 = vpop.permute.xlu0 %871
    %874 = vset.pattern.permute.xlu0 2
    %875 = vperm.xlu0 %874, %v60
    %v876 = vpop.permute.xlu0 %875
    %878 = vset.pattern.permute.xlu0 2
    %879 = vperm.xlu0 %878, %v61
    %v880 = vpop.permute.xlu0 %879
    %882 = vset.pattern.permute.xlu0 2
    %883 = vperm.xlu0 %882, %v62
    %v884 = vpop.permute.xlu0 %883
    %886 = vset.pattern.permute.xlu0 2
    %887 = vperm.xlu0 %886, %v63
    %v888 = vpop.permute.xlu0 %887
    %890 = vset.pattern.permute.xlu0 2
    %891 = vperm.xlu0 %890, %v64
    %v892 = vpop.permute.xlu0 %891
    %894 = vset.pattern.permute.xlu0 2
    %895 = vperm.xlu0 %894, %v65
    %v896 = vpop.permute.xlu0 %895
    %898 = vset.pattern.permute.xlu0 2
    %899 = vperm.xlu0 %898, %v66
    %v900 = vpop.permute.xlu0 %899
    %902 = vset.pattern.permute.xlu0 2
    %903 = vperm.xlu0 %902, %v67
    %v904 = vpop.permute.xlu0 %903
    %906 = vset.pattern.permute.xlu0 2
    %907 = vperm.xlu0 %906, %v68
    %v908 = vpop.permute.xlu0 %907
    %910 = vset.pattern.permute.xlu0 2
    %911 = vperm.xlu0 %910, %v69
    %v912 = vpop.permute.xlu0 %911
    %914 = vset.pattern.permute.xlu0 2
    %915 = vperm.xlu0 %914, %v70
    %v916 = vpop.permute.xlu0 %915
    %918 = vset.pattern.permute.xlu0 2
    %919 = vperm.xlu0 %918, %v71
    %v920 = vpop.permute.xlu0 %919
    %v922 = vperm.slane %v72, 2
    %v923 = vmul.f32 %v732, %v922
    %v924 = vmul.f32 %v736, %v922
    %v925 = vmul.f32 %v740, %v922
    %v926 = vmul.f32 %v744, %v922
    %v927 = vmul.f32 %v748, %v922
    %v928 = vmul.f32 %v752, %v922
    %v929 = vmul.f32 %v756, %v922
    %v930 = vmul.f32 %v760, %v922
    %v931 = vmul.f32 %v764, %v922
    %v932 = vmul.f32 %v768, %v922
    %v933 = vmul.f32 %v772, %v922
    %v934 = vmul.f32 %v776, %v922
    %v935 = vmul.f32 %v780, %v922
    %v936 = vmul.f32 %v784, %v922
    %v937 = vmul.f32 %v788, %v922
    %v938 = vmul.f32 %v792, %v922
    %v939 = vmul.f32 %v796, %v922
    %v940 = vmul.f32 %v800, %v922
    %v941 = vmul.f32 %v804, %v922
    %v942 = vmul.f32 %v808, %v922
    %v943 = vmul.f32 %v812, %v922
    %v944 = vmul.f32 %v816, %v922
    %v945 = vmul.f32 %v820, %v922
    %v946 = vmul.f32 %v824, %v922
    %v947 = vmul.f32 %v828, %v922
    %v948 = vmul.f32 %v832, %v922
    %v949 = vmul.f32 %v836, %v922
    %v950 = vmul.f32 %v840, %v922
    %v951 = vmul.f32 %v844, %v922
    %v952 = vmul.f32 %v848, %v922
    %v953 = vmul.f32 %v852, %v922
    %v954 = vmul.f32 %v856, %v922
    %v955 = vmul.f32 %v860, %v922
    %v956 = vmul.f32 %v864, %v922
    %v957 = vmul.f32 %v868, %v922
    %v958 = vmul.f32 %v872, %v922
    %v959 = vmul.f32 %v876, %v922
    %v960 = vmul.f32 %v880, %v922
    %v961 = vmul.f32 %v884, %v922
    %v962 = vmul.f32 %v888, %v922
    %v963 = vmul.f32 %v892, %v922
    %v964 = vmul.f32 %v896, %v922
    %v965 = vmul.f32 %v900, %v922
    %v966 = vmul.f32 %v904, %v922
    %v967 = vmul.f32 %v908, %v922
    %v968 = vmul.f32 %v912, %v922
    %v969 = vmul.f32 %v916, %v922
    %v970 = vmul.f32 %v920, %v922
    %v971 = vadd.f32 %v682, %v923
    %v972 = vadd.f32 %v683, %v924
    %v973 = vadd.f32 %v684, %v925
    %v974 = vadd.f32 %v685, %v926
    %v975 = vadd.f32 %v686, %v927
    %v976 = vadd.f32 %v687, %v928
    %v977 = vadd.f32 %v688, %v929
    %v978 = vadd.f32 %v689, %v930
    %v979 = vadd.f32 %v690, %v931
    %v980 = vadd.f32 %v691, %v932
    %v981 = vadd.f32 %v692, %v933
    %v982 = vadd.f32 %v693, %v934
    %v983 = vadd.f32 %v694, %v935
    %v984 = vadd.f32 %v695, %v936
    %v985 = vadd.f32 %v696, %v937
    %v986 = vadd.f32 %v697, %v938
    %v987 = vadd.f32 %v698, %v939
    %v988 = vadd.f32 %v699, %v940
    %v989 = vadd.f32 %v700, %v941
    %v990 = vadd.f32 %v701, %v942
    %v991 = vadd.f32 %v702, %v943
    %v992 = vadd.f32 %v703, %v944
    %v993 = vadd.f32 %v704, %v945
    %v994 = vadd.f32 %v705, %v946
    %v995 = vadd.f32 %v706, %v947
    %v996 = vadd.f32 %v707, %v948
    %v997 = vadd.f32 %v708, %v949
    %v998 = vadd.f32 %v709, %v950
    %v999 = vadd.f32 %v710, %v951
    %v1000 = vadd.f32 %v711, %v952
    %v1001 = vadd.f32 %v712, %v953
    %v1002 = vadd.f32 %v713, %v954
    %v1003 = vadd.f32 %v714, %v955
    %v1004 = vadd.f32 %v715, %v956
    %v1005 = vadd.f32 %v716, %v957
    %v1006 = vadd.f32 %v717, %v958
    %v1007 = vadd.f32 %v718, %v959
    %v1008 = vadd.f32 %v719, %v960
    %v1009 = vadd.f32 %v720, %v961
    %v1010 = vadd.f32 %v721, %v962
    %v1011 = vadd.f32 %v722, %v963
    %v1012 = vadd.f32 %v723, %v964
    %v1013 = vadd.f32 %v724, %v965
    %v1014 = vadd.f32 %v725, %v966
    %v1015 = vadd.f32 %v726, %v967
    %v1016 = vadd.f32 %v727, %v968
    %v1017 = vadd.f32 %v728, %v969
    %v1018 = vadd.f32 %v729, %v970
    %1019 = vset.pattern.permute.xlu0 3
    %1020 = vperm.xlu0 %1019, %v24
    %v1021 = vpop.permute.xlu0 %1020
    %1023 = vset.pattern.permute.xlu0 3
    %1024 = vperm.xlu0 %1023, %v25
    %v1025 = vpop.permute.xlu0 %1024
    %1027 = vset.pattern.permute.xlu0 3
    %1028 = vperm.xlu0 %1027, %v26
    %v1029 = vpop.permute.xlu0 %1028
    %1031 = vset.pattern.permute.xlu0 3
    %1032 = vperm.xlu0 %1031, %v27
    %v1033 = vpop.permute.xlu0 %1032
    %1035 = vset.pattern.permute.xlu0 3
    %1036 = vperm.xlu0 %1035, %v28
    %v1037 = vpop.permute.xlu0 %1036
    %1039 = vset.pattern.permute.xlu0 3
    %1040 = vperm.xlu0 %1039, %v29
    %v1041 = vpop.permute.xlu0 %1040
    %1043 = vset.pattern.permute.xlu0 3
    %1044 = vperm.xlu0 %1043, %v30
    %v1045 = vpop.permute.xlu0 %1044
    %1047 = vset.pattern.permute.xlu0 3
    %1048 = vperm.xlu0 %1047, %v31
    %v1049 = vpop.permute.xlu0 %1048
    %1051 = vset.pattern.permute.xlu0 3
    %1052 = vperm.xlu0 %1051, %v32
    %v1053 = vpop.permute.xlu0 %1052
    %1055 = vset.pattern.permute.xlu0 3
    %1056 = vperm.xlu0 %1055, %v33
    %v1057 = vpop.permute.xlu0 %1056
    %1059 = vset.pattern.permute.xlu0 3
    %1060 = vperm.xlu0 %1059, %v34
    %v1061 = vpop.permute.xlu0 %1060
    %1063 = vset.pattern.permute.xlu0 3
    %1064 = vperm.xlu0 %1063, %v35
    %v1065 = vpop.permute.xlu0 %1064
    %1067 = vset.pattern.permute.xlu0 3
    %1068 = vperm.xlu0 %1067, %v36
    %v1069 = vpop.permute.xlu0 %1068
    %1071 = vset.pattern.permute.xlu0 3
    %1072 = vperm.xlu0 %1071, %v37
    %v1073 = vpop.permute.xlu0 %1072
    %1075 = vset.pattern.permute.xlu0 3
    %1076 = vperm.xlu0 %1075, %v38
    %v1077 = vpop.permute.xlu0 %1076
    %1079 = vset.pattern.permute.xlu0 3
    %1080 = vperm.xlu0 %1079, %v39
    %v1081 = vpop.permute.xlu0 %1080
    %1083 = vset.pattern.permute.xlu0 3
    %1084 = vperm.xlu0 %1083, %v40
    %v1085 = vpop.permute.xlu0 %1084
    %1087 = vset.pattern.permute.xlu0 3
    %1088 = vperm.xlu0 %1087, %v41
    %v1089 = vpop.permute.xlu0 %1088
    %1091 = vset.pattern.permute.xlu0 3
    %1092 = vperm.xlu0 %1091, %v42
    %v1093 = vpop.permute.xlu0 %1092
    %1095 = vset.pattern.permute.xlu0 3
    %1096 = vperm.xlu0 %1095, %v43
    %v1097 = vpop.permute.xlu0 %1096
    %1099 = vset.pattern.permute.xlu0 3
    %1100 = vperm.xlu0 %1099, %v44
    %v1101 = vpop.permute.xlu0 %1100
    %1103 = vset.pattern.permute.xlu0 3
    %1104 = vperm.xlu0 %1103, %v45
    %v1105 = vpop.permute.xlu0 %1104
    %1107 = vset.pattern.permute.xlu0 3
    %1108 = vperm.xlu0 %1107, %v46
    %v1109 = vpop.permute.xlu0 %1108
    %1111 = vset.pattern.permute.xlu0 3
    %1112 = vperm.xlu0 %1111, %v47
    %v1113 = vpop.permute.xlu0 %1112
    %1115 = vset.pattern.permute.xlu0 3
    %1116 = vperm.xlu0 %1115, %v48
    %v1117 = vpop.permute.xlu0 %1116
    %1119 = vset.pattern.permute.xlu0 3
    %1120 = vperm.xlu0 %1119, %v49
    %v1121 = vpop.permute.xlu0 %1120
    %1123 = vset.pattern.permute.xlu0 3
    %1124 = vperm.xlu0 %1123, %v50
    %v1125 = vpop.permute.xlu0 %1124
    %1127 = vset.pattern.permute.xlu0 3
    %1128 = vperm.xlu0 %1127, %v51
    %v1129 = vpop.permute.xlu0 %1128
    %1131 = vset.pattern.permute.xlu0 3
    %1132 = vperm.xlu0 %1131, %v52
    %v1133 = vpop.permute.xlu0 %1132
    %1135 = vset.pattern.permute.xlu0 3
    %1136 = vperm.xlu0 %1135, %v53
    %v1137 = vpop.permute.xlu0 %1136
    %1139 = vset.pattern.permute.xlu0 3
    %1140 = vperm.xlu0 %1139, %v54
    %v1141 = vpop.permute.xlu0 %1140
    %1143 = vset.pattern.permute.xlu0 3
    %1144 = vperm.xlu0 %1143, %v55
    %v1145 = vpop.permute.xlu0 %1144
    %1147 = vset.pattern.permute.xlu0 3
    %1148 = vperm.xlu0 %1147, %v56
    %v1149 = vpop.permute.xlu0 %1148
    %1151 = vset.pattern.permute.xlu0 3
    %1152 = vperm.xlu0 %1151, %v57
    %v1153 = vpop.permute.xlu0 %1152
    %1155 = vset.pattern.permute.xlu0 3
    %1156 = vperm.xlu0 %1155, %v58
    %v1157 = vpop.permute.xlu0 %1156
    %1159 = vset.pattern.permute.xlu0 3
    %1160 = vperm.xlu0 %1159, %v59
    %v1161 = vpop.permute.xlu0 %1160
    %1163 = vset.pattern.permute.xlu0 3
    %1164 = vperm.xlu0 %1163, %v60
    %v1165 = vpop.permute.xlu0 %1164
    %1167 = vset.pattern.permute.xlu0 3
    %1168 = vperm.xlu0 %1167, %v61
    %v1169 = vpop.permute.xlu0 %1168
    %1171 = vset.pattern.permute.xlu0 3
    %1172 = vperm.xlu0 %1171, %v62
    %v1173 = vpop.permute.xlu0 %1172
    %1175 = vset.pattern.permute.xlu0 3
    %1176 = vperm.xlu0 %1175, %v63
    %v1177 = vpop.permute.xlu0 %1176
    %1179 = vset.pattern.permute.xlu0 3
    %1180 = vperm.xlu0 %1179, %v64
    %v1181 = vpop.permute.xlu0 %1180
    %1183 = vset.pattern.permute.xlu0 3
    %1184 = vperm.xlu0 %1183, %v65
    %v1185 = vpop.permute.xlu0 %1184
    %1187 = vset.pattern.permute.xlu0 3
    %1188 = vperm.xlu0 %1187, %v66
    %v1189 = vpop.permute.xlu0 %1188
    %1191 = vset.pattern.permute.xlu0 3
    %1192 = vperm.xlu0 %1191, %v67
    %v1193 = vpop.permute.xlu0 %1192
    %1195 = vset.pattern.permute.xlu0 3
    %1196 = vperm.xlu0 %1195, %v68
    %v1197 = vpop.permute.xlu0 %1196
    %1199 = vset.pattern.permute.xlu0 3
    %1200 = vperm.xlu0 %1199, %v69
    %v1201 = vpop.permute.xlu0 %1200
    %1203 = vset.pattern.permute.xlu0 3
    %1204 = vperm.xlu0 %1203, %v70
    %v1205 = vpop.permute.xlu0 %1204
    %1207 = vset.pattern.permute.xlu0 3
    %1208 = vperm.xlu0 %1207, %v71
    %v1209 = vpop.permute.xlu0 %1208
    %v1211 = vperm.slane %v72, 3
    %v1212 = vmul.f32 %v1021, %v1211
    %v1213 = vmul.f32 %v1025, %v1211
    %v1214 = vmul.f32 %v1029, %v1211
    %v1215 = vmul.f32 %v1033, %v1211
    %v1216 = vmul.f32 %v1037, %v1211
    %v1217 = vmul.f32 %v1041, %v1211
    %v1218 = vmul.f32 %v1045, %v1211
    %v1219 = vmul.f32 %v1049, %v1211
    %v1220 = vmul.f32 %v1053, %v1211
    %v1221 = vmul.f32 %v1057, %v1211
    %v1222 = vmul.f32 %v1061, %v1211
    %v1223 = vmul.f32 %v1065, %v1211
    %v1224 = vmul.f32 %v1069, %v1211
    %v1225 = vmul.f32 %v1073, %v1211
    %v1226 = vmul.f32 %v1077, %v1211
    %v1227 = vmul.f32 %v1081, %v1211
    %v1228 = vmul.f32 %v1085, %v1211
    %v1229 = vmul.f32 %v1089, %v1211
    %v1230 = vmul.f32 %v1093, %v1211
    %v1231 = vmul.f32 %v1097, %v1211
    %v1232 = vmul.f32 %v1101, %v1211
    %v1233 = vmul.f32 %v1105, %v1211
    %v1234 = vmul.f32 %v1109, %v1211
    %v1235 = vmul.f32 %v1113, %v1211
    %v1236 = vmul.f32 %v1117, %v1211
    %v1237 = vmul.f32 %v1121, %v1211
    %v1238 = vmul.f32 %v1125, %v1211
    %v1239 = vmul.f32 %v1129, %v1211
    %v1240 = vmul.f32 %v1133, %v1211
    %v1241 = vmul.f32 %v1137, %v1211
    %v1242 = vmul.f32 %v1141, %v1211
    %v1243 = vmul.f32 %v1145, %v1211
    %v1244 = vmul.f32 %v1149, %v1211
    %v1245 = vmul.f32 %v1153, %v1211
    %v1246 = vmul.f32 %v1157, %v1211
    %v1247 = vmul.f32 %v1161, %v1211
    %v1248 = vmul.f32 %v1165, %v1211
    %v1249 = vmul.f32 %v1169, %v1211
    %v1250 = vmul.f32 %v1173, %v1211
    %v1251 = vmul.f32 %v1177, %v1211
    %v1252 = vmul.f32 %v1181, %v1211
    %v1253 = vmul.f32 %v1185, %v1211
    %v1254 = vmul.f32 %v1189, %v1211
    %v1255 = vmul.f32 %v1193, %v1211
    %v1256 = vmul.f32 %v1197, %v1211
    %v1257 = vmul.f32 %v1201, %v1211
    %v1258 = vmul.f32 %v1205, %v1211
    %v1259 = vmul.f32 %v1209, %v1211
    %v1260 = vadd.f32 %v971, %v1212
    %v1261 = vadd.f32 %v972, %v1213
    %v1262 = vadd.f32 %v973, %v1214
    %v1263 = vadd.f32 %v974, %v1215
    %v1264 = vadd.f32 %v975, %v1216
    %v1265 = vadd.f32 %v976, %v1217
    %v1266 = vadd.f32 %v977, %v1218
    %v1267 = vadd.f32 %v978, %v1219
    %v1268 = vadd.f32 %v979, %v1220
    %v1269 = vadd.f32 %v980, %v1221
    %v1270 = vadd.f32 %v981, %v1222
    %v1271 = vadd.f32 %v982, %v1223
    %v1272 = vadd.f32 %v983, %v1224
    %v1273 = vadd.f32 %v984, %v1225
    %v1274 = vadd.f32 %v985, %v1226
    %v1275 = vadd.f32 %v986, %v1227
    %v1276 = vadd.f32 %v987, %v1228
    %v1277 = vadd.f32 %v988, %v1229
    %v1278 = vadd.f32 %v989, %v1230
    %v1279 = vadd.f32 %v990, %v1231
    %v1280 = vadd.f32 %v991, %v1232
    %v1281 = vadd.f32 %v992, %v1233
    %v1282 = vadd.f32 %v993, %v1234
    %v1283 = vadd.f32 %v994, %v1235
    %v1284 = vadd.f32 %v995, %v1236
    %v1285 = vadd.f32 %v996, %v1237
    %v1286 = vadd.f32 %v997, %v1238
    %v1287 = vadd.f32 %v998, %v1239
    %v1288 = vadd.f32 %v999, %v1240
    %v1289 = vadd.f32 %v1000, %v1241
    %v1290 = vadd.f32 %v1001, %v1242
    %v1291 = vadd.f32 %v1002, %v1243
    %v1292 = vadd.f32 %v1003, %v1244
    %v1293 = vadd.f32 %v1004, %v1245
    %v1294 = vadd.f32 %v1005, %v1246
    %v1295 = vadd.f32 %v1006, %v1247
    %v1296 = vadd.f32 %v1007, %v1248
    %v1297 = vadd.f32 %v1008, %v1249
    %v1298 = vadd.f32 %v1009, %v1250
    %v1299 = vadd.f32 %v1010, %v1251
    %v1300 = vadd.f32 %v1011, %v1252
    %v1301 = vadd.f32 %v1012, %v1253
    %v1302 = vadd.f32 %v1013, %v1254
    %v1303 = vadd.f32 %v1014, %v1255
    %v1304 = vadd.f32 %v1015, %v1256
    %v1305 = vadd.f32 %v1016, %v1257
    %v1306 = vadd.f32 %v1017, %v1258
    %v1307 = vadd.f32 %v1018, %v1259
    %1308 = vset.pattern.permute.xlu0 4
    %1309 = vperm.xlu0 %1308, %v24
    %v1310 = vpop.permute.xlu0 %1309
    %1312 = vset.pattern.permute.xlu0 4
    %1313 = vperm.xlu0 %1312, %v25
    %v1314 = vpop.permute.xlu0 %1313
    %1316 = vset.pattern.permute.xlu0 4
    %1317 = vperm.xlu0 %1316, %v26
    %v1318 = vpop.permute.xlu0 %1317
    %1320 = vset.pattern.permute.xlu0 4
    %1321 = vperm.xlu0 %1320, %v27
    %v1322 = vpop.permute.xlu0 %1321
    %1324 = vset.pattern.permute.xlu0 4
    %1325 = vperm.xlu0 %1324, %v28
    %v1326 = vpop.permute.xlu0 %1325
    %1328 = vset.pattern.permute.xlu0 4
    %1329 = vperm.xlu0 %1328, %v29
    %v1330 = vpop.permute.xlu0 %1329
    %1332 = vset.pattern.permute.xlu0 4
    %1333 = vperm.xlu0 %1332, %v30
    %v1334 = vpop.permute.xlu0 %1333
    %1336 = vset.pattern.permute.xlu0 4
    %1337 = vperm.xlu0 %1336, %v31
    %v1338 = vpop.permute.xlu0 %1337
    %1340 = vset.pattern.permute.xlu0 4
    %1341 = vperm.xlu0 %1340, %v32
    %v1342 = vpop.permute.xlu0 %1341
    %1344 = vset.pattern.permute.xlu0 4
    %1345 = vperm.xlu0 %1344, %v33
    %v1346 = vpop.permute.xlu0 %1345
    %1348 = vset.pattern.permute.xlu0 4
    %1349 = vperm.xlu0 %1348, %v34
    %v1350 = vpop.permute.xlu0 %1349
    %1352 = vset.pattern.permute.xlu0 4
    %1353 = vperm.xlu0 %1352, %v35
    %v1354 = vpop.permute.xlu0 %1353
    %1356 = vset.pattern.permute.xlu0 4
    %1357 = vperm.xlu0 %1356, %v36
    %v1358 = vpop.permute.xlu0 %1357
    %1360 = vset.pattern.permute.xlu0 4
    %1361 = vperm.xlu0 %1360, %v37
    %v1362 = vpop.permute.xlu0 %1361
    %1364 = vset.pattern.permute.xlu0 4
    %1365 = vperm.xlu0 %1364, %v38
    %v1366 = vpop.permute.xlu0 %1365
    %1368 = vset.pattern.permute.xlu0 4
    %1369 = vperm.xlu0 %1368, %v39
    %v1370 = vpop.permute.xlu0 %1369
    %1372 = vset.pattern.permute.xlu0 4
    %1373 = vperm.xlu0 %1372, %v40
    %v1374 = vpop.permute.xlu0 %1373
    %1376 = vset.pattern.permute.xlu0 4
    %1377 = vperm.xlu0 %1376, %v41
    %v1378 = vpop.permute.xlu0 %1377
    %1380 = vset.pattern.permute.xlu0 4
    %1381 = vperm.xlu0 %1380, %v42
    %v1382 = vpop.permute.xlu0 %1381
    %1384 = vset.pattern.permute.xlu0 4
    %1385 = vperm.xlu0 %1384, %v43
    %v1386 = vpop.permute.xlu0 %1385
    %1388 = vset.pattern.permute.xlu0 4
    %1389 = vperm.xlu0 %1388, %v44
    %v1390 = vpop.permute.xlu0 %1389
    %1392 = vset.pattern.permute.xlu0 4
    %1393 = vperm.xlu0 %1392, %v45
    %v1394 = vpop.permute.xlu0 %1393
    %1396 = vset.pattern.permute.xlu0 4
    %1397 = vperm.xlu0 %1396, %v46
    %v1398 = vpop.permute.xlu0 %1397
    %1400 = vset.pattern.permute.xlu0 4
    %1401 = vperm.xlu0 %1400, %v47
    %v1402 = vpop.permute.xlu0 %1401
    %1404 = vset.pattern.permute.xlu0 4
    %1405 = vperm.xlu0 %1404, %v48
    %v1406 = vpop.permute.xlu0 %1405
    %1408 = vset.pattern.permute.xlu0 4
    %1409 = vperm.xlu0 %1408, %v49
    %v1410 = vpop.permute.xlu0 %1409
    %1412 = vset.pattern.permute.xlu0 4
    %1413 = vperm.xlu0 %1412, %v50
    %v1414 = vpop.permute.xlu0 %1413
    %1416 = vset.pattern.permute.xlu0 4
    %1417 = vperm.xlu0 %1416, %v51
    %v1418 = vpop.permute.xlu0 %1417
    %1420 = vset.pattern.permute.xlu0 4
    %1421 = vperm.xlu0 %1420, %v52
    %v1422 = vpop.permute.xlu0 %1421
    %1424 = vset.pattern.permute.xlu0 4
    %1425 = vperm.xlu0 %1424, %v53
    %v1426 = vpop.permute.xlu0 %1425
    %1428 = vset.pattern.permute.xlu0 4
    %1429 = vperm.xlu0 %1428, %v54
    %v1430 = vpop.permute.xlu0 %1429
    %1432 = vset.pattern.permute.xlu0 4
    %1433 = vperm.xlu0 %1432, %v55
    %v1434 = vpop.permute.xlu0 %1433
    %1436 = vset.pattern.permute.xlu0 4
    %1437 = vperm.xlu0 %1436, %v56
    %v1438 = vpop.permute.xlu0 %1437
    %1440 = vset.pattern.permute.xlu0 4
    %1441 = vperm.xlu0 %1440, %v57
    %v1442 = vpop.permute.xlu0 %1441
    %1444 = vset.pattern.permute.xlu0 4
    %1445 = vperm.xlu0 %1444, %v58
    %v1446 = vpop.permute.xlu0 %1445
    %1448 = vset.pattern.permute.xlu0 4
    %1449 = vperm.xlu0 %1448, %v59
    %v1450 = vpop.permute.xlu0 %1449
    %1452 = vset.pattern.permute.xlu0 4
    %1453 = vperm.xlu0 %1452, %v60
    %v1454 = vpop.permute.xlu0 %1453
    %1456 = vset.pattern.permute.xlu0 4
    %1457 = vperm.xlu0 %1456, %v61
    %v1458 = vpop.permute.xlu0 %1457
    %1460 = vset.pattern.permute.xlu0 4
    %1461 = vperm.xlu0 %1460, %v62
    %v1462 = vpop.permute.xlu0 %1461
    %1464 = vset.pattern.permute.xlu0 4
    %1465 = vperm.xlu0 %1464, %v63
    %v1466 = vpop.permute.xlu0 %1465
    %1468 = vset.pattern.permute.xlu0 4
    %1469 = vperm.xlu0 %1468, %v64
    %v1470 = vpop.permute.xlu0 %1469
    %1472 = vset.pattern.permute.xlu0 4
    %1473 = vperm.xlu0 %1472, %v65
    %v1474 = vpop.permute.xlu0 %1473
    %1476 = vset.pattern.permute.xlu0 4
    %1477 = vperm.xlu0 %1476, %v66
    %v1478 = vpop.permute.xlu0 %1477
    %1480 = vset.pattern.permute.xlu0 4
    %1481 = vperm.xlu0 %1480, %v67
    %v1482 = vpop.permute.xlu0 %1481
    %1484 = vset.pattern.permute.xlu0 4
    %1485 = vperm.xlu0 %1484, %v68
    %v1486 = vpop.permute.xlu0 %1485
    %1488 = vset.pattern.permute.xlu0 4
    %1489 = vperm.xlu0 %1488, %v69
    %v1490 = vpop.permute.xlu0 %1489
    %1492 = vset.pattern.permute.xlu0 4
    %1493 = vperm.xlu0 %1492, %v70
    %v1494 = vpop.permute.xlu0 %1493
    %1496 = vset.pattern.permute.xlu0 4
    %1497 = vperm.xlu0 %1496, %v71
    %v1498 = vpop.permute.xlu0 %1497
    %v1500 = vperm.slane %v72, 4
    %v1501 = vmul.f32 %v1310, %v1500
    %v1502 = vmul.f32 %v1314, %v1500
    %v1503 = vmul.f32 %v1318, %v1500
    %v1504 = vmul.f32 %v1322, %v1500
    %v1505 = vmul.f32 %v1326, %v1500
    %v1506 = vmul.f32 %v1330, %v1500
    %v1507 = vmul.f32 %v1334, %v1500
    %v1508 = vmul.f32 %v1338, %v1500
    %v1509 = vmul.f32 %v1342, %v1500
    %v1510 = vmul.f32 %v1346, %v1500
    %v1511 = vmul.f32 %v1350, %v1500
    %v1512 = vmul.f32 %v1354, %v1500
    %v1513 = vmul.f32 %v1358, %v1500
    %v1514 = vmul.f32 %v1362, %v1500
    %v1515 = vmul.f32 %v1366, %v1500
    %v1516 = vmul.f32 %v1370, %v1500
    %v1517 = vmul.f32 %v1374, %v1500
    %v1518 = vmul.f32 %v1378, %v1500
    %v1519 = vmul.f32 %v1382, %v1500
    %v1520 = vmul.f32 %v1386, %v1500
    %v1521 = vmul.f32 %v1390, %v1500
    %v1522 = vmul.f32 %v1394, %v1500
    %v1523 = vmul.f32 %v1398, %v1500
    %v1524 = vmul.f32 %v1402, %v1500
    %v1525 = vmul.f32 %v1406, %v1500
    %v1526 = vmul.f32 %v1410, %v1500
    %v1527 = vmul.f32 %v1414, %v1500
    %v1528 = vmul.f32 %v1418, %v1500
    %v1529 = vmul.f32 %v1422, %v1500
    %v1530 = vmul.f32 %v1426, %v1500
    %v1531 = vmul.f32 %v1430, %v1500
    %v1532 = vmul.f32 %v1434, %v1500
    %v1533 = vmul.f32 %v1438, %v1500
    %v1534 = vmul.f32 %v1442, %v1500
    %v1535 = vmul.f32 %v1446, %v1500
    %v1536 = vmul.f32 %v1450, %v1500
    %v1537 = vmul.f32 %v1454, %v1500
    %v1538 = vmul.f32 %v1458, %v1500
    %v1539 = vmul.f32 %v1462, %v1500
    %v1540 = vmul.f32 %v1466, %v1500
    %v1541 = vmul.f32 %v1470, %v1500
    %v1542 = vmul.f32 %v1474, %v1500
    %v1543 = vmul.f32 %v1478, %v1500
    %v1544 = vmul.f32 %v1482, %v1500
    %v1545 = vmul.f32 %v1486, %v1500
    %v1546 = vmul.f32 %v1490, %v1500
    %v1547 = vmul.f32 %v1494, %v1500
    %v1548 = vmul.f32 %v1498, %v1500
    %v1549 = vadd.f32 %v1260, %v1501
    %v1550 = vadd.f32 %v1261, %v1502
    %v1551 = vadd.f32 %v1262, %v1503
    %v1552 = vadd.f32 %v1263, %v1504
    %v1553 = vadd.f32 %v1264, %v1505
    %v1554 = vadd.f32 %v1265, %v1506
    %v1555 = vadd.f32 %v1266, %v1507
    %v1556 = vadd.f32 %v1267, %v1508
    %v1557 = vadd.f32 %v1268, %v1509
    %v1558 = vadd.f32 %v1269, %v1510
    %v1559 = vadd.f32 %v1270, %v1511
    %v1560 = vadd.f32 %v1271, %v1512
    %v1561 = vadd.f32 %v1272, %v1513
    %v1562 = vadd.f32 %v1273, %v1514
    %v1563 = vadd.f32 %v1274, %v1515
    %v1564 = vadd.f32 %v1275, %v1516
    %v1565 = vadd.f32 %v1276, %v1517
    %v1566 = vadd.f32 %v1277, %v1518
    %v1567 = vadd.f32 %v1278, %v1519
    %v1568 = vadd.f32 %v1279, %v1520
    %v1569 = vadd.f32 %v1280, %v1521
    %v1570 = vadd.f32 %v1281, %v1522
    %v1571 = vadd.f32 %v1282, %v1523
    %v1572 = vadd.f32 %v1283, %v1524
    %v1573 = vadd.f32 %v1284, %v1525
    %v1574 = vadd.f32 %v1285, %v1526
    %v1575 = vadd.f32 %v1286, %v1527
    %v1576 = vadd.f32 %v1287, %v1528
    %v1577 = vadd.f32 %v1288, %v1529
    %v1578 = vadd.f32 %v1289, %v1530
    %v1579 = vadd.f32 %v1290, %v1531
    %v1580 = vadd.f32 %v1291, %v1532
    %v1581 = vadd.f32 %v1292, %v1533
    %v1582 = vadd.f32 %v1293, %v1534
    %v1583 = vadd.f32 %v1294, %v1535
    %v1584 = vadd.f32 %v1295, %v1536
    %v1585 = vadd.f32 %v1296, %v1537
    %v1586 = vadd.f32 %v1297, %v1538
    %v1587 = vadd.f32 %v1298, %v1539
    %v1588 = vadd.f32 %v1299, %v1540
    %v1589 = vadd.f32 %v1300, %v1541
    %v1590 = vadd.f32 %v1301, %v1542
    %v1591 = vadd.f32 %v1302, %v1543
    %v1592 = vadd.f32 %v1303, %v1544
    %v1593 = vadd.f32 %v1304, %v1545
    %v1594 = vadd.f32 %v1305, %v1546
    %v1595 = vadd.f32 %v1306, %v1547
    %v1596 = vadd.f32 %v1307, %v1548
    %1597 = vset.pattern.permute.xlu0 5
    %1598 = vperm.xlu0 %1597, %v24
    %v1599 = vpop.permute.xlu0 %1598
    %1601 = vset.pattern.permute.xlu0 5
    %1602 = vperm.xlu0 %1601, %v25
    %v1603 = vpop.permute.xlu0 %1602
    %1605 = vset.pattern.permute.xlu0 5
    %1606 = vperm.xlu0 %1605, %v26
    %v1607 = vpop.permute.xlu0 %1606
    %1609 = vset.pattern.permute.xlu0 5
    %1610 = vperm.xlu0 %1609, %v27
    %v1611 = vpop.permute.xlu0 %1610
    %1613 = vset.pattern.permute.xlu0 5
    %1614 = vperm.xlu0 %1613, %v28
    %v1615 = vpop.permute.xlu0 %1614
    %1617 = vset.pattern.permute.xlu0 5
    %1618 = vperm.xlu0 %1617, %v29
    %v1619 = vpop.permute.xlu0 %1618
    %1621 = vset.pattern.permute.xlu0 5
    %1622 = vperm.xlu0 %1621, %v30
    %v1623 = vpop.permute.xlu0 %1622
    %1625 = vset.pattern.permute.xlu0 5
    %1626 = vperm.xlu0 %1625, %v31
    %v1627 = vpop.permute.xlu0 %1626
    %1629 = vset.pattern.permute.xlu0 5
    %1630 = vperm.xlu0 %1629, %v32
    %v1631 = vpop.permute.xlu0 %1630
    %1633 = vset.pattern.permute.xlu0 5
    %1634 = vperm.xlu0 %1633, %v33
    %v1635 = vpop.permute.xlu0 %1634
    %1637 = vset.pattern.permute.xlu0 5
    %1638 = vperm.xlu0 %1637, %v34
    %v1639 = vpop.permute.xlu0 %1638
    %1641 = vset.pattern.permute.xlu0 5
    %1642 = vperm.xlu0 %1641, %v35
    %v1643 = vpop.permute.xlu0 %1642
    %1645 = vset.pattern.permute.xlu0 5
    %1646 = vperm.xlu0 %1645, %v36
    %v1647 = vpop.permute.xlu0 %1646
    %1649 = vset.pattern.permute.xlu0 5
    %1650 = vperm.xlu0 %1649, %v37
    %v1651 = vpop.permute.xlu0 %1650
    %1653 = vset.pattern.permute.xlu0 5
    %1654 = vperm.xlu0 %1653, %v38
    %v1655 = vpop.permute.xlu0 %1654
    %1657 = vset.pattern.permute.xlu0 5
    %1658 = vperm.xlu0 %1657, %v39
    %v1659 = vpop.permute.xlu0 %1658
    %1661 = vset.pattern.permute.xlu0 5
    %1662 = vperm.xlu0 %1661, %v40
    %v1663 = vpop.permute.xlu0 %1662
    %1665 = vset.pattern.permute.xlu0 5
    %1666 = vperm.xlu0 %1665, %v41
    %v1667 = vpop.permute.xlu0 %1666
    %1669 = vset.pattern.permute.xlu0 5
    %1670 = vperm.xlu0 %1669, %v42
    %v1671 = vpop.permute.xlu0 %1670
    %1673 = vset.pattern.permute.xlu0 5
    %1674 = vperm.xlu0 %1673, %v43
    %v1675 = vpop.permute.xlu0 %1674
    %1677 = vset.pattern.permute.xlu0 5
    %1678 = vperm.xlu0 %1677, %v44
    %v1679 = vpop.permute.xlu0 %1678
    %1681 = vset.pattern.permute.xlu0 5
    %1682 = vperm.xlu0 %1681, %v45
    %v1683 = vpop.permute.xlu0 %1682
    %1685 = vset.pattern.permute.xlu0 5
    %1686 = vperm.xlu0 %1685, %v46
    %v1687 = vpop.permute.xlu0 %1686
    %1689 = vset.pattern.permute.xlu0 5
    %1690 = vperm.xlu0 %1689, %v47
    %v1691 = vpop.permute.xlu0 %1690
    %1693 = vset.pattern.permute.xlu0 5
    %1694 = vperm.xlu0 %1693, %v48
    %v1695 = vpop.permute.xlu0 %1694
    %1697 = vset.pattern.permute.xlu0 5
    %1698 = vperm.xlu0 %1697, %v49
    %v1699 = vpop.permute.xlu0 %1698
    %1701 = vset.pattern.permute.xlu0 5
    %1702 = vperm.xlu0 %1701, %v50
    %v1703 = vpop.permute.xlu0 %1702
    %1705 = vset.pattern.permute.xlu0 5
    %1706 = vperm.xlu0 %1705, %v51
    %v1707 = vpop.permute.xlu0 %1706
    %1709 = vset.pattern.permute.xlu0 5
    %1710 = vperm.xlu0 %1709, %v52
    %v1711 = vpop.permute.xlu0 %1710
    %1713 = vset.pattern.permute.xlu0 5
    %1714 = vperm.xlu0 %1713, %v53
    %v1715 = vpop.permute.xlu0 %1714
    %1717 = vset.pattern.permute.xlu0 5
    %1718 = vperm.xlu0 %1717, %v54
    %v1719 = vpop.permute.xlu0 %1718
    %1721 = vset.pattern.permute.xlu0 5
    %1722 = vperm.xlu0 %1721, %v55
    %v1723 = vpop.permute.xlu0 %1722
    %1725 = vset.pattern.permute.xlu0 5
    %1726 = vperm.xlu0 %1725, %v56
    %v1727 = vpop.permute.xlu0 %1726
    %1729 = vset.pattern.permute.xlu0 5
    %1730 = vperm.xlu0 %1729, %v57
    %v1731 = vpop.permute.xlu0 %1730
    %1733 = vset.pattern.permute.xlu0 5
    %1734 = vperm.xlu0 %1733, %v58
    %v1735 = vpop.permute.xlu0 %1734
    %1737 = vset.pattern.permute.xlu0 5
    %1738 = vperm.xlu0 %1737, %v59
    %v1739 = vpop.permute.xlu0 %1738
    %1741 = vset.pattern.permute.xlu0 5
    %1742 = vperm.xlu0 %1741, %v60
    %v1743 = vpop.permute.xlu0 %1742
    %1745 = vset.pattern.permute.xlu0 5
    %1746 = vperm.xlu0 %1745, %v61
    %v1747 = vpop.permute.xlu0 %1746
    %1749 = vset.pattern.permute.xlu0 5
    %1750 = vperm.xlu0 %1749, %v62
    %v1751 = vpop.permute.xlu0 %1750
    %1753 = vset.pattern.permute.xlu0 5
    %1754 = vperm.xlu0 %1753, %v63
    %v1755 = vpop.permute.xlu0 %1754
    %1757 = vset.pattern.permute.xlu0 5
    %1758 = vperm.xlu0 %1757, %v64
    %v1759 = vpop.permute.xlu0 %1758
    %1761 = vset.pattern.permute.xlu0 5
    %1762 = vperm.xlu0 %1761, %v65
    %v1763 = vpop.permute.xlu0 %1762
    %1765 = vset.pattern.permute.xlu0 5
    %1766 = vperm.xlu0 %1765, %v66
    %v1767 = vpop.permute.xlu0 %1766
    %1769 = vset.pattern.permute.xlu0 5
    %1770 = vperm.xlu0 %1769, %v67
    %v1771 = vpop.permute.xlu0 %1770
    %1773 = vset.pattern.permute.xlu0 5
    %1774 = vperm.xlu0 %1773, %v68
    %v1775 = vpop.permute.xlu0 %1774
    %1777 = vset.pattern.permute.xlu0 5
    %1778 = vperm.xlu0 %1777, %v69
    %v1779 = vpop.permute.xlu0 %1778
    %1781 = vset.pattern.permute.xlu0 5
    %1782 = vperm.xlu0 %1781, %v70
    %v1783 = vpop.permute.xlu0 %1782
    %1785 = vset.pattern.permute.xlu0 5
    %1786 = vperm.xlu0 %1785, %v71
    %v1787 = vpop.permute.xlu0 %1786
    %v1789 = vperm.slane %v72, 5
    %v1790 = vmul.f32 %v1599, %v1789
    %v1791 = vmul.f32 %v1603, %v1789
    %v1792 = vmul.f32 %v1607, %v1789
    %v1793 = vmul.f32 %v1611, %v1789
    %v1794 = vmul.f32 %v1615, %v1789
    %v1795 = vmul.f32 %v1619, %v1789
    %v1796 = vmul.f32 %v1623, %v1789
    %v1797 = vmul.f32 %v1627, %v1789
    %v1798 = vmul.f32 %v1631, %v1789
    %v1799 = vmul.f32 %v1635, %v1789
    %v1800 = vmul.f32 %v1639, %v1789
    %v1801 = vmul.f32 %v1643, %v1789
    %v1802 = vmul.f32 %v1647, %v1789
    %v1803 = vmul.f32 %v1651, %v1789
    %v1804 = vmul.f32 %v1655, %v1789
    %v1805 = vmul.f32 %v1659, %v1789
    %v1806 = vmul.f32 %v1663, %v1789
    %v1807 = vmul.f32 %v1667, %v1789
    %v1808 = vmul.f32 %v1671, %v1789
    %v1809 = vmul.f32 %v1675, %v1789
    %v1810 = vmul.f32 %v1679, %v1789
    %v1811 = vmul.f32 %v1683, %v1789
    %v1812 = vmul.f32 %v1687, %v1789
    %v1813 = vmul.f32 %v1691, %v1789
    %v1814 = vmul.f32 %v1695, %v1789
    %v1815 = vmul.f32 %v1699, %v1789
    %v1816 = vmul.f32 %v1703, %v1789
    %v1817 = vmul.f32 %v1707, %v1789
    %v1818 = vmul.f32 %v1711, %v1789
    %v1819 = vmul.f32 %v1715, %v1789
    %v1820 = vmul.f32 %v1719, %v1789
    %v1821 = vmul.f32 %v1723, %v1789
    %v1822 = vmul.f32 %v1727, %v1789
    %v1823 = vmul.f32 %v1731, %v1789
    %v1824 = vmul.f32 %v1735, %v1789
    %v1825 = vmul.f32 %v1739, %v1789
    %v1826 = vmul.f32 %v1743, %v1789
    %v1827 = vmul.f32 %v1747, %v1789
    %v1828 = vmul.f32 %v1751, %v1789
    %v1829 = vmul.f32 %v1755, %v1789
    %v1830 = vmul.f32 %v1759, %v1789
    %v1831 = vmul.f32 %v1763, %v1789
    %v1832 = vmul.f32 %v1767, %v1789
    %v1833 = vmul.f32 %v1771, %v1789
    %v1834 = vmul.f32 %v1775, %v1789
    %v1835 = vmul.f32 %v1779, %v1789
    %v1836 = vmul.f32 %v1783, %v1789
    %v1837 = vmul.f32 %v1787, %v1789
    %v1838 = vadd.f32 %v1549, %v1790
    %v1839 = vadd.f32 %v1550, %v1791
    %v1840 = vadd.f32 %v1551, %v1792
    %v1841 = vadd.f32 %v1552, %v1793
    %v1842 = vadd.f32 %v1553, %v1794
    %v1843 = vadd.f32 %v1554, %v1795
    %v1844 = vadd.f32 %v1555, %v1796
    %v1845 = vadd.f32 %v1556, %v1797
    %v1846 = vadd.f32 %v1557, %v1798
    %v1847 = vadd.f32 %v1558, %v1799
    %v1848 = vadd.f32 %v1559, %v1800
    %v1849 = vadd.f32 %v1560, %v1801
    %v1850 = vadd.f32 %v1561, %v1802
    %v1851 = vadd.f32 %v1562, %v1803
    %v1852 = vadd.f32 %v1563, %v1804
    %v1853 = vadd.f32 %v1564, %v1805
    %v1854 = vadd.f32 %v1565, %v1806
    %v1855 = vadd.f32 %v1566, %v1807
    %v1856 = vadd.f32 %v1567, %v1808
    %v1857 = vadd.f32 %v1568, %v1809
    %v1858 = vadd.f32 %v1569, %v1810
    %v1859 = vadd.f32 %v1570, %v1811
    %v1860 = vadd.f32 %v1571, %v1812
    %v1861 = vadd.f32 %v1572, %v1813
    %v1862 = vadd.f32 %v1573, %v1814
    %v1863 = vadd.f32 %v1574, %v1815
    %v1864 = vadd.f32 %v1575, %v1816
    %v1865 = vadd.f32 %v1576, %v1817
    %v1866 = vadd.f32 %v1577, %v1818
    %v1867 = vadd.f32 %v1578, %v1819
    %v1868 = vadd.f32 %v1579, %v1820
    %v1869 = vadd.f32 %v1580, %v1821
    %v1870 = vadd.f32 %v1581, %v1822
    %v1871 = vadd.f32 %v1582, %v1823
    %v1872 = vadd.f32 %v1583, %v1824
    %v1873 = vadd.f32 %v1584, %v1825
    %v1874 = vadd.f32 %v1585, %v1826
    %v1875 = vadd.f32 %v1586, %v1827
    %v1876 = vadd.f32 %v1587, %v1828
    %v1877 = vadd.f32 %v1588, %v1829
    %v1878 = vadd.f32 %v1589, %v1830
    %v1879 = vadd.f32 %v1590, %v1831
    %v1880 = vadd.f32 %v1591, %v1832
    %v1881 = vadd.f32 %v1592, %v1833
    %v1882 = vadd.f32 %v1593, %v1834
    %v1883 = vadd.f32 %v1594, %v1835
    %v1884 = vadd.f32 %v1595, %v1836
    %v1885 = vadd.f32 %v1596, %v1837
    %1886 = vset.pattern.permute.xlu0 6
    %1887 = vperm.xlu0 %1886, %v24
    %v1888 = vpop.permute.xlu0 %1887
    %1890 = vset.pattern.permute.xlu0 6
    %1891 = vperm.xlu0 %1890, %v25
    %v1892 = vpop.permute.xlu0 %1891
    %1894 = vset.pattern.permute.xlu0 6
    %1895 = vperm.xlu0 %1894, %v26
    %v1896 = vpop.permute.xlu0 %1895
    %1898 = vset.pattern.permute.xlu0 6
    %1899 = vperm.xlu0 %1898, %v27
    %v1900 = vpop.permute.xlu0 %1899
    %1902 = vset.pattern.permute.xlu0 6
    %1903 = vperm.xlu0 %1902, %v28
    %v1904 = vpop.permute.xlu0 %1903
    %1906 = vset.pattern.permute.xlu0 6
    %1907 = vperm.xlu0 %1906, %v29
    %v1908 = vpop.permute.xlu0 %1907
    %1910 = vset.pattern.permute.xlu0 6
    %1911 = vperm.xlu0 %1910, %v30
    %v1912 = vpop.permute.xlu0 %1911
    %1914 = vset.pattern.permute.xlu0 6
    %1915 = vperm.xlu0 %1914, %v31
    %v1916 = vpop.permute.xlu0 %1915
    %1918 = vset.pattern.permute.xlu0 6
    %1919 = vperm.xlu0 %1918, %v32
    %v1920 = vpop.permute.xlu0 %1919
    %1922 = vset.pattern.permute.xlu0 6
    %1923 = vperm.xlu0 %1922, %v33
    %v1924 = vpop.permute.xlu0 %1923
    %1926 = vset.pattern.permute.xlu0 6
    %1927 = vperm.xlu0 %1926, %v34
    %v1928 = vpop.permute.xlu0 %1927
    %1930 = vset.pattern.permute.xlu0 6
    %1931 = vperm.xlu0 %1930, %v35
    %v1932 = vpop.permute.xlu0 %1931
    %1934 = vset.pattern.permute.xlu0 6
    %1935 = vperm.xlu0 %1934, %v36
    %v1936 = vpop.permute.xlu0 %1935
    %1938 = vset.pattern.permute.xlu0 6
    %1939 = vperm.xlu0 %1938, %v37
    %v1940 = vpop.permute.xlu0 %1939
    %1942 = vset.pattern.permute.xlu0 6
    %1943 = vperm.xlu0 %1942, %v38
    %v1944 = vpop.permute.xlu0 %1943
    %1946 = vset.pattern.permute.xlu0 6
    %1947 = vperm.xlu0 %1946, %v39
    %v1948 = vpop.permute.xlu0 %1947
    %1950 = vset.pattern.permute.xlu0 6
    %1951 = vperm.xlu0 %1950, %v40
    %v1952 = vpop.permute.xlu0 %1951
    %1954 = vset.pattern.permute.xlu0 6
    %1955 = vperm.xlu0 %1954, %v41
    %v1956 = vpop.permute.xlu0 %1955
    %1958 = vset.pattern.permute.xlu0 6
    %1959 = vperm.xlu0 %1958, %v42
    %v1960 = vpop.permute.xlu0 %1959
    %1962 = vset.pattern.permute.xlu0 6
    %1963 = vperm.xlu0 %1962, %v43
    %v1964 = vpop.permute.xlu0 %1963
    %1966 = vset.pattern.permute.xlu0 6
    %1967 = vperm.xlu0 %1966, %v44
    %v1968 = vpop.permute.xlu0 %1967
    %1970 = vset.pattern.permute.xlu0 6
    %1971 = vperm.xlu0 %1970, %v45
    %v1972 = vpop.permute.xlu0 %1971
    %1974 = vset.pattern.permute.xlu0 6
    %1975 = vperm.xlu0 %1974, %v46
    %v1976 = vpop.permute.xlu0 %1975
    %1978 = vset.pattern.permute.xlu0 6
    %1979 = vperm.xlu0 %1978, %v47
    %v1980 = vpop.permute.xlu0 %1979
    %1982 = vset.pattern.permute.xlu0 6
    %1983 = vperm.xlu0 %1982, %v48
    %v1984 = vpop.permute.xlu0 %1983
    %1986 = vset.pattern.permute.xlu0 6
    %1987 = vperm.xlu0 %1986, %v49
    %v1988 = vpop.permute.xlu0 %1987
    %1990 = vset.pattern.permute.xlu0 6
    %1991 = vperm.xlu0 %1990, %v50
    %v1992 = vpop.permute.xlu0 %1991
    %1994 = vset.pattern.permute.xlu0 6
    %1995 = vperm.xlu0 %1994, %v51
    %v1996 = vpop.permute.xlu0 %1995
    %1998 = vset.pattern.permute.xlu0 6
    %1999 = vperm.xlu0 %1998, %v52
    %v2000 = vpop.permute.xlu0 %1999
    %2002 = vset.pattern.permute.xlu0 6
    %2003 = vperm.xlu0 %2002, %v53
    %v2004 = vpop.permute.xlu0 %2003
    %2006 = vset.pattern.permute.xlu0 6
    %2007 = vperm.xlu0 %2006, %v54
    %v2008 = vpop.permute.xlu0 %2007
    %2010 = vset.pattern.permute.xlu0 6
    %2011 = vperm.xlu0 %2010, %v55
    %v2012 = vpop.permute.xlu0 %2011
    %2014 = vset.pattern.permute.xlu0 6
    %2015 = vperm.xlu0 %2014, %v56
    %v2016 = vpop.permute.xlu0 %2015
    %2018 = vset.pattern.permute.xlu0 6
    %2019 = vperm.xlu0 %2018, %v57
    %v2020 = vpop.permute.xlu0 %2019
    %2022 = vset.pattern.permute.xlu0 6
    %2023 = vperm.xlu0 %2022, %v58
    %v2024 = vpop.permute.xlu0 %2023
    %2026 = vset.pattern.permute.xlu0 6
    %2027 = vperm.xlu0 %2026, %v59
    %v2028 = vpop.permute.xlu0 %2027
    %2030 = vset.pattern.permute.xlu0 6
    %2031 = vperm.xlu0 %2030, %v60
    %v2032 = vpop.permute.xlu0 %2031
    %2034 = vset.pattern.permute.xlu0 6
    %2035 = vperm.xlu0 %2034, %v61
    %v2036 = vpop.permute.xlu0 %2035
    %2038 = vset.pattern.permute.xlu0 6
    %2039 = vperm.xlu0 %2038, %v62
    %v2040 = vpop.permute.xlu0 %2039
    %2042 = vset.pattern.permute.xlu0 6
    %2043 = vperm.xlu0 %2042, %v63
    %v2044 = vpop.permute.xlu0 %2043
    %2046 = vset.pattern.permute.xlu0 6
    %2047 = vperm.xlu0 %2046, %v64
    %v2048 = vpop.permute.xlu0 %2047
    %2050 = vset.pattern.permute.xlu0 6
    %2051 = vperm.xlu0 %2050, %v65
    %v2052 = vpop.permute.xlu0 %2051
    %2054 = vset.pattern.permute.xlu0 6
    %2055 = vperm.xlu0 %2054, %v66
    %v2056 = vpop.permute.xlu0 %2055
    %2058 = vset.pattern.permute.xlu0 6
    %2059 = vperm.xlu0 %2058, %v67
    %v2060 = vpop.permute.xlu0 %2059
    %2062 = vset.pattern.permute.xlu0 6
    %2063 = vperm.xlu0 %2062, %v68
    %v2064 = vpop.permute.xlu0 %2063
    %2066 = vset.pattern.permute.xlu0 6
    %2067 = vperm.xlu0 %2066, %v69
    %v2068 = vpop.permute.xlu0 %2067
    %2070 = vset.pattern.permute.xlu0 6
    %2071 = vperm.xlu0 %2070, %v70
    %v2072 = vpop.permute.xlu0 %2071
    %2074 = vset.pattern.permute.xlu0 6
    %2075 = vperm.xlu0 %2074, %v71
    %v2076 = vpop.permute.xlu0 %2075
    %v2078 = vperm.slane %v72, 6
    %v2079 = vmul.f32 %v1888, %v2078
    %v2080 = vmul.f32 %v1892, %v2078
    %v2081 = vmul.f32 %v1896, %v2078
    %v2082 = vmul.f32 %v1900, %v2078
    %v2083 = vmul.f32 %v1904, %v2078
    %v2084 = vmul.f32 %v1908, %v2078
    %v2085 = vmul.f32 %v1912, %v2078
    %v2086 = vmul.f32 %v1916, %v2078
    %v2087 = vmul.f32 %v1920, %v2078
    %v2088 = vmul.f32 %v1924, %v2078
    %v2089 = vmul.f32 %v1928, %v2078
    %v2090 = vmul.f32 %v1932, %v2078
    %v2091 = vmul.f32 %v1936, %v2078
    %v2092 = vmul.f32 %v1940, %v2078
    %v2093 = vmul.f32 %v1944, %v2078
    %v2094 = vmul.f32 %v1948, %v2078
    %v2095 = vmul.f32 %v1952, %v2078
    %v2096 = vmul.f32 %v1956, %v2078
    %v2097 = vmul.f32 %v1960, %v2078
    %v2098 = vmul.f32 %v1964, %v2078
    %v2099 = vmul.f32 %v1968, %v2078
    %v2100 = vmul.f32 %v1972, %v2078
    %v2101 = vmul.f32 %v1976, %v2078
    %v2102 = vmul.f32 %v1980, %v2078
    %v2103 = vmul.f32 %v1984, %v2078
    %v2104 = vmul.f32 %v1988, %v2078
    %v2105 = vmul.f32 %v1992, %v2078
    %v2106 = vmul.f32 %v1996, %v2078
    %v2107 = vmul.f32 %v2000, %v2078
    %v2108 = vmul.f32 %v2004, %v2078
    %v2109 = vmul.f32 %v2008, %v2078
    %v2110 = vmul.f32 %v2012, %v2078
    %v2111 = vmul.f32 %v2016, %v2078
    %v2112 = vmul.f32 %v2020, %v2078
    %v2113 = vmul.f32 %v2024, %v2078
    %v2114 = vmul.f32 %v2028, %v2078
    %v2115 = vmul.f32 %v2032, %v2078
    %v2116 = vmul.f32 %v2036, %v2078
    %v2117 = vmul.f32 %v2040, %v2078
    %v2118 = vmul.f32 %v2044, %v2078
    %v2119 = vmul.f32 %v2048, %v2078
    %v2120 = vmul.f32 %v2052, %v2078
    %v2121 = vmul.f32 %v2056, %v2078
    %v2122 = vmul.f32 %v2060, %v2078
    %v2123 = vmul.f32 %v2064, %v2078
    %v2124 = vmul.f32 %v2068, %v2078
    %v2125 = vmul.f32 %v2072, %v2078
    %v2126 = vmul.f32 %v2076, %v2078
    %v2127 = vadd.f32 %v1838, %v2079
    %v2128 = vadd.f32 %v1839, %v2080
    %v2129 = vadd.f32 %v1840, %v2081
    %v2130 = vadd.f32 %v1841, %v2082
    %v2131 = vadd.f32 %v1842, %v2083
    %v2132 = vadd.f32 %v1843, %v2084
    %v2133 = vadd.f32 %v1844, %v2085
    %v2134 = vadd.f32 %v1845, %v2086
    %v2135 = vadd.f32 %v1846, %v2087
    %v2136 = vadd.f32 %v1847, %v2088
    %v2137 = vadd.f32 %v1848, %v2089
    %v2138 = vadd.f32 %v1849, %v2090
    %v2139 = vadd.f32 %v1850, %v2091
    %v2140 = vadd.f32 %v1851, %v2092
    %v2141 = vadd.f32 %v1852, %v2093
    %v2142 = vadd.f32 %v1853, %v2094
    %v2143 = vadd.f32 %v1854, %v2095
    %v2144 = vadd.f32 %v1855, %v2096
    %v2145 = vadd.f32 %v1856, %v2097
    %v2146 = vadd.f32 %v1857, %v2098
    %v2147 = vadd.f32 %v1858, %v2099
    %v2148 = vadd.f32 %v1859, %v2100
    %v2149 = vadd.f32 %v1860, %v2101
    %v2150 = vadd.f32 %v1861, %v2102
    %v2151 = vadd.f32 %v1862, %v2103
    %v2152 = vadd.f32 %v1863, %v2104
    %v2153 = vadd.f32 %v1864, %v2105
    %v2154 = vadd.f32 %v1865, %v2106
    %v2155 = vadd.f32 %v1866, %v2107
    %v2156 = vadd.f32 %v1867, %v2108
    %v2157 = vadd.f32 %v1868, %v2109
    %v2158 = vadd.f32 %v1869, %v2110
    %v2159 = vadd.f32 %v1870, %v2111
    %v2160 = vadd.f32 %v1871, %v2112
    %v2161 = vadd.f32 %v1872, %v2113
    %v2162 = vadd.f32 %v1873, %v2114
    %v2163 = vadd.f32 %v1874, %v2115
    %v2164 = vadd.f32 %v1875, %v2116
    %v2165 = vadd.f32 %v1876, %v2117
    %v2166 = vadd.f32 %v1877, %v2118
    %v2167 = vadd.f32 %v1878, %v2119
    %v2168 = vadd.f32 %v1879, %v2120
    %v2169 = vadd.f32 %v1880, %v2121
    %v2170 = vadd.f32 %v1881, %v2122
    %v2171 = vadd.f32 %v1882, %v2123
    %v2172 = vadd.f32 %v1883, %v2124
    %v2173 = vadd.f32 %v1884, %v2125
    %v2174 = vadd.f32 %v1885, %v2126
    %2175 = vset.pattern.permute.xlu0 7
    %2176 = vperm.xlu0 %2175, %v24
    %v2177 = vpop.permute.xlu0 %2176
    %2179 = vset.pattern.permute.xlu0 7
    %2180 = vperm.xlu0 %2179, %v25
    %v2181 = vpop.permute.xlu0 %2180
    %2183 = vset.pattern.permute.xlu0 7
    %2184 = vperm.xlu0 %2183, %v26
    %v2185 = vpop.permute.xlu0 %2184
    %2187 = vset.pattern.permute.xlu0 7
    %2188 = vperm.xlu0 %2187, %v27
    %v2189 = vpop.permute.xlu0 %2188
    %2191 = vset.pattern.permute.xlu0 7
    %2192 = vperm.xlu0 %2191, %v28
    %v2193 = vpop.permute.xlu0 %2192
    %2195 = vset.pattern.permute.xlu0 7
    %2196 = vperm.xlu0 %2195, %v29
    %v2197 = vpop.permute.xlu0 %2196
    %2199 = vset.pattern.permute.xlu0 7
    %2200 = vperm.xlu0 %2199, %v30
    %v2201 = vpop.permute.xlu0 %2200
    %2203 = vset.pattern.permute.xlu0 7
    %2204 = vperm.xlu0 %2203, %v31
    %v2205 = vpop.permute.xlu0 %2204
    %2207 = vset.pattern.permute.xlu0 7
    %2208 = vperm.xlu0 %2207, %v32
    %v2209 = vpop.permute.xlu0 %2208
    %2211 = vset.pattern.permute.xlu0 7
    %2212 = vperm.xlu0 %2211, %v33
    %v2213 = vpop.permute.xlu0 %2212
    %2215 = vset.pattern.permute.xlu0 7
    %2216 = vperm.xlu0 %2215, %v34
    %v2217 = vpop.permute.xlu0 %2216
    %2219 = vset.pattern.permute.xlu0 7
    %2220 = vperm.xlu0 %2219, %v35
    %v2221 = vpop.permute.xlu0 %2220
    %2223 = vset.pattern.permute.xlu0 7
    %2224 = vperm.xlu0 %2223, %v36
    %v2225 = vpop.permute.xlu0 %2224
    %2227 = vset.pattern.permute.xlu0 7
    %2228 = vperm.xlu0 %2227, %v37
    %v2229 = vpop.permute.xlu0 %2228
    %2231 = vset.pattern.permute.xlu0 7
    %2232 = vperm.xlu0 %2231, %v38
    %v2233 = vpop.permute.xlu0 %2232
    %2235 = vset.pattern.permute.xlu0 7
    %2236 = vperm.xlu0 %2235, %v39
    %v2237 = vpop.permute.xlu0 %2236
    %2239 = vset.pattern.permute.xlu0 7
    %2240 = vperm.xlu0 %2239, %v40
    %v2241 = vpop.permute.xlu0 %2240
    %2243 = vset.pattern.permute.xlu0 7
    %2244 = vperm.xlu0 %2243, %v41
    %v2245 = vpop.permute.xlu0 %2244
    %2247 = vset.pattern.permute.xlu0 7
    %2248 = vperm.xlu0 %2247, %v42
    %v2249 = vpop.permute.xlu0 %2248
    %2251 = vset.pattern.permute.xlu0 7
    %2252 = vperm.xlu0 %2251, %v43
    %v2253 = vpop.permute.xlu0 %2252
    %2255 = vset.pattern.permute.xlu0 7
    %2256 = vperm.xlu0 %2255, %v44
    %v2257 = vpop.permute.xlu0 %2256
    %2259 = vset.pattern.permute.xlu0 7
    %2260 = vperm.xlu0 %2259, %v45
    %v2261 = vpop.permute.xlu0 %2260
    %2263 = vset.pattern.permute.xlu0 7
    %2264 = vperm.xlu0 %2263, %v46
    %v2265 = vpop.permute.xlu0 %2264
    %2267 = vset.pattern.permute.xlu0 7
    %2268 = vperm.xlu0 %2267, %v47
    %v2269 = vpop.permute.xlu0 %2268
    %2271 = vset.pattern.permute.xlu0 7
    %2272 = vperm.xlu0 %2271, %v48
    %v2273 = vpop.permute.xlu0 %2272
    %2275 = vset.pattern.permute.xlu0 7
    %2276 = vperm.xlu0 %2275, %v49
    %v2277 = vpop.permute.xlu0 %2276
    %2279 = vset.pattern.permute.xlu0 7
    %2280 = vperm.xlu0 %2279, %v50
    %v2281 = vpop.permute.xlu0 %2280
    %2283 = vset.pattern.permute.xlu0 7
    %2284 = vperm.xlu0 %2283, %v51
    %v2285 = vpop.permute.xlu0 %2284
    %2287 = vset.pattern.permute.xlu0 7
    %2288 = vperm.xlu0 %2287, %v52
    %v2289 = vpop.permute.xlu0 %2288
    %2291 = vset.pattern.permute.xlu0 7
    %2292 = vperm.xlu0 %2291, %v53
    %v2293 = vpop.permute.xlu0 %2292
    %2295 = vset.pattern.permute.xlu0 7
    %2296 = vperm.xlu0 %2295, %v54
    %v2297 = vpop.permute.xlu0 %2296
    %2299 = vset.pattern.permute.xlu0 7
    %2300 = vperm.xlu0 %2299, %v55
    %v2301 = vpop.permute.xlu0 %2300
    %2303 = vset.pattern.permute.xlu0 7
    %2304 = vperm.xlu0 %2303, %v56
    %v2305 = vpop.permute.xlu0 %2304
    %2307 = vset.pattern.permute.xlu0 7
    %2308 = vperm.xlu0 %2307, %v57
    %v2309 = vpop.permute.xlu0 %2308
    %2311 = vset.pattern.permute.xlu0 7
    %2312 = vperm.xlu0 %2311, %v58
    %v2313 = vpop.permute.xlu0 %2312
    %2315 = vset.pattern.permute.xlu0 7
    %2316 = vperm.xlu0 %2315, %v59
    %v2317 = vpop.permute.xlu0 %2316
    %2319 = vset.pattern.permute.xlu0 7
    %2320 = vperm.xlu0 %2319, %v60
    %v2321 = vpop.permute.xlu0 %2320
    %2323 = vset.pattern.permute.xlu0 7
    %2324 = vperm.xlu0 %2323, %v61
    %v2325 = vpop.permute.xlu0 %2324
    %2327 = vset.pattern.permute.xlu0 7
    %2328 = vperm.xlu0 %2327, %v62
    %v2329 = vpop.permute.xlu0 %2328
    %2331 = vset.pattern.permute.xlu0 7
    %2332 = vperm.xlu0 %2331, %v63
    %v2333 = vpop.permute.xlu0 %2332
    %2335 = vset.pattern.permute.xlu0 7
    %2336 = vperm.xlu0 %2335, %v64
    %v2337 = vpop.permute.xlu0 %2336
    %2339 = vset.pattern.permute.xlu0 7
    %2340 = vperm.xlu0 %2339, %v65
    %v2341 = vpop.permute.xlu0 %2340
    %2343 = vset.pattern.permute.xlu0 7
    %2344 = vperm.xlu0 %2343, %v66
    %v2345 = vpop.permute.xlu0 %2344
    %2347 = vset.pattern.permute.xlu0 7
    %2348 = vperm.xlu0 %2347, %v67
    %v2349 = vpop.permute.xlu0 %2348
    %2351 = vset.pattern.permute.xlu0 7
    %2352 = vperm.xlu0 %2351, %v68
    %v2353 = vpop.permute.xlu0 %2352
    %2355 = vset.pattern.permute.xlu0 7
    %2356 = vperm.xlu0 %2355, %v69
    %v2357 = vpop.permute.xlu0 %2356
    %2359 = vset.pattern.permute.xlu0 7
    %2360 = vperm.xlu0 %2359, %v70
    %v2361 = vpop.permute.xlu0 %2360
    %2363 = vset.pattern.permute.xlu0 7
    %2364 = vperm.xlu0 %2363, %v71
    %v2365 = vpop.permute.xlu0 %2364
    %v2367 = vperm.slane %v72, 7
    %v2368 = vmul.f32 %v2177, %v2367
    %v2369 = vmul.f32 %v2181, %v2367
    %v2370 = vmul.f32 %v2185, %v2367
    %v2371 = vmul.f32 %v2189, %v2367
    %v2372 = vmul.f32 %v2193, %v2367
    %v2373 = vmul.f32 %v2197, %v2367
    %v2374 = vmul.f32 %v2201, %v2367
    %v2375 = vmul.f32 %v2205, %v2367
    %v2376 = vmul.f32 %v2209, %v2367
    %v2377 = vmul.f32 %v2213, %v2367
    %v2378 = vmul.f32 %v2217, %v2367
    %v2379 = vmul.f32 %v2221, %v2367
    %v2380 = vmul.f32 %v2225, %v2367
    %v2381 = vmul.f32 %v2229, %v2367
    %v2382 = vmul.f32 %v2233, %v2367
    %v2383 = vmul.f32 %v2237, %v2367
    %v2384 = vmul.f32 %v2241, %v2367
    %v2385 = vmul.f32 %v2245, %v2367
    %v2386 = vmul.f32 %v2249, %v2367
    %v2387 = vmul.f32 %v2253, %v2367
    %v2388 = vmul.f32 %v2257, %v2367
    %v2389 = vmul.f32 %v2261, %v2367
    %v2390 = vmul.f32 %v2265, %v2367
    %v2391 = vmul.f32 %v2269, %v2367
    %v2392 = vmul.f32 %v2273, %v2367
    %v2393 = vmul.f32 %v2277, %v2367
    %v2394 = vmul.f32 %v2281, %v2367
    %v2395 = vmul.f32 %v2285, %v2367
    %v2396 = vmul.f32 %v2289, %v2367
    %v2397 = vmul.f32 %v2293, %v2367
    %v2398 = vmul.f32 %v2297, %v2367
    %v2399 = vmul.f32 %v2301, %v2367
    %v2400 = vmul.f32 %v2305, %v2367
    %v2401 = vmul.f32 %v2309, %v2367
    %v2402 = vmul.f32 %v2313, %v2367
    %v2403 = vmul.f32 %v2317, %v2367
    %v2404 = vmul.f32 %v2321, %v2367
    %v2405 = vmul.f32 %v2325, %v2367
    %v2406 = vmul.f32 %v2329, %v2367
    %v2407 = vmul.f32 %v2333, %v2367
    %v2408 = vmul.f32 %v2337, %v2367
    %v2409 = vmul.f32 %v2341, %v2367
    %v2410 = vmul.f32 %v2345, %v2367
    %v2411 = vmul.f32 %v2349, %v2367
    %v2412 = vmul.f32 %v2353, %v2367
    %v2413 = vmul.f32 %v2357, %v2367
    %v2414 = vmul.f32 %v2361, %v2367
    %v2415 = vmul.f32 %v2365, %v2367
    %v2416 = vadd.f32 %v2127, %v2368
    %v2417 = vadd.f32 %v2128, %v2369
    %v2418 = vadd.f32 %v2129, %v2370
    %v2419 = vadd.f32 %v2130, %v2371
    %v2420 = vadd.f32 %v2131, %v2372
    %v2421 = vadd.f32 %v2132, %v2373
    %v2422 = vadd.f32 %v2133, %v2374
    %v2423 = vadd.f32 %v2134, %v2375
    %v2424 = vadd.f32 %v2135, %v2376
    %v2425 = vadd.f32 %v2136, %v2377
    %v2426 = vadd.f32 %v2137, %v2378
    %v2427 = vadd.f32 %v2138, %v2379
    %v2428 = vadd.f32 %v2139, %v2380
    %v2429 = vadd.f32 %v2140, %v2381
    %v2430 = vadd.f32 %v2141, %v2382
    %v2431 = vadd.f32 %v2142, %v2383
    %v2432 = vadd.f32 %v2143, %v2384
    %v2433 = vadd.f32 %v2144, %v2385
    %v2434 = vadd.f32 %v2145, %v2386
    %v2435 = vadd.f32 %v2146, %v2387
    %v2436 = vadd.f32 %v2147, %v2388
    %v2437 = vadd.f32 %v2148, %v2389
    %v2438 = vadd.f32 %v2149, %v2390
    %v2439 = vadd.f32 %v2150, %v2391
    %v2440 = vadd.f32 %v2151, %v2392
    %v2441 = vadd.f32 %v2152, %v2393
    %v2442 = vadd.f32 %v2153, %v2394
    %v2443 = vadd.f32 %v2154, %v2395
    %v2444 = vadd.f32 %v2155, %v2396
    %v2445 = vadd.f32 %v2156, %v2397
    %v2446 = vadd.f32 %v2157, %v2398
    %v2447 = vadd.f32 %v2158, %v2399
    %v2448 = vadd.f32 %v2159, %v2400
    %v2449 = vadd.f32 %v2160, %v2401
    %v2450 = vadd.f32 %v2161, %v2402
    %v2451 = vadd.f32 %v2162, %v2403
    %v2452 = vadd.f32 %v2163, %v2404
    %v2453 = vadd.f32 %v2164, %v2405
    %v2454 = vadd.f32 %v2165, %v2406
    %v2455 = vadd.f32 %v2166, %v2407
    %v2456 = vadd.f32 %v2167, %v2408
    %v2457 = vadd.f32 %v2168, %v2409
    %v2458 = vadd.f32 %v2169, %v2410
    %v2459 = vadd.f32 %v2170, %v2411
    %v2460 = vadd.f32 %v2171, %v2412
    %v2461 = vadd.f32 %v2172, %v2413
    %v2462 = vadd.f32 %v2173, %v2414
    %v2463 = vadd.f32 %v2174, %v2415
    %v2464 = vperm.slane %v73, 0
    %v2465 = vmul.f32 %v107, %v2464
    %v2466 = vmul.f32 %v112, %v2464
    %v2467 = vmul.f32 %v117, %v2464
    %v2468 = vmul.f32 %v122, %v2464
    %v2469 = vmul.f32 %v127, %v2464
    %v2470 = vmul.f32 %v132, %v2464
    %v2471 = vmul.f32 %v137, %v2464
    %v2472 = vmul.f32 %v142, %v2464
    %v2473 = vmul.f32 %v147, %v2464
    %v2474 = vmul.f32 %v152, %v2464
    %v2475 = vmul.f32 %v157, %v2464
    %v2476 = vmul.f32 %v162, %v2464
    %v2477 = vmul.f32 %v167, %v2464
    %v2478 = vmul.f32 %v172, %v2464
    %v2479 = vmul.f32 %v177, %v2464
    %v2480 = vmul.f32 %v182, %v2464
    %v2481 = vmul.f32 %v187, %v2464
    %v2482 = vmul.f32 %v192, %v2464
    %v2483 = vmul.f32 %v197, %v2464
    %v2484 = vmul.f32 %v202, %v2464
    %v2485 = vmul.f32 %v207, %v2464
    %v2486 = vmul.f32 %v212, %v2464
    %v2487 = vmul.f32 %v217, %v2464
    %v2488 = vmul.f32 %v222, %v2464
    %v2489 = vmul.f32 %v227, %v2464
    %v2490 = vmul.f32 %v232, %v2464
    %v2491 = vmul.f32 %v237, %v2464
    %v2492 = vmul.f32 %v242, %v2464
    %v2493 = vmul.f32 %v247, %v2464
    %v2494 = vmul.f32 %v252, %v2464
    %v2495 = vmul.f32 %v257, %v2464
    %v2496 = vmul.f32 %v262, %v2464
    %v2497 = vmul.f32 %v267, %v2464
    %v2498 = vmul.f32 %v272, %v2464
    %v2499 = vmul.f32 %v277, %v2464
    %v2500 = vmul.f32 %v282, %v2464
    %v2501 = vmul.f32 %v287, %v2464
    %v2502 = vmul.f32 %v292, %v2464
    %v2503 = vmul.f32 %v297, %v2464
    %v2504 = vmul.f32 %v302, %v2464
    %v2505 = vmul.f32 %v307, %v2464
    %v2506 = vmul.f32 %v312, %v2464
    %v2507 = vmul.f32 %v317, %v2464
    %v2508 = vmul.f32 %v322, %v2464
    %v2509 = vmul.f32 %v327, %v2464
    %v2510 = vmul.f32 %v332, %v2464
    %v2511 = vmul.f32 %v337, %v2464
    %v2512 = vmul.f32 %v342, %v2464
    %vm2561 = vcmask 1046528
    %v2562 = vrot.slane %v2465, 1
    %v2563 = vrot.slane %v2466, 1
    %v2564 = vsel %vm2561, %v2562, %v2563
    %v2565 = vrot.slane %v2467, 1
    %v2566 = vrot.slane %v2468, 1
    %v2567 = vsel %vm2561, %v2565, %v2566
    %v2568 = vrot.slane %v2469, 1
    %v2569 = vrot.slane %v2470, 1
    %v2570 = vsel %vm2561, %v2568, %v2569
    %v2571 = vrot.slane %v2471, 1
    %v2572 = vrot.slane %v2472, 1
    %v2573 = vsel %vm2561, %v2571, %v2572
    %v2574 = vrot.slane %v2473, 1
    %v2575 = vrot.slane %v2474, 1
    %v2576 = vsel %vm2561, %v2574, %v2575
    %v2577 = vrot.slane %v2475, 1
    %v2578 = vrot.slane %v2476, 1
    %v2579 = vsel %vm2561, %v2577, %v2578
    %v2580 = vrot.slane %v2477, 1
    %v2581 = vrot.slane %v2478, 1
    %v2582 = vsel %vm2561, %v2580, %v2581
    %v2583 = vrot.slane %v2479, 1
    %v2584 = vrot.slane %v2480, 1
    %v2585 = vsel %vm2561, %v2583, %v2584
    %v2586 = vrot.slane %v2481, 1
    %v2587 = vrot.slane %v2482, 1
    %v2588 = vsel %vm2561, %v2586, %v2587
    %v2589 = vrot.slane %v2483, 1
    %v2590 = vrot.slane %v2484, 1
    %v2591 = vsel %vm2561, %v2589, %v2590
    %v2592 = vrot.slane %v2485, 1
    %v2593 = vrot.slane %v2486, 1
    %v2594 = vsel %vm2561, %v2592, %v2593
    %v2595 = vrot.slane %v2487, 1
    %v2596 = vrot.slane %v2488, 1
    %v2597 = vsel %vm2561, %v2595, %v2596
    %v2598 = vrot.slane %v2489, 1
    %v2599 = vrot.slane %v2490, 1
    %v2600 = vsel %vm2561, %v2598, %v2599
    %v2601 = vrot.slane %v2491, 1
    %v2602 = vrot.slane %v2492, 1
    %v2603 = vsel %vm2561, %v2601, %v2602
    %v2604 = vrot.slane %v2493, 1
    %v2605 = vrot.slane %v2494, 1
    %v2606 = vsel %vm2561, %v2604, %v2605
    %v2607 = vrot.slane %v2495, 1
    %v2608 = vrot.slane %v2496, 1
    %v2609 = vsel %vm2561, %v2607, %v2608
    %v2610 = vrot.slane %v2497, 1
    %v2611 = vrot.slane %v2498, 1
    %v2612 = vsel %vm2561, %v2610, %v2611
    %v2613 = vrot.slane %v2499, 1
    %v2614 = vrot.slane %v2500, 1
    %v2615 = vsel %vm2561, %v2613, %v2614
    %v2616 = vrot.slane %v2501, 1
    %v2617 = vrot.slane %v2502, 1
    %v2618 = vsel %vm2561, %v2616, %v2617
    %v2619 = vrot.slane %v2503, 1
    %v2620 = vrot.slane %v2504, 1
    %v2621 = vsel %vm2561, %v2619, %v2620
    %v2622 = vrot.slane %v2505, 1
    %v2623 = vrot.slane %v2506, 1
    %v2624 = vsel %vm2561, %v2622, %v2623
    %v2625 = vrot.slane %v2507, 1
    %v2626 = vrot.slane %v2508, 1
    %v2627 = vsel %vm2561, %v2625, %v2626
    %v2628 = vrot.slane %v2509, 1
    %v2629 = vrot.slane %v2510, 1
    %v2630 = vsel %vm2561, %v2628, %v2629
    %v2631 = vrot.slane %v2511, 1
    %v2632 = vrot.slane %v2512, 1
    %v2633 = vsel %vm2561, %v2631, %v2632
    %v2682 = vadd.f32 %v2416, %v2564
    %v2683 = vadd.f32 %v2417, %v2563
    %v2684 = vadd.f32 %v2418, %v2567
    %v2685 = vadd.f32 %v2419, %v2566
    %v2686 = vadd.f32 %v2420, %v2570
    %v2687 = vadd.f32 %v2421, %v2569
    %v2688 = vadd.f32 %v2422, %v2573
    %v2689 = vadd.f32 %v2423, %v2572
    %v2690 = vadd.f32 %v2424, %v2576
    %v2691 = vadd.f32 %v2425, %v2575
    %v2692 = vadd.f32 %v2426, %v2579
    %v2693 = vadd.f32 %v2427, %v2578
    %v2694 = vadd.f32 %v2428, %v2582
    %v2695 = vadd.f32 %v2429, %v2581
    %v2696 = vadd.f32 %v2430, %v2585
    %v2697 = vadd.f32 %v2431, %v2584
    %v2698 = vadd.f32 %v2432, %v2588
    %v2699 = vadd.f32 %v2433, %v2587
    %v2700 = vadd.f32 %v2434, %v2591
    %v2701 = vadd.f32 %v2435, %v2590
    %v2702 = vadd.f32 %v2436, %v2594
    %v2703 = vadd.f32 %v2437, %v2593
    %v2704 = vadd.f32 %v2438, %v2597
    %v2705 = vadd.f32 %v2439, %v2596
    %v2706 = vadd.f32 %v2440, %v2600
    %v2707 = vadd.f32 %v2441, %v2599
    %v2708 = vadd.f32 %v2442, %v2603
    %v2709 = vadd.f32 %v2443, %v2602
    %v2710 = vadd.f32 %v2444, %v2606
    %v2711 = vadd.f32 %v2445, %v2605
    %v2712 = vadd.f32 %v2446, %v2609
    %v2713 = vadd.f32 %v2447, %v2608
    %v2714 = vadd.f32 %v2448, %v2612
    %v2715 = vadd.f32 %v2449, %v2611
    %v2716 = vadd.f32 %v2450, %v2615
    %v2717 = vadd.f32 %v2451, %v2614
    %v2718 = vadd.f32 %v2452, %v2618
    %v2719 = vadd.f32 %v2453, %v2617
    %v2720 = vadd.f32 %v2454, %v2621
    %v2721 = vadd.f32 %v2455, %v2620
    %v2722 = vadd.f32 %v2456, %v2624
    %v2723 = vadd.f32 %v2457, %v2623
    %v2724 = vadd.f32 %v2458, %v2627
    %v2725 = vadd.f32 %v2459, %v2626
    %v2726 = vadd.f32 %v2460, %v2630
    %v2727 = vadd.f32 %v2461, %v2629
    %v2728 = vadd.f32 %v2462, %v2633
    %v2729 = vadd.f32 %v2463, %v2632
    %v2730 = vperm.slane %v73, 1
    %v2731 = vmul.f32 %v443, %v2730
    %v2732 = vmul.f32 %v447, %v2730
    %v2733 = vmul.f32 %v451, %v2730
    %v2734 = vmul.f32 %v455, %v2730
    %v2735 = vmul.f32 %v459, %v2730
    %v2736 = vmul.f32 %v463, %v2730
    %v2737 = vmul.f32 %v467, %v2730
    %v2738 = vmul.f32 %v471, %v2730
    %v2739 = vmul.f32 %v475, %v2730
    %v2740 = vmul.f32 %v479, %v2730
    %v2741 = vmul.f32 %v483, %v2730
    %v2742 = vmul.f32 %v487, %v2730
    %v2743 = vmul.f32 %v491, %v2730
    %v2744 = vmul.f32 %v495, %v2730
    %v2745 = vmul.f32 %v499, %v2730
    %v2746 = vmul.f32 %v503, %v2730
    %v2747 = vmul.f32 %v507, %v2730
    %v2748 = vmul.f32 %v511, %v2730
    %v2749 = vmul.f32 %v515, %v2730
    %v2750 = vmul.f32 %v519, %v2730
    %v2751 = vmul.f32 %v523, %v2730
    %v2752 = vmul.f32 %v527, %v2730
    %v2753 = vmul.f32 %v531, %v2730
    %v2754 = vmul.f32 %v535, %v2730
    %v2755 = vmul.f32 %v539, %v2730
    %v2756 = vmul.f32 %v543, %v2730
    %v2757 = vmul.f32 %v547, %v2730
    %v2758 = vmul.f32 %v551, %v2730
    %v2759 = vmul.f32 %v555, %v2730
    %v2760 = vmul.f32 %v559, %v2730
    %v2761 = vmul.f32 %v563, %v2730
    %v2762 = vmul.f32 %v567, %v2730
    %v2763 = vmul.f32 %v571, %v2730
    %v2764 = vmul.f32 %v575, %v2730
    %v2765 = vmul.f32 %v579, %v2730
    %v2766 = vmul.f32 %v583, %v2730
    %v2767 = vmul.f32 %v587, %v2730
    %v2768 = vmul.f32 %v591, %v2730
    %v2769 = vmul.f32 %v595, %v2730
    %v2770 = vmul.f32 %v599, %v2730
    %v2771 = vmul.f32 %v603, %v2730
    %v2772 = vmul.f32 %v607, %v2730
    %v2773 = vmul.f32 %v611, %v2730
    %v2774 = vmul.f32 %v615, %v2730
    %v2775 = vmul.f32 %v619, %v2730
    %v2776 = vmul.f32 %v623, %v2730
    %v2777 = vmul.f32 %v627, %v2730
    %v2778 = vmul.f32 %v631, %v2730
    %v2827 = vrot.slane %v2731, 1
    %v2828 = vrot.slane %v2732, 1
    %v2829 = vsel %vm2561, %v2827, %v2828
    %v2830 = vrot.slane %v2733, 1
    %v2831 = vrot.slane %v2734, 1
    %v2832 = vsel %vm2561, %v2830, %v2831
    %v2833 = vrot.slane %v2735, 1
    %v2834 = vrot.slane %v2736, 1
    %v2835 = vsel %vm2561, %v2833, %v2834
    %v2836 = vrot.slane %v2737, 1
    %v2837 = vrot.slane %v2738, 1
    %v2838 = vsel %vm2561, %v2836, %v2837
    %v2839 = vrot.slane %v2739, 1
    %v2840 = vrot.slane %v2740, 1
    %v2841 = vsel %vm2561, %v2839, %v2840
    %v2842 = vrot.slane %v2741, 1
    %v2843 = vrot.slane %v2742, 1
    %v2844 = vsel %vm2561, %v2842, %v2843
    %v2845 = vrot.slane %v2743, 1
    %v2846 = vrot.slane %v2744, 1
    %v2847 = vsel %vm2561, %v2845, %v2846
    %v2848 = vrot.slane %v2745, 1
    %v2849 = vrot.slane %v2746, 1
    %v2850 = vsel %vm2561, %v2848, %v2849
    %v2851 = vrot.slane %v2747, 1
    %v2852 = vrot.slane %v2748, 1
    %v2853 = vsel %vm2561, %v2851, %v2852
    %v2854 = vrot.slane %v2749, 1
    %v2855 = vrot.slane %v2750, 1
    %v2856 = vsel %vm2561, %v2854, %v2855
    %v2857 = vrot.slane %v2751, 1
    %v2858 = vrot.slane %v2752, 1
    %v2859 = vsel %vm2561, %v2857, %v2858
    %v2860 = vrot.slane %v2753, 1
    %v2861 = vrot.slane %v2754, 1
    %v2862 = vsel %vm2561, %v2860, %v2861
    %v2863 = vrot.slane %v2755, 1
    %v2864 = vrot.slane %v2756, 1
    %v2865 = vsel %vm2561, %v2863, %v2864
    %v2866 = vrot.slane %v2757, 1
    %v2867 = vrot.slane %v2758, 1
    %v2868 = vsel %vm2561, %v2866, %v2867
    %v2869 = vrot.slane %v2759, 1
    %v2870 = vrot.slane %v2760, 1
    %v2871 = vsel %vm2561, %v2869, %v2870
    %v2872 = vrot.slane %v2761, 1
    %v2873 = vrot.slane %v2762, 1
    %v2874 = vsel %vm2561, %v2872, %v2873
    %v2875 = vrot.slane %v2763, 1
    %v2876 = vrot.slane %v2764, 1
    %v2877 = vsel %vm2561, %v2875, %v2876
    %v2878 = vrot.slane %v2765, 1
    %v2879 = vrot.slane %v2766, 1
    %v2880 = vsel %vm2561, %v2878, %v2879
    %v2881 = vrot.slane %v2767, 1
    %v2882 = vrot.slane %v2768, 1
    %v2883 = vsel %vm2561, %v2881, %v2882
    %v2884 = vrot.slane %v2769, 1
    %v2885 = vrot.slane %v2770, 1
    %v2886 = vsel %vm2561, %v2884, %v2885
    %v2887 = vrot.slane %v2771, 1
    %v2888 = vrot.slane %v2772, 1
    %v2889 = vsel %vm2561, %v2887, %v2888
    %v2890 = vrot.slane %v2773, 1
    %v2891 = vrot.slane %v2774, 1
    %v2892 = vsel %vm2561, %v2890, %v2891
    %v2893 = vrot.slane %v2775, 1
    %v2894 = vrot.slane %v2776, 1
    %v2895 = vsel %vm2561, %v2893, %v2894
    %v2896 = vrot.slane %v2777, 1
    %v2897 = vrot.slane %v2778, 1
    %v2898 = vsel %vm2561, %v2896, %v2897
    %v2947 = vadd.f32 %v2682, %v2829
    %v2948 = vadd.f32 %v2683, %v2828
    %v2949 = vadd.f32 %v2684, %v2832
    %v2950 = vadd.f32 %v2685, %v2831
    %v2951 = vadd.f32 %v2686, %v2835
    %v2952 = vadd.f32 %v2687, %v2834
    %v2953 = vadd.f32 %v2688, %v2838
    %v2954 = vadd.f32 %v2689, %v2837
    %v2955 = vadd.f32 %v2690, %v2841
    %v2956 = vadd.f32 %v2691, %v2840
    %v2957 = vadd.f32 %v2692, %v2844
    %v2958 = vadd.f32 %v2693, %v2843
    %v2959 = vadd.f32 %v2694, %v2847
    %v2960 = vadd.f32 %v2695, %v2846
    %v2961 = vadd.f32 %v2696, %v2850
    %v2962 = vadd.f32 %v2697, %v2849
    %v2963 = vadd.f32 %v2698, %v2853
    %v2964 = vadd.f32 %v2699, %v2852
    %v2965 = vadd.f32 %v2700, %v2856
    %v2966 = vadd.f32 %v2701, %v2855
    %v2967 = vadd.f32 %v2702, %v2859
    %v2968 = vadd.f32 %v2703, %v2858
    %v2969 = vadd.f32 %v2704, %v2862
    %v2970 = vadd.f32 %v2705, %v2861
    %v2971 = vadd.f32 %v2706, %v2865
    %v2972 = vadd.f32 %v2707, %v2864
    %v2973 = vadd.f32 %v2708, %v2868
    %v2974 = vadd.f32 %v2709, %v2867
    %v2975 = vadd.f32 %v2710, %v2871
    %v2976 = vadd.f32 %v2711, %v2870
    %v2977 = vadd.f32 %v2712, %v2874
    %v2978 = vadd.f32 %v2713, %v2873
    %v2979 = vadd.f32 %v2714, %v2877
    %v2980 = vadd.f32 %v2715, %v2876
    %v2981 = vadd.f32 %v2716, %v2880
    %v2982 = vadd.f32 %v2717, %v2879
    %v2983 = vadd.f32 %v2718, %v2883
    %v2984 = vadd.f32 %v2719, %v2882
    %v2985 = vadd.f32 %v2720, %v2886
    %v2986 = vadd.f32 %v2721, %v2885
    %v2987 = vadd.f32 %v2722, %v2889
    %v2988 = vadd.f32 %v2723, %v2888
    %v2989 = vadd.f32 %v2724, %v2892
    %v2990 = vadd.f32 %v2725, %v2891
    %v2991 = vadd.f32 %v2726, %v2895
    %v2992 = vadd.f32 %v2727, %v2894
    %v2993 = vadd.f32 %v2728, %v2898
    %v2994 = vadd.f32 %v2729, %v2897
    %v2995 = vperm.slane %v73, 2
    %v2996 = vmul.f32 %v732, %v2995
    %v2997 = vmul.f32 %v736, %v2995
    %v2998 = vmul.f32 %v740, %v2995
    %v2999 = vmul.f32 %v744, %v2995
    %v3000 = vmul.f32 %v748, %v2995
    %v3001 = vmul.f32 %v752, %v2995
    %v3002 = vmul.f32 %v756, %v2995
    %v3003 = vmul.f32 %v760, %v2995
    %v3004 = vmul.f32 %v764, %v2995
    %v3005 = vmul.f32 %v768, %v2995
    %v3006 = vmul.f32 %v772, %v2995
    %v3007 = vmul.f32 %v776, %v2995
    %v3008 = vmul.f32 %v780, %v2995
    %v3009 = vmul.f32 %v784, %v2995
    %v3010 = vmul.f32 %v788, %v2995
    %v3011 = vmul.f32 %v792, %v2995
    %v3012 = vmul.f32 %v796, %v2995
    %v3013 = vmul.f32 %v800, %v2995
    %v3014 = vmul.f32 %v804, %v2995
    %v3015 = vmul.f32 %v808, %v2995
    %v3016 = vmul.f32 %v812, %v2995
    %v3017 = vmul.f32 %v816, %v2995
    %v3018 = vmul.f32 %v820, %v2995
    %v3019 = vmul.f32 %v824, %v2995
    %v3020 = vmul.f32 %v828, %v2995
    %v3021 = vmul.f32 %v832, %v2995
    %v3022 = vmul.f32 %v836, %v2995
    %v3023 = vmul.f32 %v840, %v2995
    %v3024 = vmul.f32 %v844, %v2995
    %v3025 = vmul.f32 %v848, %v2995
    %v3026 = vmul.f32 %v852, %v2995
    %v3027 = vmul.f32 %v856, %v2995
    %v3028 = vmul.f32 %v860, %v2995
    %v3029 = vmul.f32 %v864, %v2995
    %v3030 = vmul.f32 %v868, %v2995
    %v3031 = vmul.f32 %v872, %v2995
    %v3032 = vmul.f32 %v876, %v2995
    %v3033 = vmul.f32 %v880, %v2995
    %v3034 = vmul.f32 %v884, %v2995
    %v3035 = vmul.f32 %v888, %v2995
    %v3036 = vmul.f32 %v892, %v2995
    %v3037 = vmul.f32 %v896, %v2995
    %v3038 = vmul.f32 %v900, %v2995
    %v3039 = vmul.f32 %v904, %v2995
    %v3040 = vmul.f32 %v908, %v2995
    %v3041 = vmul.f32 %v912, %v2995
    %v3042 = vmul.f32 %v916, %v2995
    %v3043 = vmul.f32 %v920, %v2995
    %v3092 = vrot.slane %v2996, 1
    %v3093 = vrot.slane %v2997, 1
    %v3094 = vsel %vm2561, %v3092, %v3093
    %v3095 = vrot.slane %v2998, 1
    %v3096 = vrot.slane %v2999, 1
    %v3097 = vsel %vm2561, %v3095, %v3096
    %v3098 = vrot.slane %v3000, 1
    %v3099 = vrot.slane %v3001, 1
    %v3100 = vsel %vm2561, %v3098, %v3099
    %v3101 = vrot.slane %v3002, 1
    %v3102 = vrot.slane %v3003, 1
    %v3103 = vsel %vm2561, %v3101, %v3102
    %v3104 = vrot.slane %v3004, 1
    %v3105 = vrot.slane %v3005, 1
    %v3106 = vsel %vm2561, %v3104, %v3105
    %v3107 = vrot.slane %v3006, 1
    %v3108 = vrot.slane %v3007, 1
    %v3109 = vsel %vm2561, %v3107, %v3108
    %v3110 = vrot.slane %v3008, 1
    %v3111 = vrot.slane %v3009, 1
    %v3112 = vsel %vm2561, %v3110, %v3111
    %v3113 = vrot.slane %v3010, 1
    %v3114 = vrot.slane %v3011, 1
    %v3115 = vsel %vm2561, %v3113, %v3114
    %v3116 = vrot.slane %v3012, 1
    %v3117 = vrot.slane %v3013, 1
    %v3118 = vsel %vm2561, %v3116, %v3117
    %v3119 = vrot.slane %v3014, 1
    %v3120 = vrot.slane %v3015, 1
    %v3121 = vsel %vm2561, %v3119, %v3120
    %v3122 = vrot.slane %v3016, 1
    %v3123 = vrot.slane %v3017, 1
    %v3124 = vsel %vm2561, %v3122, %v3123
    %v3125 = vrot.slane %v3018, 1
    %v3126 = vrot.slane %v3019, 1
    %v3127 = vsel %vm2561, %v3125, %v3126
    %v3128 = vrot.slane %v3020, 1
    %v3129 = vrot.slane %v3021, 1
    %v3130 = vsel %vm2561, %v3128, %v3129
    %v3131 = vrot.slane %v3022, 1
    %v3132 = vrot.slane %v3023, 1
    %v3133 = vsel %vm2561, %v3131, %v3132
    %v3134 = vrot.slane %v3024, 1
    %v3135 = vrot.slane %v3025, 1
    %v3136 = vsel %vm2561, %v3134, %v3135
    %v3137 = vrot.slane %v3026, 1
    %v3138 = vrot.slane %v3027, 1
    %v3139 = vsel %vm2561, %v3137, %v3138
    %v3140 = vrot.slane %v3028, 1
    %v3141 = vrot.slane %v3029, 1
    %v3142 = vsel %vm2561, %v3140, %v3141
    %v3143 = vrot.slane %v3030, 1
    %v3144 = vrot.slane %v3031, 1
    %v3145 = vsel %vm2561, %v3143, %v3144
    %v3146 = vrot.slane %v3032, 1
    %v3147 = vrot.slane %v3033, 1
    %v3148 = vsel %vm2561, %v3146, %v3147
    %v3149 = vrot.slane %v3034, 1
    %v3150 = vrot.slane %v3035, 1
    %v3151 = vsel %vm2561, %v3149, %v3150
    %v3152 = vrot.slane %v3036, 1
    %v3153 = vrot.slane %v3037, 1
    %v3154 = vsel %vm2561, %v3152, %v3153
    %v3155 = vrot.slane %v3038, 1
    %v3156 = vrot.slane %v3039, 1
    %v3157 = vsel %vm2561, %v3155, %v3156
    %v3158 = vrot.slane %v3040, 1
    %v3159 = vrot.slane %v3041, 1
    %v3160 = vsel %vm2561, %v3158, %v3159
    %v3161 = vrot.slane %v3042, 1
    %v3162 = vrot.slane %v3043, 1
    %v3163 = vsel %vm2561, %v3161, %v3162
    %v3212 = vadd.f32 %v2947, %v3094
    %v3213 = vadd.f32 %v2948, %v3093
    %v3214 = vadd.f32 %v2949, %v3097
    %v3215 = vadd.f32 %v2950, %v3096
    %v3216 = vadd.f32 %v2951, %v3100
    %v3217 = vadd.f32 %v2952, %v3099
    %v3218 = vadd.f32 %v2953, %v3103
    %v3219 = vadd.f32 %v2954, %v3102
    %v3220 = vadd.f32 %v2955, %v3106
    %v3221 = vadd.f32 %v2956, %v3105
    %v3222 = vadd.f32 %v2957, %v3109
    %v3223 = vadd.f32 %v2958, %v3108
    %v3224 = vadd.f32 %v2959, %v3112
    %v3225 = vadd.f32 %v2960, %v3111
    %v3226 = vadd.f32 %v2961, %v3115
    %v3227 = vadd.f32 %v2962, %v3114
    %v3228 = vadd.f32 %v2963, %v3118
    %v3229 = vadd.f32 %v2964, %v3117
    %v3230 = vadd.f32 %v2965, %v3121
    %v3231 = vadd.f32 %v2966, %v3120
    %v3232 = vadd.f32 %v2967, %v3124
    %v3233 = vadd.f32 %v2968, %v3123
    %v3234 = vadd.f32 %v2969, %v3127
    %v3235 = vadd.f32 %v2970, %v3126
    %v3236 = vadd.f32 %v2971, %v3130
    %v3237 = vadd.f32 %v2972, %v3129
    %v3238 = vadd.f32 %v2973, %v3133
    %v3239 = vadd.f32 %v2974, %v3132
    %v3240 = vadd.f32 %v2975, %v3136
    %v3241 = vadd.f32 %v2976, %v3135
    %v3242 = vadd.f32 %v2977, %v3139
    %v3243 = vadd.f32 %v2978, %v3138
    %v3244 = vadd.f32 %v2979, %v3142
    %v3245 = vadd.f32 %v2980, %v3141
    %v3246 = vadd.f32 %v2981, %v3145
    %v3247 = vadd.f32 %v2982, %v3144
    %v3248 = vadd.f32 %v2983, %v3148
    %v3249 = vadd.f32 %v2984, %v3147
    %v3250 = vadd.f32 %v2985, %v3151
    %v3251 = vadd.f32 %v2986, %v3150
    %v3252 = vadd.f32 %v2987, %v3154
    %v3253 = vadd.f32 %v2988, %v3153
    %v3254 = vadd.f32 %v2989, %v3157
    %v3255 = vadd.f32 %v2990, %v3156
    %v3256 = vadd.f32 %v2991, %v3160
    %v3257 = vadd.f32 %v2992, %v3159
    %v3258 = vadd.f32 %v2993, %v3163
    %v3259 = vadd.f32 %v2994, %v3162
    %v3260 = vperm.slane %v73, 3
    %v3261 = vmul.f32 %v1021, %v3260
    %v3262 = vmul.f32 %v1025, %v3260
    %v3263 = vmul.f32 %v1029, %v3260
    %v3264 = vmul.f32 %v1033, %v3260
    %v3265 = vmul.f32 %v1037, %v3260
    %v3266 = vmul.f32 %v1041, %v3260
    %v3267 = vmul.f32 %v1045, %v3260
    %v3268 = vmul.f32 %v1049, %v3260
    %v3269 = vmul.f32 %v1053, %v3260
    %v3270 = vmul.f32 %v1057, %v3260
    %v3271 = vmul.f32 %v1061, %v3260
    %v3272 = vmul.f32 %v1065, %v3260
    %v3273 = vmul.f32 %v1069, %v3260
    %v3274 = vmul.f32 %v1073, %v3260
    %v3275 = vmul.f32 %v1077, %v3260
    %v3276 = vmul.f32 %v1081, %v3260
    %v3277 = vmul.f32 %v1085, %v3260
    %v3278 = vmul.f32 %v1089, %v3260
    %v3279 = vmul.f32 %v1093, %v3260
    %v3280 = vmul.f32 %v1097, %v3260
    %v3281 = vmul.f32 %v1101, %v3260
    %v3282 = vmul.f32 %v1105, %v3260
    %v3283 = vmul.f32 %v1109, %v3260
    %v3284 = vmul.f32 %v1113, %v3260
    %v3285 = vmul.f32 %v1117, %v3260
    %v3286 = vmul.f32 %v1121, %v3260
    %v3287 = vmul.f32 %v1125, %v3260
    %v3288 = vmul.f32 %v1129, %v3260
    %v3289 = vmul.f32 %v1133, %v3260
    %v3290 = vmul.f32 %v1137, %v3260
    %v3291 = vmul.f32 %v1141, %v3260
    %v3292 = vmul.f32 %v1145, %v3260
    %v3293 = vmul.f32 %v1149, %v3260
    %v3294 = vmul.f32 %v1153, %v3260
    %v3295 = vmul.f32 %v1157, %v3260
    %v3296 = vmul.f32 %v1161, %v3260
    %v3297 = vmul.f32 %v1165, %v3260
    %v3298 = vmul.f32 %v1169, %v3260
    %v3299 = vmul.f32 %v1173, %v3260
    %v3300 = vmul.f32 %v1177, %v3260
    %v3301 = vmul.f32 %v1181, %v3260
    %v3302 = vmul.f32 %v1185, %v3260
    %v3303 = vmul.f32 %v1189, %v3260
    %v3304 = vmul.f32 %v1193, %v3260
    %v3305 = vmul.f32 %v1197, %v3260
    %v3306 = vmul.f32 %v1201, %v3260
    %v3307 = vmul.f32 %v1205, %v3260
    %v3308 = vmul.f32 %v1209, %v3260
    %v3357 = vrot.slane %v3261, 1
    %v3358 = vrot.slane %v3262, 1
    %v3359 = vsel %vm2561, %v3357, %v3358
    %v3360 = vrot.slane %v3263, 1
    %v3361 = vrot.slane %v3264, 1
    %v3362 = vsel %vm2561, %v3360, %v3361
    %v3363 = vrot.slane %v3265, 1
    %v3364 = vrot.slane %v3266, 1
    %v3365 = vsel %vm2561, %v3363, %v3364
    %v3366 = vrot.slane %v3267, 1
    %v3367 = vrot.slane %v3268, 1
    %v3368 = vsel %vm2561, %v3366, %v3367
    %v3369 = vrot.slane %v3269, 1
    %v3370 = vrot.slane %v3270, 1
    %v3371 = vsel %vm2561, %v3369, %v3370
    %v3372 = vrot.slane %v3271, 1
    %v3373 = vrot.slane %v3272, 1
    %v3374 = vsel %vm2561, %v3372, %v3373
    %v3375 = vrot.slane %v3273, 1
    %v3376 = vrot.slane %v3274, 1
    %v3377 = vsel %vm2561, %v3375, %v3376
    %v3378 = vrot.slane %v3275, 1
    %v3379 = vrot.slane %v3276, 1
    %v3380 = vsel %vm2561, %v3378, %v3379
    %v3381 = vrot.slane %v3277, 1
    %v3382 = vrot.slane %v3278, 1
    %v3383 = vsel %vm2561, %v3381, %v3382
    %v3384 = vrot.slane %v3279, 1
    %v3385 = vrot.slane %v3280, 1
    %v3386 = vsel %vm2561, %v3384, %v3385
    %v3387 = vrot.slane %v3281, 1
    %v3388 = vrot.slane %v3282, 1
    %v3389 = vsel %vm2561, %v3387, %v3388
    %v3390 = vrot.slane %v3283, 1
    %v3391 = vrot.slane %v3284, 1
    %v3392 = vsel %vm2561, %v3390, %v3391
    %v3393 = vrot.slane %v3285, 1
    %v3394 = vrot.slane %v3286, 1
    %v3395 = vsel %vm2561, %v3393, %v3394
    %v3396 = vrot.slane %v3287, 1
    %v3397 = vrot.slane %v3288, 1
    %v3398 = vsel %vm2561, %v3396, %v3397
    %v3399 = vrot.slane %v3289, 1
    %v3400 = vrot.slane %v3290, 1
    %v3401 = vsel %vm2561, %v3399, %v3400
    %v3402 = vrot.slane %v3291, 1
    %v3403 = vrot.slane %v3292, 1
    %v3404 = vsel %vm2561, %v3402, %v3403
    %v3405 = vrot.slane %v3293, 1
    %v3406 = vrot.slane %v3294, 1
    %v3407 = vsel %vm2561, %v3405, %v3406
    %v3408 = vrot.slane %v3295, 1
    %v3409 = vrot.slane %v3296, 1
    %v3410 = vsel %vm2561, %v3408, %v3409
    %v3411 = vrot.slane %v3297, 1
    %v3412 = vrot.slane %v3298, 1
    %v3413 = vsel %vm2561, %v3411, %v3412
    %v3414 = vrot.slane %v3299, 1
    %v3415 = vrot.slane %v3300, 1
    %v3416 = vsel %vm2561, %v3414, %v3415
    %v3417 = vrot.slane %v3301, 1
    %v3418 = vrot.slane %v3302, 1
    %v3419 = vsel %vm2561, %v3417, %v3418
    %v3420 = vrot.slane %v3303, 1
    %v3421 = vrot.slane %v3304, 1
    %v3422 = vsel %vm2561, %v3420, %v3421
    %v3423 = vrot.slane %v3305, 1
    %v3424 = vrot.slane %v3306, 1
    %v3425 = vsel %vm2561, %v3423, %v3424
    %v3426 = vrot.slane %v3307, 1
    %v3427 = vrot.slane %v3308, 1
    %v3428 = vsel %vm2561, %v3426, %v3427
    %v3477 = vadd.f32 %v3212, %v3359
    %v3478 = vadd.f32 %v3213, %v3358
    %v3479 = vadd.f32 %v3214, %v3362
    %v3480 = vadd.f32 %v3215, %v3361
    %v3481 = vadd.f32 %v3216, %v3365
    %v3482 = vadd.f32 %v3217, %v3364
    %v3483 = vadd.f32 %v3218, %v3368
    %v3484 = vadd.f32 %v3219, %v3367
    %v3485 = vadd.f32 %v3220, %v3371
    %v3486 = vadd.f32 %v3221, %v3370
    %v3487 = vadd.f32 %v3222, %v3374
    %v3488 = vadd.f32 %v3223, %v3373
    %v3489 = vadd.f32 %v3224, %v3377
    %v3490 = vadd.f32 %v3225, %v3376
    %v3491 = vadd.f32 %v3226, %v3380
    %v3492 = vadd.f32 %v3227, %v3379
    %v3493 = vadd.f32 %v3228, %v3383
    %v3494 = vadd.f32 %v3229, %v3382
    %v3495 = vadd.f32 %v3230, %v3386
    %v3496 = vadd.f32 %v3231, %v3385
    %v3497 = vadd.f32 %v3232, %v3389
    %v3498 = vadd.f32 %v3233, %v3388
    %v3499 = vadd.f32 %v3234, %v3392
    %v3500 = vadd.f32 %v3235, %v3391
    %v3501 = vadd.f32 %v3236, %v3395
    %v3502 = vadd.f32 %v3237, %v3394
    %v3503 = vadd.f32 %v3238, %v3398
    %v3504 = vadd.f32 %v3239, %v3397
    %v3505 = vadd.f32 %v3240, %v3401
    %v3506 = vadd.f32 %v3241, %v3400
    %v3507 = vadd.f32 %v3242, %v3404
    %v3508 = vadd.f32 %v3243, %v3403
    %v3509 = vadd.f32 %v3244, %v3407
    %v3510 = vadd.f32 %v3245, %v3406
    %v3511 = vadd.f32 %v3246, %v3410
    %v3512 = vadd.f32 %v3247, %v3409
    %v3513 = vadd.f32 %v3248, %v3413
    %v3514 = vadd.f32 %v3249, %v3412
    %v3515 = vadd.f32 %v3250, %v3416
    %v3516 = vadd.f32 %v3251, %v3415
    %v3517 = vadd.f32 %v3252, %v3419
    %v3518 = vadd.f32 %v3253, %v3418
    %v3519 = vadd.f32 %v3254, %v3422
    %v3520 = vadd.f32 %v3255, %v3421
    %v3521 = vadd.f32 %v3256, %v3425
    %v3522 = vadd.f32 %v3257, %v3424
    %v3523 = vadd.f32 %v3258, %v3428
    %v3524 = vadd.f32 %v3259, %v3427
    %v3525 = vperm.slane %v73, 4
    %v3526 = vmul.f32 %v1310, %v3525
    %v3527 = vmul.f32 %v1314, %v3525
    %v3528 = vmul.f32 %v1318, %v3525
    %v3529 = vmul.f32 %v1322, %v3525
    %v3530 = vmul.f32 %v1326, %v3525
    %v3531 = vmul.f32 %v1330, %v3525
    %v3532 = vmul.f32 %v1334, %v3525
    %v3533 = vmul.f32 %v1338, %v3525
    %v3534 = vmul.f32 %v1342, %v3525
    %v3535 = vmul.f32 %v1346, %v3525
    %v3536 = vmul.f32 %v1350, %v3525
    %v3537 = vmul.f32 %v1354, %v3525
    %v3538 = vmul.f32 %v1358, %v3525
    %v3539 = vmul.f32 %v1362, %v3525
    %v3540 = vmul.f32 %v1366, %v3525
    %v3541 = vmul.f32 %v1370, %v3525
    %v3542 = vmul.f32 %v1374, %v3525
    %v3543 = vmul.f32 %v1378, %v3525
    %v3544 = vmul.f32 %v1382, %v3525
    %v3545 = vmul.f32 %v1386, %v3525
    %v3546 = vmul.f32 %v1390, %v3525
    %v3547 = vmul.f32 %v1394, %v3525
    %v3548 = vmul.f32 %v1398, %v3525
    %v3549 = vmul.f32 %v1402, %v3525
    %v3550 = vmul.f32 %v1406, %v3525
    %v3551 = vmul.f32 %v1410, %v3525
    %v3552 = vmul.f32 %v1414, %v3525
    %v3553 = vmul.f32 %v1418, %v3525
    %v3554 = vmul.f32 %v1422, %v3525
    %v3555 = vmul.f32 %v1426, %v3525
    %v3556 = vmul.f32 %v1430, %v3525
    %v3557 = vmul.f32 %v1434, %v3525
    %v3558 = vmul.f32 %v1438, %v3525
    %v3559 = vmul.f32 %v1442, %v3525
    %v3560 = vmul.f32 %v1446, %v3525
    %v3561 = vmul.f32 %v1450, %v3525
    %v3562 = vmul.f32 %v1454, %v3525
    %v3563 = vmul.f32 %v1458, %v3525
    %v3564 = vmul.f32 %v1462, %v3525
    %v3565 = vmul.f32 %v1466, %v3525
    %v3566 = vmul.f32 %v1470, %v3525
    %v3567 = vmul.f32 %v1474, %v3525
    %v3568 = vmul.f32 %v1478, %v3525
    %v3569 = vmul.f32 %v1482, %v3525
    %v3570 = vmul.f32 %v1486, %v3525
    %v3571 = vmul.f32 %v1490, %v3525
    %v3572 = vmul.f32 %v1494, %v3525
    %v3573 = vmul.f32 %v1498, %v3525
    %v3622 = vrot.slane %v3526, 1
    %v3623 = vrot.slane %v3527, 1
    %v3624 = vsel %vm2561, %v3622, %v3623
    %v3625 = vrot.slane %v3528, 1
    %v3626 = vrot.slane %v3529, 1
    %v3627 = vsel %vm2561, %v3625, %v3626
    %v3628 = vrot.slane %v3530, 1
    %v3629 = vrot.slane %v3531, 1
    %v3630 = vsel %vm2561, %v3628, %v3629
    %v3631 = vrot.slane %v3532, 1
    %v3632 = vrot.slane %v3533, 1
    %v3633 = vsel %vm2561, %v3631, %v3632
    %v3634 = vrot.slane %v3534, 1
    %v3635 = vrot.slane %v3535, 1
    %v3636 = vsel %vm2561, %v3634, %v3635
    %v3637 = vrot.slane %v3536, 1
    %v3638 = vrot.slane %v3537, 1
    %v3639 = vsel %vm2561, %v3637, %v3638
    %v3640 = vrot.slane %v3538, 1
    %v3641 = vrot.slane %v3539, 1
    %v3642 = vsel %vm2561, %v3640, %v3641
    %v3643 = vrot.slane %v3540, 1
    %v3644 = vrot.slane %v3541, 1
    %v3645 = vsel %vm2561, %v3643, %v3644
    %v3646 = vrot.slane %v3542, 1
    %v3647 = vrot.slane %v3543, 1
    %v3648 = vsel %vm2561, %v3646, %v3647
    %v3649 = vrot.slane %v3544, 1
    %v3650 = vrot.slane %v3545, 1
    %v3651 = vsel %vm2561, %v3649, %v3650
    %v3652 = vrot.slane %v3546, 1
    %v3653 = vrot.slane %v3547, 1
    %v3654 = vsel %vm2561, %v3652, %v3653
    %v3655 = vrot.slane %v3548, 1
    %v3656 = vrot.slane %v3549, 1
    %v3657 = vsel %vm2561, %v3655, %v3656
    %v3658 = vrot.slane %v3550, 1
    %v3659 = vrot.slane %v3551, 1
    %v3660 = vsel %vm2561, %v3658, %v3659
    %v3661 = vrot.slane %v3552, 1
    %v3662 = vrot.slane %v3553, 1
    %v3663 = vsel %vm2561, %v3661, %v3662
    %v3664 = vrot.slane %v3554, 1
    %v3665 = vrot.slane %v3555, 1
    %v3666 = vsel %vm2561, %v3664, %v3665
    %v3667 = vrot.slane %v3556, 1
    %v3668 = vrot.slane %v3557, 1
    %v3669 = vsel %vm2561, %v3667, %v3668
    %v3670 = vrot.slane %v3558, 1
    %v3671 = vrot.slane %v3559, 1
    %v3672 = vsel %vm2561, %v3670, %v3671
    %v3673 = vrot.slane %v3560, 1
    %v3674 = vrot.slane %v3561, 1
    %v3675 = vsel %vm2561, %v3673, %v3674
    %v3676 = vrot.slane %v3562, 1
    %v3677 = vrot.slane %v3563, 1
    %v3678 = vsel %vm2561, %v3676, %v3677
    %v3679 = vrot.slane %v3564, 1
    %v3680 = vrot.slane %v3565, 1
    %v3681 = vsel %vm2561, %v3679, %v3680
    %v3682 = vrot.slane %v3566, 1
    %v3683 = vrot.slane %v3567, 1
    %v3684 = vsel %vm2561, %v3682, %v3683
    %v3685 = vrot.slane %v3568, 1
    %v3686 = vrot.slane %v3569, 1
    %v3687 = vsel %vm2561, %v3685, %v3686
    %v3688 = vrot.slane %v3570, 1
    %v3689 = vrot.slane %v3571, 1
    %v3690 = vsel %vm2561, %v3688, %v3689
    %v3691 = vrot.slane %v3572, 1
    %v3692 = vrot.slane %v3573, 1
    %v3693 = vsel %vm2561, %v3691, %v3692
    %v3742 = vadd.f32 %v3477, %v3624
    %v3743 = vadd.f32 %v3478, %v3623
    %v3744 = vadd.f32 %v3479, %v3627
    %v3745 = vadd.f32 %v3480, %v3626
    %v3746 = vadd.f32 %v3481, %v3630
    %v3747 = vadd.f32 %v3482, %v3629
    %v3748 = vadd.f32 %v3483, %v3633
    %v3749 = vadd.f32 %v3484, %v3632
    %v3750 = vadd.f32 %v3485, %v3636
    %v3751 = vadd.f32 %v3486, %v3635
    %v3752 = vadd.f32 %v3487, %v3639
    %v3753 = vadd.f32 %v3488, %v3638
    %v3754 = vadd.f32 %v3489, %v3642
    %v3755 = vadd.f32 %v3490, %v3641
    %v3756 = vadd.f32 %v3491, %v3645
    %v3757 = vadd.f32 %v3492, %v3644
    %v3758 = vadd.f32 %v3493, %v3648
    %v3759 = vadd.f32 %v3494, %v3647
    %v3760 = vadd.f32 %v3495, %v3651
    %v3761 = vadd.f32 %v3496, %v3650
    %v3762 = vadd.f32 %v3497, %v3654
    %v3763 = vadd.f32 %v3498, %v3653
    %v3764 = vadd.f32 %v3499, %v3657
    %v3765 = vadd.f32 %v3500, %v3656
    %v3766 = vadd.f32 %v3501, %v3660
    %v3767 = vadd.f32 %v3502, %v3659
    %v3768 = vadd.f32 %v3503, %v3663
    %v3769 = vadd.f32 %v3504, %v3662
    %v3770 = vadd.f32 %v3505, %v3666
    %v3771 = vadd.f32 %v3506, %v3665
    %v3772 = vadd.f32 %v3507, %v3669
    %v3773 = vadd.f32 %v3508, %v3668
    %v3774 = vadd.f32 %v3509, %v3672
    %v3775 = vadd.f32 %v3510, %v3671
    %v3776 = vadd.f32 %v3511, %v3675
    %v3777 = vadd.f32 %v3512, %v3674
    %v3778 = vadd.f32 %v3513, %v3678
    %v3779 = vadd.f32 %v3514, %v3677
    %v3780 = vadd.f32 %v3515, %v3681
    %v3781 = vadd.f32 %v3516, %v3680
    %v3782 = vadd.f32 %v3517, %v3684
    %v3783 = vadd.f32 %v3518, %v3683
    %v3784 = vadd.f32 %v3519, %v3687
    %v3785 = vadd.f32 %v3520, %v3686
    %v3786 = vadd.f32 %v3521, %v3690
    %v3787 = vadd.f32 %v3522, %v3689
    %v3788 = vadd.f32 %v3523, %v3693
    %v3789 = vadd.f32 %v3524, %v3692
    %v3790 = vperm.slane %v73, 5
    %v3791 = vmul.f32 %v1599, %v3790
    %v3792 = vmul.f32 %v1603, %v3790
    %v3793 = vmul.f32 %v1607, %v3790
    %v3794 = vmul.f32 %v1611, %v3790
    %v3795 = vmul.f32 %v1615, %v3790
    %v3796 = vmul.f32 %v1619, %v3790
    %v3797 = vmul.f32 %v1623, %v3790
    %v3798 = vmul.f32 %v1627, %v3790
    %v3799 = vmul.f32 %v1631, %v3790
    %v3800 = vmul.f32 %v1635, %v3790
    %v3801 = vmul.f32 %v1639, %v3790
    %v3802 = vmul.f32 %v1643, %v3790
    %v3803 = vmul.f32 %v1647, %v3790
    %v3804 = vmul.f32 %v1651, %v3790
    %v3805 = vmul.f32 %v1655, %v3790
    %v3806 = vmul.f32 %v1659, %v3790
    %v3807 = vmul.f32 %v1663, %v3790
    %v3808 = vmul.f32 %v1667, %v3790
    %v3809 = vmul.f32 %v1671, %v3790
    %v3810 = vmul.f32 %v1675, %v3790
    %v3811 = vmul.f32 %v1679, %v3790
    %v3812 = vmul.f32 %v1683, %v3790
    %v3813 = vmul.f32 %v1687, %v3790
    %v3814 = vmul.f32 %v1691, %v3790
    %v3815 = vmul.f32 %v1695, %v3790
    %v3816 = vmul.f32 %v1699, %v3790
    %v3817 = vmul.f32 %v1703, %v3790
    %v3818 = vmul.f32 %v1707, %v3790
    %v3819 = vmul.f32 %v1711, %v3790
    %v3820 = vmul.f32 %v1715, %v3790
    %v3821 = vmul.f32 %v1719, %v3790
    %v3822 = vmul.f32 %v1723, %v3790
    %v3823 = vmul.f32 %v1727, %v3790
    %v3824 = vmul.f32 %v1731, %v3790
    %v3825 = vmul.f32 %v1735, %v3790
    %v3826 = vmul.f32 %v1739, %v3790
    %v3827 = vmul.f32 %v1743, %v3790
    %v3828 = vmul.f32 %v1747, %v3790
    %v3829 = vmul.f32 %v1751, %v3790
    %v3830 = vmul.f32 %v1755, %v3790
    %v3831 = vmul.f32 %v1759, %v3790
    %v3832 = vmul.f32 %v1763, %v3790
    %v3833 = vmul.f32 %v1767, %v3790
    %v3834 = vmul.f32 %v1771, %v3790
    %v3835 = vmul.f32 %v1775, %v3790
    %v3836 = vmul.f32 %v1779, %v3790
    %v3837 = vmul.f32 %v1783, %v3790
    %v3838 = vmul.f32 %v1787, %v3790
    %v3887 = vrot.slane %v3791, 1
    %v3888 = vrot.slane %v3792, 1
    %v3889 = vsel %vm2561, %v3887, %v3888
    %v3890 = vrot.slane %v3793, 1
    %v3891 = vrot.slane %v3794, 1
    %v3892 = vsel %vm2561, %v3890, %v3891
    %v3893 = vrot.slane %v3795, 1
    %v3894 = vrot.slane %v3796, 1
    %v3895 = vsel %vm2561, %v3893, %v3894
    %v3896 = vrot.slane %v3797, 1
    %v3897 = vrot.slane %v3798, 1
    %v3898 = vsel %vm2561, %v3896, %v3897
    %v3899 = vrot.slane %v3799, 1
    %v3900 = vrot.slane %v3800, 1
    %v3901 = vsel %vm2561, %v3899, %v3900
    %v3902 = vrot.slane %v3801, 1
    %v3903 = vrot.slane %v3802, 1
    %v3904 = vsel %vm2561, %v3902, %v3903
    %v3905 = vrot.slane %v3803, 1
    %v3906 = vrot.slane %v3804, 1
    %v3907 = vsel %vm2561, %v3905, %v3906
    %v3908 = vrot.slane %v3805, 1
    %v3909 = vrot.slane %v3806, 1
    %v3910 = vsel %vm2561, %v3908, %v3909
    %v3911 = vrot.slane %v3807, 1
    %v3912 = vrot.slane %v3808, 1
    %v3913 = vsel %vm2561, %v3911, %v3912
    %v3914 = vrot.slane %v3809, 1
    %v3915 = vrot.slane %v3810, 1
    %v3916 = vsel %vm2561, %v3914, %v3915
    %v3917 = vrot.slane %v3811, 1
    %v3918 = vrot.slane %v3812, 1
    %v3919 = vsel %vm2561, %v3917, %v3918
    %v3920 = vrot.slane %v3813, 1
    %v3921 = vrot.slane %v3814, 1
    %v3922 = vsel %vm2561, %v3920, %v3921
    %v3923 = vrot.slane %v3815, 1
    %v3924 = vrot.slane %v3816, 1
    %v3925 = vsel %vm2561, %v3923, %v3924
    %v3926 = vrot.slane %v3817, 1
    %v3927 = vrot.slane %v3818, 1
    %v3928 = vsel %vm2561, %v3926, %v3927
    %v3929 = vrot.slane %v3819, 1
    %v3930 = vrot.slane %v3820, 1
    %v3931 = vsel %vm2561, %v3929, %v3930
    %v3932 = vrot.slane %v3821, 1
    %v3933 = vrot.slane %v3822, 1
    %v3934 = vsel %vm2561, %v3932, %v3933
    %v3935 = vrot.slane %v3823, 1
    %v3936 = vrot.slane %v3824, 1
    %v3937 = vsel %vm2561, %v3935, %v3936
    %v3938 = vrot.slane %v3825, 1
    %v3939 = vrot.slane %v3826, 1
    %v3940 = vsel %vm2561, %v3938, %v3939
    %v3941 = vrot.slane %v3827, 1
    %v3942 = vrot.slane %v3828, 1
    %v3943 = vsel %vm2561, %v3941, %v3942
    %v3944 = vrot.slane %v3829, 1
    %v3945 = vrot.slane %v3830, 1
    %v3946 = vsel %vm2561, %v3944, %v3945
    %v3947 = vrot.slane %v3831, 1
    %v3948 = vrot.slane %v3832, 1
    %v3949 = vsel %vm2561, %v3947, %v3948
    %v3950 = vrot.slane %v3833, 1
    %v3951 = vrot.slane %v3834, 1
    %v3952 = vsel %vm2561, %v3950, %v3951
    %v3953 = vrot.slane %v3835, 1
    %v3954 = vrot.slane %v3836, 1
    %v3955 = vsel %vm2561, %v3953, %v3954
    %v3956 = vrot.slane %v3837, 1
    %v3957 = vrot.slane %v3838, 1
    %v3958 = vsel %vm2561, %v3956, %v3957
    %v4007 = vadd.f32 %v3742, %v3889
    %v4008 = vadd.f32 %v3743, %v3888
    %v4009 = vadd.f32 %v3744, %v3892
    %v4010 = vadd.f32 %v3745, %v3891
    %v4011 = vadd.f32 %v3746, %v3895
    %v4012 = vadd.f32 %v3747, %v3894
    %v4013 = vadd.f32 %v3748, %v3898
    %v4014 = vadd.f32 %v3749, %v3897
    %v4015 = vadd.f32 %v3750, %v3901
    %v4016 = vadd.f32 %v3751, %v3900
    %v4017 = vadd.f32 %v3752, %v3904
    %v4018 = vadd.f32 %v3753, %v3903
    %v4019 = vadd.f32 %v3754, %v3907
    %v4020 = vadd.f32 %v3755, %v3906
    %v4021 = vadd.f32 %v3756, %v3910
    %v4022 = vadd.f32 %v3757, %v3909
    %v4023 = vadd.f32 %v3758, %v3913
    %v4024 = vadd.f32 %v3759, %v3912
    %v4025 = vadd.f32 %v3760, %v3916
    %v4026 = vadd.f32 %v3761, %v3915
    %v4027 = vadd.f32 %v3762, %v3919
    %v4028 = vadd.f32 %v3763, %v3918
    %v4029 = vadd.f32 %v3764, %v3922
    %v4030 = vadd.f32 %v3765, %v3921
    %v4031 = vadd.f32 %v3766, %v3925
    %v4032 = vadd.f32 %v3767, %v3924
    %v4033 = vadd.f32 %v3768, %v3928
    %v4034 = vadd.f32 %v3769, %v3927
    %v4035 = vadd.f32 %v3770, %v3931
    %v4036 = vadd.f32 %v3771, %v3930
    %v4037 = vadd.f32 %v3772, %v3934
    %v4038 = vadd.f32 %v3773, %v3933
    %v4039 = vadd.f32 %v3774, %v3937
    %v4040 = vadd.f32 %v3775, %v3936
    %v4041 = vadd.f32 %v3776, %v3940
    %v4042 = vadd.f32 %v3777, %v3939
    %v4043 = vadd.f32 %v3778, %v3943
    %v4044 = vadd.f32 %v3779, %v3942
    %v4045 = vadd.f32 %v3780, %v3946
    %v4046 = vadd.f32 %v3781, %v3945
    %v4047 = vadd.f32 %v3782, %v3949
    %v4048 = vadd.f32 %v3783, %v3948
    %v4049 = vadd.f32 %v3784, %v3952
    %v4050 = vadd.f32 %v3785, %v3951
    %v4051 = vadd.f32 %v3786, %v3955
    %v4052 = vadd.f32 %v3787, %v3954
    %v4053 = vadd.f32 %v3788, %v3958
    %v4054 = vadd.f32 %v3789, %v3957
    %v4055 = vperm.slane %v73, 6
    %v4056 = vmul.f32 %v1888, %v4055
    %v4057 = vmul.f32 %v1892, %v4055
    %v4058 = vmul.f32 %v1896, %v4055
    %v4059 = vmul.f32 %v1900, %v4055
    %v4060 = vmul.f32 %v1904, %v4055
    %v4061 = vmul.f32 %v1908, %v4055
    %v4062 = vmul.f32 %v1912, %v4055
    %v4063 = vmul.f32 %v1916, %v4055
    %v4064 = vmul.f32 %v1920, %v4055
    %v4065 = vmul.f32 %v1924, %v4055
    %v4066 = vmul.f32 %v1928, %v4055
    %v4067 = vmul.f32 %v1932, %v4055
    %v4068 = vmul.f32 %v1936, %v4055
    %v4069 = vmul.f32 %v1940, %v4055
    %v4070 = vmul.f32 %v1944, %v4055
    %v4071 = vmul.f32 %v1948, %v4055
    %v4072 = vmul.f32 %v1952, %v4055
    %v4073 = vmul.f32 %v1956, %v4055
    %v4074 = vmul.f32 %v1960, %v4055
    %v4075 = vmul.f32 %v1964, %v4055
    %v4076 = vmul.f32 %v1968, %v4055
    %v4077 = vmul.f32 %v1972, %v4055
    %v4078 = vmul.f32 %v1976, %v4055
    %v4079 = vmul.f32 %v1980, %v4055
    %v4080 = vmul.f32 %v1984, %v4055
    %v4081 = vmul.f32 %v1988, %v4055
    %v4082 = vmul.f32 %v1992, %v4055
    %v4083 = vmul.f32 %v1996, %v4055
    %v4084 = vmul.f32 %v2000, %v4055
    %v4085 = vmul.f32 %v2004, %v4055
    %v4086 = vmul.f32 %v2008, %v4055
    %v4087 = vmul.f32 %v2012, %v4055
    %v4088 = vmul.f32 %v2016, %v4055
    %v4089 = vmul.f32 %v2020, %v4055
    %v4090 = vmul.f32 %v2024, %v4055
    %v4091 = vmul.f32 %v2028, %v4055
    %v4092 = vmul.f32 %v2032, %v4055
    %v4093 = vmul.f32 %v2036, %v4055
    %v4094 = vmul.f32 %v2040, %v4055
    %v4095 = vmul.f32 %v2044, %v4055
    %v4096 = vmul.f32 %v2048, %v4055
    %v4097 = vmul.f32 %v2052, %v4055
    %v4098 = vmul.f32 %v2056, %v4055
    %v4099 = vmul.f32 %v2060, %v4055
    %v4100 = vmul.f32 %v2064, %v4055
    %v4101 = vmul.f32 %v2068, %v4055
    %v4102 = vmul.f32 %v2072, %v4055
    %v4103 = vmul.f32 %v2076, %v4055
    %v4152 = vrot.slane %v4056, 1
    %v4153 = vrot.slane %v4057, 1
    %v4154 = vsel %vm2561, %v4152, %v4153
    %v4155 = vrot.slane %v4058, 1
    %v4156 = vrot.slane %v4059, 1
    %v4157 = vsel %vm2561, %v4155, %v4156
    %v4158 = vrot.slane %v4060, 1
    %v4159 = vrot.slane %v4061, 1
    %v4160 = vsel %vm2561, %v4158, %v4159
    %v4161 = vrot.slane %v4062, 1
    %v4162 = vrot.slane %v4063, 1
    %v4163 = vsel %vm2561, %v4161, %v4162
    %v4164 = vrot.slane %v4064, 1
    %v4165 = vrot.slane %v4065, 1
    %v4166 = vsel %vm2561, %v4164, %v4165
    %v4167 = vrot.slane %v4066, 1
    %v4168 = vrot.slane %v4067, 1
    %v4169 = vsel %vm2561, %v4167, %v4168
    %v4170 = vrot.slane %v4068, 1
    %v4171 = vrot.slane %v4069, 1
    %v4172 = vsel %vm2561, %v4170, %v4171
    %v4173 = vrot.slane %v4070, 1
    %v4174 = vrot.slane %v4071, 1
    %v4175 = vsel %vm2561, %v4173, %v4174
    %v4176 = vrot.slane %v4072, 1
    %v4177 = vrot.slane %v4073, 1
    %v4178 = vsel %vm2561, %v4176, %v4177
    %v4179 = vrot.slane %v4074, 1
    %v4180 = vrot.slane %v4075, 1
    %v4181 = vsel %vm2561, %v4179, %v4180
    %v4182 = vrot.slane %v4076, 1
    %v4183 = vrot.slane %v4077, 1
    %v4184 = vsel %vm2561, %v4182, %v4183
    %v4185 = vrot.slane %v4078, 1
    %v4186 = vrot.slane %v4079, 1
    %v4187 = vsel %vm2561, %v4185, %v4186
    %v4188 = vrot.slane %v4080, 1
    %v4189 = vrot.slane %v4081, 1
    %v4190 = vsel %vm2561, %v4188, %v4189
    %v4191 = vrot.slane %v4082, 1
    %v4192 = vrot.slane %v4083, 1
    %v4193 = vsel %vm2561, %v4191, %v4192
    %v4194 = vrot.slane %v4084, 1
    %v4195 = vrot.slane %v4085, 1
    %v4196 = vsel %vm2561, %v4194, %v4195
    %v4197 = vrot.slane %v4086, 1
    %v4198 = vrot.slane %v4087, 1
    %v4199 = vsel %vm2561, %v4197, %v4198
    %v4200 = vrot.slane %v4088, 1
    %v4201 = vrot.slane %v4089, 1
    %v4202 = vsel %vm2561, %v4200, %v4201
    %v4203 = vrot.slane %v4090, 1
    %v4204 = vrot.slane %v4091, 1
    %v4205 = vsel %vm2561, %v4203, %v4204
    %v4206 = vrot.slane %v4092, 1
    %v4207 = vrot.slane %v4093, 1
    %v4208 = vsel %vm2561, %v4206, %v4207
    %v4209 = vrot.slane %v4094, 1
    %v4210 = vrot.slane %v4095, 1
    %v4211 = vsel %vm2561, %v4209, %v4210
    %v4212 = vrot.slane %v4096, 1
    %v4213 = vrot.slane %v4097, 1
    %v4214 = vsel %vm2561, %v4212, %v4213
    %v4215 = vrot.slane %v4098, 1
    %v4216 = vrot.slane %v4099, 1
    %v4217 = vsel %vm2561, %v4215, %v4216
    %v4218 = vrot.slane %v4100, 1
    %v4219 = vrot.slane %v4101, 1
    %v4220 = vsel %vm2561, %v4218, %v4219
    %v4221 = vrot.slane %v4102, 1
    %v4222 = vrot.slane %v4103, 1
    %v4223 = vsel %vm2561, %v4221, %v4222
    %v4272 = vadd.f32 %v4007, %v4154
    %v4273 = vadd.f32 %v4008, %v4153
    %v4274 = vadd.f32 %v4009, %v4157
    %v4275 = vadd.f32 %v4010, %v4156
    %v4276 = vadd.f32 %v4011, %v4160
    %v4277 = vadd.f32 %v4012, %v4159
    %v4278 = vadd.f32 %v4013, %v4163
    %v4279 = vadd.f32 %v4014, %v4162
    %v4280 = vadd.f32 %v4015, %v4166
    %v4281 = vadd.f32 %v4016, %v4165
    %v4282 = vadd.f32 %v4017, %v4169
    %v4283 = vadd.f32 %v4018, %v4168
    %v4284 = vadd.f32 %v4019, %v4172
    %v4285 = vadd.f32 %v4020, %v4171
    %v4286 = vadd.f32 %v4021, %v4175
    %v4287 = vadd.f32 %v4022, %v4174
    %v4288 = vadd.f32 %v4023, %v4178
    %v4289 = vadd.f32 %v4024, %v4177
    %v4290 = vadd.f32 %v4025, %v4181
    %v4291 = vadd.f32 %v4026, %v4180
    %v4292 = vadd.f32 %v4027, %v4184
    %v4293 = vadd.f32 %v4028, %v4183
    %v4294 = vadd.f32 %v4029, %v4187
    %v4295 = vadd.f32 %v4030, %v4186
    %v4296 = vadd.f32 %v4031, %v4190
    %v4297 = vadd.f32 %v4032, %v4189
    %v4298 = vadd.f32 %v4033, %v4193
    %v4299 = vadd.f32 %v4034, %v4192
    %v4300 = vadd.f32 %v4035, %v4196
    %v4301 = vadd.f32 %v4036, %v4195
    %v4302 = vadd.f32 %v4037, %v4199
    %v4303 = vadd.f32 %v4038, %v4198
    %v4304 = vadd.f32 %v4039, %v4202
    %v4305 = vadd.f32 %v4040, %v4201
    %v4306 = vadd.f32 %v4041, %v4205
    %v4307 = vadd.f32 %v4042, %v4204
    %v4308 = vadd.f32 %v4043, %v4208
    %v4309 = vadd.f32 %v4044, %v4207
    %v4310 = vadd.f32 %v4045, %v4211
    %v4311 = vadd.f32 %v4046, %v4210
    %v4312 = vadd.f32 %v4047, %v4214
    %v4313 = vadd.f32 %v4048, %v4213
    %v4314 = vadd.f32 %v4049, %v4217
    %v4315 = vadd.f32 %v4050, %v4216
    %v4316 = vadd.f32 %v4051, %v4220
    %v4317 = vadd.f32 %v4052, %v4219
    %v4318 = vadd.f32 %v4053, %v4223
    %v4319 = vadd.f32 %v4054, %v4222
    %v4320 = vperm.slane %v73, 7
    %v4321 = vmul.f32 %v2177, %v4320
    %v4322 = vmul.f32 %v2181, %v4320
    %v4323 = vmul.f32 %v2185, %v4320
    %v4324 = vmul.f32 %v2189, %v4320
    %v4325 = vmul.f32 %v2193, %v4320
    %v4326 = vmul.f32 %v2197, %v4320
    %v4327 = vmul.f32 %v2201, %v4320
    %v4328 = vmul.f32 %v2205, %v4320
    %v4329 = vmul.f32 %v2209, %v4320
    %v4330 = vmul.f32 %v2213, %v4320
    %v4331 = vmul.f32 %v2217, %v4320
    %v4332 = vmul.f32 %v2221, %v4320
    %v4333 = vmul.f32 %v2225, %v4320
    %v4334 = vmul.f32 %v2229, %v4320
    %v4335 = vmul.f32 %v2233, %v4320
    %v4336 = vmul.f32 %v2237, %v4320
    %v4337 = vmul.f32 %v2241, %v4320
    %v4338 = vmul.f32 %v2245, %v4320
    %v4339 = vmul.f32 %v2249, %v4320
    %v4340 = vmul.f32 %v2253, %v4320
    %v4341 = vmul.f32 %v2257, %v4320
    %v4342 = vmul.f32 %v2261, %v4320
    %v4343 = vmul.f32 %v2265, %v4320
    %v4344 = vmul.f32 %v2269, %v4320
    %v4345 = vmul.f32 %v2273, %v4320
    %v4346 = vmul.f32 %v2277, %v4320
    %v4347 = vmul.f32 %v2281, %v4320
    %v4348 = vmul.f32 %v2285, %v4320
    %v4349 = vmul.f32 %v2289, %v4320
    %v4350 = vmul.f32 %v2293, %v4320
    %v4351 = vmul.f32 %v2297, %v4320
    %v4352 = vmul.f32 %v2301, %v4320
    %v4353 = vmul.f32 %v2305, %v4320
    %v4354 = vmul.f32 %v2309, %v4320
    %v4355 = vmul.f32 %v2313, %v4320
    %v4356 = vmul.f32 %v2317, %v4320
    %v4357 = vmul.f32 %v2321, %v4320
    %v4358 = vmul.f32 %v2325, %v4320
    %v4359 = vmul.f32 %v2329, %v4320
    %v4360 = vmul.f32 %v2333, %v4320
    %v4361 = vmul.f32 %v2337, %v4320
    %v4362 = vmul.f32 %v2341, %v4320
    %v4363 = vmul.f32 %v2345, %v4320
    %v4364 = vmul.f32 %v2349, %v4320
    %v4365 = vmul.f32 %v2353, %v4320
    %v4366 = vmul.f32 %v2357, %v4320
    %v4367 = vmul.f32 %v2361, %v4320
    %v4368 = vmul.f32 %v2365, %v4320
    %v4417 = vrot.slane %v4321, 1
    %v4418 = vrot.slane %v4322, 1
    %v4419 = vsel %vm2561, %v4417, %v4418
    %v4420 = vrot.slane %v4323, 1
    %v4421 = vrot.slane %v4324, 1
    %v4422 = vsel %vm2561, %v4420, %v4421
    %v4423 = vrot.slane %v4325, 1
    %v4424 = vrot.slane %v4326, 1
    %v4425 = vsel %vm2561, %v4423, %v4424
    %v4426 = vrot.slane %v4327, 1
    %v4427 = vrot.slane %v4328, 1
    %v4428 = vsel %vm2561, %v4426, %v4427
    %v4429 = vrot.slane %v4329, 1
    %v4430 = vrot.slane %v4330, 1
    %v4431 = vsel %vm2561, %v4429, %v4430
    %v4432 = vrot.slane %v4331, 1
    %v4433 = vrot.slane %v4332, 1
    %v4434 = vsel %vm2561, %v4432, %v4433
    %v4435 = vrot.slane %v4333, 1
    %v4436 = vrot.slane %v4334, 1
    %v4437 = vsel %vm2561, %v4435, %v4436
    %v4438 = vrot.slane %v4335, 1
    %v4439 = vrot.slane %v4336, 1
    %v4440 = vsel %vm2561, %v4438, %v4439
    %v4441 = vrot.slane %v4337, 1
    %v4442 = vrot.slane %v4338, 1
    %v4443 = vsel %vm2561, %v4441, %v4442
    %v4444 = vrot.slane %v4339, 1
    %v4445 = vrot.slane %v4340, 1
    %v4446 = vsel %vm2561, %v4444, %v4445
    %v4447 = vrot.slane %v4341, 1
    %v4448 = vrot.slane %v4342, 1
    %v4449 = vsel %vm2561, %v4447, %v4448
    %v4450 = vrot.slane %v4343, 1
    %v4451 = vrot.slane %v4344, 1
    %v4452 = vsel %vm2561, %v4450, %v4451
    %v4453 = vrot.slane %v4345, 1
    %v4454 = vrot.slane %v4346, 1
    %v4455 = vsel %vm2561, %v4453, %v4454
    %v4456 = vrot.slane %v4347, 1
    %v4457 = vrot.slane %v4348, 1
    %v4458 = vsel %vm2561, %v4456, %v4457
    %v4459 = vrot.slane %v4349, 1
    %v4460 = vrot.slane %v4350, 1
    %v4461 = vsel %vm2561, %v4459, %v4460
    %v4462 = vrot.slane %v4351, 1
    %v4463 = vrot.slane %v4352, 1
    %v4464 = vsel %vm2561, %v4462, %v4463
    %v4465 = vrot.slane %v4353, 1
    %v4466 = vrot.slane %v4354, 1
    %v4467 = vsel %vm2561, %v4465, %v4466
    %v4468 = vrot.slane %v4355, 1
    %v4469 = vrot.slane %v4356, 1
    %v4470 = vsel %vm2561, %v4468, %v4469
    %v4471 = vrot.slane %v4357, 1
    %v4472 = vrot.slane %v4358, 1
    %v4473 = vsel %vm2561, %v4471, %v4472
    %v4474 = vrot.slane %v4359, 1
    %v4475 = vrot.slane %v4360, 1
    %v4476 = vsel %vm2561, %v4474, %v4475
    %v4477 = vrot.slane %v4361, 1
    %v4478 = vrot.slane %v4362, 1
    %v4479 = vsel %vm2561, %v4477, %v4478
    %v4480 = vrot.slane %v4363, 1
    %v4481 = vrot.slane %v4364, 1
    %v4482 = vsel %vm2561, %v4480, %v4481
    %v4483 = vrot.slane %v4365, 1
    %v4484 = vrot.slane %v4366, 1
    %v4485 = vsel %vm2561, %v4483, %v4484
    %v4486 = vrot.slane %v4367, 1
    %v4487 = vrot.slane %v4368, 1
    %v4488 = vsel %vm2561, %v4486, %v4487
    %v4537 = vadd.f32 %v4272, %v4419
    %v4538 = vadd.f32 %v4273, %v4418
    %v4539 = vadd.f32 %v4274, %v4422
    %v4540 = vadd.f32 %v4275, %v4421
    %v4541 = vadd.f32 %v4276, %v4425
    %v4542 = vadd.f32 %v4277, %v4424
    %v4543 = vadd.f32 %v4278, %v4428
    %v4544 = vadd.f32 %v4279, %v4427
    %v4545 = vadd.f32 %v4280, %v4431
    %v4546 = vadd.f32 %v4281, %v4430
    %v4547 = vadd.f32 %v4282, %v4434
    %v4548 = vadd.f32 %v4283, %v4433
    %v4549 = vadd.f32 %v4284, %v4437
    %v4550 = vadd.f32 %v4285, %v4436
    %v4551 = vadd.f32 %v4286, %v4440
    %v4552 = vadd.f32 %v4287, %v4439
    %v4553 = vadd.f32 %v4288, %v4443
    %v4554 = vadd.f32 %v4289, %v4442
    %v4555 = vadd.f32 %v4290, %v4446
    %v4556 = vadd.f32 %v4291, %v4445
    %v4557 = vadd.f32 %v4292, %v4449
    %v4558 = vadd.f32 %v4293, %v4448
    %v4559 = vadd.f32 %v4294, %v4452
    %v4560 = vadd.f32 %v4295, %v4451
    %v4561 = vadd.f32 %v4296, %v4455
    %v4562 = vadd.f32 %v4297, %v4454
    %v4563 = vadd.f32 %v4298, %v4458
    %v4564 = vadd.f32 %v4299, %v4457
    %v4565 = vadd.f32 %v4300, %v4461
    %v4566 = vadd.f32 %v4301, %v4460
    %v4567 = vadd.f32 %v4302, %v4464
    %v4568 = vadd.f32 %v4303, %v4463
    %v4569 = vadd.f32 %v4304, %v4467
    %v4570 = vadd.f32 %v4305, %v4466
    %v4571 = vadd.f32 %v4306, %v4470
    %v4572 = vadd.f32 %v4307, %v4469
    %v4573 = vadd.f32 %v4308, %v4473
    %v4574 = vadd.f32 %v4309, %v4472
    %v4575 = vadd.f32 %v4310, %v4476
    %v4576 = vadd.f32 %v4311, %v4475
    %v4577 = vadd.f32 %v4312, %v4479
    %v4578 = vadd.f32 %v4313, %v4478
    %v4579 = vadd.f32 %v4314, %v4482
    %v4580 = vadd.f32 %v4315, %v4481
    %v4581 = vadd.f32 %v4316, %v4485
    %v4582 = vadd.f32 %v4317, %v4484
    %v4583 = vadd.f32 %v4318, %v4488
    %v4584 = vadd.f32 %v4319, %v4487
    %v4586 = vperm.slane %v78, 0
    %v4588 = vadd.f32 %v4537, %v4586
    %v4589 = vadd.f32 %v4538, %v4586
    %v4590 = vadd.f32 %v4539, %v4586
    %v4591 = vadd.f32 %v4540, %v4586
    %v4592 = vadd.f32 %v4541, %v4586
    %v4593 = vadd.f32 %v4542, %v4586
    %v4594 = vadd.f32 %v4543, %v4586
    %v4595 = vadd.f32 %v4544, %v4586
    %v4596 = vadd.f32 %v4545, %v4586
    %v4597 = vadd.f32 %v4546, %v4586
    %v4598 = vadd.f32 %v4547, %v4586
    %v4599 = vadd.f32 %v4548, %v4586
    %v4600 = vadd.f32 %v4549, %v4586
    %v4601 = vadd.f32 %v4550, %v4586
    %v4602 = vadd.f32 %v4551, %v4586
    %v4603 = vadd.f32 %v4552, %v4586
    %v4604 = vadd.f32 %v4553, %v4586
    %v4605 = vadd.f32 %v4554, %v4586
    %v4606 = vadd.f32 %v4555, %v4586
    %v4607 = vadd.f32 %v4556, %v4586
    %v4608 = vadd.f32 %v4557, %v4586
    %v4609 = vadd.f32 %v4558, %v4586
    %v4610 = vadd.f32 %v4559, %v4586
    %v4611 = vadd.f32 %v4560, %v4586
    %v4612 = vadd.f32 %v4561, %v4586
    %v4613 = vadd.f32 %v4562, %v4586
    %v4614 = vadd.f32 %v4563, %v4586
    %v4615 = vadd.f32 %v4564, %v4586
    %v4616 = vadd.f32 %v4565, %v4586
    %v4617 = vadd.f32 %v4566, %v4586
    %v4618 = vadd.f32 %v4567, %v4586
    %v4619 = vadd.f32 %v4568, %v4586
    %v4620 = vadd.f32 %v4569, %v4586
    %v4621 = vadd.f32 %v4570, %v4586
    %v4622 = vadd.f32 %v4571, %v4586
    %v4623 = vadd.f32 %v4572, %v4586
    %v4624 = vadd.f32 %v4573, %v4586
    %v4625 = vadd.f32 %v4574, %v4586
    %v4626 = vadd.f32 %v4575, %v4586
    %v4627 = vadd.f32 %v4576, %v4586
    %v4628 = vadd.f32 %v4577, %v4586
    %v4629 = vadd.f32 %v4578, %v4586
    %v4630 = vadd.f32 %v4579, %v4586
    %v4631 = vadd.f32 %v4580, %v4586
    %v4632 = vadd.f32 %v4581, %v4586
    %v4633 = vadd.f32 %v4582, %v4586
    %v4634 = vadd.f32 %v4583, %v4586
    %v4635 = vadd.f32 %v4584, %v4586
    %v4636 = vmax.f32 %v4588, 0.0
    %v4637 = vmax.f32 %v4589, 0.0
    %v4638 = vmax.f32 %v4590, 0.0
    %v4639 = vmax.f32 %v4591, 0.0
    %v4640 = vmax.f32 %v4592, 0.0
    %v4641 = vmax.f32 %v4593, 0.0
    %v4642 = vmax.f32 %v4594, 0.0
    %v4643 = vmax.f32 %v4595, 0.0
    %v4644 = vmax.f32 %v4596, 0.0
    %v4645 = vmax.f32 %v4597, 0.0
    %v4646 = vmax.f32 %v4598, 0.0
    %v4647 = vmax.f32 %v4599, 0.0
    %v4648 = vmax.f32 %v4600, 0.0
    %v4649 = vmax.f32 %v4601, 0.0
    %v4650 = vmax.f32 %v4602, 0.0
    %v4651 = vmax.f32 %v4603, 0.0
    %v4652 = vmax.f32 %v4604, 0.0
    %v4653 = vmax.f32 %v4605, 0.0
    %v4654 = vmax.f32 %v4606, 0.0
    %v4655 = vmax.f32 %v4607, 0.0
    %v4656 = vmax.f32 %v4608, 0.0
    %v4657 = vmax.f32 %v4609, 0.0
    %v4658 = vmax.f32 %v4610, 0.0
    %v4659 = vmax.f32 %v4611, 0.0
    %v4660 = vmax.f32 %v4612, 0.0
    %v4661 = vmax.f32 %v4613, 0.0
    %v4662 = vmax.f32 %v4614, 0.0
    %v4663 = vmax.f32 %v4615, 0.0
    %v4664 = vmax.f32 %v4616, 0.0
    %v4665 = vmax.f32 %v4617, 0.0
    %v4666 = vmax.f32 %v4618, 0.0
    %v4667 = vmax.f32 %v4619, 0.0
    %v4668 = vmax.f32 %v4620, 0.0
    %v4669 = vmax.f32 %v4621, 0.0
    %v4670 = vmax.f32 %v4622, 0.0
    %v4671 = vmax.f32 %v4623, 0.0
    %v4672 = vmax.f32 %v4624, 0.0
    %v4673 = vmax.f32 %v4625, 0.0
    %v4674 = vmax.f32 %v4626, 0.0
    %v4675 = vmax.f32 %v4627, 0.0
    %v4676 = vmax.f32 %v4628, 0.0
    %v4677 = vmax.f32 %v4629, 0.0
    %v4678 = vmax.f32 %v4630, 0.0
    %v4679 = vmax.f32 %v4631, 0.0
    %v4680 = vmax.f32 %v4632, 0.0
    %v4681 = vmax.f32 %v4633, 0.0
    %v4682 = vmax.f32 %v4634, 0.0
    %v4683 = vmax.f32 %v4635, 0.0
    %4685 = vset.pattern.permute.xlu0 0
    %4686 = vperm.xlu0 %4685, %v80
    %v4687 = vpop.permute.xlu0 %4686
    %4690 = vset.pattern.permute.xlu0 0
    %4691 = vperm.xlu0 %4690, %v81
    %v4692 = vpop.permute.xlu0 %4691
    %4695 = vset.pattern.permute.xlu0 0
    %4696 = vperm.xlu0 %4695, %v82
    %v4697 = vpop.permute.xlu0 %4696
    %4700 = vset.pattern.permute.xlu0 0
    %4701 = vperm.xlu0 %4700, %v83
    %v4702 = vpop.permute.xlu0 %4701
    %4705 = vset.pattern.permute.xlu0 0
    %4706 = vperm.xlu0 %4705, %v84
    %v4707 = vpop.permute.xlu0 %4706
    %4710 = vset.pattern.permute.xlu0 0
    %4711 = vperm.xlu0 %4710, %v85
    %v4712 = vpop.permute.xlu0 %4711
    %4715 = vset.pattern.permute.xlu0 0
    %4716 = vperm.xlu0 %4715, %v86
    %v4717 = vpop.permute.xlu0 %4716
    %4720 = vset.pattern.permute.xlu0 0
    %4721 = vperm.xlu0 %4720, %v87
    %v4722 = vpop.permute.xlu0 %4721
    %4725 = vset.pattern.permute.xlu0 0
    %4726 = vperm.xlu0 %4725, %v88
    %v4727 = vpop.permute.xlu0 %4726
    %4730 = vset.pattern.permute.xlu0 0
    %4731 = vperm.xlu0 %4730, %v89
    %v4732 = vpop.permute.xlu0 %4731
    %4735 = vset.pattern.permute.xlu0 0
    %4736 = vperm.xlu0 %4735, %v90
    %v4737 = vpop.permute.xlu0 %4736
    %4740 = vset.pattern.permute.xlu0 0
    %4741 = vperm.xlu0 %4740, %v91
    %v4742 = vpop.permute.xlu0 %4741
    %4745 = vset.pattern.permute.xlu0 0
    %4746 = vperm.xlu0 %4745, %v92
    %v4747 = vpop.permute.xlu0 %4746
    %4750 = vset.pattern.permute.xlu0 0
    %4751 = vperm.xlu0 %4750, %v93
    %v4752 = vpop.permute.xlu0 %4751
    %4755 = vset.pattern.permute.xlu0 0
    %4756 = vperm.xlu0 %4755, %v94
    %v4757 = vpop.permute.xlu0 %4756
    %4760 = vset.pattern.permute.xlu0 0
    %4761 = vperm.xlu0 %4760, %v95
    %v4762 = vpop.permute.xlu0 %4761
    %4765 = vset.pattern.permute.xlu0 0
    %4766 = vperm.xlu0 %4765, %v96
    %v4767 = vpop.permute.xlu0 %4766
    %4770 = vset.pattern.permute.xlu0 0
    %4771 = vperm.xlu0 %4770, %v97
    %v4772 = vpop.permute.xlu0 %4771
    %4775 = vset.pattern.permute.xlu0 0
    %4776 = vperm.xlu0 %4775, %v98
    %v4777 = vpop.permute.xlu0 %4776
    %4780 = vset.pattern.permute.xlu0 0
    %4781 = vperm.xlu0 %4780, %v99
    %v4782 = vpop.permute.xlu0 %4781
    %4785 = vset.pattern.permute.xlu0 0
    %4786 = vperm.xlu0 %4785, %v100
    %v4787 = vpop.permute.xlu0 %4786
    %4790 = vset.pattern.permute.xlu0 0
    %4791 = vperm.xlu0 %4790, %v101
    %v4792 = vpop.permute.xlu0 %4791
    %4795 = vset.pattern.permute.xlu0 0
    %4796 = vperm.xlu0 %4795, %v102
    %v4797 = vpop.permute.xlu0 %4796
    %4800 = vset.pattern.permute.xlu0 0
    %4801 = vperm.xlu0 %4800, %v103
    %v4802 = vpop.permute.xlu0 %4801
    %v4804 = vmul.f32 %v4636, %v4687
    %v4805 = vmul.f32 %v4637, %v4692
    %v4806 = vmul.f32 %v4638, %v4697
    %v4807 = vmul.f32 %v4639, %v4702
    %v4808 = vmul.f32 %v4640, %v4707
    %v4809 = vmul.f32 %v4641, %v4712
    %v4810 = vmul.f32 %v4642, %v4717
    %v4811 = vmul.f32 %v4643, %v4722
    %v4812 = vmul.f32 %v4644, %v4727
    %v4813 = vmul.f32 %v4645, %v4732
    %v4814 = vmul.f32 %v4646, %v4737
    %v4815 = vmul.f32 %v4647, %v4742
    %v4816 = vmul.f32 %v4648, %v4747
    %v4817 = vmul.f32 %v4649, %v4752
    %v4818 = vmul.f32 %v4650, %v4757
    %v4819 = vmul.f32 %v4651, %v4762
    %v4820 = vmul.f32 %v4652, %v4767
    %v4821 = vmul.f32 %v4653, %v4772
    %v4822 = vmul.f32 %v4654, %v4777
    %v4823 = vmul.f32 %v4655, %v4782
    %v4824 = vmul.f32 %v4656, %v4787
    %v4825 = vmul.f32 %v4657, %v4792
    %v4826 = vmul.f32 %v4658, %v4797
    %v4827 = vmul.f32 %v4659, %v4802
    %v4828 = vmul.f32 %v4660, %v4687
    %v4829 = vmul.f32 %v4661, %v4692
    %v4830 = vmul.f32 %v4662, %v4697
    %v4831 = vmul.f32 %v4663, %v4702
    %v4832 = vmul.f32 %v4664, %v4707
    %v4833 = vmul.f32 %v4665, %v4712
    %v4834 = vmul.f32 %v4666, %v4717
    %v4835 = vmul.f32 %v4667, %v4722
    %v4836 = vmul.f32 %v4668, %v4727
    %v4837 = vmul.f32 %v4669, %v4732
    %v4838 = vmul.f32 %v4670, %v4737
    %v4839 = vmul.f32 %v4671, %v4742
    %v4840 = vmul.f32 %v4672, %v4747
    %v4841 = vmul.f32 %v4673, %v4752
    %v4842 = vmul.f32 %v4674, %v4757
    %v4843 = vmul.f32 %v4675, %v4762
    %v4844 = vmul.f32 %v4676, %v4767
    %v4845 = vmul.f32 %v4677, %v4772
    %v4846 = vmul.f32 %v4678, %v4777
    %v4847 = vmul.f32 %v4679, %v4782
    %v4848 = vmul.f32 %v4680, %v4787
    %v4849 = vmul.f32 %v4681, %v4792
    %v4850 = vmul.f32 %v4682, %v4797
    %v4851 = vmul.f32 %v4683, %v4802
    %4853 = vset.pattern.permute.xlu0 0
    %4854 = vperm.xlu0 %4853, %v4804
    %v4855 = vpop.permute.xlu0 %4854
    %4858 = vset.pattern.permute.xlu0 0
    %4859 = vperm.xlu0 %4858, %v4805
    %v4860 = vpop.permute.xlu0 %4859
    %4863 = vset.pattern.permute.xlu0 0
    %4864 = vperm.xlu0 %4863, %v4806
    %v4865 = vpop.permute.xlu0 %4864
    %4868 = vset.pattern.permute.xlu0 0
    %4869 = vperm.xlu0 %4868, %v4807
    %v4870 = vpop.permute.xlu0 %4869
    %4873 = vset.pattern.permute.xlu0 0
    %4874 = vperm.xlu0 %4873, %v4808
    %v4875 = vpop.permute.xlu0 %4874
    %4878 = vset.pattern.permute.xlu0 0
    %4879 = vperm.xlu0 %4878, %v4809
    %v4880 = vpop.permute.xlu0 %4879
    %4883 = vset.pattern.permute.xlu0 0
    %4884 = vperm.xlu0 %4883, %v4810
    %v4885 = vpop.permute.xlu0 %4884
    %4888 = vset.pattern.permute.xlu0 0
    %4889 = vperm.xlu0 %4888, %v4811
    %v4890 = vpop.permute.xlu0 %4889
    %4893 = vset.pattern.permute.xlu0 0
    %4894 = vperm.xlu0 %4893, %v4812
    %v4895 = vpop.permute.xlu0 %4894
    %4898 = vset.pattern.permute.xlu0 0
    %4899 = vperm.xlu0 %4898, %v4813
    %v4900 = vpop.permute.xlu0 %4899
    %4903 = vset.pattern.permute.xlu0 0
    %4904 = vperm.xlu0 %4903, %v4814
    %v4905 = vpop.permute.xlu0 %4904
    %4908 = vset.pattern.permute.xlu0 0
    %4909 = vperm.xlu0 %4908, %v4815
    %v4910 = vpop.permute.xlu0 %4909
    %4913 = vset.pattern.permute.xlu0 0
    %4914 = vperm.xlu0 %4913, %v4816
    %v4915 = vpop.permute.xlu0 %4914
    %4918 = vset.pattern.permute.xlu0 0
    %4919 = vperm.xlu0 %4918, %v4817
    %v4920 = vpop.permute.xlu0 %4919
    %4923 = vset.pattern.permute.xlu0 0
    %4924 = vperm.xlu0 %4923, %v4818
    %v4925 = vpop.permute.xlu0 %4924
    %4928 = vset.pattern.permute.xlu0 0
    %4929 = vperm.xlu0 %4928, %v4819
    %v4930 = vpop.permute.xlu0 %4929
    %4933 = vset.pattern.permute.xlu0 0
    %4934 = vperm.xlu0 %4933, %v4820
    %v4935 = vpop.permute.xlu0 %4934
    %4938 = vset.pattern.permute.xlu0 0
    %4939 = vperm.xlu0 %4938, %v4821
    %v4940 = vpop.permute.xlu0 %4939
    %4943 = vset.pattern.permute.xlu0 0
    %4944 = vperm.xlu0 %4943, %v4822
    %v4945 = vpop.permute.xlu0 %4944
    %4948 = vset.pattern.permute.xlu0 0
    %4949 = vperm.xlu0 %4948, %v4823
    %v4950 = vpop.permute.xlu0 %4949
    %4953 = vset.pattern.permute.xlu0 0
    %4954 = vperm.xlu0 %4953, %v4824
    %v4955 = vpop.permute.xlu0 %4954
    %4958 = vset.pattern.permute.xlu0 0
    %4959 = vperm.xlu0 %4958, %v4825
    %v4960 = vpop.permute.xlu0 %4959
    %4963 = vset.pattern.permute.xlu0 0
    %4964 = vperm.xlu0 %4963, %v4828
    %v4965 = vpop.permute.xlu0 %4964
    %4968 = vset.pattern.permute.xlu0 0
    %4969 = vperm.xlu0 %4968, %v4829
    %v4970 = vpop.permute.xlu0 %4969
    %4973 = vset.pattern.permute.xlu0 0
    %4974 = vperm.xlu0 %4973, %v4830
    %v4975 = vpop.permute.xlu0 %4974
    %4978 = vset.pattern.permute.xlu0 0
    %4979 = vperm.xlu0 %4978, %v4831
    %v4980 = vpop.permute.xlu0 %4979
    %4983 = vset.pattern.permute.xlu0 0
    %4984 = vperm.xlu0 %4983, %v4832
    %v4985 = vpop.permute.xlu0 %4984
    %4988 = vset.pattern.permute.xlu0 0
    %4989 = vperm.xlu0 %4988, %v4833
    %v4990 = vpop.permute.xlu0 %4989
    %4993 = vset.pattern.permute.xlu0 0
    %4994 = vperm.xlu0 %4993, %v4834
    %v4995 = vpop.permute.xlu0 %4994
    %4998 = vset.pattern.permute.xlu0 0
    %4999 = vperm.xlu0 %4998, %v4835
    %v5000 = vpop.permute.xlu0 %4999
    %5003 = vset.pattern.permute.xlu0 0
    %5004 = vperm.xlu0 %5003, %v4836
    %v5005 = vpop.permute.xlu0 %5004
    %5008 = vset.pattern.permute.xlu0 0
    %5009 = vperm.xlu0 %5008, %v4837
    %v5010 = vpop.permute.xlu0 %5009
    %5013 = vset.pattern.permute.xlu0 0
    %5014 = vperm.xlu0 %5013, %v4838
    %v5015 = vpop.permute.xlu0 %5014
    %5018 = vset.pattern.permute.xlu0 0
    %5019 = vperm.xlu0 %5018, %v4839
    %v5020 = vpop.permute.xlu0 %5019
    %5023 = vset.pattern.permute.xlu0 0
    %5024 = vperm.xlu0 %5023, %v4840
    %v5025 = vpop.permute.xlu0 %5024
    %5028 = vset.pattern.permute.xlu0 0
    %5029 = vperm.xlu0 %5028, %v4841
    %v5030 = vpop.permute.xlu0 %5029
    %5033 = vset.pattern.permute.xlu0 0
    %5034 = vperm.xlu0 %5033, %v4842
    %v5035 = vpop.permute.xlu0 %5034
    %5038 = vset.pattern.permute.xlu0 0
    %5039 = vperm.xlu0 %5038, %v4843
    %v5040 = vpop.permute.xlu0 %5039
    %5043 = vset.pattern.permute.xlu0 0
    %5044 = vperm.xlu0 %5043, %v4844
    %v5045 = vpop.permute.xlu0 %5044
    %5048 = vset.pattern.permute.xlu0 0
    %5049 = vperm.xlu0 %5048, %v4845
    %v5050 = vpop.permute.xlu0 %5049
    %5053 = vset.pattern.permute.xlu0 0
    %5054 = vperm.xlu0 %5053, %v4846
    %v5055 = vpop.permute.xlu0 %5054
    %5058 = vset.pattern.permute.xlu0 0
    %5059 = vperm.xlu0 %5058, %v4847
    %v5060 = vpop.permute.xlu0 %5059
    %5063 = vset.pattern.permute.xlu0 0
    %5064 = vperm.xlu0 %5063, %v4848
    %v5065 = vpop.permute.xlu0 %5064
    %5068 = vset.pattern.permute.xlu0 0
    %5069 = vperm.xlu0 %5068, %v4849
    %v5070 = vpop.permute.xlu0 %5069
    %v5072 = vperm.slane %v74, 0
    %v5073 = vmul.f32 %v4855, %v5072
    %v5074 = vmul.f32 %v4860, %v5072
    %v5075 = vmul.f32 %v4865, %v5072
    %v5076 = vmul.f32 %v4870, %v5072
    %v5077 = vmul.f32 %v4875, %v5072
    %v5078 = vmul.f32 %v4880, %v5072
    %v5079 = vmul.f32 %v4885, %v5072
    %v5080 = vmul.f32 %v4890, %v5072
    %v5081 = vmul.f32 %v4895, %v5072
    %v5082 = vmul.f32 %v4900, %v5072
    %v5083 = vmul.f32 %v4905, %v5072
    %v5084 = vmul.f32 %v4910, %v5072
    %v5085 = vmul.f32 %v4915, %v5072
    %v5086 = vmul.f32 %v4920, %v5072
    %v5087 = vmul.f32 %v4925, %v5072
    %v5088 = vmul.f32 %v4930, %v5072
    %v5089 = vmul.f32 %v4935, %v5072
    %v5090 = vmul.f32 %v4940, %v5072
    %v5091 = vmul.f32 %v4945, %v5072
    %v5092 = vmul.f32 %v4950, %v5072
    %v5093 = vmul.f32 %v4955, %v5072
    %v5094 = vmul.f32 %v4960, %v5072
    %v5095 = vmul.f32 %v4965, %v5072
    %v5096 = vmul.f32 %v4970, %v5072
    %v5097 = vmul.f32 %v4975, %v5072
    %v5098 = vmul.f32 %v4980, %v5072
    %v5099 = vmul.f32 %v4985, %v5072
    %v5100 = vmul.f32 %v4990, %v5072
    %v5101 = vmul.f32 %v4995, %v5072
    %v5102 = vmul.f32 %v5000, %v5072
    %v5103 = vmul.f32 %v5005, %v5072
    %v5104 = vmul.f32 %v5010, %v5072
    %v5105 = vmul.f32 %v5015, %v5072
    %v5106 = vmul.f32 %v5020, %v5072
    %v5107 = vmul.f32 %v5025, %v5072
    %v5108 = vmul.f32 %v5030, %v5072
    %v5109 = vmul.f32 %v5035, %v5072
    %v5110 = vmul.f32 %v5040, %v5072
    %v5111 = vmul.f32 %v5045, %v5072
    %v5112 = vmul.f32 %v5050, %v5072
    %v5113 = vmul.f32 %v5055, %v5072
    %v5114 = vmul.f32 %v5060, %v5072
    %v5115 = vmul.f32 %v5065, %v5072
    %v5116 = vmul.f32 %v5070, %v5072
    %v5117 = vadd.f32 %v5073, 0.0
    %v5118 = vadd.f32 %v5074, 0.0
    %v5119 = vadd.f32 %v5075, 0.0
    %v5120 = vadd.f32 %v5076, 0.0
    %v5121 = vadd.f32 %v5077, 0.0
    %v5122 = vadd.f32 %v5078, 0.0
    %v5123 = vadd.f32 %v5079, 0.0
    %v5124 = vadd.f32 %v5080, 0.0
    %v5125 = vadd.f32 %v5081, 0.0
    %v5126 = vadd.f32 %v5082, 0.0
    %v5127 = vadd.f32 %v5083, 0.0
    %v5128 = vadd.f32 %v5084, 0.0
    %v5129 = vadd.f32 %v5085, 0.0
    %v5130 = vadd.f32 %v5086, 0.0
    %v5131 = vadd.f32 %v5087, 0.0
    %v5132 = vadd.f32 %v5088, 0.0
    %v5133 = vadd.f32 %v5089, 0.0
    %v5134 = vadd.f32 %v5090, 0.0
    %v5135 = vadd.f32 %v5091, 0.0
    %v5136 = vadd.f32 %v5092, 0.0
    %v5137 = vadd.f32 %v5093, 0.0
    %v5138 = vadd.f32 %v5094, 0.0
    %v5139 = vadd.f32 %v5095, 0.0
    %v5140 = vadd.f32 %v5096, 0.0
    %v5141 = vadd.f32 %v5097, 0.0
    %v5142 = vadd.f32 %v5098, 0.0
    %v5143 = vadd.f32 %v5099, 0.0
    %v5144 = vadd.f32 %v5100, 0.0
    %v5145 = vadd.f32 %v5101, 0.0
    %v5146 = vadd.f32 %v5102, 0.0
    %v5147 = vadd.f32 %v5103, 0.0
    %v5148 = vadd.f32 %v5104, 0.0
    %v5149 = vadd.f32 %v5105, 0.0
    %v5150 = vadd.f32 %v5106, 0.0
    %v5151 = vadd.f32 %v5107, 0.0
    %v5152 = vadd.f32 %v5108, 0.0
    %v5153 = vadd.f32 %v5109, 0.0
    %v5154 = vadd.f32 %v5110, 0.0
    %v5155 = vadd.f32 %v5111, 0.0
    %v5156 = vadd.f32 %v5112, 0.0
    %v5157 = vadd.f32 %v5113, 0.0
    %v5158 = vadd.f32 %v5114, 0.0
    %v5159 = vadd.f32 %v5115, 0.0
    %v5160 = vadd.f32 %v5116, 0.0
    %5161 = vset.pattern.permute.xlu0 1
    %5162 = vperm.xlu0 %5161, %v4804
    %v5163 = vpop.permute.xlu0 %5162
    %5165 = vset.pattern.permute.xlu0 1
    %5166 = vperm.xlu0 %5165, %v4805
    %v5167 = vpop.permute.xlu0 %5166
    %5169 = vset.pattern.permute.xlu0 1
    %5170 = vperm.xlu0 %5169, %v4806
    %v5171 = vpop.permute.xlu0 %5170
    %5173 = vset.pattern.permute.xlu0 1
    %5174 = vperm.xlu0 %5173, %v4807
    %v5175 = vpop.permute.xlu0 %5174
    %5177 = vset.pattern.permute.xlu0 1
    %5178 = vperm.xlu0 %5177, %v4808
    %v5179 = vpop.permute.xlu0 %5178
    %5181 = vset.pattern.permute.xlu0 1
    %5182 = vperm.xlu0 %5181, %v4809
    %v5183 = vpop.permute.xlu0 %5182
    %5185 = vset.pattern.permute.xlu0 1
    %5186 = vperm.xlu0 %5185, %v4810
    %v5187 = vpop.permute.xlu0 %5186
    %5189 = vset.pattern.permute.xlu0 1
    %5190 = vperm.xlu0 %5189, %v4811
    %v5191 = vpop.permute.xlu0 %5190
    %5193 = vset.pattern.permute.xlu0 1
    %5194 = vperm.xlu0 %5193, %v4812
    %v5195 = vpop.permute.xlu0 %5194
    %5197 = vset.pattern.permute.xlu0 1
    %5198 = vperm.xlu0 %5197, %v4813
    %v5199 = vpop.permute.xlu0 %5198
    %5201 = vset.pattern.permute.xlu0 1
    %5202 = vperm.xlu0 %5201, %v4814
    %v5203 = vpop.permute.xlu0 %5202
    %5205 = vset.pattern.permute.xlu0 1
    %5206 = vperm.xlu0 %5205, %v4815
    %v5207 = vpop.permute.xlu0 %5206
    %5209 = vset.pattern.permute.xlu0 1
    %5210 = vperm.xlu0 %5209, %v4816
    %v5211 = vpop.permute.xlu0 %5210
    %5213 = vset.pattern.permute.xlu0 1
    %5214 = vperm.xlu0 %5213, %v4817
    %v5215 = vpop.permute.xlu0 %5214
    %5217 = vset.pattern.permute.xlu0 1
    %5218 = vperm.xlu0 %5217, %v4818
    %v5219 = vpop.permute.xlu0 %5218
    %5221 = vset.pattern.permute.xlu0 1
    %5222 = vperm.xlu0 %5221, %v4819
    %v5223 = vpop.permute.xlu0 %5222
    %5225 = vset.pattern.permute.xlu0 1
    %5226 = vperm.xlu0 %5225, %v4820
    %v5227 = vpop.permute.xlu0 %5226
    %5229 = vset.pattern.permute.xlu0 1
    %5230 = vperm.xlu0 %5229, %v4821
    %v5231 = vpop.permute.xlu0 %5230
    %5233 = vset.pattern.permute.xlu0 1
    %5234 = vperm.xlu0 %5233, %v4822
    %v5235 = vpop.permute.xlu0 %5234
    %5237 = vset.pattern.permute.xlu0 1
    %5238 = vperm.xlu0 %5237, %v4823
    %v5239 = vpop.permute.xlu0 %5238
    %5241 = vset.pattern.permute.xlu0 1
    %5242 = vperm.xlu0 %5241, %v4824
    %v5243 = vpop.permute.xlu0 %5242
    %5245 = vset.pattern.permute.xlu0 1
    %5246 = vperm.xlu0 %5245, %v4825
    %v5247 = vpop.permute.xlu0 %5246
    %5249 = vset.pattern.permute.xlu0 1
    %5250 = vperm.xlu0 %5249, %v4828
    %v5251 = vpop.permute.xlu0 %5250
    %5253 = vset.pattern.permute.xlu0 1
    %5254 = vperm.xlu0 %5253, %v4829
    %v5255 = vpop.permute.xlu0 %5254
    %5257 = vset.pattern.permute.xlu0 1
    %5258 = vperm.xlu0 %5257, %v4830
    %v5259 = vpop.permute.xlu0 %5258
    %5261 = vset.pattern.permute.xlu0 1
    %5262 = vperm.xlu0 %5261, %v4831
    %v5263 = vpop.permute.xlu0 %5262
    %5265 = vset.pattern.permute.xlu0 1
    %5266 = vperm.xlu0 %5265, %v4832
    %v5267 = vpop.permute.xlu0 %5266
    %5269 = vset.pattern.permute.xlu0 1
    %5270 = vperm.xlu0 %5269, %v4833
    %v5271 = vpop.permute.xlu0 %5270
    %5273 = vset.pattern.permute.xlu0 1
    %5274 = vperm.xlu0 %5273, %v4834
    %v5275 = vpop.permute.xlu0 %5274
    %5277 = vset.pattern.permute.xlu0 1
    %5278 = vperm.xlu0 %5277, %v4835
    %v5279 = vpop.permute.xlu0 %5278
    %5281 = vset.pattern.permute.xlu0 1
    %5282 = vperm.xlu0 %5281, %v4836
    %v5283 = vpop.permute.xlu0 %5282
    %5285 = vset.pattern.permute.xlu0 1
    %5286 = vperm.xlu0 %5285, %v4837
    %v5287 = vpop.permute.xlu0 %5286
    %5289 = vset.pattern.permute.xlu0 1
    %5290 = vperm.xlu0 %5289, %v4838
    %v5291 = vpop.permute.xlu0 %5290
    %5293 = vset.pattern.permute.xlu0 1
    %5294 = vperm.xlu0 %5293, %v4839
    %v5295 = vpop.permute.xlu0 %5294
    %5297 = vset.pattern.permute.xlu0 1
    %5298 = vperm.xlu0 %5297, %v4840
    %v5299 = vpop.permute.xlu0 %5298
    %5301 = vset.pattern.permute.xlu0 1
    %5302 = vperm.xlu0 %5301, %v4841
    %v5303 = vpop.permute.xlu0 %5302
    %5305 = vset.pattern.permute.xlu0 1
    %5306 = vperm.xlu0 %5305, %v4842
    %v5307 = vpop.permute.xlu0 %5306
    %5309 = vset.pattern.permute.xlu0 1
    %5310 = vperm.xlu0 %5309, %v4843
    %v5311 = vpop.permute.xlu0 %5310
    %5313 = vset.pattern.permute.xlu0 1
    %5314 = vperm.xlu0 %5313, %v4844
    %v5315 = vpop.permute.xlu0 %5314
    %5317 = vset.pattern.permute.xlu0 1
    %5318 = vperm.xlu0 %5317, %v4845
    %v5319 = vpop.permute.xlu0 %5318
    %5321 = vset.pattern.permute.xlu0 1
    %5322 = vperm.xlu0 %5321, %v4846
    %v5323 = vpop.permute.xlu0 %5322
    %5325 = vset.pattern.permute.xlu0 1
    %5326 = vperm.xlu0 %5325, %v4847
    %v5327 = vpop.permute.xlu0 %5326
    %5329 = vset.pattern.permute.xlu0 1
    %5330 = vperm.xlu0 %5329, %v4848
    %v5331 = vpop.permute.xlu0 %5330
    %5333 = vset.pattern.permute.xlu0 1
    %5334 = vperm.xlu0 %5333, %v4849
    %v5335 = vpop.permute.xlu0 %5334
    %v5337 = vperm.slane %v74, 1
    %v5338 = vmul.f32 %v5163, %v5337
    %v5339 = vmul.f32 %v5167, %v5337
    %v5340 = vmul.f32 %v5171, %v5337
    %v5341 = vmul.f32 %v5175, %v5337
    %v5342 = vmul.f32 %v5179, %v5337
    %v5343 = vmul.f32 %v5183, %v5337
    %v5344 = vmul.f32 %v5187, %v5337
    %v5345 = vmul.f32 %v5191, %v5337
    %v5346 = vmul.f32 %v5195, %v5337
    %v5347 = vmul.f32 %v5199, %v5337
    %v5348 = vmul.f32 %v5203, %v5337
    %v5349 = vmul.f32 %v5207, %v5337
    %v5350 = vmul.f32 %v5211, %v5337
    %v5351 = vmul.f32 %v5215, %v5337
    %v5352 = vmul.f32 %v5219, %v5337
    %v5353 = vmul.f32 %v5223, %v5337
    %v5354 = vmul.f32 %v5227, %v5337
    %v5355 = vmul.f32 %v5231, %v5337
    %v5356 = vmul.f32 %v5235, %v5337
    %v5357 = vmul.f32 %v5239, %v5337
    %v5358 = vmul.f32 %v5243, %v5337
    %v5359 = vmul.f32 %v5247, %v5337
    %v5360 = vmul.f32 %v5251, %v5337
    %v5361 = vmul.f32 %v5255, %v5337
    %v5362 = vmul.f32 %v5259, %v5337
    %v5363 = vmul.f32 %v5263, %v5337
    %v5364 = vmul.f32 %v5267, %v5337
    %v5365 = vmul.f32 %v5271, %v5337
    %v5366 = vmul.f32 %v5275, %v5337
    %v5367 = vmul.f32 %v5279, %v5337
    %v5368 = vmul.f32 %v5283, %v5337
    %v5369 = vmul.f32 %v5287, %v5337
    %v5370 = vmul.f32 %v5291, %v5337
    %v5371 = vmul.f32 %v5295, %v5337
    %v5372 = vmul.f32 %v5299, %v5337
    %v5373 = vmul.f32 %v5303, %v5337
    %v5374 = vmul.f32 %v5307, %v5337
    %v5375 = vmul.f32 %v5311, %v5337
    %v5376 = vmul.f32 %v5315, %v5337
    %v5377 = vmul.f32 %v5319, %v5337
    %v5378 = vmul.f32 %v5323, %v5337
    %v5379 = vmul.f32 %v5327, %v5337
    %v5380 = vmul.f32 %v5331, %v5337
    %v5381 = vmul.f32 %v5335, %v5337
    %v5382 = vadd.f32 %v5117, %v5338
    %v5383 = vadd.f32 %v5118, %v5339
    %v5384 = vadd.f32 %v5119, %v5340
    %v5385 = vadd.f32 %v5120, %v5341
    %v5386 = vadd.f32 %v5121, %v5342
    %v5387 = vadd.f32 %v5122, %v5343
    %v5388 = vadd.f32 %v5123, %v5344
    %v5389 = vadd.f32 %v5124, %v5345
    %v5390 = vadd.f32 %v5125, %v5346
    %v5391 = vadd.f32 %v5126, %v5347
    %v5392 = vadd.f32 %v5127, %v5348
    %v5393 = vadd.f32 %v5128, %v5349
    %v5394 = vadd.f32 %v5129, %v5350
    %v5395 = vadd.f32 %v5130, %v5351
    %v5396 = vadd.f32 %v5131, %v5352
    %v5397 = vadd.f32 %v5132, %v5353
    %v5398 = vadd.f32 %v5133, %v5354
    %v5399 = vadd.f32 %v5134, %v5355
    %v5400 = vadd.f32 %v5135, %v5356
    %v5401 = vadd.f32 %v5136, %v5357
    %v5402 = vadd.f32 %v5137, %v5358
    %v5403 = vadd.f32 %v5138, %v5359
    %v5404 = vadd.f32 %v5139, %v5360
    %v5405 = vadd.f32 %v5140, %v5361
    %v5406 = vadd.f32 %v5141, %v5362
    %v5407 = vadd.f32 %v5142, %v5363
    %v5408 = vadd.f32 %v5143, %v5364
    %v5409 = vadd.f32 %v5144, %v5365
    %v5410 = vadd.f32 %v5145, %v5366
    %v5411 = vadd.f32 %v5146, %v5367
    %v5412 = vadd.f32 %v5147, %v5368
    %v5413 = vadd.f32 %v5148, %v5369
    %v5414 = vadd.f32 %v5149, %v5370
    %v5415 = vadd.f32 %v5150, %v5371
    %v5416 = vadd.f32 %v5151, %v5372
    %v5417 = vadd.f32 %v5152, %v5373
    %v5418 = vadd.f32 %v5153, %v5374
    %v5419 = vadd.f32 %v5154, %v5375
    %v5420 = vadd.f32 %v5155, %v5376
    %v5421 = vadd.f32 %v5156, %v5377
    %v5422 = vadd.f32 %v5157, %v5378
    %v5423 = vadd.f32 %v5158, %v5379
    %v5424 = vadd.f32 %v5159, %v5380
    %v5425 = vadd.f32 %v5160, %v5381
    %5426 = vset.pattern.permute.xlu0 2
    %5427 = vperm.xlu0 %5426, %v4804
    %v5428 = vpop.permute.xlu0 %5427
    %5430 = vset.pattern.permute.xlu0 2
    %5431 = vperm.xlu0 %5430, %v4805
    %v5432 = vpop.permute.xlu0 %5431
    %5434 = vset.pattern.permute.xlu0 2
    %5435 = vperm.xlu0 %5434, %v4806
    %v5436 = vpop.permute.xlu0 %5435
    %5438 = vset.pattern.permute.xlu0 2
    %5439 = vperm.xlu0 %5438, %v4807
    %v5440 = vpop.permute.xlu0 %5439
    %5442 = vset.pattern.permute.xlu0 2
    %5443 = vperm.xlu0 %5442, %v4808
    %v5444 = vpop.permute.xlu0 %5443
    %5446 = vset.pattern.permute.xlu0 2
    %5447 = vperm.xlu0 %5446, %v4809
    %v5448 = vpop.permute.xlu0 %5447
    %5450 = vset.pattern.permute.xlu0 2
    %5451 = vperm.xlu0 %5450, %v4810
    %v5452 = vpop.permute.xlu0 %5451
    %5454 = vset.pattern.permute.xlu0 2
    %5455 = vperm.xlu0 %5454, %v4811
    %v5456 = vpop.permute.xlu0 %5455
    %5458 = vset.pattern.permute.xlu0 2
    %5459 = vperm.xlu0 %5458, %v4812
    %v5460 = vpop.permute.xlu0 %5459
    %5462 = vset.pattern.permute.xlu0 2
    %5463 = vperm.xlu0 %5462, %v4813
    %v5464 = vpop.permute.xlu0 %5463
    %5466 = vset.pattern.permute.xlu0 2
    %5467 = vperm.xlu0 %5466, %v4814
    %v5468 = vpop.permute.xlu0 %5467
    %5470 = vset.pattern.permute.xlu0 2
    %5471 = vperm.xlu0 %5470, %v4815
    %v5472 = vpop.permute.xlu0 %5471
    %5474 = vset.pattern.permute.xlu0 2
    %5475 = vperm.xlu0 %5474, %v4816
    %v5476 = vpop.permute.xlu0 %5475
    %5478 = vset.pattern.permute.xlu0 2
    %5479 = vperm.xlu0 %5478, %v4817
    %v5480 = vpop.permute.xlu0 %5479
    %5482 = vset.pattern.permute.xlu0 2
    %5483 = vperm.xlu0 %5482, %v4818
    %v5484 = vpop.permute.xlu0 %5483
    %5486 = vset.pattern.permute.xlu0 2
    %5487 = vperm.xlu0 %5486, %v4819
    %v5488 = vpop.permute.xlu0 %5487
    %5490 = vset.pattern.permute.xlu0 2
    %5491 = vperm.xlu0 %5490, %v4820
    %v5492 = vpop.permute.xlu0 %5491
    %5494 = vset.pattern.permute.xlu0 2
    %5495 = vperm.xlu0 %5494, %v4821
    %v5496 = vpop.permute.xlu0 %5495
    %5498 = vset.pattern.permute.xlu0 2
    %5499 = vperm.xlu0 %5498, %v4822
    %v5500 = vpop.permute.xlu0 %5499
    %5502 = vset.pattern.permute.xlu0 2
    %5503 = vperm.xlu0 %5502, %v4823
    %v5504 = vpop.permute.xlu0 %5503
    %5506 = vset.pattern.permute.xlu0 2
    %5507 = vperm.xlu0 %5506, %v4824
    %v5508 = vpop.permute.xlu0 %5507
    %5510 = vset.pattern.permute.xlu0 2
    %5511 = vperm.xlu0 %5510, %v4825
    %v5512 = vpop.permute.xlu0 %5511
    %5514 = vset.pattern.permute.xlu0 2
    %5515 = vperm.xlu0 %5514, %v4828
    %v5516 = vpop.permute.xlu0 %5515
    %5518 = vset.pattern.permute.xlu0 2
    %5519 = vperm.xlu0 %5518, %v4829
    %v5520 = vpop.permute.xlu0 %5519
    %5522 = vset.pattern.permute.xlu0 2
    %5523 = vperm.xlu0 %5522, %v4830
    %v5524 = vpop.permute.xlu0 %5523
    %5526 = vset.pattern.permute.xlu0 2
    %5527 = vperm.xlu0 %5526, %v4831
    %v5528 = vpop.permute.xlu0 %5527
    %5530 = vset.pattern.permute.xlu0 2
    %5531 = vperm.xlu0 %5530, %v4832
    %v5532 = vpop.permute.xlu0 %5531
    %5534 = vset.pattern.permute.xlu0 2
    %5535 = vperm.xlu0 %5534, %v4833
    %v5536 = vpop.permute.xlu0 %5535
    %5538 = vset.pattern.permute.xlu0 2
    %5539 = vperm.xlu0 %5538, %v4834
    %v5540 = vpop.permute.xlu0 %5539
    %5542 = vset.pattern.permute.xlu0 2
    %5543 = vperm.xlu0 %5542, %v4835
    %v5544 = vpop.permute.xlu0 %5543
    %5546 = vset.pattern.permute.xlu0 2
    %5547 = vperm.xlu0 %5546, %v4836
    %v5548 = vpop.permute.xlu0 %5547
    %5550 = vset.pattern.permute.xlu0 2
    %5551 = vperm.xlu0 %5550, %v4837
    %v5552 = vpop.permute.xlu0 %5551
    %5554 = vset.pattern.permute.xlu0 2
    %5555 = vperm.xlu0 %5554, %v4838
    %v5556 = vpop.permute.xlu0 %5555
    %5558 = vset.pattern.permute.xlu0 2
    %5559 = vperm.xlu0 %5558, %v4839
    %v5560 = vpop.permute.xlu0 %5559
    %5562 = vset.pattern.permute.xlu0 2
    %5563 = vperm.xlu0 %5562, %v4840
    %v5564 = vpop.permute.xlu0 %5563
    %5566 = vset.pattern.permute.xlu0 2
    %5567 = vperm.xlu0 %5566, %v4841
    %v5568 = vpop.permute.xlu0 %5567
    %5570 = vset.pattern.permute.xlu0 2
    %5571 = vperm.xlu0 %5570, %v4842
    %v5572 = vpop.permute.xlu0 %5571
    %5574 = vset.pattern.permute.xlu0 2
    %5575 = vperm.xlu0 %5574, %v4843
    %v5576 = vpop.permute.xlu0 %5575
    %5578 = vset.pattern.permute.xlu0 2
    %5579 = vperm.xlu0 %5578, %v4844
    %v5580 = vpop.permute.xlu0 %5579
    %5582 = vset.pattern.permute.xlu0 2
    %5583 = vperm.xlu0 %5582, %v4845
    %v5584 = vpop.permute.xlu0 %5583
    %5586 = vset.pattern.permute.xlu0 2
    %5587 = vperm.xlu0 %5586, %v4846
    %v5588 = vpop.permute.xlu0 %5587
    %5590 = vset.pattern.permute.xlu0 2
    %5591 = vperm.xlu0 %5590, %v4847
    %v5592 = vpop.permute.xlu0 %5591
    %5594 = vset.pattern.permute.xlu0 2
    %5595 = vperm.xlu0 %5594, %v4848
    %v5596 = vpop.permute.xlu0 %5595
    %5598 = vset.pattern.permute.xlu0 2
    %5599 = vperm.xlu0 %5598, %v4849
    %v5600 = vpop.permute.xlu0 %5599
    %v5602 = vperm.slane %v74, 2
    %v5603 = vmul.f32 %v5428, %v5602
    %v5604 = vmul.f32 %v5432, %v5602
    %v5605 = vmul.f32 %v5436, %v5602
    %v5606 = vmul.f32 %v5440, %v5602
    %v5607 = vmul.f32 %v5444, %v5602
    %v5608 = vmul.f32 %v5448, %v5602
    %v5609 = vmul.f32 %v5452, %v5602
    %v5610 = vmul.f32 %v5456, %v5602
    %v5611 = vmul.f32 %v5460, %v5602
    %v5612 = vmul.f32 %v5464, %v5602
    %v5613 = vmul.f32 %v5468, %v5602
    %v5614 = vmul.f32 %v5472, %v5602
    %v5615 = vmul.f32 %v5476, %v5602
    %v5616 = vmul.f32 %v5480, %v5602
    %v5617 = vmul.f32 %v5484, %v5602
    %v5618 = vmul.f32 %v5488, %v5602
    %v5619 = vmul.f32 %v5492, %v5602
    %v5620 = vmul.f32 %v5496, %v5602
    %v5621 = vmul.f32 %v5500, %v5602
    %v5622 = vmul.f32 %v5504, %v5602
    %v5623 = vmul.f32 %v5508, %v5602
    %v5624 = vmul.f32 %v5512, %v5602
    %v5625 = vmul.f32 %v5516, %v5602
    %v5626 = vmul.f32 %v5520, %v5602
    %v5627 = vmul.f32 %v5524, %v5602
    %v5628 = vmul.f32 %v5528, %v5602
    %v5629 = vmul.f32 %v5532, %v5602
    %v5630 = vmul.f32 %v5536, %v5602
    %v5631 = vmul.f32 %v5540, %v5602
    %v5632 = vmul.f32 %v5544, %v5602
    %v5633 = vmul.f32 %v5548, %v5602
    %v5634 = vmul.f32 %v5552, %v5602
    %v5635 = vmul.f32 %v5556, %v5602
    %v5636 = vmul.f32 %v5560, %v5602
    %v5637 = vmul.f32 %v5564, %v5602
    %v5638 = vmul.f32 %v5568, %v5602
    %v5639 = vmul.f32 %v5572, %v5602
    %v5640 = vmul.f32 %v5576, %v5602
    %v5641 = vmul.f32 %v5580, %v5602
    %v5642 = vmul.f32 %v5584, %v5602
    %v5643 = vmul.f32 %v5588, %v5602
    %v5644 = vmul.f32 %v5592, %v5602
    %v5645 = vmul.f32 %v5596, %v5602
    %v5646 = vmul.f32 %v5600, %v5602
    %v5647 = vadd.f32 %v5382, %v5603
    %v5648 = vadd.f32 %v5383, %v5604
    %v5649 = vadd.f32 %v5384, %v5605
    %v5650 = vadd.f32 %v5385, %v5606
    %v5651 = vadd.f32 %v5386, %v5607
    %v5652 = vadd.f32 %v5387, %v5608
    %v5653 = vadd.f32 %v5388, %v5609
    %v5654 = vadd.f32 %v5389, %v5610
    %v5655 = vadd.f32 %v5390, %v5611
    %v5656 = vadd.f32 %v5391, %v5612
    %v5657 = vadd.f32 %v5392, %v5613
    %v5658 = vadd.f32 %v5393, %v5614
    %v5659 = vadd.f32 %v5394, %v5615
    %v5660 = vadd.f32 %v5395, %v5616
    %v5661 = vadd.f32 %v5396, %v5617
    %v5662 = vadd.f32 %v5397, %v5618
    %v5663 = vadd.f32 %v5398, %v5619
    %v5664 = vadd.f32 %v5399, %v5620
    %v5665 = vadd.f32 %v5400, %v5621
    %v5666 = vadd.f32 %v5401, %v5622
    %v5667 = vadd.f32 %v5402, %v5623
    %v5668 = vadd.f32 %v5403, %v5624
    %v5669 = vadd.f32 %v5404, %v5625
    %v5670 = vadd.f32 %v5405, %v5626
    %v5671 = vadd.f32 %v5406, %v5627
    %v5672 = vadd.f32 %v5407, %v5628
    %v5673 = vadd.f32 %v5408, %v5629
    %v5674 = vadd.f32 %v5409, %v5630
    %v5675 = vadd.f32 %v5410, %v5631
    %v5676 = vadd.f32 %v5411, %v5632
    %v5677 = vadd.f32 %v5412, %v5633
    %v5678 = vadd.f32 %v5413, %v5634
    %v5679 = vadd.f32 %v5414, %v5635
    %v5680 = vadd.f32 %v5415, %v5636
    %v5681 = vadd.f32 %v5416, %v5637
    %v5682 = vadd.f32 %v5417, %v5638
    %v5683 = vadd.f32 %v5418, %v5639
    %v5684 = vadd.f32 %v5419, %v5640
    %v5685 = vadd.f32 %v5420, %v5641
    %v5686 = vadd.f32 %v5421, %v5642
    %v5687 = vadd.f32 %v5422, %v5643
    %v5688 = vadd.f32 %v5423, %v5644
    %v5689 = vadd.f32 %v5424, %v5645
    %v5690 = vadd.f32 %v5425, %v5646
    %5691 = vset.pattern.permute.xlu0 3
    %5692 = vperm.xlu0 %5691, %v4804
    %v5693 = vpop.permute.xlu0 %5692
    %5695 = vset.pattern.permute.xlu0 3
    %5696 = vperm.xlu0 %5695, %v4805
    %v5697 = vpop.permute.xlu0 %5696
    %5699 = vset.pattern.permute.xlu0 3
    %5700 = vperm.xlu0 %5699, %v4806
    %v5701 = vpop.permute.xlu0 %5700
    %5703 = vset.pattern.permute.xlu0 3
    %5704 = vperm.xlu0 %5703, %v4807
    %v5705 = vpop.permute.xlu0 %5704
    %5707 = vset.pattern.permute.xlu0 3
    %5708 = vperm.xlu0 %5707, %v4808
    %v5709 = vpop.permute.xlu0 %5708
    %5711 = vset.pattern.permute.xlu0 3
    %5712 = vperm.xlu0 %5711, %v4809
    %v5713 = vpop.permute.xlu0 %5712
    %5715 = vset.pattern.permute.xlu0 3
    %5716 = vperm.xlu0 %5715, %v4810
    %v5717 = vpop.permute.xlu0 %5716
    %5719 = vset.pattern.permute.xlu0 3
    %5720 = vperm.xlu0 %5719, %v4811
    %v5721 = vpop.permute.xlu0 %5720
    %5723 = vset.pattern.permute.xlu0 3
    %5724 = vperm.xlu0 %5723, %v4812
    %v5725 = vpop.permute.xlu0 %5724
    %5727 = vset.pattern.permute.xlu0 3
    %5728 = vperm.xlu0 %5727, %v4813
    %v5729 = vpop.permute.xlu0 %5728
    %5731 = vset.pattern.permute.xlu0 3
    %5732 = vperm.xlu0 %5731, %v4814
    %v5733 = vpop.permute.xlu0 %5732
    %5735 = vset.pattern.permute.xlu0 3
    %5736 = vperm.xlu0 %5735, %v4815
    %v5737 = vpop.permute.xlu0 %5736
    %5739 = vset.pattern.permute.xlu0 3
    %5740 = vperm.xlu0 %5739, %v4816
    %v5741 = vpop.permute.xlu0 %5740
    %5743 = vset.pattern.permute.xlu0 3
    %5744 = vperm.xlu0 %5743, %v4817
    %v5745 = vpop.permute.xlu0 %5744
    %5747 = vset.pattern.permute.xlu0 3
    %5748 = vperm.xlu0 %5747, %v4818
    %v5749 = vpop.permute.xlu0 %5748
    %5751 = vset.pattern.permute.xlu0 3
    %5752 = vperm.xlu0 %5751, %v4819
    %v5753 = vpop.permute.xlu0 %5752
    %5755 = vset.pattern.permute.xlu0 3
    %5756 = vperm.xlu0 %5755, %v4820
    %v5757 = vpop.permute.xlu0 %5756
    %5759 = vset.pattern.permute.xlu0 3
    %5760 = vperm.xlu0 %5759, %v4821
    %v5761 = vpop.permute.xlu0 %5760
    %5763 = vset.pattern.permute.xlu0 3
    %5764 = vperm.xlu0 %5763, %v4822
    %v5765 = vpop.permute.xlu0 %5764
    %5767 = vset.pattern.permute.xlu0 3
    %5768 = vperm.xlu0 %5767, %v4823
    %v5769 = vpop.permute.xlu0 %5768
    %5771 = vset.pattern.permute.xlu0 3
    %5772 = vperm.xlu0 %5771, %v4824
    %v5773 = vpop.permute.xlu0 %5772
    %5775 = vset.pattern.permute.xlu0 3
    %5776 = vperm.xlu0 %5775, %v4825
    %v5777 = vpop.permute.xlu0 %5776
    %5779 = vset.pattern.permute.xlu0 3
    %5780 = vperm.xlu0 %5779, %v4828
    %v5781 = vpop.permute.xlu0 %5780
    %5783 = vset.pattern.permute.xlu0 3
    %5784 = vperm.xlu0 %5783, %v4829
    %v5785 = vpop.permute.xlu0 %5784
    %5787 = vset.pattern.permute.xlu0 3
    %5788 = vperm.xlu0 %5787, %v4830
    %v5789 = vpop.permute.xlu0 %5788
    %5791 = vset.pattern.permute.xlu0 3
    %5792 = vperm.xlu0 %5791, %v4831
    %v5793 = vpop.permute.xlu0 %5792
    %5795 = vset.pattern.permute.xlu0 3
    %5796 = vperm.xlu0 %5795, %v4832
    %v5797 = vpop.permute.xlu0 %5796
    %5799 = vset.pattern.permute.xlu0 3
    %5800 = vperm.xlu0 %5799, %v4833
    %v5801 = vpop.permute.xlu0 %5800
    %5803 = vset.pattern.permute.xlu0 3
    %5804 = vperm.xlu0 %5803, %v4834
    %v5805 = vpop.permute.xlu0 %5804
    %5807 = vset.pattern.permute.xlu0 3
    %5808 = vperm.xlu0 %5807, %v4835
    %v5809 = vpop.permute.xlu0 %5808
    %5811 = vset.pattern.permute.xlu0 3
    %5812 = vperm.xlu0 %5811, %v4836
    %v5813 = vpop.permute.xlu0 %5812
    %5815 = vset.pattern.permute.xlu0 3
    %5816 = vperm.xlu0 %5815, %v4837
    %v5817 = vpop.permute.xlu0 %5816
    %5819 = vset.pattern.permute.xlu0 3
    %5820 = vperm.xlu0 %5819, %v4838
    %v5821 = vpop.permute.xlu0 %5820
    %5823 = vset.pattern.permute.xlu0 3
    %5824 = vperm.xlu0 %5823, %v4839
    %v5825 = vpop.permute.xlu0 %5824
    %5827 = vset.pattern.permute.xlu0 3
    %5828 = vperm.xlu0 %5827, %v4840
    %v5829 = vpop.permute.xlu0 %5828
    %5831 = vset.pattern.permute.xlu0 3
    %5832 = vperm.xlu0 %5831, %v4841
    %v5833 = vpop.permute.xlu0 %5832
    %5835 = vset.pattern.permute.xlu0 3
    %5836 = vperm.xlu0 %5835, %v4842
    %v5837 = vpop.permute.xlu0 %5836
    %5839 = vset.pattern.permute.xlu0 3
    %5840 = vperm.xlu0 %5839, %v4843
    %v5841 = vpop.permute.xlu0 %5840
    %5843 = vset.pattern.permute.xlu0 3
    %5844 = vperm.xlu0 %5843, %v4844
    %v5845 = vpop.permute.xlu0 %5844
    %5847 = vset.pattern.permute.xlu0 3
    %5848 = vperm.xlu0 %5847, %v4845
    %v5849 = vpop.permute.xlu0 %5848
    %5851 = vset.pattern.permute.xlu0 3
    %5852 = vperm.xlu0 %5851, %v4846
    %v5853 = vpop.permute.xlu0 %5852
    %5855 = vset.pattern.permute.xlu0 3
    %5856 = vperm.xlu0 %5855, %v4847
    %v5857 = vpop.permute.xlu0 %5856
    %5859 = vset.pattern.permute.xlu0 3
    %5860 = vperm.xlu0 %5859, %v4848
    %v5861 = vpop.permute.xlu0 %5860
    %5863 = vset.pattern.permute.xlu0 3
    %5864 = vperm.xlu0 %5863, %v4849
    %v5865 = vpop.permute.xlu0 %5864
    %v5867 = vperm.slane %v74, 3
    %v5868 = vmul.f32 %v5693, %v5867
    %v5869 = vmul.f32 %v5697, %v5867
    %v5870 = vmul.f32 %v5701, %v5867
    %v5871 = vmul.f32 %v5705, %v5867
    %v5872 = vmul.f32 %v5709, %v5867
    %v5873 = vmul.f32 %v5713, %v5867
    %v5874 = vmul.f32 %v5717, %v5867
    %v5875 = vmul.f32 %v5721, %v5867
    %v5876 = vmul.f32 %v5725, %v5867
    %v5877 = vmul.f32 %v5729, %v5867
    %v5878 = vmul.f32 %v5733, %v5867
    %v5879 = vmul.f32 %v5737, %v5867
    %v5880 = vmul.f32 %v5741, %v5867
    %v5881 = vmul.f32 %v5745, %v5867
    %v5882 = vmul.f32 %v5749, %v5867
    %v5883 = vmul.f32 %v5753, %v5867
    %v5884 = vmul.f32 %v5757, %v5867
    %v5885 = vmul.f32 %v5761, %v5867
    %v5886 = vmul.f32 %v5765, %v5867
    %v5887 = vmul.f32 %v5769, %v5867
    %v5888 = vmul.f32 %v5773, %v5867
    %v5889 = vmul.f32 %v5777, %v5867
    %v5890 = vmul.f32 %v5781, %v5867
    %v5891 = vmul.f32 %v5785, %v5867
    %v5892 = vmul.f32 %v5789, %v5867
    %v5893 = vmul.f32 %v5793, %v5867
    %v5894 = vmul.f32 %v5797, %v5867
    %v5895 = vmul.f32 %v5801, %v5867
    %v5896 = vmul.f32 %v5805, %v5867
    %v5897 = vmul.f32 %v5809, %v5867
    %v5898 = vmul.f32 %v5813, %v5867
    %v5899 = vmul.f32 %v5817, %v5867
    %v5900 = vmul.f32 %v5821, %v5867
    %v5901 = vmul.f32 %v5825, %v5867
    %v5902 = vmul.f32 %v5829, %v5867
    %v5903 = vmul.f32 %v5833, %v5867
    %v5904 = vmul.f32 %v5837, %v5867
    %v5905 = vmul.f32 %v5841, %v5867
    %v5906 = vmul.f32 %v5845, %v5867
    %v5907 = vmul.f32 %v5849, %v5867
    %v5908 = vmul.f32 %v5853, %v5867
    %v5909 = vmul.f32 %v5857, %v5867
    %v5910 = vmul.f32 %v5861, %v5867
    %v5911 = vmul.f32 %v5865, %v5867
    %v5912 = vadd.f32 %v5647, %v5868
    %v5913 = vadd.f32 %v5648, %v5869
    %v5914 = vadd.f32 %v5649, %v5870
    %v5915 = vadd.f32 %v5650, %v5871
    %v5916 = vadd.f32 %v5651, %v5872
    %v5917 = vadd.f32 %v5652, %v5873
    %v5918 = vadd.f32 %v5653, %v5874
    %v5919 = vadd.f32 %v5654, %v5875
    %v5920 = vadd.f32 %v5655, %v5876
    %v5921 = vadd.f32 %v5656, %v5877
    %v5922 = vadd.f32 %v5657, %v5878
    %v5923 = vadd.f32 %v5658, %v5879
    %v5924 = vadd.f32 %v5659, %v5880
    %v5925 = vadd.f32 %v5660, %v5881
    %v5926 = vadd.f32 %v5661, %v5882
    %v5927 = vadd.f32 %v5662, %v5883
    %v5928 = vadd.f32 %v5663, %v5884
    %v5929 = vadd.f32 %v5664, %v5885
    %v5930 = vadd.f32 %v5665, %v5886
    %v5931 = vadd.f32 %v5666, %v5887
    %v5932 = vadd.f32 %v5667, %v5888
    %v5933 = vadd.f32 %v5668, %v5889
    %v5934 = vadd.f32 %v5669, %v5890
    %v5935 = vadd.f32 %v5670, %v5891
    %v5936 = vadd.f32 %v5671, %v5892
    %v5937 = vadd.f32 %v5672, %v5893
    %v5938 = vadd.f32 %v5673, %v5894
    %v5939 = vadd.f32 %v5674, %v5895
    %v5940 = vadd.f32 %v5675, %v5896
    %v5941 = vadd.f32 %v5676, %v5897
    %v5942 = vadd.f32 %v5677, %v5898
    %v5943 = vadd.f32 %v5678, %v5899
    %v5944 = vadd.f32 %v5679, %v5900
    %v5945 = vadd.f32 %v5680, %v5901
    %v5946 = vadd.f32 %v5681, %v5902
    %v5947 = vadd.f32 %v5682, %v5903
    %v5948 = vadd.f32 %v5683, %v5904
    %v5949 = vadd.f32 %v5684, %v5905
    %v5950 = vadd.f32 %v5685, %v5906
    %v5951 = vadd.f32 %v5686, %v5907
    %v5952 = vadd.f32 %v5687, %v5908
    %v5953 = vadd.f32 %v5688, %v5909
    %v5954 = vadd.f32 %v5689, %v5910
    %v5955 = vadd.f32 %v5690, %v5911
    %5956 = vset.pattern.permute.xlu0 4
    %5957 = vperm.xlu0 %5956, %v4804
    %v5958 = vpop.permute.xlu0 %5957
    %5960 = vset.pattern.permute.xlu0 4
    %5961 = vperm.xlu0 %5960, %v4805
    %v5962 = vpop.permute.xlu0 %5961
    %5964 = vset.pattern.permute.xlu0 4
    %5965 = vperm.xlu0 %5964, %v4806
    %v5966 = vpop.permute.xlu0 %5965
    %5968 = vset.pattern.permute.xlu0 4
    %5969 = vperm.xlu0 %5968, %v4807
    %v5970 = vpop.permute.xlu0 %5969
    %5972 = vset.pattern.permute.xlu0 4
    %5973 = vperm.xlu0 %5972, %v4808
    %v5974 = vpop.permute.xlu0 %5973
    %5976 = vset.pattern.permute.xlu0 4
    %5977 = vperm.xlu0 %5976, %v4809
    %v5978 = vpop.permute.xlu0 %5977
    %5980 = vset.pattern.permute.xlu0 4
    %5981 = vperm.xlu0 %5980, %v4810
    %v5982 = vpop.permute.xlu0 %5981
    %5984 = vset.pattern.permute.xlu0 4
    %5985 = vperm.xlu0 %5984, %v4811
    %v5986 = vpop.permute.xlu0 %5985
    %5988 = vset.pattern.permute.xlu0 4
    %5989 = vperm.xlu0 %5988, %v4812
    %v5990 = vpop.permute.xlu0 %5989
    %5992 = vset.pattern.permute.xlu0 4
    %5993 = vperm.xlu0 %5992, %v4813
    %v5994 = vpop.permute.xlu0 %5993
    %5996 = vset.pattern.permute.xlu0 4
    %5997 = vperm.xlu0 %5996, %v4814
    %v5998 = vpop.permute.xlu0 %5997
    %6000 = vset.pattern.permute.xlu0 4
    %6001 = vperm.xlu0 %6000, %v4815
    %v6002 = vpop.permute.xlu0 %6001
    %6004 = vset.pattern.permute.xlu0 4
    %6005 = vperm.xlu0 %6004, %v4816
    %v6006 = vpop.permute.xlu0 %6005
    %6008 = vset.pattern.permute.xlu0 4
    %6009 = vperm.xlu0 %6008, %v4817
    %v6010 = vpop.permute.xlu0 %6009
    %6012 = vset.pattern.permute.xlu0 4
    %6013 = vperm.xlu0 %6012, %v4818
    %v6014 = vpop.permute.xlu0 %6013
    %6016 = vset.pattern.permute.xlu0 4
    %6017 = vperm.xlu0 %6016, %v4819
    %v6018 = vpop.permute.xlu0 %6017
    %6020 = vset.pattern.permute.xlu0 4
    %6021 = vperm.xlu0 %6020, %v4820
    %v6022 = vpop.permute.xlu0 %6021
    %6024 = vset.pattern.permute.xlu0 4
    %6025 = vperm.xlu0 %6024, %v4821
    %v6026 = vpop.permute.xlu0 %6025
    %6028 = vset.pattern.permute.xlu0 4
    %6029 = vperm.xlu0 %6028, %v4822
    %v6030 = vpop.permute.xlu0 %6029
    %6032 = vset.pattern.permute.xlu0 4
    %6033 = vperm.xlu0 %6032, %v4823
    %v6034 = vpop.permute.xlu0 %6033
    %6036 = vset.pattern.permute.xlu0 4
    %6037 = vperm.xlu0 %6036, %v4824
    %v6038 = vpop.permute.xlu0 %6037
    %6040 = vset.pattern.permute.xlu0 4
    %6041 = vperm.xlu0 %6040, %v4825
    %v6042 = vpop.permute.xlu0 %6041
    %6044 = vset.pattern.permute.xlu0 4
    %6045 = vperm.xlu0 %6044, %v4828
    %v6046 = vpop.permute.xlu0 %6045
    %6048 = vset.pattern.permute.xlu0 4
    %6049 = vperm.xlu0 %6048, %v4829
    %v6050 = vpop.permute.xlu0 %6049
    %6052 = vset.pattern.permute.xlu0 4
    %6053 = vperm.xlu0 %6052, %v4830
    %v6054 = vpop.permute.xlu0 %6053
    %6056 = vset.pattern.permute.xlu0 4
    %6057 = vperm.xlu0 %6056, %v4831
    %v6058 = vpop.permute.xlu0 %6057
    %6060 = vset.pattern.permute.xlu0 4
    %6061 = vperm.xlu0 %6060, %v4832
    %v6062 = vpop.permute.xlu0 %6061
    %6064 = vset.pattern.permute.xlu0 4
    %6065 = vperm.xlu0 %6064, %v4833
    %v6066 = vpop.permute.xlu0 %6065
    %6068 = vset.pattern.permute.xlu0 4
    %6069 = vperm.xlu0 %6068, %v4834
    %v6070 = vpop.permute.xlu0 %6069
    %6072 = vset.pattern.permute.xlu0 4
    %6073 = vperm.xlu0 %6072, %v4835
    %v6074 = vpop.permute.xlu0 %6073
    %6076 = vset.pattern.permute.xlu0 4
    %6077 = vperm.xlu0 %6076, %v4836
    %v6078 = vpop.permute.xlu0 %6077
    %6080 = vset.pattern.permute.xlu0 4
    %6081 = vperm.xlu0 %6080, %v4837
    %v6082 = vpop.permute.xlu0 %6081
    %6084 = vset.pattern.permute.xlu0 4
    %6085 = vperm.xlu0 %6084, %v4838
    %v6086 = vpop.permute.xlu0 %6085
    %6088 = vset.pattern.permute.xlu0 4
    %6089 = vperm.xlu0 %6088, %v4839
    %v6090 = vpop.permute.xlu0 %6089
    %6092 = vset.pattern.permute.xlu0 4
    %6093 = vperm.xlu0 %6092, %v4840
    %v6094 = vpop.permute.xlu0 %6093
    %6096 = vset.pattern.permute.xlu0 4
    %6097 = vperm.xlu0 %6096, %v4841
    %v6098 = vpop.permute.xlu0 %6097
    %6100 = vset.pattern.permute.xlu0 4
    %6101 = vperm.xlu0 %6100, %v4842
    %v6102 = vpop.permute.xlu0 %6101
    %6104 = vset.pattern.permute.xlu0 4
    %6105 = vperm.xlu0 %6104, %v4843
    %v6106 = vpop.permute.xlu0 %6105
    %6108 = vset.pattern.permute.xlu0 4
    %6109 = vperm.xlu0 %6108, %v4844
    %v6110 = vpop.permute.xlu0 %6109
    %6112 = vset.pattern.permute.xlu0 4
    %6113 = vperm.xlu0 %6112, %v4845
    %v6114 = vpop.permute.xlu0 %6113
    %6116 = vset.pattern.permute.xlu0 4
    %6117 = vperm.xlu0 %6116, %v4846
    %v6118 = vpop.permute.xlu0 %6117
    %6120 = vset.pattern.permute.xlu0 4
    %6121 = vperm.xlu0 %6120, %v4847
    %v6122 = vpop.permute.xlu0 %6121
    %6124 = vset.pattern.permute.xlu0 4
    %6125 = vperm.xlu0 %6124, %v4848
    %v6126 = vpop.permute.xlu0 %6125
    %6128 = vset.pattern.permute.xlu0 4
    %6129 = vperm.xlu0 %6128, %v4849
    %v6130 = vpop.permute.xlu0 %6129
    %v6132 = vperm.slane %v74, 4
    %v6133 = vmul.f32 %v5958, %v6132
    %v6134 = vmul.f32 %v5962, %v6132
    %v6135 = vmul.f32 %v5966, %v6132
    %v6136 = vmul.f32 %v5970, %v6132
    %v6137 = vmul.f32 %v5974, %v6132
    %v6138 = vmul.f32 %v5978, %v6132
    %v6139 = vmul.f32 %v5982, %v6132
    %v6140 = vmul.f32 %v5986, %v6132
    %v6141 = vmul.f32 %v5990, %v6132
    %v6142 = vmul.f32 %v5994, %v6132
    %v6143 = vmul.f32 %v5998, %v6132
    %v6144 = vmul.f32 %v6002, %v6132
    %v6145 = vmul.f32 %v6006, %v6132
    %v6146 = vmul.f32 %v6010, %v6132
    %v6147 = vmul.f32 %v6014, %v6132
    %v6148 = vmul.f32 %v6018, %v6132
    %v6149 = vmul.f32 %v6022, %v6132
    %v6150 = vmul.f32 %v6026, %v6132
    %v6151 = vmul.f32 %v6030, %v6132
    %v6152 = vmul.f32 %v6034, %v6132
    %v6153 = vmul.f32 %v6038, %v6132
    %v6154 = vmul.f32 %v6042, %v6132
    %v6155 = vmul.f32 %v6046, %v6132
    %v6156 = vmul.f32 %v6050, %v6132
    %v6157 = vmul.f32 %v6054, %v6132
    %v6158 = vmul.f32 %v6058, %v6132
    %v6159 = vmul.f32 %v6062, %v6132
    %v6160 = vmul.f32 %v6066, %v6132
    %v6161 = vmul.f32 %v6070, %v6132
    %v6162 = vmul.f32 %v6074, %v6132
    %v6163 = vmul.f32 %v6078, %v6132
    %v6164 = vmul.f32 %v6082, %v6132
    %v6165 = vmul.f32 %v6086, %v6132
    %v6166 = vmul.f32 %v6090, %v6132
    %v6167 = vmul.f32 %v6094, %v6132
    %v6168 = vmul.f32 %v6098, %v6132
    %v6169 = vmul.f32 %v6102, %v6132
    %v6170 = vmul.f32 %v6106, %v6132
    %v6171 = vmul.f32 %v6110, %v6132
    %v6172 = vmul.f32 %v6114, %v6132
    %v6173 = vmul.f32 %v6118, %v6132
    %v6174 = vmul.f32 %v6122, %v6132
    %v6175 = vmul.f32 %v6126, %v6132
    %v6176 = vmul.f32 %v6130, %v6132
    %v6177 = vadd.f32 %v5912, %v6133
    %v6178 = vadd.f32 %v5913, %v6134
    %v6179 = vadd.f32 %v5914, %v6135
    %v6180 = vadd.f32 %v5915, %v6136
    %v6181 = vadd.f32 %v5916, %v6137
    %v6182 = vadd.f32 %v5917, %v6138
    %v6183 = vadd.f32 %v5918, %v6139
    %v6184 = vadd.f32 %v5919, %v6140
    %v6185 = vadd.f32 %v5920, %v6141
    %v6186 = vadd.f32 %v5921, %v6142
    %v6187 = vadd.f32 %v5922, %v6143
    %v6188 = vadd.f32 %v5923, %v6144
    %v6189 = vadd.f32 %v5924, %v6145
    %v6190 = vadd.f32 %v5925, %v6146
    %v6191 = vadd.f32 %v5926, %v6147
    %v6192 = vadd.f32 %v5927, %v6148
    %v6193 = vadd.f32 %v5928, %v6149
    %v6194 = vadd.f32 %v5929, %v6150
    %v6195 = vadd.f32 %v5930, %v6151
    %v6196 = vadd.f32 %v5931, %v6152
    %v6197 = vadd.f32 %v5932, %v6153
    %v6198 = vadd.f32 %v5933, %v6154
    %v6199 = vadd.f32 %v5934, %v6155
    %v6200 = vadd.f32 %v5935, %v6156
    %v6201 = vadd.f32 %v5936, %v6157
    %v6202 = vadd.f32 %v5937, %v6158
    %v6203 = vadd.f32 %v5938, %v6159
    %v6204 = vadd.f32 %v5939, %v6160
    %v6205 = vadd.f32 %v5940, %v6161
    %v6206 = vadd.f32 %v5941, %v6162
    %v6207 = vadd.f32 %v5942, %v6163
    %v6208 = vadd.f32 %v5943, %v6164
    %v6209 = vadd.f32 %v5944, %v6165
    %v6210 = vadd.f32 %v5945, %v6166
    %v6211 = vadd.f32 %v5946, %v6167
    %v6212 = vadd.f32 %v5947, %v6168
    %v6213 = vadd.f32 %v5948, %v6169
    %v6214 = vadd.f32 %v5949, %v6170
    %v6215 = vadd.f32 %v5950, %v6171
    %v6216 = vadd.f32 %v5951, %v6172
    %v6217 = vadd.f32 %v5952, %v6173
    %v6218 = vadd.f32 %v5953, %v6174
    %v6219 = vadd.f32 %v5954, %v6175
    %v6220 = vadd.f32 %v5955, %v6176
    %6221 = vset.pattern.permute.xlu0 5
    %6222 = vperm.xlu0 %6221, %v4804
    %v6223 = vpop.permute.xlu0 %6222
    %6225 = vset.pattern.permute.xlu0 5
    %6226 = vperm.xlu0 %6225, %v4805
    %v6227 = vpop.permute.xlu0 %6226
    %6229 = vset.pattern.permute.xlu0 5
    %6230 = vperm.xlu0 %6229, %v4806
    %v6231 = vpop.permute.xlu0 %6230
    %6233 = vset.pattern.permute.xlu0 5
    %6234 = vperm.xlu0 %6233, %v4807
    %v6235 = vpop.permute.xlu0 %6234
    %6237 = vset.pattern.permute.xlu0 5
    %6238 = vperm.xlu0 %6237, %v4808
    %v6239 = vpop.permute.xlu0 %6238
    %6241 = vset.pattern.permute.xlu0 5
    %6242 = vperm.xlu0 %6241, %v4809
    %v6243 = vpop.permute.xlu0 %6242
    %6245 = vset.pattern.permute.xlu0 5
    %6246 = vperm.xlu0 %6245, %v4810
    %v6247 = vpop.permute.xlu0 %6246
    %6249 = vset.pattern.permute.xlu0 5
    %6250 = vperm.xlu0 %6249, %v4811
    %v6251 = vpop.permute.xlu0 %6250
    %6253 = vset.pattern.permute.xlu0 5
    %6254 = vperm.xlu0 %6253, %v4812
    %v6255 = vpop.permute.xlu0 %6254
    %6257 = vset.pattern.permute.xlu0 5
    %6258 = vperm.xlu0 %6257, %v4813
    %v6259 = vpop.permute.xlu0 %6258
    %6261 = vset.pattern.permute.xlu0 5
    %6262 = vperm.xlu0 %6261, %v4814
    %v6263 = vpop.permute.xlu0 %6262
    %6265 = vset.pattern.permute.xlu0 5
    %6266 = vperm.xlu0 %6265, %v4815
    %v6267 = vpop.permute.xlu0 %6266
    %6269 = vset.pattern.permute.xlu0 5
    %6270 = vperm.xlu0 %6269, %v4816
    %v6271 = vpop.permute.xlu0 %6270
    %6273 = vset.pattern.permute.xlu0 5
    %6274 = vperm.xlu0 %6273, %v4817
    %v6275 = vpop.permute.xlu0 %6274
    %6277 = vset.pattern.permute.xlu0 5
    %6278 = vperm.xlu0 %6277, %v4818
    %v6279 = vpop.permute.xlu0 %6278
    %6281 = vset.pattern.permute.xlu0 5
    %6282 = vperm.xlu0 %6281, %v4819
    %v6283 = vpop.permute.xlu0 %6282
    %6285 = vset.pattern.permute.xlu0 5
    %6286 = vperm.xlu0 %6285, %v4820
    %v6287 = vpop.permute.xlu0 %6286
    %6289 = vset.pattern.permute.xlu0 5
    %6290 = vperm.xlu0 %6289, %v4821
    %v6291 = vpop.permute.xlu0 %6290
    %6293 = vset.pattern.permute.xlu0 5
    %6294 = vperm.xlu0 %6293, %v4822
    %v6295 = vpop.permute.xlu0 %6294
    %6297 = vset.pattern.permute.xlu0 5
    %6298 = vperm.xlu0 %6297, %v4823
    %v6299 = vpop.permute.xlu0 %6298
    %6301 = vset.pattern.permute.xlu0 5
    %6302 = vperm.xlu0 %6301, %v4824
    %v6303 = vpop.permute.xlu0 %6302
    %6305 = vset.pattern.permute.xlu0 5
    %6306 = vperm.xlu0 %6305, %v4825
    %v6307 = vpop.permute.xlu0 %6306
    %6309 = vset.pattern.permute.xlu0 5
    %6310 = vperm.xlu0 %6309, %v4828
    %v6311 = vpop.permute.xlu0 %6310
    %6313 = vset.pattern.permute.xlu0 5
    %6314 = vperm.xlu0 %6313, %v4829
    %v6315 = vpop.permute.xlu0 %6314
    %6317 = vset.pattern.permute.xlu0 5
    %6318 = vperm.xlu0 %6317, %v4830
    %v6319 = vpop.permute.xlu0 %6318
    %6321 = vset.pattern.permute.xlu0 5
    %6322 = vperm.xlu0 %6321, %v4831
    %v6323 = vpop.permute.xlu0 %6322
    %6325 = vset.pattern.permute.xlu0 5
    %6326 = vperm.xlu0 %6325, %v4832
    %v6327 = vpop.permute.xlu0 %6326
    %6329 = vset.pattern.permute.xlu0 5
    %6330 = vperm.xlu0 %6329, %v4833
    %v6331 = vpop.permute.xlu0 %6330
    %6333 = vset.pattern.permute.xlu0 5
    %6334 = vperm.xlu0 %6333, %v4834
    %v6335 = vpop.permute.xlu0 %6334
    %6337 = vset.pattern.permute.xlu0 5
    %6338 = vperm.xlu0 %6337, %v4835
    %v6339 = vpop.permute.xlu0 %6338
    %6341 = vset.pattern.permute.xlu0 5
    %6342 = vperm.xlu0 %6341, %v4836
    %v6343 = vpop.permute.xlu0 %6342
    %6345 = vset.pattern.permute.xlu0 5
    %6346 = vperm.xlu0 %6345, %v4837
    %v6347 = vpop.permute.xlu0 %6346
    %6349 = vset.pattern.permute.xlu0 5
    %6350 = vperm.xlu0 %6349, %v4838
    %v6351 = vpop.permute.xlu0 %6350
    %6353 = vset.pattern.permute.xlu0 5
    %6354 = vperm.xlu0 %6353, %v4839
    %v6355 = vpop.permute.xlu0 %6354
    %6357 = vset.pattern.permute.xlu0 5
    %6358 = vperm.xlu0 %6357, %v4840
    %v6359 = vpop.permute.xlu0 %6358
    %6361 = vset.pattern.permute.xlu0 5
    %6362 = vperm.xlu0 %6361, %v4841
    %v6363 = vpop.permute.xlu0 %6362
    %6365 = vset.pattern.permute.xlu0 5
    %6366 = vperm.xlu0 %6365, %v4842
    %v6367 = vpop.permute.xlu0 %6366
    %6369 = vset.pattern.permute.xlu0 5
    %6370 = vperm.xlu0 %6369, %v4843
    %v6371 = vpop.permute.xlu0 %6370
    %6373 = vset.pattern.permute.xlu0 5
    %6374 = vperm.xlu0 %6373, %v4844
    %v6375 = vpop.permute.xlu0 %6374
    %6377 = vset.pattern.permute.xlu0 5
    %6378 = vperm.xlu0 %6377, %v4845
    %v6379 = vpop.permute.xlu0 %6378
    %6381 = vset.pattern.permute.xlu0 5
    %6382 = vperm.xlu0 %6381, %v4846
    %v6383 = vpop.permute.xlu0 %6382
    %6385 = vset.pattern.permute.xlu0 5
    %6386 = vperm.xlu0 %6385, %v4847
    %v6387 = vpop.permute.xlu0 %6386
    %6389 = vset.pattern.permute.xlu0 5
    %6390 = vperm.xlu0 %6389, %v4848
    %v6391 = vpop.permute.xlu0 %6390
    %6393 = vset.pattern.permute.xlu0 5
    %6394 = vperm.xlu0 %6393, %v4849
    %v6395 = vpop.permute.xlu0 %6394
    %v6397 = vperm.slane %v74, 5
    %v6398 = vmul.f32 %v6223, %v6397
    %v6399 = vmul.f32 %v6227, %v6397
    %v6400 = vmul.f32 %v6231, %v6397
    %v6401 = vmul.f32 %v6235, %v6397
    %v6402 = vmul.f32 %v6239, %v6397
    %v6403 = vmul.f32 %v6243, %v6397
    %v6404 = vmul.f32 %v6247, %v6397
    %v6405 = vmul.f32 %v6251, %v6397
    %v6406 = vmul.f32 %v6255, %v6397
    %v6407 = vmul.f32 %v6259, %v6397
    %v6408 = vmul.f32 %v6263, %v6397
    %v6409 = vmul.f32 %v6267, %v6397
    %v6410 = vmul.f32 %v6271, %v6397
    %v6411 = vmul.f32 %v6275, %v6397
    %v6412 = vmul.f32 %v6279, %v6397
    %v6413 = vmul.f32 %v6283, %v6397
    %v6414 = vmul.f32 %v6287, %v6397
    %v6415 = vmul.f32 %v6291, %v6397
    %v6416 = vmul.f32 %v6295, %v6397
    %v6417 = vmul.f32 %v6299, %v6397
    %v6418 = vmul.f32 %v6303, %v6397
    %v6419 = vmul.f32 %v6307, %v6397
    %v6420 = vmul.f32 %v6311, %v6397
    %v6421 = vmul.f32 %v6315, %v6397
    %v6422 = vmul.f32 %v6319, %v6397
    %v6423 = vmul.f32 %v6323, %v6397
    %v6424 = vmul.f32 %v6327, %v6397
    %v6425 = vmul.f32 %v6331, %v6397
    %v6426 = vmul.f32 %v6335, %v6397
    %v6427 = vmul.f32 %v6339, %v6397
    %v6428 = vmul.f32 %v6343, %v6397
    %v6429 = vmul.f32 %v6347, %v6397
    %v6430 = vmul.f32 %v6351, %v6397
    %v6431 = vmul.f32 %v6355, %v6397
    %v6432 = vmul.f32 %v6359, %v6397
    %v6433 = vmul.f32 %v6363, %v6397
    %v6434 = vmul.f32 %v6367, %v6397
    %v6435 = vmul.f32 %v6371, %v6397
    %v6436 = vmul.f32 %v6375, %v6397
    %v6437 = vmul.f32 %v6379, %v6397
    %v6438 = vmul.f32 %v6383, %v6397
    %v6439 = vmul.f32 %v6387, %v6397
    %v6440 = vmul.f32 %v6391, %v6397
    %v6441 = vmul.f32 %v6395, %v6397
    %v6442 = vadd.f32 %v6177, %v6398
    %v6443 = vadd.f32 %v6178, %v6399
    %v6444 = vadd.f32 %v6179, %v6400
    %v6445 = vadd.f32 %v6180, %v6401
    %v6446 = vadd.f32 %v6181, %v6402
    %v6447 = vadd.f32 %v6182, %v6403
    %v6448 = vadd.f32 %v6183, %v6404
    %v6449 = vadd.f32 %v6184, %v6405
    %v6450 = vadd.f32 %v6185, %v6406
    %v6451 = vadd.f32 %v6186, %v6407
    %v6452 = vadd.f32 %v6187, %v6408
    %v6453 = vadd.f32 %v6188, %v6409
    %v6454 = vadd.f32 %v6189, %v6410
    %v6455 = vadd.f32 %v6190, %v6411
    %v6456 = vadd.f32 %v6191, %v6412
    %v6457 = vadd.f32 %v6192, %v6413
    %v6458 = vadd.f32 %v6193, %v6414
    %v6459 = vadd.f32 %v6194, %v6415
    %v6460 = vadd.f32 %v6195, %v6416
    %v6461 = vadd.f32 %v6196, %v6417
    %v6462 = vadd.f32 %v6197, %v6418
    %v6463 = vadd.f32 %v6198, %v6419
    %v6464 = vadd.f32 %v6199, %v6420
    %v6465 = vadd.f32 %v6200, %v6421
    %v6466 = vadd.f32 %v6201, %v6422
    %v6467 = vadd.f32 %v6202, %v6423
    %v6468 = vadd.f32 %v6203, %v6424
    %v6469 = vadd.f32 %v6204, %v6425
    %v6470 = vadd.f32 %v6205, %v6426
    %v6471 = vadd.f32 %v6206, %v6427
    %v6472 = vadd.f32 %v6207, %v6428
    %v6473 = vadd.f32 %v6208, %v6429
    %v6474 = vadd.f32 %v6209, %v6430
    %v6475 = vadd.f32 %v6210, %v6431
    %v6476 = vadd.f32 %v6211, %v6432
    %v6477 = vadd.f32 %v6212, %v6433
    %v6478 = vadd.f32 %v6213, %v6434
    %v6479 = vadd.f32 %v6214, %v6435
    %v6480 = vadd.f32 %v6215, %v6436
    %v6481 = vadd.f32 %v6216, %v6437
    %v6482 = vadd.f32 %v6217, %v6438
    %v6483 = vadd.f32 %v6218, %v6439
    %v6484 = vadd.f32 %v6219, %v6440
    %v6485 = vadd.f32 %v6220, %v6441
    %6486 = vset.pattern.permute.xlu0 6
    %6487 = vperm.xlu0 %6486, %v4804
    %v6488 = vpop.permute.xlu0 %6487
    %6490 = vset.pattern.permute.xlu0 6
    %6491 = vperm.xlu0 %6490, %v4805
    %v6492 = vpop.permute.xlu0 %6491
    %6494 = vset.pattern.permute.xlu0 6
    %6495 = vperm.xlu0 %6494, %v4806
    %v6496 = vpop.permute.xlu0 %6495
    %6498 = vset.pattern.permute.xlu0 6
    %6499 = vperm.xlu0 %6498, %v4807
    %v6500 = vpop.permute.xlu0 %6499
    %6502 = vset.pattern.permute.xlu0 6
    %6503 = vperm.xlu0 %6502, %v4808
    %v6504 = vpop.permute.xlu0 %6503
    %6506 = vset.pattern.permute.xlu0 6
    %6507 = vperm.xlu0 %6506, %v4809
    %v6508 = vpop.permute.xlu0 %6507
    %6510 = vset.pattern.permute.xlu0 6
    %6511 = vperm.xlu0 %6510, %v4810
    %v6512 = vpop.permute.xlu0 %6511
    %6514 = vset.pattern.permute.xlu0 6
    %6515 = vperm.xlu0 %6514, %v4811
    %v6516 = vpop.permute.xlu0 %6515
    %6518 = vset.pattern.permute.xlu0 6
    %6519 = vperm.xlu0 %6518, %v4812
    %v6520 = vpop.permute.xlu0 %6519
    %6522 = vset.pattern.permute.xlu0 6
    %6523 = vperm.xlu0 %6522, %v4813
    %v6524 = vpop.permute.xlu0 %6523
    %6526 = vset.pattern.permute.xlu0 6
    %6527 = vperm.xlu0 %6526, %v4814
    %v6528 = vpop.permute.xlu0 %6527
    %6530 = vset.pattern.permute.xlu0 6
    %6531 = vperm.xlu0 %6530, %v4815
    %v6532 = vpop.permute.xlu0 %6531
    %6534 = vset.pattern.permute.xlu0 6
    %6535 = vperm.xlu0 %6534, %v4816
    %v6536 = vpop.permute.xlu0 %6535
    %6538 = vset.pattern.permute.xlu0 6
    %6539 = vperm.xlu0 %6538, %v4817
    %v6540 = vpop.permute.xlu0 %6539
    %6542 = vset.pattern.permute.xlu0 6
    %6543 = vperm.xlu0 %6542, %v4818
    %v6544 = vpop.permute.xlu0 %6543
    %6546 = vset.pattern.permute.xlu0 6
    %6547 = vperm.xlu0 %6546, %v4819
    %v6548 = vpop.permute.xlu0 %6547
    %6550 = vset.pattern.permute.xlu0 6
    %6551 = vperm.xlu0 %6550, %v4820
    %v6552 = vpop.permute.xlu0 %6551
    %6554 = vset.pattern.permute.xlu0 6
    %6555 = vperm.xlu0 %6554, %v4821
    %v6556 = vpop.permute.xlu0 %6555
    %6558 = vset.pattern.permute.xlu0 6
    %6559 = vperm.xlu0 %6558, %v4822
    %v6560 = vpop.permute.xlu0 %6559
    %6562 = vset.pattern.permute.xlu0 6
    %6563 = vperm.xlu0 %6562, %v4823
    %v6564 = vpop.permute.xlu0 %6563
    %6566 = vset.pattern.permute.xlu0 6
    %6567 = vperm.xlu0 %6566, %v4824
    %v6568 = vpop.permute.xlu0 %6567
    %6570 = vset.pattern.permute.xlu0 6
    %6571 = vperm.xlu0 %6570, %v4825
    %v6572 = vpop.permute.xlu0 %6571
    %6574 = vset.pattern.permute.xlu0 6
    %6575 = vperm.xlu0 %6574, %v4828
    %v6576 = vpop.permute.xlu0 %6575
    %6578 = vset.pattern.permute.xlu0 6
    %6579 = vperm.xlu0 %6578, %v4829
    %v6580 = vpop.permute.xlu0 %6579
    %6582 = vset.pattern.permute.xlu0 6
    %6583 = vperm.xlu0 %6582, %v4830
    %v6584 = vpop.permute.xlu0 %6583
    %6586 = vset.pattern.permute.xlu0 6
    %6587 = vperm.xlu0 %6586, %v4831
    %v6588 = vpop.permute.xlu0 %6587
    %6590 = vset.pattern.permute.xlu0 6
    %6591 = vperm.xlu0 %6590, %v4832
    %v6592 = vpop.permute.xlu0 %6591
    %6594 = vset.pattern.permute.xlu0 6
    %6595 = vperm.xlu0 %6594, %v4833
    %v6596 = vpop.permute.xlu0 %6595
    %6598 = vset.pattern.permute.xlu0 6
    %6599 = vperm.xlu0 %6598, %v4834
    %v6600 = vpop.permute.xlu0 %6599
    %6602 = vset.pattern.permute.xlu0 6
    %6603 = vperm.xlu0 %6602, %v4835
    %v6604 = vpop.permute.xlu0 %6603
    %6606 = vset.pattern.permute.xlu0 6
    %6607 = vperm.xlu0 %6606, %v4836
    %v6608 = vpop.permute.xlu0 %6607
    %6610 = vset.pattern.permute.xlu0 6
    %6611 = vperm.xlu0 %6610, %v4837
    %v6612 = vpop.permute.xlu0 %6611
    %6614 = vset.pattern.permute.xlu0 6
    %6615 = vperm.xlu0 %6614, %v4838
    %v6616 = vpop.permute.xlu0 %6615
    %6618 = vset.pattern.permute.xlu0 6
    %6619 = vperm.xlu0 %6618, %v4839
    %v6620 = vpop.permute.xlu0 %6619
    %6622 = vset.pattern.permute.xlu0 6
    %6623 = vperm.xlu0 %6622, %v4840
    %v6624 = vpop.permute.xlu0 %6623
    %6626 = vset.pattern.permute.xlu0 6
    %6627 = vperm.xlu0 %6626, %v4841
    %v6628 = vpop.permute.xlu0 %6627
    %6630 = vset.pattern.permute.xlu0 6
    %6631 = vperm.xlu0 %6630, %v4842
    %v6632 = vpop.permute.xlu0 %6631
    %6634 = vset.pattern.permute.xlu0 6
    %6635 = vperm.xlu0 %6634, %v4843
    %v6636 = vpop.permute.xlu0 %6635
    %6638 = vset.pattern.permute.xlu0 6
    %6639 = vperm.xlu0 %6638, %v4844
    %v6640 = vpop.permute.xlu0 %6639
    %6642 = vset.pattern.permute.xlu0 6
    %6643 = vperm.xlu0 %6642, %v4845
    %v6644 = vpop.permute.xlu0 %6643
    %6646 = vset.pattern.permute.xlu0 6
    %6647 = vperm.xlu0 %6646, %v4846
    %v6648 = vpop.permute.xlu0 %6647
    %6650 = vset.pattern.permute.xlu0 6
    %6651 = vperm.xlu0 %6650, %v4847
    %v6652 = vpop.permute.xlu0 %6651
    %6654 = vset.pattern.permute.xlu0 6
    %6655 = vperm.xlu0 %6654, %v4848
    %v6656 = vpop.permute.xlu0 %6655
    %6658 = vset.pattern.permute.xlu0 6
    %6659 = vperm.xlu0 %6658, %v4849
    %v6660 = vpop.permute.xlu0 %6659
    %v6662 = vperm.slane %v74, 6
    %v6663 = vmul.f32 %v6488, %v6662
    %v6664 = vmul.f32 %v6492, %v6662
    %v6665 = vmul.f32 %v6496, %v6662
    %v6666 = vmul.f32 %v6500, %v6662
    %v6667 = vmul.f32 %v6504, %v6662
    %v6668 = vmul.f32 %v6508, %v6662
    %v6669 = vmul.f32 %v6512, %v6662
    %v6670 = vmul.f32 %v6516, %v6662
    %v6671 = vmul.f32 %v6520, %v6662
    %v6672 = vmul.f32 %v6524, %v6662
    %v6673 = vmul.f32 %v6528, %v6662
    %v6674 = vmul.f32 %v6532, %v6662
    %v6675 = vmul.f32 %v6536, %v6662
    %v6676 = vmul.f32 %v6540, %v6662
    %v6677 = vmul.f32 %v6544, %v6662
    %v6678 = vmul.f32 %v6548, %v6662
    %v6679 = vmul.f32 %v6552, %v6662
    %v6680 = vmul.f32 %v6556, %v6662
    %v6681 = vmul.f32 %v6560, %v6662
    %v6682 = vmul.f32 %v6564, %v6662
    %v6683 = vmul.f32 %v6568, %v6662
    %v6684 = vmul.f32 %v6572, %v6662
    %v6685 = vmul.f32 %v6576, %v6662
    %v6686 = vmul.f32 %v6580, %v6662
    %v6687 = vmul.f32 %v6584, %v6662
    %v6688 = vmul.f32 %v6588, %v6662
    %v6689 = vmul.f32 %v6592, %v6662
    %v6690 = vmul.f32 %v6596, %v6662
    %v6691 = vmul.f32 %v6600, %v6662
    %v6692 = vmul.f32 %v6604, %v6662
    %v6693 = vmul.f32 %v6608, %v6662
    %v6694 = vmul.f32 %v6612, %v6662
    %v6695 = vmul.f32 %v6616, %v6662
    %v6696 = vmul.f32 %v6620, %v6662
    %v6697 = vmul.f32 %v6624, %v6662
    %v6698 = vmul.f32 %v6628, %v6662
    %v6699 = vmul.f32 %v6632, %v6662
    %v6700 = vmul.f32 %v6636, %v6662
    %v6701 = vmul.f32 %v6640, %v6662
    %v6702 = vmul.f32 %v6644, %v6662
    %v6703 = vmul.f32 %v6648, %v6662
    %v6704 = vmul.f32 %v6652, %v6662
    %v6705 = vmul.f32 %v6656, %v6662
    %v6706 = vmul.f32 %v6660, %v6662
    %v6707 = vadd.f32 %v6442, %v6663
    %v6708 = vadd.f32 %v6443, %v6664
    %v6709 = vadd.f32 %v6444, %v6665
    %v6710 = vadd.f32 %v6445, %v6666
    %v6711 = vadd.f32 %v6446, %v6667
    %v6712 = vadd.f32 %v6447, %v6668
    %v6713 = vadd.f32 %v6448, %v6669
    %v6714 = vadd.f32 %v6449, %v6670
    %v6715 = vadd.f32 %v6450, %v6671
    %v6716 = vadd.f32 %v6451, %v6672
    %v6717 = vadd.f32 %v6452, %v6673
    %v6718 = vadd.f32 %v6453, %v6674
    %v6719 = vadd.f32 %v6454, %v6675
    %v6720 = vadd.f32 %v6455, %v6676
    %v6721 = vadd.f32 %v6456, %v6677
    %v6722 = vadd.f32 %v6457, %v6678
    %v6723 = vadd.f32 %v6458, %v6679
    %v6724 = vadd.f32 %v6459, %v6680
    %v6725 = vadd.f32 %v6460, %v6681
    %v6726 = vadd.f32 %v6461, %v6682
    %v6727 = vadd.f32 %v6462, %v6683
    %v6728 = vadd.f32 %v6463, %v6684
    %v6729 = vadd.f32 %v6464, %v6685
    %v6730 = vadd.f32 %v6465, %v6686
    %v6731 = vadd.f32 %v6466, %v6687
    %v6732 = vadd.f32 %v6467, %v6688
    %v6733 = vadd.f32 %v6468, %v6689
    %v6734 = vadd.f32 %v6469, %v6690
    %v6735 = vadd.f32 %v6470, %v6691
    %v6736 = vadd.f32 %v6471, %v6692
    %v6737 = vadd.f32 %v6472, %v6693
    %v6738 = vadd.f32 %v6473, %v6694
    %v6739 = vadd.f32 %v6474, %v6695
    %v6740 = vadd.f32 %v6475, %v6696
    %v6741 = vadd.f32 %v6476, %v6697
    %v6742 = vadd.f32 %v6477, %v6698
    %v6743 = vadd.f32 %v6478, %v6699
    %v6744 = vadd.f32 %v6479, %v6700
    %v6745 = vadd.f32 %v6480, %v6701
    %v6746 = vadd.f32 %v6481, %v6702
    %v6747 = vadd.f32 %v6482, %v6703
    %v6748 = vadd.f32 %v6483, %v6704
    %v6749 = vadd.f32 %v6484, %v6705
    %v6750 = vadd.f32 %v6485, %v6706
    %6751 = vset.pattern.permute.xlu0 7
    %6752 = vperm.xlu0 %6751, %v4804
    %v6753 = vpop.permute.xlu0 %6752
    %6755 = vset.pattern.permute.xlu0 7
    %6756 = vperm.xlu0 %6755, %v4805
    %v6757 = vpop.permute.xlu0 %6756
    %6759 = vset.pattern.permute.xlu0 7
    %6760 = vperm.xlu0 %6759, %v4806
    %v6761 = vpop.permute.xlu0 %6760
    %6763 = vset.pattern.permute.xlu0 7
    %6764 = vperm.xlu0 %6763, %v4807
    %v6765 = vpop.permute.xlu0 %6764
    %6767 = vset.pattern.permute.xlu0 7
    %6768 = vperm.xlu0 %6767, %v4808
    %v6769 = vpop.permute.xlu0 %6768
    %6771 = vset.pattern.permute.xlu0 7
    %6772 = vperm.xlu0 %6771, %v4809
    %v6773 = vpop.permute.xlu0 %6772
    %6775 = vset.pattern.permute.xlu0 7
    %6776 = vperm.xlu0 %6775, %v4810
    %v6777 = vpop.permute.xlu0 %6776
    %6779 = vset.pattern.permute.xlu0 7
    %6780 = vperm.xlu0 %6779, %v4811
    %v6781 = vpop.permute.xlu0 %6780
    %6783 = vset.pattern.permute.xlu0 7
    %6784 = vperm.xlu0 %6783, %v4812
    %v6785 = vpop.permute.xlu0 %6784
    %6787 = vset.pattern.permute.xlu0 7
    %6788 = vperm.xlu0 %6787, %v4813
    %v6789 = vpop.permute.xlu0 %6788
    %6791 = vset.pattern.permute.xlu0 7
    %6792 = vperm.xlu0 %6791, %v4814
    %v6793 = vpop.permute.xlu0 %6792
    %6795 = vset.pattern.permute.xlu0 7
    %6796 = vperm.xlu0 %6795, %v4815
    %v6797 = vpop.permute.xlu0 %6796
    %6799 = vset.pattern.permute.xlu0 7
    %6800 = vperm.xlu0 %6799, %v4816
    %v6801 = vpop.permute.xlu0 %6800
    %6803 = vset.pattern.permute.xlu0 7
    %6804 = vperm.xlu0 %6803, %v4817
    %v6805 = vpop.permute.xlu0 %6804
    %6807 = vset.pattern.permute.xlu0 7
    %6808 = vperm.xlu0 %6807, %v4818
    %v6809 = vpop.permute.xlu0 %6808
    %6811 = vset.pattern.permute.xlu0 7
    %6812 = vperm.xlu0 %6811, %v4819
    %v6813 = vpop.permute.xlu0 %6812
    %6815 = vset.pattern.permute.xlu0 7
    %6816 = vperm.xlu0 %6815, %v4820
    %v6817 = vpop.permute.xlu0 %6816
    %6819 = vset.pattern.permute.xlu0 7
    %6820 = vperm.xlu0 %6819, %v4821
    %v6821 = vpop.permute.xlu0 %6820
    %6823 = vset.pattern.permute.xlu0 7
    %6824 = vperm.xlu0 %6823, %v4822
    %v6825 = vpop.permute.xlu0 %6824
    %6827 = vset.pattern.permute.xlu0 7
    %6828 = vperm.xlu0 %6827, %v4823
    %v6829 = vpop.permute.xlu0 %6828
    %6831 = vset.pattern.permute.xlu0 7
    %6832 = vperm.xlu0 %6831, %v4824
    %v6833 = vpop.permute.xlu0 %6832
    %6835 = vset.pattern.permute.xlu0 7
    %6836 = vperm.xlu0 %6835, %v4825
    %v6837 = vpop.permute.xlu0 %6836
    %6839 = vset.pattern.permute.xlu0 7
    %6840 = vperm.xlu0 %6839, %v4828
    %v6841 = vpop.permute.xlu0 %6840
    %6843 = vset.pattern.permute.xlu0 7
    %6844 = vperm.xlu0 %6843, %v4829
    %v6845 = vpop.permute.xlu0 %6844
    %6847 = vset.pattern.permute.xlu0 7
    %6848 = vperm.xlu0 %6847, %v4830
    %v6849 = vpop.permute.xlu0 %6848
    %6851 = vset.pattern.permute.xlu0 7
    %6852 = vperm.xlu0 %6851, %v4831
    %v6853 = vpop.permute.xlu0 %6852
    %6855 = vset.pattern.permute.xlu0 7
    %6856 = vperm.xlu0 %6855, %v4832
    %v6857 = vpop.permute.xlu0 %6856
    %6859 = vset.pattern.permute.xlu0 7
    %6860 = vperm.xlu0 %6859, %v4833
    %v6861 = vpop.permute.xlu0 %6860
    %6863 = vset.pattern.permute.xlu0 7
    %6864 = vperm.xlu0 %6863, %v4834
    %v6865 = vpop.permute.xlu0 %6864
    %6867 = vset.pattern.permute.xlu0 7
    %6868 = vperm.xlu0 %6867, %v4835
    %v6869 = vpop.permute.xlu0 %6868
    %6871 = vset.pattern.permute.xlu0 7
    %6872 = vperm.xlu0 %6871, %v4836
    %v6873 = vpop.permute.xlu0 %6872
    %6875 = vset.pattern.permute.xlu0 7
    %6876 = vperm.xlu0 %6875, %v4837
    %v6877 = vpop.permute.xlu0 %6876
    %6879 = vset.pattern.permute.xlu0 7
    %6880 = vperm.xlu0 %6879, %v4838
    %v6881 = vpop.permute.xlu0 %6880
    %6883 = vset.pattern.permute.xlu0 7
    %6884 = vperm.xlu0 %6883, %v4839
    %v6885 = vpop.permute.xlu0 %6884
    %6887 = vset.pattern.permute.xlu0 7
    %6888 = vperm.xlu0 %6887, %v4840
    %v6889 = vpop.permute.xlu0 %6888
    %6891 = vset.pattern.permute.xlu0 7
    %6892 = vperm.xlu0 %6891, %v4841
    %v6893 = vpop.permute.xlu0 %6892
    %6895 = vset.pattern.permute.xlu0 7
    %6896 = vperm.xlu0 %6895, %v4842
    %v6897 = vpop.permute.xlu0 %6896
    %6899 = vset.pattern.permute.xlu0 7
    %6900 = vperm.xlu0 %6899, %v4843
    %v6901 = vpop.permute.xlu0 %6900
    %6903 = vset.pattern.permute.xlu0 7
    %6904 = vperm.xlu0 %6903, %v4844
    %v6905 = vpop.permute.xlu0 %6904
    %6907 = vset.pattern.permute.xlu0 7
    %6908 = vperm.xlu0 %6907, %v4845
    %v6909 = vpop.permute.xlu0 %6908
    %6911 = vset.pattern.permute.xlu0 7
    %6912 = vperm.xlu0 %6911, %v4846
    %v6913 = vpop.permute.xlu0 %6912
    %6915 = vset.pattern.permute.xlu0 7
    %6916 = vperm.xlu0 %6915, %v4847
    %v6917 = vpop.permute.xlu0 %6916
    %6919 = vset.pattern.permute.xlu0 7
    %6920 = vperm.xlu0 %6919, %v4848
    %v6921 = vpop.permute.xlu0 %6920
    %6923 = vset.pattern.permute.xlu0 7
    %6924 = vperm.xlu0 %6923, %v4849
    %v6925 = vpop.permute.xlu0 %6924
    %v6927 = vperm.slane %v74, 7
    %v6928 = vmul.f32 %v6753, %v6927
    %v6929 = vmul.f32 %v6757, %v6927
    %v6930 = vmul.f32 %v6761, %v6927
    %v6931 = vmul.f32 %v6765, %v6927
    %v6932 = vmul.f32 %v6769, %v6927
    %v6933 = vmul.f32 %v6773, %v6927
    %v6934 = vmul.f32 %v6777, %v6927
    %v6935 = vmul.f32 %v6781, %v6927
    %v6936 = vmul.f32 %v6785, %v6927
    %v6937 = vmul.f32 %v6789, %v6927
    %v6938 = vmul.f32 %v6793, %v6927
    %v6939 = vmul.f32 %v6797, %v6927
    %v6940 = vmul.f32 %v6801, %v6927
    %v6941 = vmul.f32 %v6805, %v6927
    %v6942 = vmul.f32 %v6809, %v6927
    %v6943 = vmul.f32 %v6813, %v6927
    %v6944 = vmul.f32 %v6817, %v6927
    %v6945 = vmul.f32 %v6821, %v6927
    %v6946 = vmul.f32 %v6825, %v6927
    %v6947 = vmul.f32 %v6829, %v6927
    %v6948 = vmul.f32 %v6833, %v6927
    %v6949 = vmul.f32 %v6837, %v6927
    %v6950 = vmul.f32 %v6841, %v6927
    %v6951 = vmul.f32 %v6845, %v6927
    %v6952 = vmul.f32 %v6849, %v6927
    %v6953 = vmul.f32 %v6853, %v6927
    %v6954 = vmul.f32 %v6857, %v6927
    %v6955 = vmul.f32 %v6861, %v6927
    %v6956 = vmul.f32 %v6865, %v6927
    %v6957 = vmul.f32 %v6869, %v6927
    %v6958 = vmul.f32 %v6873, %v6927
    %v6959 = vmul.f32 %v6877, %v6927
    %v6960 = vmul.f32 %v6881, %v6927
    %v6961 = vmul.f32 %v6885, %v6927
    %v6962 = vmul.f32 %v6889, %v6927
    %v6963 = vmul.f32 %v6893, %v6927
    %v6964 = vmul.f32 %v6897, %v6927
    %v6965 = vmul.f32 %v6901, %v6927
    %v6966 = vmul.f32 %v6905, %v6927
    %v6967 = vmul.f32 %v6909, %v6927
    %v6968 = vmul.f32 %v6913, %v6927
    %v6969 = vmul.f32 %v6917, %v6927
    %v6970 = vmul.f32 %v6921, %v6927
    %v6971 = vmul.f32 %v6925, %v6927
    %v6972 = vadd.f32 %v6707, %v6928
    %v6973 = vadd.f32 %v6708, %v6929
    %v6974 = vadd.f32 %v6709, %v6930
    %v6975 = vadd.f32 %v6710, %v6931
    %v6976 = vadd.f32 %v6711, %v6932
    %v6977 = vadd.f32 %v6712, %v6933
    %v6978 = vadd.f32 %v6713, %v6934
    %v6979 = vadd.f32 %v6714, %v6935
    %v6980 = vadd.f32 %v6715, %v6936
    %v6981 = vadd.f32 %v6716, %v6937
    %v6982 = vadd.f32 %v6717, %v6938
    %v6983 = vadd.f32 %v6718, %v6939
    %v6984 = vadd.f32 %v6719, %v6940
    %v6985 = vadd.f32 %v6720, %v6941
    %v6986 = vadd.f32 %v6721, %v6942
    %v6987 = vadd.f32 %v6722, %v6943
    %v6988 = vadd.f32 %v6723, %v6944
    %v6989 = vadd.f32 %v6724, %v6945
    %v6990 = vadd.f32 %v6725, %v6946
    %v6991 = vadd.f32 %v6726, %v6947
    %v6992 = vadd.f32 %v6727, %v6948
    %v6993 = vadd.f32 %v6728, %v6949
    %v6994 = vadd.f32 %v6729, %v6950
    %v6995 = vadd.f32 %v6730, %v6951
    %v6996 = vadd.f32 %v6731, %v6952
    %v6997 = vadd.f32 %v6732, %v6953
    %v6998 = vadd.f32 %v6733, %v6954
    %v6999 = vadd.f32 %v6734, %v6955
    %v7000 = vadd.f32 %v6735, %v6956
    %v7001 = vadd.f32 %v6736, %v6957
    %v7002 = vadd.f32 %v6737, %v6958
    %v7003 = vadd.f32 %v6738, %v6959
    %v7004 = vadd.f32 %v6739, %v6960
    %v7005 = vadd.f32 %v6740, %v6961
    %v7006 = vadd.f32 %v6741, %v6962
    %v7007 = vadd.f32 %v6742, %v6963
    %v7008 = vadd.f32 %v6743, %v6964
    %v7009 = vadd.f32 %v6744, %v6965
    %v7010 = vadd.f32 %v6745, %v6966
    %v7011 = vadd.f32 %v6746, %v6967
    %v7012 = vadd.f32 %v6747, %v6968
    %v7013 = vadd.f32 %v6748, %v6969
    %v7014 = vadd.f32 %v6749, %v6970
    %v7015 = vadd.f32 %v6750, %v6971
    %7016 = vset.pattern.permute.xlu0 8
    %7017 = vperm.xlu0 %7016, %v4804
    %v7018 = vpop.permute.xlu0 %7017
    %7020 = vset.pattern.permute.xlu0 8
    %7021 = vperm.xlu0 %7020, %v4805
    %v7022 = vpop.permute.xlu0 %7021
    %7024 = vset.pattern.permute.xlu0 8
    %7025 = vperm.xlu0 %7024, %v4806
    %v7026 = vpop.permute.xlu0 %7025
    %7028 = vset.pattern.permute.xlu0 8
    %7029 = vperm.xlu0 %7028, %v4807
    %v7030 = vpop.permute.xlu0 %7029
    %7032 = vset.pattern.permute.xlu0 8
    %7033 = vperm.xlu0 %7032, %v4808
    %v7034 = vpop.permute.xlu0 %7033
    %7036 = vset.pattern.permute.xlu0 8
    %7037 = vperm.xlu0 %7036, %v4809
    %v7038 = vpop.permute.xlu0 %7037
    %7040 = vset.pattern.permute.xlu0 8
    %7041 = vperm.xlu0 %7040, %v4810
    %v7042 = vpop.permute.xlu0 %7041
    %7044 = vset.pattern.permute.xlu0 8
    %7045 = vperm.xlu0 %7044, %v4811
    %v7046 = vpop.permute.xlu0 %7045
    %7048 = vset.pattern.permute.xlu0 8
    %7049 = vperm.xlu0 %7048, %v4812
    %v7050 = vpop.permute.xlu0 %7049
    %7052 = vset.pattern.permute.xlu0 8
    %7053 = vperm.xlu0 %7052, %v4813
    %v7054 = vpop.permute.xlu0 %7053
    %7056 = vset.pattern.permute.xlu0 8
    %7057 = vperm.xlu0 %7056, %v4814
    %v7058 = vpop.permute.xlu0 %7057
    %7060 = vset.pattern.permute.xlu0 8
    %7061 = vperm.xlu0 %7060, %v4815
    %v7062 = vpop.permute.xlu0 %7061
    %7064 = vset.pattern.permute.xlu0 8
    %7065 = vperm.xlu0 %7064, %v4816
    %v7066 = vpop.permute.xlu0 %7065
    %7068 = vset.pattern.permute.xlu0 8
    %7069 = vperm.xlu0 %7068, %v4817
    %v7070 = vpop.permute.xlu0 %7069
    %7072 = vset.pattern.permute.xlu0 8
    %7073 = vperm.xlu0 %7072, %v4818
    %v7074 = vpop.permute.xlu0 %7073
    %7076 = vset.pattern.permute.xlu0 8
    %7077 = vperm.xlu0 %7076, %v4819
    %v7078 = vpop.permute.xlu0 %7077
    %7080 = vset.pattern.permute.xlu0 8
    %7081 = vperm.xlu0 %7080, %v4820
    %v7082 = vpop.permute.xlu0 %7081
    %7084 = vset.pattern.permute.xlu0 8
    %7085 = vperm.xlu0 %7084, %v4821
    %v7086 = vpop.permute.xlu0 %7085
    %7088 = vset.pattern.permute.xlu0 8
    %7089 = vperm.xlu0 %7088, %v4822
    %v7090 = vpop.permute.xlu0 %7089
    %7092 = vset.pattern.permute.xlu0 8
    %7093 = vperm.xlu0 %7092, %v4823
    %v7094 = vpop.permute.xlu0 %7093
    %7096 = vset.pattern.permute.xlu0 8
    %7097 = vperm.xlu0 %7096, %v4824
    %v7098 = vpop.permute.xlu0 %7097
    %7100 = vset.pattern.permute.xlu0 8
    %7101 = vperm.xlu0 %7100, %v4825
    %v7102 = vpop.permute.xlu0 %7101
    %7104 = vset.pattern.permute.xlu0 8
    %7105 = vperm.xlu0 %7104, %v4828
    %v7106 = vpop.permute.xlu0 %7105
    %7108 = vset.pattern.permute.xlu0 8
    %7109 = vperm.xlu0 %7108, %v4829
    %v7110 = vpop.permute.xlu0 %7109
    %7112 = vset.pattern.permute.xlu0 8
    %7113 = vperm.xlu0 %7112, %v4830
    %v7114 = vpop.permute.xlu0 %7113
    %7116 = vset.pattern.permute.xlu0 8
    %7117 = vperm.xlu0 %7116, %v4831
    %v7118 = vpop.permute.xlu0 %7117
    %7120 = vset.pattern.permute.xlu0 8
    %7121 = vperm.xlu0 %7120, %v4832
    %v7122 = vpop.permute.xlu0 %7121
    %7124 = vset.pattern.permute.xlu0 8
    %7125 = vperm.xlu0 %7124, %v4833
    %v7126 = vpop.permute.xlu0 %7125
    %7128 = vset.pattern.permute.xlu0 8
    %7129 = vperm.xlu0 %7128, %v4834
    %v7130 = vpop.permute.xlu0 %7129
    %7132 = vset.pattern.permute.xlu0 8
    %7133 = vperm.xlu0 %7132, %v4835
    %v7134 = vpop.permute.xlu0 %7133
    %7136 = vset.pattern.permute.xlu0 8
    %7137 = vperm.xlu0 %7136, %v4836
    %v7138 = vpop.permute.xlu0 %7137
    %7140 = vset.pattern.permute.xlu0 8
    %7141 = vperm.xlu0 %7140, %v4837
    %v7142 = vpop.permute.xlu0 %7141
    %7144 = vset.pattern.permute.xlu0 8
    %7145 = vperm.xlu0 %7144, %v4838
    %v7146 = vpop.permute.xlu0 %7145
    %7148 = vset.pattern.permute.xlu0 8
    %7149 = vperm.xlu0 %7148, %v4839
    %v7150 = vpop.permute.xlu0 %7149
    %7152 = vset.pattern.permute.xlu0 8
    %7153 = vperm.xlu0 %7152, %v4840
    %v7154 = vpop.permute.xlu0 %7153
    %7156 = vset.pattern.permute.xlu0 8
    %7157 = vperm.xlu0 %7156, %v4841
    %v7158 = vpop.permute.xlu0 %7157
    %7160 = vset.pattern.permute.xlu0 8
    %7161 = vperm.xlu0 %7160, %v4842
    %v7162 = vpop.permute.xlu0 %7161
    %7164 = vset.pattern.permute.xlu0 8
    %7165 = vperm.xlu0 %7164, %v4843
    %v7166 = vpop.permute.xlu0 %7165
    %7168 = vset.pattern.permute.xlu0 8
    %7169 = vperm.xlu0 %7168, %v4844
    %v7170 = vpop.permute.xlu0 %7169
    %7172 = vset.pattern.permute.xlu0 8
    %7173 = vperm.xlu0 %7172, %v4845
    %v7174 = vpop.permute.xlu0 %7173
    %7176 = vset.pattern.permute.xlu0 8
    %7177 = vperm.xlu0 %7176, %v4846
    %v7178 = vpop.permute.xlu0 %7177
    %7180 = vset.pattern.permute.xlu0 8
    %7181 = vperm.xlu0 %7180, %v4847
    %v7182 = vpop.permute.xlu0 %7181
    %7184 = vset.pattern.permute.xlu0 8
    %7185 = vperm.xlu0 %7184, %v4848
    %v7186 = vpop.permute.xlu0 %7185
    %7188 = vset.pattern.permute.xlu0 8
    %7189 = vperm.xlu0 %7188, %v4849
    %v7190 = vpop.permute.xlu0 %7189
    %v7192 = vperm.slane %v75, 0
    %v7193 = vmul.f32 %v7018, %v7192
    %v7194 = vmul.f32 %v7022, %v7192
    %v7195 = vmul.f32 %v7026, %v7192
    %v7196 = vmul.f32 %v7030, %v7192
    %v7197 = vmul.f32 %v7034, %v7192
    %v7198 = vmul.f32 %v7038, %v7192
    %v7199 = vmul.f32 %v7042, %v7192
    %v7200 = vmul.f32 %v7046, %v7192
    %v7201 = vmul.f32 %v7050, %v7192
    %v7202 = vmul.f32 %v7054, %v7192
    %v7203 = vmul.f32 %v7058, %v7192
    %v7204 = vmul.f32 %v7062, %v7192
    %v7205 = vmul.f32 %v7066, %v7192
    %v7206 = vmul.f32 %v7070, %v7192
    %v7207 = vmul.f32 %v7074, %v7192
    %v7208 = vmul.f32 %v7078, %v7192
    %v7209 = vmul.f32 %v7082, %v7192
    %v7210 = vmul.f32 %v7086, %v7192
    %v7211 = vmul.f32 %v7090, %v7192
    %v7212 = vmul.f32 %v7094, %v7192
    %v7213 = vmul.f32 %v7098, %v7192
    %v7214 = vmul.f32 %v7102, %v7192
    %v7215 = vmul.f32 %v7106, %v7192
    %v7216 = vmul.f32 %v7110, %v7192
    %v7217 = vmul.f32 %v7114, %v7192
    %v7218 = vmul.f32 %v7118, %v7192
    %v7219 = vmul.f32 %v7122, %v7192
    %v7220 = vmul.f32 %v7126, %v7192
    %v7221 = vmul.f32 %v7130, %v7192
    %v7222 = vmul.f32 %v7134, %v7192
    %v7223 = vmul.f32 %v7138, %v7192
    %v7224 = vmul.f32 %v7142, %v7192
    %v7225 = vmul.f32 %v7146, %v7192
    %v7226 = vmul.f32 %v7150, %v7192
    %v7227 = vmul.f32 %v7154, %v7192
    %v7228 = vmul.f32 %v7158, %v7192
    %v7229 = vmul.f32 %v7162, %v7192
    %v7230 = vmul.f32 %v7166, %v7192
    %v7231 = vmul.f32 %v7170, %v7192
    %v7232 = vmul.f32 %v7174, %v7192
    %v7233 = vmul.f32 %v7178, %v7192
    %v7234 = vmul.f32 %v7182, %v7192
    %v7235 = vmul.f32 %v7186, %v7192
    %v7236 = vmul.f32 %v7190, %v7192
    %v7237 = vadd.f32 %v6972, %v7193
    %v7238 = vadd.f32 %v6973, %v7194
    %v7239 = vadd.f32 %v6974, %v7195
    %v7240 = vadd.f32 %v6975, %v7196
    %v7241 = vadd.f32 %v6976, %v7197
    %v7242 = vadd.f32 %v6977, %v7198
    %v7243 = vadd.f32 %v6978, %v7199
    %v7244 = vadd.f32 %v6979, %v7200
    %v7245 = vadd.f32 %v6980, %v7201
    %v7246 = vadd.f32 %v6981, %v7202
    %v7247 = vadd.f32 %v6982, %v7203
    %v7248 = vadd.f32 %v6983, %v7204
    %v7249 = vadd.f32 %v6984, %v7205
    %v7250 = vadd.f32 %v6985, %v7206
    %v7251 = vadd.f32 %v6986, %v7207
    %v7252 = vadd.f32 %v6987, %v7208
    %v7253 = vadd.f32 %v6988, %v7209
    %v7254 = vadd.f32 %v6989, %v7210
    %v7255 = vadd.f32 %v6990, %v7211
    %v7256 = vadd.f32 %v6991, %v7212
    %v7257 = vadd.f32 %v6992, %v7213
    %v7258 = vadd.f32 %v6993, %v7214
    %v7259 = vadd.f32 %v6994, %v7215
    %v7260 = vadd.f32 %v6995, %v7216
    %v7261 = vadd.f32 %v6996, %v7217
    %v7262 = vadd.f32 %v6997, %v7218
    %v7263 = vadd.f32 %v6998, %v7219
    %v7264 = vadd.f32 %v6999, %v7220
    %v7265 = vadd.f32 %v7000, %v7221
    %v7266 = vadd.f32 %v7001, %v7222
    %v7267 = vadd.f32 %v7002, %v7223
    %v7268 = vadd.f32 %v7003, %v7224
    %v7269 = vadd.f32 %v7004, %v7225
    %v7270 = vadd.f32 %v7005, %v7226
    %v7271 = vadd.f32 %v7006, %v7227
    %v7272 = vadd.f32 %v7007, %v7228
    %v7273 = vadd.f32 %v7008, %v7229
    %v7274 = vadd.f32 %v7009, %v7230
    %v7275 = vadd.f32 %v7010, %v7231
    %v7276 = vadd.f32 %v7011, %v7232
    %v7277 = vadd.f32 %v7012, %v7233
    %v7278 = vadd.f32 %v7013, %v7234
    %v7279 = vadd.f32 %v7014, %v7235
    %v7280 = vadd.f32 %v7015, %v7236
    %7281 = vset.pattern.permute.xlu0 9
    %7282 = vperm.xlu0 %7281, %v4804
    %v7283 = vpop.permute.xlu0 %7282
    %7285 = vset.pattern.permute.xlu0 9
    %7286 = vperm.xlu0 %7285, %v4805
    %v7287 = vpop.permute.xlu0 %7286
    %7289 = vset.pattern.permute.xlu0 9
    %7290 = vperm.xlu0 %7289, %v4806
    %v7291 = vpop.permute.xlu0 %7290
    %7293 = vset.pattern.permute.xlu0 9
    %7294 = vperm.xlu0 %7293, %v4807
    %v7295 = vpop.permute.xlu0 %7294
    %7297 = vset.pattern.permute.xlu0 9
    %7298 = vperm.xlu0 %7297, %v4808
    %v7299 = vpop.permute.xlu0 %7298
    %7301 = vset.pattern.permute.xlu0 9
    %7302 = vperm.xlu0 %7301, %v4809
    %v7303 = vpop.permute.xlu0 %7302
    %7305 = vset.pattern.permute.xlu0 9
    %7306 = vperm.xlu0 %7305, %v4810
    %v7307 = vpop.permute.xlu0 %7306
    %7309 = vset.pattern.permute.xlu0 9
    %7310 = vperm.xlu0 %7309, %v4811
    %v7311 = vpop.permute.xlu0 %7310
    %7313 = vset.pattern.permute.xlu0 9
    %7314 = vperm.xlu0 %7313, %v4812
    %v7315 = vpop.permute.xlu0 %7314
    %7317 = vset.pattern.permute.xlu0 9
    %7318 = vperm.xlu0 %7317, %v4813
    %v7319 = vpop.permute.xlu0 %7318
    %7321 = vset.pattern.permute.xlu0 9
    %7322 = vperm.xlu0 %7321, %v4814
    %v7323 = vpop.permute.xlu0 %7322
    %7325 = vset.pattern.permute.xlu0 9
    %7326 = vperm.xlu0 %7325, %v4815
    %v7327 = vpop.permute.xlu0 %7326
    %7329 = vset.pattern.permute.xlu0 9
    %7330 = vperm.xlu0 %7329, %v4816
    %v7331 = vpop.permute.xlu0 %7330
    %7333 = vset.pattern.permute.xlu0 9
    %7334 = vperm.xlu0 %7333, %v4817
    %v7335 = vpop.permute.xlu0 %7334
    %7337 = vset.pattern.permute.xlu0 9
    %7338 = vperm.xlu0 %7337, %v4818
    %v7339 = vpop.permute.xlu0 %7338
    %7341 = vset.pattern.permute.xlu0 9
    %7342 = vperm.xlu0 %7341, %v4819
    %v7343 = vpop.permute.xlu0 %7342
    %7345 = vset.pattern.permute.xlu0 9
    %7346 = vperm.xlu0 %7345, %v4820
    %v7347 = vpop.permute.xlu0 %7346
    %7349 = vset.pattern.permute.xlu0 9
    %7350 = vperm.xlu0 %7349, %v4821
    %v7351 = vpop.permute.xlu0 %7350
    %7353 = vset.pattern.permute.xlu0 9
    %7354 = vperm.xlu0 %7353, %v4822
    %v7355 = vpop.permute.xlu0 %7354
    %7357 = vset.pattern.permute.xlu0 9
    %7358 = vperm.xlu0 %7357, %v4823
    %v7359 = vpop.permute.xlu0 %7358
    %7361 = vset.pattern.permute.xlu0 9
    %7362 = vperm.xlu0 %7361, %v4824
    %v7363 = vpop.permute.xlu0 %7362
    %7365 = vset.pattern.permute.xlu0 9
    %7366 = vperm.xlu0 %7365, %v4825
    %v7367 = vpop.permute.xlu0 %7366
    %7369 = vset.pattern.permute.xlu0 9
    %7370 = vperm.xlu0 %7369, %v4828
    %v7371 = vpop.permute.xlu0 %7370
    %7373 = vset.pattern.permute.xlu0 9
    %7374 = vperm.xlu0 %7373, %v4829
    %v7375 = vpop.permute.xlu0 %7374
    %7377 = vset.pattern.permute.xlu0 9
    %7378 = vperm.xlu0 %7377, %v4830
    %v7379 = vpop.permute.xlu0 %7378
    %7381 = vset.pattern.permute.xlu0 9
    %7382 = vperm.xlu0 %7381, %v4831
    %v7383 = vpop.permute.xlu0 %7382
    %7385 = vset.pattern.permute.xlu0 9
    %7386 = vperm.xlu0 %7385, %v4832
    %v7387 = vpop.permute.xlu0 %7386
    %7389 = vset.pattern.permute.xlu0 9
    %7390 = vperm.xlu0 %7389, %v4833
    %v7391 = vpop.permute.xlu0 %7390
    %7393 = vset.pattern.permute.xlu0 9
    %7394 = vperm.xlu0 %7393, %v4834
    %v7395 = vpop.permute.xlu0 %7394
    %7397 = vset.pattern.permute.xlu0 9
    %7398 = vperm.xlu0 %7397, %v4835
    %v7399 = vpop.permute.xlu0 %7398
    %7401 = vset.pattern.permute.xlu0 9
    %7402 = vperm.xlu0 %7401, %v4836
    %v7403 = vpop.permute.xlu0 %7402
    %7405 = vset.pattern.permute.xlu0 9
    %7406 = vperm.xlu0 %7405, %v4837
    %v7407 = vpop.permute.xlu0 %7406
    %7409 = vset.pattern.permute.xlu0 9
    %7410 = vperm.xlu0 %7409, %v4838
    %v7411 = vpop.permute.xlu0 %7410
    %7413 = vset.pattern.permute.xlu0 9
    %7414 = vperm.xlu0 %7413, %v4839
    %v7415 = vpop.permute.xlu0 %7414
    %7417 = vset.pattern.permute.xlu0 9
    %7418 = vperm.xlu0 %7417, %v4840
    %v7419 = vpop.permute.xlu0 %7418
    %7421 = vset.pattern.permute.xlu0 9
    %7422 = vperm.xlu0 %7421, %v4841
    %v7423 = vpop.permute.xlu0 %7422
    %7425 = vset.pattern.permute.xlu0 9
    %7426 = vperm.xlu0 %7425, %v4842
    %v7427 = vpop.permute.xlu0 %7426
    %7429 = vset.pattern.permute.xlu0 9
    %7430 = vperm.xlu0 %7429, %v4843
    %v7431 = vpop.permute.xlu0 %7430
    %7433 = vset.pattern.permute.xlu0 9
    %7434 = vperm.xlu0 %7433, %v4844
    %v7435 = vpop.permute.xlu0 %7434
    %7437 = vset.pattern.permute.xlu0 9
    %7438 = vperm.xlu0 %7437, %v4845
    %v7439 = vpop.permute.xlu0 %7438
    %7441 = vset.pattern.permute.xlu0 9
    %7442 = vperm.xlu0 %7441, %v4846
    %v7443 = vpop.permute.xlu0 %7442
    %7445 = vset.pattern.permute.xlu0 9
    %7446 = vperm.xlu0 %7445, %v4847
    %v7447 = vpop.permute.xlu0 %7446
    %7449 = vset.pattern.permute.xlu0 9
    %7450 = vperm.xlu0 %7449, %v4848
    %v7451 = vpop.permute.xlu0 %7450
    %7453 = vset.pattern.permute.xlu0 9
    %7454 = vperm.xlu0 %7453, %v4849
    %v7455 = vpop.permute.xlu0 %7454
    %v7457 = vperm.slane %v75, 1
    %v7458 = vmul.f32 %v7283, %v7457
    %v7459 = vmul.f32 %v7287, %v7457
    %v7460 = vmul.f32 %v7291, %v7457
    %v7461 = vmul.f32 %v7295, %v7457
    %v7462 = vmul.f32 %v7299, %v7457
    %v7463 = vmul.f32 %v7303, %v7457
    %v7464 = vmul.f32 %v7307, %v7457
    %v7465 = vmul.f32 %v7311, %v7457
    %v7466 = vmul.f32 %v7315, %v7457
    %v7467 = vmul.f32 %v7319, %v7457
    %v7468 = vmul.f32 %v7323, %v7457
    %v7469 = vmul.f32 %v7327, %v7457
    %v7470 = vmul.f32 %v7331, %v7457
    %v7471 = vmul.f32 %v7335, %v7457
    %v7472 = vmul.f32 %v7339, %v7457
    %v7473 = vmul.f32 %v7343, %v7457
    %v7474 = vmul.f32 %v7347, %v7457
    %v7475 = vmul.f32 %v7351, %v7457
    %v7476 = vmul.f32 %v7355, %v7457
    %v7477 = vmul.f32 %v7359, %v7457
    %v7478 = vmul.f32 %v7363, %v7457
    %v7479 = vmul.f32 %v7367, %v7457
    %v7480 = vmul.f32 %v7371, %v7457
    %v7481 = vmul.f32 %v7375, %v7457
    %v7482 = vmul.f32 %v7379, %v7457
    %v7483 = vmul.f32 %v7383, %v7457
    %v7484 = vmul.f32 %v7387, %v7457
    %v7485 = vmul.f32 %v7391, %v7457
    %v7486 = vmul.f32 %v7395, %v7457
    %v7487 = vmul.f32 %v7399, %v7457
    %v7488 = vmul.f32 %v7403, %v7457
    %v7489 = vmul.f32 %v7407, %v7457
    %v7490 = vmul.f32 %v7411, %v7457
    %v7491 = vmul.f32 %v7415, %v7457
    %v7492 = vmul.f32 %v7419, %v7457
    %v7493 = vmul.f32 %v7423, %v7457
    %v7494 = vmul.f32 %v7427, %v7457
    %v7495 = vmul.f32 %v7431, %v7457
    %v7496 = vmul.f32 %v7435, %v7457
    %v7497 = vmul.f32 %v7439, %v7457
    %v7498 = vmul.f32 %v7443, %v7457
    %v7499 = vmul.f32 %v7447, %v7457
    %v7500 = vmul.f32 %v7451, %v7457
    %v7501 = vmul.f32 %v7455, %v7457
    %v7502 = vadd.f32 %v7237, %v7458
    %v7503 = vadd.f32 %v7238, %v7459
    %v7504 = vadd.f32 %v7239, %v7460
    %v7505 = vadd.f32 %v7240, %v7461
    %v7506 = vadd.f32 %v7241, %v7462
    %v7507 = vadd.f32 %v7242, %v7463
    %v7508 = vadd.f32 %v7243, %v7464
    %v7509 = vadd.f32 %v7244, %v7465
    %v7510 = vadd.f32 %v7245, %v7466
    %v7511 = vadd.f32 %v7246, %v7467
    %v7512 = vadd.f32 %v7247, %v7468
    %v7513 = vadd.f32 %v7248, %v7469
    %v7514 = vadd.f32 %v7249, %v7470
    %v7515 = vadd.f32 %v7250, %v7471
    %v7516 = vadd.f32 %v7251, %v7472
    %v7517 = vadd.f32 %v7252, %v7473
    %v7518 = vadd.f32 %v7253, %v7474
    %v7519 = vadd.f32 %v7254, %v7475
    %v7520 = vadd.f32 %v7255, %v7476
    %v7521 = vadd.f32 %v7256, %v7477
    %v7522 = vadd.f32 %v7257, %v7478
    %v7523 = vadd.f32 %v7258, %v7479
    %v7524 = vadd.f32 %v7259, %v7480
    %v7525 = vadd.f32 %v7260, %v7481
    %v7526 = vadd.f32 %v7261, %v7482
    %v7527 = vadd.f32 %v7262, %v7483
    %v7528 = vadd.f32 %v7263, %v7484
    %v7529 = vadd.f32 %v7264, %v7485
    %v7530 = vadd.f32 %v7265, %v7486
    %v7531 = vadd.f32 %v7266, %v7487
    %v7532 = vadd.f32 %v7267, %v7488
    %v7533 = vadd.f32 %v7268, %v7489
    %v7534 = vadd.f32 %v7269, %v7490
    %v7535 = vadd.f32 %v7270, %v7491
    %v7536 = vadd.f32 %v7271, %v7492
    %v7537 = vadd.f32 %v7272, %v7493
    %v7538 = vadd.f32 %v7273, %v7494
    %v7539 = vadd.f32 %v7274, %v7495
    %v7540 = vadd.f32 %v7275, %v7496
    %v7541 = vadd.f32 %v7276, %v7497
    %v7542 = vadd.f32 %v7277, %v7498
    %v7543 = vadd.f32 %v7278, %v7499
    %v7544 = vadd.f32 %v7279, %v7500
    %v7545 = vadd.f32 %v7280, %v7501
    %7546 = vset.pattern.permute.xlu0 10
    %7547 = vperm.xlu0 %7546, %v4804
    %v7548 = vpop.permute.xlu0 %7547
    %7550 = vset.pattern.permute.xlu0 10
    %7551 = vperm.xlu0 %7550, %v4805
    %v7552 = vpop.permute.xlu0 %7551
    %7554 = vset.pattern.permute.xlu0 10
    %7555 = vperm.xlu0 %7554, %v4806
    %v7556 = vpop.permute.xlu0 %7555
    %7558 = vset.pattern.permute.xlu0 10
    %7559 = vperm.xlu0 %7558, %v4807
    %v7560 = vpop.permute.xlu0 %7559
    %7562 = vset.pattern.permute.xlu0 10
    %7563 = vperm.xlu0 %7562, %v4808
    %v7564 = vpop.permute.xlu0 %7563
    %7566 = vset.pattern.permute.xlu0 10
    %7567 = vperm.xlu0 %7566, %v4809
    %v7568 = vpop.permute.xlu0 %7567
    %7570 = vset.pattern.permute.xlu0 10
    %7571 = vperm.xlu0 %7570, %v4810
    %v7572 = vpop.permute.xlu0 %7571
    %7574 = vset.pattern.permute.xlu0 10
    %7575 = vperm.xlu0 %7574, %v4811
    %v7576 = vpop.permute.xlu0 %7575
    %7578 = vset.pattern.permute.xlu0 10
    %7579 = vperm.xlu0 %7578, %v4812
    %v7580 = vpop.permute.xlu0 %7579
    %7582 = vset.pattern.permute.xlu0 10
    %7583 = vperm.xlu0 %7582, %v4813
    %v7584 = vpop.permute.xlu0 %7583
    %7586 = vset.pattern.permute.xlu0 10
    %7587 = vperm.xlu0 %7586, %v4814
    %v7588 = vpop.permute.xlu0 %7587
    %7590 = vset.pattern.permute.xlu0 10
    %7591 = vperm.xlu0 %7590, %v4815
    %v7592 = vpop.permute.xlu0 %7591
    %7594 = vset.pattern.permute.xlu0 10
    %7595 = vperm.xlu0 %7594, %v4816
    %v7596 = vpop.permute.xlu0 %7595
    %7598 = vset.pattern.permute.xlu0 10
    %7599 = vperm.xlu0 %7598, %v4817
    %v7600 = vpop.permute.xlu0 %7599
    %7602 = vset.pattern.permute.xlu0 10
    %7603 = vperm.xlu0 %7602, %v4818
    %v7604 = vpop.permute.xlu0 %7603
    %7606 = vset.pattern.permute.xlu0 10
    %7607 = vperm.xlu0 %7606, %v4819
    %v7608 = vpop.permute.xlu0 %7607
    %7610 = vset.pattern.permute.xlu0 10
    %7611 = vperm.xlu0 %7610, %v4820
    %v7612 = vpop.permute.xlu0 %7611
    %7614 = vset.pattern.permute.xlu0 10
    %7615 = vperm.xlu0 %7614, %v4821
    %v7616 = vpop.permute.xlu0 %7615
    %7618 = vset.pattern.permute.xlu0 10
    %7619 = vperm.xlu0 %7618, %v4822
    %v7620 = vpop.permute.xlu0 %7619
    %7622 = vset.pattern.permute.xlu0 10
    %7623 = vperm.xlu0 %7622, %v4823
    %v7624 = vpop.permute.xlu0 %7623
    %7626 = vset.pattern.permute.xlu0 10
    %7627 = vperm.xlu0 %7626, %v4824
    %v7628 = vpop.permute.xlu0 %7627
    %7630 = vset.pattern.permute.xlu0 10
    %7631 = vperm.xlu0 %7630, %v4825
    %v7632 = vpop.permute.xlu0 %7631
    %7634 = vset.pattern.permute.xlu0 10
    %7635 = vperm.xlu0 %7634, %v4828
    %v7636 = vpop.permute.xlu0 %7635
    %7638 = vset.pattern.permute.xlu0 10
    %7639 = vperm.xlu0 %7638, %v4829
    %v7640 = vpop.permute.xlu0 %7639
    %7642 = vset.pattern.permute.xlu0 10
    %7643 = vperm.xlu0 %7642, %v4830
    %v7644 = vpop.permute.xlu0 %7643
    %7646 = vset.pattern.permute.xlu0 10
    %7647 = vperm.xlu0 %7646, %v4831
    %v7648 = vpop.permute.xlu0 %7647
    %7650 = vset.pattern.permute.xlu0 10
    %7651 = vperm.xlu0 %7650, %v4832
    %v7652 = vpop.permute.xlu0 %7651
    %7654 = vset.pattern.permute.xlu0 10
    %7655 = vperm.xlu0 %7654, %v4833
    %v7656 = vpop.permute.xlu0 %7655
    %7658 = vset.pattern.permute.xlu0 10
    %7659 = vperm.xlu0 %7658, %v4834
    %v7660 = vpop.permute.xlu0 %7659
    %7662 = vset.pattern.permute.xlu0 10
    %7663 = vperm.xlu0 %7662, %v4835
    %v7664 = vpop.permute.xlu0 %7663
    %7666 = vset.pattern.permute.xlu0 10
    %7667 = vperm.xlu0 %7666, %v4836
    %v7668 = vpop.permute.xlu0 %7667
    %7670 = vset.pattern.permute.xlu0 10
    %7671 = vperm.xlu0 %7670, %v4837
    %v7672 = vpop.permute.xlu0 %7671
    %7674 = vset.pattern.permute.xlu0 10
    %7675 = vperm.xlu0 %7674, %v4838
    %v7676 = vpop.permute.xlu0 %7675
    %7678 = vset.pattern.permute.xlu0 10
    %7679 = vperm.xlu0 %7678, %v4839
    %v7680 = vpop.permute.xlu0 %7679
    %7682 = vset.pattern.permute.xlu0 10
    %7683 = vperm.xlu0 %7682, %v4840
    %v7684 = vpop.permute.xlu0 %7683
    %7686 = vset.pattern.permute.xlu0 10
    %7687 = vperm.xlu0 %7686, %v4841
    %v7688 = vpop.permute.xlu0 %7687
    %7690 = vset.pattern.permute.xlu0 10
    %7691 = vperm.xlu0 %7690, %v4842
    %v7692 = vpop.permute.xlu0 %7691
    %7694 = vset.pattern.permute.xlu0 10
    %7695 = vperm.xlu0 %7694, %v4843
    %v7696 = vpop.permute.xlu0 %7695
    %7698 = vset.pattern.permute.xlu0 10
    %7699 = vperm.xlu0 %7698, %v4844
    %v7700 = vpop.permute.xlu0 %7699
    %7702 = vset.pattern.permute.xlu0 10
    %7703 = vperm.xlu0 %7702, %v4845
    %v7704 = vpop.permute.xlu0 %7703
    %7706 = vset.pattern.permute.xlu0 10
    %7707 = vperm.xlu0 %7706, %v4846
    %v7708 = vpop.permute.xlu0 %7707
    %7710 = vset.pattern.permute.xlu0 10
    %7711 = vperm.xlu0 %7710, %v4847
    %v7712 = vpop.permute.xlu0 %7711
    %7714 = vset.pattern.permute.xlu0 10
    %7715 = vperm.xlu0 %7714, %v4848
    %v7716 = vpop.permute.xlu0 %7715
    %7718 = vset.pattern.permute.xlu0 10
    %7719 = vperm.xlu0 %7718, %v4849
    %v7720 = vpop.permute.xlu0 %7719
    %v7722 = vperm.slane %v75, 2
    %v7723 = vmul.f32 %v7548, %v7722
    %v7724 = vmul.f32 %v7552, %v7722
    %v7725 = vmul.f32 %v7556, %v7722
    %v7726 = vmul.f32 %v7560, %v7722
    %v7727 = vmul.f32 %v7564, %v7722
    %v7728 = vmul.f32 %v7568, %v7722
    %v7729 = vmul.f32 %v7572, %v7722
    %v7730 = vmul.f32 %v7576, %v7722
    %v7731 = vmul.f32 %v7580, %v7722
    %v7732 = vmul.f32 %v7584, %v7722
    %v7733 = vmul.f32 %v7588, %v7722
    %v7734 = vmul.f32 %v7592, %v7722
    %v7735 = vmul.f32 %v7596, %v7722
    %v7736 = vmul.f32 %v7600, %v7722
    %v7737 = vmul.f32 %v7604, %v7722
    %v7738 = vmul.f32 %v7608, %v7722
    %v7739 = vmul.f32 %v7612, %v7722
    %v7740 = vmul.f32 %v7616, %v7722
    %v7741 = vmul.f32 %v7620, %v7722
    %v7742 = vmul.f32 %v7624, %v7722
    %v7743 = vmul.f32 %v7628, %v7722
    %v7744 = vmul.f32 %v7632, %v7722
    %v7745 = vmul.f32 %v7636, %v7722
    %v7746 = vmul.f32 %v7640, %v7722
    %v7747 = vmul.f32 %v7644, %v7722
    %v7748 = vmul.f32 %v7648, %v7722
    %v7749 = vmul.f32 %v7652, %v7722
    %v7750 = vmul.f32 %v7656, %v7722
    %v7751 = vmul.f32 %v7660, %v7722
    %v7752 = vmul.f32 %v7664, %v7722
    %v7753 = vmul.f32 %v7668, %v7722
    %v7754 = vmul.f32 %v7672, %v7722
    %v7755 = vmul.f32 %v7676, %v7722
    %v7756 = vmul.f32 %v7680, %v7722
    %v7757 = vmul.f32 %v7684, %v7722
    %v7758 = vmul.f32 %v7688, %v7722
    %v7759 = vmul.f32 %v7692, %v7722
    %v7760 = vmul.f32 %v7696, %v7722
    %v7761 = vmul.f32 %v7700, %v7722
    %v7762 = vmul.f32 %v7704, %v7722
    %v7763 = vmul.f32 %v7708, %v7722
    %v7764 = vmul.f32 %v7712, %v7722
    %v7765 = vmul.f32 %v7716, %v7722
    %v7766 = vmul.f32 %v7720, %v7722
    %v7767 = vadd.f32 %v7502, %v7723
    %v7768 = vadd.f32 %v7503, %v7724
    %v7769 = vadd.f32 %v7504, %v7725
    %v7770 = vadd.f32 %v7505, %v7726
    %v7771 = vadd.f32 %v7506, %v7727
    %v7772 = vadd.f32 %v7507, %v7728
    %v7773 = vadd.f32 %v7508, %v7729
    %v7774 = vadd.f32 %v7509, %v7730
    %v7775 = vadd.f32 %v7510, %v7731
    %v7776 = vadd.f32 %v7511, %v7732
    %v7777 = vadd.f32 %v7512, %v7733
    %v7778 = vadd.f32 %v7513, %v7734
    %v7779 = vadd.f32 %v7514, %v7735
    %v7780 = vadd.f32 %v7515, %v7736
    %v7781 = vadd.f32 %v7516, %v7737
    %v7782 = vadd.f32 %v7517, %v7738
    %v7783 = vadd.f32 %v7518, %v7739
    %v7784 = vadd.f32 %v7519, %v7740
    %v7785 = vadd.f32 %v7520, %v7741
    %v7786 = vadd.f32 %v7521, %v7742
    %v7787 = vadd.f32 %v7522, %v7743
    %v7788 = vadd.f32 %v7523, %v7744
    %v7789 = vadd.f32 %v7524, %v7745
    %v7790 = vadd.f32 %v7525, %v7746
    %v7791 = vadd.f32 %v7526, %v7747
    %v7792 = vadd.f32 %v7527, %v7748
    %v7793 = vadd.f32 %v7528, %v7749
    %v7794 = vadd.f32 %v7529, %v7750
    %v7795 = vadd.f32 %v7530, %v7751
    %v7796 = vadd.f32 %v7531, %v7752
    %v7797 = vadd.f32 %v7532, %v7753
    %v7798 = vadd.f32 %v7533, %v7754
    %v7799 = vadd.f32 %v7534, %v7755
    %v7800 = vadd.f32 %v7535, %v7756
    %v7801 = vadd.f32 %v7536, %v7757
    %v7802 = vadd.f32 %v7537, %v7758
    %v7803 = vadd.f32 %v7538, %v7759
    %v7804 = vadd.f32 %v7539, %v7760
    %v7805 = vadd.f32 %v7540, %v7761
    %v7806 = vadd.f32 %v7541, %v7762
    %v7807 = vadd.f32 %v7542, %v7763
    %v7808 = vadd.f32 %v7543, %v7764
    %v7809 = vadd.f32 %v7544, %v7765
    %v7810 = vadd.f32 %v7545, %v7766
    %7811 = vset.pattern.permute.xlu0 11
    %7812 = vperm.xlu0 %7811, %v4804
    %v7813 = vpop.permute.xlu0 %7812
    %7815 = vset.pattern.permute.xlu0 11
    %7816 = vperm.xlu0 %7815, %v4805
    %v7817 = vpop.permute.xlu0 %7816
    %7819 = vset.pattern.permute.xlu0 11
    %7820 = vperm.xlu0 %7819, %v4806
    %v7821 = vpop.permute.xlu0 %7820
    %7823 = vset.pattern.permute.xlu0 11
    %7824 = vperm.xlu0 %7823, %v4807
    %v7825 = vpop.permute.xlu0 %7824
    %7827 = vset.pattern.permute.xlu0 11
    %7828 = vperm.xlu0 %7827, %v4808
    %v7829 = vpop.permute.xlu0 %7828
    %7831 = vset.pattern.permute.xlu0 11
    %7832 = vperm.xlu0 %7831, %v4809
    %v7833 = vpop.permute.xlu0 %7832
    %7835 = vset.pattern.permute.xlu0 11
    %7836 = vperm.xlu0 %7835, %v4810
    %v7837 = vpop.permute.xlu0 %7836
    %7839 = vset.pattern.permute.xlu0 11
    %7840 = vperm.xlu0 %7839, %v4811
    %v7841 = vpop.permute.xlu0 %7840
    %7843 = vset.pattern.permute.xlu0 11
    %7844 = vperm.xlu0 %7843, %v4812
    %v7845 = vpop.permute.xlu0 %7844
    %7847 = vset.pattern.permute.xlu0 11
    %7848 = vperm.xlu0 %7847, %v4813
    %v7849 = vpop.permute.xlu0 %7848
    %7851 = vset.pattern.permute.xlu0 11
    %7852 = vperm.xlu0 %7851, %v4814
    %v7853 = vpop.permute.xlu0 %7852
    %7855 = vset.pattern.permute.xlu0 11
    %7856 = vperm.xlu0 %7855, %v4815
    %v7857 = vpop.permute.xlu0 %7856
    %7859 = vset.pattern.permute.xlu0 11
    %7860 = vperm.xlu0 %7859, %v4816
    %v7861 = vpop.permute.xlu0 %7860
    %7863 = vset.pattern.permute.xlu0 11
    %7864 = vperm.xlu0 %7863, %v4817
    %v7865 = vpop.permute.xlu0 %7864
    %7867 = vset.pattern.permute.xlu0 11
    %7868 = vperm.xlu0 %7867, %v4818
    %v7869 = vpop.permute.xlu0 %7868
    %7871 = vset.pattern.permute.xlu0 11
    %7872 = vperm.xlu0 %7871, %v4819
    %v7873 = vpop.permute.xlu0 %7872
    %7875 = vset.pattern.permute.xlu0 11
    %7876 = vperm.xlu0 %7875, %v4820
    %v7877 = vpop.permute.xlu0 %7876
    %7879 = vset.pattern.permute.xlu0 11
    %7880 = vperm.xlu0 %7879, %v4821
    %v7881 = vpop.permute.xlu0 %7880
    %7883 = vset.pattern.permute.xlu0 11
    %7884 = vperm.xlu0 %7883, %v4822
    %v7885 = vpop.permute.xlu0 %7884
    %7887 = vset.pattern.permute.xlu0 11
    %7888 = vperm.xlu0 %7887, %v4823
    %v7889 = vpop.permute.xlu0 %7888
    %7891 = vset.pattern.permute.xlu0 11
    %7892 = vperm.xlu0 %7891, %v4824
    %v7893 = vpop.permute.xlu0 %7892
    %7895 = vset.pattern.permute.xlu0 11
    %7896 = vperm.xlu0 %7895, %v4825
    %v7897 = vpop.permute.xlu0 %7896
    %7899 = vset.pattern.permute.xlu0 11
    %7900 = vperm.xlu0 %7899, %v4828
    %v7901 = vpop.permute.xlu0 %7900
    %7903 = vset.pattern.permute.xlu0 11
    %7904 = vperm.xlu0 %7903, %v4829
    %v7905 = vpop.permute.xlu0 %7904
    %7907 = vset.pattern.permute.xlu0 11
    %7908 = vperm.xlu0 %7907, %v4830
    %v7909 = vpop.permute.xlu0 %7908
    %7911 = vset.pattern.permute.xlu0 11
    %7912 = vperm.xlu0 %7911, %v4831
    %v7913 = vpop.permute.xlu0 %7912
    %7915 = vset.pattern.permute.xlu0 11
    %7916 = vperm.xlu0 %7915, %v4832
    %v7917 = vpop.permute.xlu0 %7916
    %7919 = vset.pattern.permute.xlu0 11
    %7920 = vperm.xlu0 %7919, %v4833
    %v7921 = vpop.permute.xlu0 %7920
    %7923 = vset.pattern.permute.xlu0 11
    %7924 = vperm.xlu0 %7923, %v4834
    %v7925 = vpop.permute.xlu0 %7924
    %7927 = vset.pattern.permute.xlu0 11
    %7928 = vperm.xlu0 %7927, %v4835
    %v7929 = vpop.permute.xlu0 %7928
    %7931 = vset.pattern.permute.xlu0 11
    %7932 = vperm.xlu0 %7931, %v4836
    %v7933 = vpop.permute.xlu0 %7932
    %7935 = vset.pattern.permute.xlu0 11
    %7936 = vperm.xlu0 %7935, %v4837
    %v7937 = vpop.permute.xlu0 %7936
    %7939 = vset.pattern.permute.xlu0 11
    %7940 = vperm.xlu0 %7939, %v4838
    %v7941 = vpop.permute.xlu0 %7940
    %7943 = vset.pattern.permute.xlu0 11
    %7944 = vperm.xlu0 %7943, %v4839
    %v7945 = vpop.permute.xlu0 %7944
    %7947 = vset.pattern.permute.xlu0 11
    %7948 = vperm.xlu0 %7947, %v4840
    %v7949 = vpop.permute.xlu0 %7948
    %7951 = vset.pattern.permute.xlu0 11
    %7952 = vperm.xlu0 %7951, %v4841
    %v7953 = vpop.permute.xlu0 %7952
    %7955 = vset.pattern.permute.xlu0 11
    %7956 = vperm.xlu0 %7955, %v4842
    %v7957 = vpop.permute.xlu0 %7956
    %7959 = vset.pattern.permute.xlu0 11
    %7960 = vperm.xlu0 %7959, %v4843
    %v7961 = vpop.permute.xlu0 %7960
    %7963 = vset.pattern.permute.xlu0 11
    %7964 = vperm.xlu0 %7963, %v4844
    %v7965 = vpop.permute.xlu0 %7964
    %7967 = vset.pattern.permute.xlu0 11
    %7968 = vperm.xlu0 %7967, %v4845
    %v7969 = vpop.permute.xlu0 %7968
    %7971 = vset.pattern.permute.xlu0 11
    %7972 = vperm.xlu0 %7971, %v4846
    %v7973 = vpop.permute.xlu0 %7972
    %7975 = vset.pattern.permute.xlu0 11
    %7976 = vperm.xlu0 %7975, %v4847
    %v7977 = vpop.permute.xlu0 %7976
    %7979 = vset.pattern.permute.xlu0 11
    %7980 = vperm.xlu0 %7979, %v4848
    %v7981 = vpop.permute.xlu0 %7980
    %7983 = vset.pattern.permute.xlu0 11
    %7984 = vperm.xlu0 %7983, %v4849
    %v7985 = vpop.permute.xlu0 %7984
    %v7987 = vperm.slane %v75, 3
    %v7988 = vmul.f32 %v7813, %v7987
    %v7989 = vmul.f32 %v7817, %v7987
    %v7990 = vmul.f32 %v7821, %v7987
    %v7991 = vmul.f32 %v7825, %v7987
    %v7992 = vmul.f32 %v7829, %v7987
    %v7993 = vmul.f32 %v7833, %v7987
    %v7994 = vmul.f32 %v7837, %v7987
    %v7995 = vmul.f32 %v7841, %v7987
    %v7996 = vmul.f32 %v7845, %v7987
    %v7997 = vmul.f32 %v7849, %v7987
    %v7998 = vmul.f32 %v7853, %v7987
    %v7999 = vmul.f32 %v7857, %v7987
    %v8000 = vmul.f32 %v7861, %v7987
    %v8001 = vmul.f32 %v7865, %v7987
    %v8002 = vmul.f32 %v7869, %v7987
    %v8003 = vmul.f32 %v7873, %v7987
    %v8004 = vmul.f32 %v7877, %v7987
    %v8005 = vmul.f32 %v7881, %v7987
    %v8006 = vmul.f32 %v7885, %v7987
    %v8007 = vmul.f32 %v7889, %v7987
    %v8008 = vmul.f32 %v7893, %v7987
    %v8009 = vmul.f32 %v7897, %v7987
    %v8010 = vmul.f32 %v7901, %v7987
    %v8011 = vmul.f32 %v7905, %v7987
    %v8012 = vmul.f32 %v7909, %v7987
    %v8013 = vmul.f32 %v7913, %v7987
    %v8014 = vmul.f32 %v7917, %v7987
    %v8015 = vmul.f32 %v7921, %v7987
    %v8016 = vmul.f32 %v7925, %v7987
    %v8017 = vmul.f32 %v7929, %v7987
    %v8018 = vmul.f32 %v7933, %v7987
    %v8019 = vmul.f32 %v7937, %v7987
    %v8020 = vmul.f32 %v7941, %v7987
    %v8021 = vmul.f32 %v7945, %v7987
    %v8022 = vmul.f32 %v7949, %v7987
    %v8023 = vmul.f32 %v7953, %v7987
    %v8024 = vmul.f32 %v7957, %v7987
    %v8025 = vmul.f32 %v7961, %v7987
    %v8026 = vmul.f32 %v7965, %v7987
    %v8027 = vmul.f32 %v7969, %v7987
    %v8028 = vmul.f32 %v7973, %v7987
    %v8029 = vmul.f32 %v7977, %v7987
    %v8030 = vmul.f32 %v7981, %v7987
    %v8031 = vmul.f32 %v7985, %v7987
    %v8032 = vadd.f32 %v7767, %v7988
    %v8033 = vadd.f32 %v7768, %v7989
    %v8034 = vadd.f32 %v7769, %v7990
    %v8035 = vadd.f32 %v7770, %v7991
    %v8036 = vadd.f32 %v7771, %v7992
    %v8037 = vadd.f32 %v7772, %v7993
    %v8038 = vadd.f32 %v7773, %v7994
    %v8039 = vadd.f32 %v7774, %v7995
    %v8040 = vadd.f32 %v7775, %v7996
    %v8041 = vadd.f32 %v7776, %v7997
    %v8042 = vadd.f32 %v7777, %v7998
    %v8043 = vadd.f32 %v7778, %v7999
    %v8044 = vadd.f32 %v7779, %v8000
    %v8045 = vadd.f32 %v7780, %v8001
    %v8046 = vadd.f32 %v7781, %v8002
    %v8047 = vadd.f32 %v7782, %v8003
    %v8048 = vadd.f32 %v7783, %v8004
    %v8049 = vadd.f32 %v7784, %v8005
    %v8050 = vadd.f32 %v7785, %v8006
    %v8051 = vadd.f32 %v7786, %v8007
    %v8052 = vadd.f32 %v7787, %v8008
    %v8053 = vadd.f32 %v7788, %v8009
    %v8054 = vadd.f32 %v7789, %v8010
    %v8055 = vadd.f32 %v7790, %v8011
    %v8056 = vadd.f32 %v7791, %v8012
    %v8057 = vadd.f32 %v7792, %v8013
    %v8058 = vadd.f32 %v7793, %v8014
    %v8059 = vadd.f32 %v7794, %v8015
    %v8060 = vadd.f32 %v7795, %v8016
    %v8061 = vadd.f32 %v7796, %v8017
    %v8062 = vadd.f32 %v7797, %v8018
    %v8063 = vadd.f32 %v7798, %v8019
    %v8064 = vadd.f32 %v7799, %v8020
    %v8065 = vadd.f32 %v7800, %v8021
    %v8066 = vadd.f32 %v7801, %v8022
    %v8067 = vadd.f32 %v7802, %v8023
    %v8068 = vadd.f32 %v7803, %v8024
    %v8069 = vadd.f32 %v7804, %v8025
    %v8070 = vadd.f32 %v7805, %v8026
    %v8071 = vadd.f32 %v7806, %v8027
    %v8072 = vadd.f32 %v7807, %v8028
    %v8073 = vadd.f32 %v7808, %v8029
    %v8074 = vadd.f32 %v7809, %v8030
    %v8075 = vadd.f32 %v7810, %v8031
    %8076 = vset.pattern.permute.xlu0 12
    %8077 = vperm.xlu0 %8076, %v4804
    %v8078 = vpop.permute.xlu0 %8077
    %8080 = vset.pattern.permute.xlu0 12
    %8081 = vperm.xlu0 %8080, %v4805
    %v8082 = vpop.permute.xlu0 %8081
    %8084 = vset.pattern.permute.xlu0 12
    %8085 = vperm.xlu0 %8084, %v4806
    %v8086 = vpop.permute.xlu0 %8085
    %8088 = vset.pattern.permute.xlu0 12
    %8089 = vperm.xlu0 %8088, %v4807
    %v8090 = vpop.permute.xlu0 %8089
    %8092 = vset.pattern.permute.xlu0 12
    %8093 = vperm.xlu0 %8092, %v4808
    %v8094 = vpop.permute.xlu0 %8093
    %8096 = vset.pattern.permute.xlu0 12
    %8097 = vperm.xlu0 %8096, %v4809
    %v8098 = vpop.permute.xlu0 %8097
    %8100 = vset.pattern.permute.xlu0 12
    %8101 = vperm.xlu0 %8100, %v4810
    %v8102 = vpop.permute.xlu0 %8101
    %8104 = vset.pattern.permute.xlu0 12
    %8105 = vperm.xlu0 %8104, %v4811
    %v8106 = vpop.permute.xlu0 %8105
    %8108 = vset.pattern.permute.xlu0 12
    %8109 = vperm.xlu0 %8108, %v4812
    %v8110 = vpop.permute.xlu0 %8109
    %8112 = vset.pattern.permute.xlu0 12
    %8113 = vperm.xlu0 %8112, %v4813
    %v8114 = vpop.permute.xlu0 %8113
    %8116 = vset.pattern.permute.xlu0 12
    %8117 = vperm.xlu0 %8116, %v4814
    %v8118 = vpop.permute.xlu0 %8117
    %8120 = vset.pattern.permute.xlu0 12
    %8121 = vperm.xlu0 %8120, %v4815
    %v8122 = vpop.permute.xlu0 %8121
    %8124 = vset.pattern.permute.xlu0 12
    %8125 = vperm.xlu0 %8124, %v4816
    %v8126 = vpop.permute.xlu0 %8125
    %8128 = vset.pattern.permute.xlu0 12
    %8129 = vperm.xlu0 %8128, %v4817
    %v8130 = vpop.permute.xlu0 %8129
    %8132 = vset.pattern.permute.xlu0 12
    %8133 = vperm.xlu0 %8132, %v4818
    %v8134 = vpop.permute.xlu0 %8133
    %8136 = vset.pattern.permute.xlu0 12
    %8137 = vperm.xlu0 %8136, %v4819
    %v8138 = vpop.permute.xlu0 %8137
    %8140 = vset.pattern.permute.xlu0 12
    %8141 = vperm.xlu0 %8140, %v4820
    %v8142 = vpop.permute.xlu0 %8141
    %8144 = vset.pattern.permute.xlu0 12
    %8145 = vperm.xlu0 %8144, %v4821
    %v8146 = vpop.permute.xlu0 %8145
    %8148 = vset.pattern.permute.xlu0 12
    %8149 = vperm.xlu0 %8148, %v4822
    %v8150 = vpop.permute.xlu0 %8149
    %8152 = vset.pattern.permute.xlu0 12
    %8153 = vperm.xlu0 %8152, %v4823
    %v8154 = vpop.permute.xlu0 %8153
    %8156 = vset.pattern.permute.xlu0 12
    %8157 = vperm.xlu0 %8156, %v4824
    %v8158 = vpop.permute.xlu0 %8157
    %8160 = vset.pattern.permute.xlu0 12
    %8161 = vperm.xlu0 %8160, %v4825
    %v8162 = vpop.permute.xlu0 %8161
    %8164 = vset.pattern.permute.xlu0 12
    %8165 = vperm.xlu0 %8164, %v4828
    %v8166 = vpop.permute.xlu0 %8165
    %8168 = vset.pattern.permute.xlu0 12
    %8169 = vperm.xlu0 %8168, %v4829
    %v8170 = vpop.permute.xlu0 %8169
    %8172 = vset.pattern.permute.xlu0 12
    %8173 = vperm.xlu0 %8172, %v4830
    %v8174 = vpop.permute.xlu0 %8173
    %8176 = vset.pattern.permute.xlu0 12
    %8177 = vperm.xlu0 %8176, %v4831
    %v8178 = vpop.permute.xlu0 %8177
    %8180 = vset.pattern.permute.xlu0 12
    %8181 = vperm.xlu0 %8180, %v4832
    %v8182 = vpop.permute.xlu0 %8181
    %8184 = vset.pattern.permute.xlu0 12
    %8185 = vperm.xlu0 %8184, %v4833
    %v8186 = vpop.permute.xlu0 %8185
    %8188 = vset.pattern.permute.xlu0 12
    %8189 = vperm.xlu0 %8188, %v4834
    %v8190 = vpop.permute.xlu0 %8189
    %8192 = vset.pattern.permute.xlu0 12
    %8193 = vperm.xlu0 %8192, %v4835
    %v8194 = vpop.permute.xlu0 %8193
    %8196 = vset.pattern.permute.xlu0 12
    %8197 = vperm.xlu0 %8196, %v4836
    %v8198 = vpop.permute.xlu0 %8197
    %8200 = vset.pattern.permute.xlu0 12
    %8201 = vperm.xlu0 %8200, %v4837
    %v8202 = vpop.permute.xlu0 %8201
    %8204 = vset.pattern.permute.xlu0 12
    %8205 = vperm.xlu0 %8204, %v4838
    %v8206 = vpop.permute.xlu0 %8205
    %8208 = vset.pattern.permute.xlu0 12
    %8209 = vperm.xlu0 %8208, %v4839
    %v8210 = vpop.permute.xlu0 %8209
    %8212 = vset.pattern.permute.xlu0 12
    %8213 = vperm.xlu0 %8212, %v4840
    %v8214 = vpop.permute.xlu0 %8213
    %8216 = vset.pattern.permute.xlu0 12
    %8217 = vperm.xlu0 %8216, %v4841
    %v8218 = vpop.permute.xlu0 %8217
    %8220 = vset.pattern.permute.xlu0 12
    %8221 = vperm.xlu0 %8220, %v4842
    %v8222 = vpop.permute.xlu0 %8221
    %8224 = vset.pattern.permute.xlu0 12
    %8225 = vperm.xlu0 %8224, %v4843
    %v8226 = vpop.permute.xlu0 %8225
    %8228 = vset.pattern.permute.xlu0 12
    %8229 = vperm.xlu0 %8228, %v4844
    %v8230 = vpop.permute.xlu0 %8229
    %8232 = vset.pattern.permute.xlu0 12
    %8233 = vperm.xlu0 %8232, %v4845
    %v8234 = vpop.permute.xlu0 %8233
    %8236 = vset.pattern.permute.xlu0 12
    %8237 = vperm.xlu0 %8236, %v4846
    %v8238 = vpop.permute.xlu0 %8237
    %8240 = vset.pattern.permute.xlu0 12
    %8241 = vperm.xlu0 %8240, %v4847
    %v8242 = vpop.permute.xlu0 %8241
    %8244 = vset.pattern.permute.xlu0 12
    %8245 = vperm.xlu0 %8244, %v4848
    %v8246 = vpop.permute.xlu0 %8245
    %8248 = vset.pattern.permute.xlu0 12
    %8249 = vperm.xlu0 %8248, %v4849
    %v8250 = vpop.permute.xlu0 %8249
    %v8252 = vperm.slane %v75, 4
    %v8253 = vmul.f32 %v8078, %v8252
    %v8254 = vmul.f32 %v8082, %v8252
    %v8255 = vmul.f32 %v8086, %v8252
    %v8256 = vmul.f32 %v8090, %v8252
    %v8257 = vmul.f32 %v8094, %v8252
    %v8258 = vmul.f32 %v8098, %v8252
    %v8259 = vmul.f32 %v8102, %v8252
    %v8260 = vmul.f32 %v8106, %v8252
    %v8261 = vmul.f32 %v8110, %v8252
    %v8262 = vmul.f32 %v8114, %v8252
    %v8263 = vmul.f32 %v8118, %v8252
    %v8264 = vmul.f32 %v8122, %v8252
    %v8265 = vmul.f32 %v8126, %v8252
    %v8266 = vmul.f32 %v8130, %v8252
    %v8267 = vmul.f32 %v8134, %v8252
    %v8268 = vmul.f32 %v8138, %v8252
    %v8269 = vmul.f32 %v8142, %v8252
    %v8270 = vmul.f32 %v8146, %v8252
    %v8271 = vmul.f32 %v8150, %v8252
    %v8272 = vmul.f32 %v8154, %v8252
    %v8273 = vmul.f32 %v8158, %v8252
    %v8274 = vmul.f32 %v8162, %v8252
    %v8275 = vmul.f32 %v8166, %v8252
    %v8276 = vmul.f32 %v8170, %v8252
    %v8277 = vmul.f32 %v8174, %v8252
    %v8278 = vmul.f32 %v8178, %v8252
    %v8279 = vmul.f32 %v8182, %v8252
    %v8280 = vmul.f32 %v8186, %v8252
    %v8281 = vmul.f32 %v8190, %v8252
    %v8282 = vmul.f32 %v8194, %v8252
    %v8283 = vmul.f32 %v8198, %v8252
    %v8284 = vmul.f32 %v8202, %v8252
    %v8285 = vmul.f32 %v8206, %v8252
    %v8286 = vmul.f32 %v8210, %v8252
    %v8287 = vmul.f32 %v8214, %v8252
    %v8288 = vmul.f32 %v8218, %v8252
    %v8289 = vmul.f32 %v8222, %v8252
    %v8290 = vmul.f32 %v8226, %v8252
    %v8291 = vmul.f32 %v8230, %v8252
    %v8292 = vmul.f32 %v8234, %v8252
    %v8293 = vmul.f32 %v8238, %v8252
    %v8294 = vmul.f32 %v8242, %v8252
    %v8295 = vmul.f32 %v8246, %v8252
    %v8296 = vmul.f32 %v8250, %v8252
    %v8297 = vadd.f32 %v8032, %v8253
    %v8298 = vadd.f32 %v8033, %v8254
    %v8299 = vadd.f32 %v8034, %v8255
    %v8300 = vadd.f32 %v8035, %v8256
    %v8301 = vadd.f32 %v8036, %v8257
    %v8302 = vadd.f32 %v8037, %v8258
    %v8303 = vadd.f32 %v8038, %v8259
    %v8304 = vadd.f32 %v8039, %v8260
    %v8305 = vadd.f32 %v8040, %v8261
    %v8306 = vadd.f32 %v8041, %v8262
    %v8307 = vadd.f32 %v8042, %v8263
    %v8308 = vadd.f32 %v8043, %v8264
    %v8309 = vadd.f32 %v8044, %v8265
    %v8310 = vadd.f32 %v8045, %v8266
    %v8311 = vadd.f32 %v8046, %v8267
    %v8312 = vadd.f32 %v8047, %v8268
    %v8313 = vadd.f32 %v8048, %v8269
    %v8314 = vadd.f32 %v8049, %v8270
    %v8315 = vadd.f32 %v8050, %v8271
    %v8316 = vadd.f32 %v8051, %v8272
    %v8317 = vadd.f32 %v8052, %v8273
    %v8318 = vadd.f32 %v8053, %v8274
    %v8319 = vadd.f32 %v8054, %v8275
    %v8320 = vadd.f32 %v8055, %v8276
    %v8321 = vadd.f32 %v8056, %v8277
    %v8322 = vadd.f32 %v8057, %v8278
    %v8323 = vadd.f32 %v8058, %v8279
    %v8324 = vadd.f32 %v8059, %v8280
    %v8325 = vadd.f32 %v8060, %v8281
    %v8326 = vadd.f32 %v8061, %v8282
    %v8327 = vadd.f32 %v8062, %v8283
    %v8328 = vadd.f32 %v8063, %v8284
    %v8329 = vadd.f32 %v8064, %v8285
    %v8330 = vadd.f32 %v8065, %v8286
    %v8331 = vadd.f32 %v8066, %v8287
    %v8332 = vadd.f32 %v8067, %v8288
    %v8333 = vadd.f32 %v8068, %v8289
    %v8334 = vadd.f32 %v8069, %v8290
    %v8335 = vadd.f32 %v8070, %v8291
    %v8336 = vadd.f32 %v8071, %v8292
    %v8337 = vadd.f32 %v8072, %v8293
    %v8338 = vadd.f32 %v8073, %v8294
    %v8339 = vadd.f32 %v8074, %v8295
    %v8340 = vadd.f32 %v8075, %v8296
    %8341 = vset.pattern.permute.xlu0 13
    %8342 = vperm.xlu0 %8341, %v4804
    %v8343 = vpop.permute.xlu0 %8342
    %8345 = vset.pattern.permute.xlu0 13
    %8346 = vperm.xlu0 %8345, %v4805
    %v8347 = vpop.permute.xlu0 %8346
    %8349 = vset.pattern.permute.xlu0 13
    %8350 = vperm.xlu0 %8349, %v4806
    %v8351 = vpop.permute.xlu0 %8350
    %8353 = vset.pattern.permute.xlu0 13
    %8354 = vperm.xlu0 %8353, %v4807
    %v8355 = vpop.permute.xlu0 %8354
    %8357 = vset.pattern.permute.xlu0 13
    %8358 = vperm.xlu0 %8357, %v4808
    %v8359 = vpop.permute.xlu0 %8358
    %8361 = vset.pattern.permute.xlu0 13
    %8362 = vperm.xlu0 %8361, %v4809
    %v8363 = vpop.permute.xlu0 %8362
    %8365 = vset.pattern.permute.xlu0 13
    %8366 = vperm.xlu0 %8365, %v4810
    %v8367 = vpop.permute.xlu0 %8366
    %8369 = vset.pattern.permute.xlu0 13
    %8370 = vperm.xlu0 %8369, %v4811
    %v8371 = vpop.permute.xlu0 %8370
    %8373 = vset.pattern.permute.xlu0 13
    %8374 = vperm.xlu0 %8373, %v4812
    %v8375 = vpop.permute.xlu0 %8374
    %8377 = vset.pattern.permute.xlu0 13
    %8378 = vperm.xlu0 %8377, %v4813
    %v8379 = vpop.permute.xlu0 %8378
    %8381 = vset.pattern.permute.xlu0 13
    %8382 = vperm.xlu0 %8381, %v4814
    %v8383 = vpop.permute.xlu0 %8382
    %8385 = vset.pattern.permute.xlu0 13
    %8386 = vperm.xlu0 %8385, %v4815
    %v8387 = vpop.permute.xlu0 %8386
    %8389 = vset.pattern.permute.xlu0 13
    %8390 = vperm.xlu0 %8389, %v4816
    %v8391 = vpop.permute.xlu0 %8390
    %8393 = vset.pattern.permute.xlu0 13
    %8394 = vperm.xlu0 %8393, %v4817
    %v8395 = vpop.permute.xlu0 %8394
    %8397 = vset.pattern.permute.xlu0 13
    %8398 = vperm.xlu0 %8397, %v4818
    %v8399 = vpop.permute.xlu0 %8398
    %8401 = vset.pattern.permute.xlu0 13
    %8402 = vperm.xlu0 %8401, %v4819
    %v8403 = vpop.permute.xlu0 %8402
    %8405 = vset.pattern.permute.xlu0 13
    %8406 = vperm.xlu0 %8405, %v4820
    %v8407 = vpop.permute.xlu0 %8406
    %8409 = vset.pattern.permute.xlu0 13
    %8410 = vperm.xlu0 %8409, %v4821
    %v8411 = vpop.permute.xlu0 %8410
    %8413 = vset.pattern.permute.xlu0 13
    %8414 = vperm.xlu0 %8413, %v4822
    %v8415 = vpop.permute.xlu0 %8414
    %8417 = vset.pattern.permute.xlu0 13
    %8418 = vperm.xlu0 %8417, %v4823
    %v8419 = vpop.permute.xlu0 %8418
    %8421 = vset.pattern.permute.xlu0 13
    %8422 = vperm.xlu0 %8421, %v4824
    %v8423 = vpop.permute.xlu0 %8422
    %8425 = vset.pattern.permute.xlu0 13
    %8426 = vperm.xlu0 %8425, %v4825
    %v8427 = vpop.permute.xlu0 %8426
    %8429 = vset.pattern.permute.xlu0 13
    %8430 = vperm.xlu0 %8429, %v4828
    %v8431 = vpop.permute.xlu0 %8430
    %8433 = vset.pattern.permute.xlu0 13
    %8434 = vperm.xlu0 %8433, %v4829
    %v8435 = vpop.permute.xlu0 %8434
    %8437 = vset.pattern.permute.xlu0 13
    %8438 = vperm.xlu0 %8437, %v4830
    %v8439 = vpop.permute.xlu0 %8438
    %8441 = vset.pattern.permute.xlu0 13
    %8442 = vperm.xlu0 %8441, %v4831
    %v8443 = vpop.permute.xlu0 %8442
    %8445 = vset.pattern.permute.xlu0 13
    %8446 = vperm.xlu0 %8445, %v4832
    %v8447 = vpop.permute.xlu0 %8446
    %8449 = vset.pattern.permute.xlu0 13
    %8450 = vperm.xlu0 %8449, %v4833
    %v8451 = vpop.permute.xlu0 %8450
    %8453 = vset.pattern.permute.xlu0 13
    %8454 = vperm.xlu0 %8453, %v4834
    %v8455 = vpop.permute.xlu0 %8454
    %8457 = vset.pattern.permute.xlu0 13
    %8458 = vperm.xlu0 %8457, %v4835
    %v8459 = vpop.permute.xlu0 %8458
    %8461 = vset.pattern.permute.xlu0 13
    %8462 = vperm.xlu0 %8461, %v4836
    %v8463 = vpop.permute.xlu0 %8462
    %8465 = vset.pattern.permute.xlu0 13
    %8466 = vperm.xlu0 %8465, %v4837
    %v8467 = vpop.permute.xlu0 %8466
    %8469 = vset.pattern.permute.xlu0 13
    %8470 = vperm.xlu0 %8469, %v4838
    %v8471 = vpop.permute.xlu0 %8470
    %8473 = vset.pattern.permute.xlu0 13
    %8474 = vperm.xlu0 %8473, %v4839
    %v8475 = vpop.permute.xlu0 %8474
    %8477 = vset.pattern.permute.xlu0 13
    %8478 = vperm.xlu0 %8477, %v4840
    %v8479 = vpop.permute.xlu0 %8478
    %8481 = vset.pattern.permute.xlu0 13
    %8482 = vperm.xlu0 %8481, %v4841
    %v8483 = vpop.permute.xlu0 %8482
    %8485 = vset.pattern.permute.xlu0 13
    %8486 = vperm.xlu0 %8485, %v4842
    %v8487 = vpop.permute.xlu0 %8486
    %8489 = vset.pattern.permute.xlu0 13
    %8490 = vperm.xlu0 %8489, %v4843
    %v8491 = vpop.permute.xlu0 %8490
    %8493 = vset.pattern.permute.xlu0 13
    %8494 = vperm.xlu0 %8493, %v4844
    %v8495 = vpop.permute.xlu0 %8494
    %8497 = vset.pattern.permute.xlu0 13
    %8498 = vperm.xlu0 %8497, %v4845
    %v8499 = vpop.permute.xlu0 %8498
    %8501 = vset.pattern.permute.xlu0 13
    %8502 = vperm.xlu0 %8501, %v4846
    %v8503 = vpop.permute.xlu0 %8502
    %8505 = vset.pattern.permute.xlu0 13
    %8506 = vperm.xlu0 %8505, %v4847
    %v8507 = vpop.permute.xlu0 %8506
    %8509 = vset.pattern.permute.xlu0 13
    %8510 = vperm.xlu0 %8509, %v4848
    %v8511 = vpop.permute.xlu0 %8510
    %8513 = vset.pattern.permute.xlu0 13
    %8514 = vperm.xlu0 %8513, %v4849
    %v8515 = vpop.permute.xlu0 %8514
    %v8517 = vperm.slane %v75, 5
    %v8518 = vmul.f32 %v8343, %v8517
    %v8519 = vmul.f32 %v8347, %v8517
    %v8520 = vmul.f32 %v8351, %v8517
    %v8521 = vmul.f32 %v8355, %v8517
    %v8522 = vmul.f32 %v8359, %v8517
    %v8523 = vmul.f32 %v8363, %v8517
    %v8524 = vmul.f32 %v8367, %v8517
    %v8525 = vmul.f32 %v8371, %v8517
    %v8526 = vmul.f32 %v8375, %v8517
    %v8527 = vmul.f32 %v8379, %v8517
    %v8528 = vmul.f32 %v8383, %v8517
    %v8529 = vmul.f32 %v8387, %v8517
    %v8530 = vmul.f32 %v8391, %v8517
    %v8531 = vmul.f32 %v8395, %v8517
    %v8532 = vmul.f32 %v8399, %v8517
    %v8533 = vmul.f32 %v8403, %v8517
    %v8534 = vmul.f32 %v8407, %v8517
    %v8535 = vmul.f32 %v8411, %v8517
    %v8536 = vmul.f32 %v8415, %v8517
    %v8537 = vmul.f32 %v8419, %v8517
    %v8538 = vmul.f32 %v8423, %v8517
    %v8539 = vmul.f32 %v8427, %v8517
    %v8540 = vmul.f32 %v8431, %v8517
    %v8541 = vmul.f32 %v8435, %v8517
    %v8542 = vmul.f32 %v8439, %v8517
    %v8543 = vmul.f32 %v8443, %v8517
    %v8544 = vmul.f32 %v8447, %v8517
    %v8545 = vmul.f32 %v8451, %v8517
    %v8546 = vmul.f32 %v8455, %v8517
    %v8547 = vmul.f32 %v8459, %v8517
    %v8548 = vmul.f32 %v8463, %v8517
    %v8549 = vmul.f32 %v8467, %v8517
    %v8550 = vmul.f32 %v8471, %v8517
    %v8551 = vmul.f32 %v8475, %v8517
    %v8552 = vmul.f32 %v8479, %v8517
    %v8553 = vmul.f32 %v8483, %v8517
    %v8554 = vmul.f32 %v8487, %v8517
    %v8555 = vmul.f32 %v8491, %v8517
    %v8556 = vmul.f32 %v8495, %v8517
    %v8557 = vmul.f32 %v8499, %v8517
    %v8558 = vmul.f32 %v8503, %v8517
    %v8559 = vmul.f32 %v8507, %v8517
    %v8560 = vmul.f32 %v8511, %v8517
    %v8561 = vmul.f32 %v8515, %v8517
    %v8562 = vadd.f32 %v8297, %v8518
    %v8563 = vadd.f32 %v8298, %v8519
    %v8564 = vadd.f32 %v8299, %v8520
    %v8565 = vadd.f32 %v8300, %v8521
    %v8566 = vadd.f32 %v8301, %v8522
    %v8567 = vadd.f32 %v8302, %v8523
    %v8568 = vadd.f32 %v8303, %v8524
    %v8569 = vadd.f32 %v8304, %v8525
    %v8570 = vadd.f32 %v8305, %v8526
    %v8571 = vadd.f32 %v8306, %v8527
    %v8572 = vadd.f32 %v8307, %v8528
    %v8573 = vadd.f32 %v8308, %v8529
    %v8574 = vadd.f32 %v8309, %v8530
    %v8575 = vadd.f32 %v8310, %v8531
    %v8576 = vadd.f32 %v8311, %v8532
    %v8577 = vadd.f32 %v8312, %v8533
    %v8578 = vadd.f32 %v8313, %v8534
    %v8579 = vadd.f32 %v8314, %v8535
    %v8580 = vadd.f32 %v8315, %v8536
    %v8581 = vadd.f32 %v8316, %v8537
    %v8582 = vadd.f32 %v8317, %v8538
    %v8583 = vadd.f32 %v8318, %v8539
    %v8584 = vadd.f32 %v8319, %v8540
    %v8585 = vadd.f32 %v8320, %v8541
    %v8586 = vadd.f32 %v8321, %v8542
    %v8587 = vadd.f32 %v8322, %v8543
    %v8588 = vadd.f32 %v8323, %v8544
    %v8589 = vadd.f32 %v8324, %v8545
    %v8590 = vadd.f32 %v8325, %v8546
    %v8591 = vadd.f32 %v8326, %v8547
    %v8592 = vadd.f32 %v8327, %v8548
    %v8593 = vadd.f32 %v8328, %v8549
    %v8594 = vadd.f32 %v8329, %v8550
    %v8595 = vadd.f32 %v8330, %v8551
    %v8596 = vadd.f32 %v8331, %v8552
    %v8597 = vadd.f32 %v8332, %v8553
    %v8598 = vadd.f32 %v8333, %v8554
    %v8599 = vadd.f32 %v8334, %v8555
    %v8600 = vadd.f32 %v8335, %v8556
    %v8601 = vadd.f32 %v8336, %v8557
    %v8602 = vadd.f32 %v8337, %v8558
    %v8603 = vadd.f32 %v8338, %v8559
    %v8604 = vadd.f32 %v8339, %v8560
    %v8605 = vadd.f32 %v8340, %v8561
    %8606 = vset.pattern.permute.xlu0 14
    %8607 = vperm.xlu0 %8606, %v4804
    %v8608 = vpop.permute.xlu0 %8607
    %8610 = vset.pattern.permute.xlu0 14
    %8611 = vperm.xlu0 %8610, %v4805
    %v8612 = vpop.permute.xlu0 %8611
    %8614 = vset.pattern.permute.xlu0 14
    %8615 = vperm.xlu0 %8614, %v4806
    %v8616 = vpop.permute.xlu0 %8615
    %8618 = vset.pattern.permute.xlu0 14
    %8619 = vperm.xlu0 %8618, %v4807
    %v8620 = vpop.permute.xlu0 %8619
    %8622 = vset.pattern.permute.xlu0 14
    %8623 = vperm.xlu0 %8622, %v4808
    %v8624 = vpop.permute.xlu0 %8623
    %8626 = vset.pattern.permute.xlu0 14
    %8627 = vperm.xlu0 %8626, %v4809
    %v8628 = vpop.permute.xlu0 %8627
    %8630 = vset.pattern.permute.xlu0 14
    %8631 = vperm.xlu0 %8630, %v4810
    %v8632 = vpop.permute.xlu0 %8631
    %8634 = vset.pattern.permute.xlu0 14
    %8635 = vperm.xlu0 %8634, %v4811
    %v8636 = vpop.permute.xlu0 %8635
    %8638 = vset.pattern.permute.xlu0 14
    %8639 = vperm.xlu0 %8638, %v4812
    %v8640 = vpop.permute.xlu0 %8639
    %8642 = vset.pattern.permute.xlu0 14
    %8643 = vperm.xlu0 %8642, %v4813
    %v8644 = vpop.permute.xlu0 %8643
    %8646 = vset.pattern.permute.xlu0 14
    %8647 = vperm.xlu0 %8646, %v4814
    %v8648 = vpop.permute.xlu0 %8647
    %8650 = vset.pattern.permute.xlu0 14
    %8651 = vperm.xlu0 %8650, %v4815
    %v8652 = vpop.permute.xlu0 %8651
    %8654 = vset.pattern.permute.xlu0 14
    %8655 = vperm.xlu0 %8654, %v4816
    %v8656 = vpop.permute.xlu0 %8655
    %8658 = vset.pattern.permute.xlu0 14
    %8659 = vperm.xlu0 %8658, %v4817
    %v8660 = vpop.permute.xlu0 %8659
    %8662 = vset.pattern.permute.xlu0 14
    %8663 = vperm.xlu0 %8662, %v4818
    %v8664 = vpop.permute.xlu0 %8663
    %8666 = vset.pattern.permute.xlu0 14
    %8667 = vperm.xlu0 %8666, %v4819
    %v8668 = vpop.permute.xlu0 %8667
    %8670 = vset.pattern.permute.xlu0 14
    %8671 = vperm.xlu0 %8670, %v4820
    %v8672 = vpop.permute.xlu0 %8671
    %8674 = vset.pattern.permute.xlu0 14
    %8675 = vperm.xlu0 %8674, %v4821
    %v8676 = vpop.permute.xlu0 %8675
    %8678 = vset.pattern.permute.xlu0 14
    %8679 = vperm.xlu0 %8678, %v4822
    %v8680 = vpop.permute.xlu0 %8679
    %8682 = vset.pattern.permute.xlu0 14
    %8683 = vperm.xlu0 %8682, %v4823
    %v8684 = vpop.permute.xlu0 %8683
    %8686 = vset.pattern.permute.xlu0 14
    %8687 = vperm.xlu0 %8686, %v4824
    %v8688 = vpop.permute.xlu0 %8687
    %8690 = vset.pattern.permute.xlu0 14
    %8691 = vperm.xlu0 %8690, %v4825
    %v8692 = vpop.permute.xlu0 %8691
    %8694 = vset.pattern.permute.xlu0 14
    %8695 = vperm.xlu0 %8694, %v4828
    %v8696 = vpop.permute.xlu0 %8695
    %8698 = vset.pattern.permute.xlu0 14
    %8699 = vperm.xlu0 %8698, %v4829
    %v8700 = vpop.permute.xlu0 %8699
    %8702 = vset.pattern.permute.xlu0 14
    %8703 = vperm.xlu0 %8702, %v4830
    %v8704 = vpop.permute.xlu0 %8703
    %8706 = vset.pattern.permute.xlu0 14
    %8707 = vperm.xlu0 %8706, %v4831
    %v8708 = vpop.permute.xlu0 %8707
    %8710 = vset.pattern.permute.xlu0 14
    %8711 = vperm.xlu0 %8710, %v4832
    %v8712 = vpop.permute.xlu0 %8711
    %8714 = vset.pattern.permute.xlu0 14
    %8715 = vperm.xlu0 %8714, %v4833
    %v8716 = vpop.permute.xlu0 %8715
    %8718 = vset.pattern.permute.xlu0 14
    %8719 = vperm.xlu0 %8718, %v4834
    %v8720 = vpop.permute.xlu0 %8719
    %8722 = vset.pattern.permute.xlu0 14
    %8723 = vperm.xlu0 %8722, %v4835
    %v8724 = vpop.permute.xlu0 %8723
    %8726 = vset.pattern.permute.xlu0 14
    %8727 = vperm.xlu0 %8726, %v4836
    %v8728 = vpop.permute.xlu0 %8727
    %8730 = vset.pattern.permute.xlu0 14
    %8731 = vperm.xlu0 %8730, %v4837
    %v8732 = vpop.permute.xlu0 %8731
    %8734 = vset.pattern.permute.xlu0 14
    %8735 = vperm.xlu0 %8734, %v4838
    %v8736 = vpop.permute.xlu0 %8735
    %8738 = vset.pattern.permute.xlu0 14
    %8739 = vperm.xlu0 %8738, %v4839
    %v8740 = vpop.permute.xlu0 %8739
    %8742 = vset.pattern.permute.xlu0 14
    %8743 = vperm.xlu0 %8742, %v4840
    %v8744 = vpop.permute.xlu0 %8743
    %8746 = vset.pattern.permute.xlu0 14
    %8747 = vperm.xlu0 %8746, %v4841
    %v8748 = vpop.permute.xlu0 %8747
    %8750 = vset.pattern.permute.xlu0 14
    %8751 = vperm.xlu0 %8750, %v4842
    %v8752 = vpop.permute.xlu0 %8751
    %8754 = vset.pattern.permute.xlu0 14
    %8755 = vperm.xlu0 %8754, %v4843
    %v8756 = vpop.permute.xlu0 %8755
    %8758 = vset.pattern.permute.xlu0 14
    %8759 = vperm.xlu0 %8758, %v4844
    %v8760 = vpop.permute.xlu0 %8759
    %8762 = vset.pattern.permute.xlu0 14
    %8763 = vperm.xlu0 %8762, %v4845
    %v8764 = vpop.permute.xlu0 %8763
    %8766 = vset.pattern.permute.xlu0 14
    %8767 = vperm.xlu0 %8766, %v4846
    %v8768 = vpop.permute.xlu0 %8767
    %8770 = vset.pattern.permute.xlu0 14
    %8771 = vperm.xlu0 %8770, %v4847
    %v8772 = vpop.permute.xlu0 %8771
    %8774 = vset.pattern.permute.xlu0 14
    %8775 = vperm.xlu0 %8774, %v4848
    %v8776 = vpop.permute.xlu0 %8775
    %8778 = vset.pattern.permute.xlu0 14
    %8779 = vperm.xlu0 %8778, %v4849
    %v8780 = vpop.permute.xlu0 %8779
    %v8782 = vperm.slane %v75, 6
    %v8783 = vmul.f32 %v8608, %v8782
    %v8784 = vmul.f32 %v8612, %v8782
    %v8785 = vmul.f32 %v8616, %v8782
    %v8786 = vmul.f32 %v8620, %v8782
    %v8787 = vmul.f32 %v8624, %v8782
    %v8788 = vmul.f32 %v8628, %v8782
    %v8789 = vmul.f32 %v8632, %v8782
    %v8790 = vmul.f32 %v8636, %v8782
    %v8791 = vmul.f32 %v8640, %v8782
    %v8792 = vmul.f32 %v8644, %v8782
    %v8793 = vmul.f32 %v8648, %v8782
    %v8794 = vmul.f32 %v8652, %v8782
    %v8795 = vmul.f32 %v8656, %v8782
    %v8796 = vmul.f32 %v8660, %v8782
    %v8797 = vmul.f32 %v8664, %v8782
    %v8798 = vmul.f32 %v8668, %v8782
    %v8799 = vmul.f32 %v8672, %v8782
    %v8800 = vmul.f32 %v8676, %v8782
    %v8801 = vmul.f32 %v8680, %v8782
    %v8802 = vmul.f32 %v8684, %v8782
    %v8803 = vmul.f32 %v8688, %v8782
    %v8804 = vmul.f32 %v8692, %v8782
    %v8805 = vmul.f32 %v8696, %v8782
    %v8806 = vmul.f32 %v8700, %v8782
    %v8807 = vmul.f32 %v8704, %v8782
    %v8808 = vmul.f32 %v8708, %v8782
    %v8809 = vmul.f32 %v8712, %v8782
    %v8810 = vmul.f32 %v8716, %v8782
    %v8811 = vmul.f32 %v8720, %v8782
    %v8812 = vmul.f32 %v8724, %v8782
    %v8813 = vmul.f32 %v8728, %v8782
    %v8814 = vmul.f32 %v8732, %v8782
    %v8815 = vmul.f32 %v8736, %v8782
    %v8816 = vmul.f32 %v8740, %v8782
    %v8817 = vmul.f32 %v8744, %v8782
    %v8818 = vmul.f32 %v8748, %v8782
    %v8819 = vmul.f32 %v8752, %v8782
    %v8820 = vmul.f32 %v8756, %v8782
    %v8821 = vmul.f32 %v8760, %v8782
    %v8822 = vmul.f32 %v8764, %v8782
    %v8823 = vmul.f32 %v8768, %v8782
    %v8824 = vmul.f32 %v8772, %v8782
    %v8825 = vmul.f32 %v8776, %v8782
    %v8826 = vmul.f32 %v8780, %v8782
    %v8827 = vadd.f32 %v8562, %v8783
    %v8828 = vadd.f32 %v8563, %v8784
    %v8829 = vadd.f32 %v8564, %v8785
    %v8830 = vadd.f32 %v8565, %v8786
    %v8831 = vadd.f32 %v8566, %v8787
    %v8832 = vadd.f32 %v8567, %v8788
    %v8833 = vadd.f32 %v8568, %v8789
    %v8834 = vadd.f32 %v8569, %v8790
    %v8835 = vadd.f32 %v8570, %v8791
    %v8836 = vadd.f32 %v8571, %v8792
    %v8837 = vadd.f32 %v8572, %v8793
    %v8838 = vadd.f32 %v8573, %v8794
    %v8839 = vadd.f32 %v8574, %v8795
    %v8840 = vadd.f32 %v8575, %v8796
    %v8841 = vadd.f32 %v8576, %v8797
    %v8842 = vadd.f32 %v8577, %v8798
    %v8843 = vadd.f32 %v8578, %v8799
    %v8844 = vadd.f32 %v8579, %v8800
    %v8845 = vadd.f32 %v8580, %v8801
    %v8846 = vadd.f32 %v8581, %v8802
    %v8847 = vadd.f32 %v8582, %v8803
    %v8848 = vadd.f32 %v8583, %v8804
    %v8849 = vadd.f32 %v8584, %v8805
    %v8850 = vadd.f32 %v8585, %v8806
    %v8851 = vadd.f32 %v8586, %v8807
    %v8852 = vadd.f32 %v8587, %v8808
    %v8853 = vadd.f32 %v8588, %v8809
    %v8854 = vadd.f32 %v8589, %v8810
    %v8855 = vadd.f32 %v8590, %v8811
    %v8856 = vadd.f32 %v8591, %v8812
    %v8857 = vadd.f32 %v8592, %v8813
    %v8858 = vadd.f32 %v8593, %v8814
    %v8859 = vadd.f32 %v8594, %v8815
    %v8860 = vadd.f32 %v8595, %v8816
    %v8861 = vadd.f32 %v8596, %v8817
    %v8862 = vadd.f32 %v8597, %v8818
    %v8863 = vadd.f32 %v8598, %v8819
    %v8864 = vadd.f32 %v8599, %v8820
    %v8865 = vadd.f32 %v8600, %v8821
    %v8866 = vadd.f32 %v8601, %v8822
    %v8867 = vadd.f32 %v8602, %v8823
    %v8868 = vadd.f32 %v8603, %v8824
    %v8869 = vadd.f32 %v8604, %v8825
    %v8870 = vadd.f32 %v8605, %v8826
    %8871 = vset.pattern.permute.xlu0 15
    %8872 = vperm.xlu0 %8871, %v4804
    %v8873 = vpop.permute.xlu0 %8872
    %8875 = vset.pattern.permute.xlu0 15
    %8876 = vperm.xlu0 %8875, %v4805
    %v8877 = vpop.permute.xlu0 %8876
    %8879 = vset.pattern.permute.xlu0 15
    %8880 = vperm.xlu0 %8879, %v4806
    %v8881 = vpop.permute.xlu0 %8880
    %8883 = vset.pattern.permute.xlu0 15
    %8884 = vperm.xlu0 %8883, %v4807
    %v8885 = vpop.permute.xlu0 %8884
    %8887 = vset.pattern.permute.xlu0 15
    %8888 = vperm.xlu0 %8887, %v4808
    %v8889 = vpop.permute.xlu0 %8888
    %8891 = vset.pattern.permute.xlu0 15
    %8892 = vperm.xlu0 %8891, %v4809
    %v8893 = vpop.permute.xlu0 %8892
    %8895 = vset.pattern.permute.xlu0 15
    %8896 = vperm.xlu0 %8895, %v4810
    %v8897 = vpop.permute.xlu0 %8896
    %8899 = vset.pattern.permute.xlu0 15
    %8900 = vperm.xlu0 %8899, %v4811
    %v8901 = vpop.permute.xlu0 %8900
    %8903 = vset.pattern.permute.xlu0 15
    %8904 = vperm.xlu0 %8903, %v4812
    %v8905 = vpop.permute.xlu0 %8904
    %8907 = vset.pattern.permute.xlu0 15
    %8908 = vperm.xlu0 %8907, %v4813
    %v8909 = vpop.permute.xlu0 %8908
    %8911 = vset.pattern.permute.xlu0 15
    %8912 = vperm.xlu0 %8911, %v4814
    %v8913 = vpop.permute.xlu0 %8912
    %8915 = vset.pattern.permute.xlu0 15
    %8916 = vperm.xlu0 %8915, %v4815
    %v8917 = vpop.permute.xlu0 %8916
    %8919 = vset.pattern.permute.xlu0 15
    %8920 = vperm.xlu0 %8919, %v4816
    %v8921 = vpop.permute.xlu0 %8920
    %8923 = vset.pattern.permute.xlu0 15
    %8924 = vperm.xlu0 %8923, %v4817
    %v8925 = vpop.permute.xlu0 %8924
    %8927 = vset.pattern.permute.xlu0 15
    %8928 = vperm.xlu0 %8927, %v4818
    %v8929 = vpop.permute.xlu0 %8928
    %8931 = vset.pattern.permute.xlu0 15
    %8932 = vperm.xlu0 %8931, %v4819
    %v8933 = vpop.permute.xlu0 %8932
    %8935 = vset.pattern.permute.xlu0 15
    %8936 = vperm.xlu0 %8935, %v4820
    %v8937 = vpop.permute.xlu0 %8936
    %8939 = vset.pattern.permute.xlu0 15
    %8940 = vperm.xlu0 %8939, %v4821
    %v8941 = vpop.permute.xlu0 %8940
    %8943 = vset.pattern.permute.xlu0 15
    %8944 = vperm.xlu0 %8943, %v4822
    %v8945 = vpop.permute.xlu0 %8944
    %8947 = vset.pattern.permute.xlu0 15
    %8948 = vperm.xlu0 %8947, %v4823
    %v8949 = vpop.permute.xlu0 %8948
    %8951 = vset.pattern.permute.xlu0 15
    %8952 = vperm.xlu0 %8951, %v4824
    %v8953 = vpop.permute.xlu0 %8952
    %8955 = vset.pattern.permute.xlu0 15
    %8956 = vperm.xlu0 %8955, %v4825
    %v8957 = vpop.permute.xlu0 %8956
    %8959 = vset.pattern.permute.xlu0 15
    %8960 = vperm.xlu0 %8959, %v4828
    %v8961 = vpop.permute.xlu0 %8960
    %8963 = vset.pattern.permute.xlu0 15
    %8964 = vperm.xlu0 %8963, %v4829
    %v8965 = vpop.permute.xlu0 %8964
    %8967 = vset.pattern.permute.xlu0 15
    %8968 = vperm.xlu0 %8967, %v4830
    %v8969 = vpop.permute.xlu0 %8968
    %8971 = vset.pattern.permute.xlu0 15
    %8972 = vperm.xlu0 %8971, %v4831
    %v8973 = vpop.permute.xlu0 %8972
    %8975 = vset.pattern.permute.xlu0 15
    %8976 = vperm.xlu0 %8975, %v4832
    %v8977 = vpop.permute.xlu0 %8976
    %8979 = vset.pattern.permute.xlu0 15
    %8980 = vperm.xlu0 %8979, %v4833
    %v8981 = vpop.permute.xlu0 %8980
    %8983 = vset.pattern.permute.xlu0 15
    %8984 = vperm.xlu0 %8983, %v4834
    %v8985 = vpop.permute.xlu0 %8984
    %8987 = vset.pattern.permute.xlu0 15
    %8988 = vperm.xlu0 %8987, %v4835
    %v8989 = vpop.permute.xlu0 %8988
    %8991 = vset.pattern.permute.xlu0 15
    %8992 = vperm.xlu0 %8991, %v4836
    %v8993 = vpop.permute.xlu0 %8992
    %8995 = vset.pattern.permute.xlu0 15
    %8996 = vperm.xlu0 %8995, %v4837
    %v8997 = vpop.permute.xlu0 %8996
    %8999 = vset.pattern.permute.xlu0 15
    %9000 = vperm.xlu0 %8999, %v4838
    %v9001 = vpop.permute.xlu0 %9000
    %9003 = vset.pattern.permute.xlu0 15
    %9004 = vperm.xlu0 %9003, %v4839
    %v9005 = vpop.permute.xlu0 %9004
    %9007 = vset.pattern.permute.xlu0 15
    %9008 = vperm.xlu0 %9007, %v4840
    %v9009 = vpop.permute.xlu0 %9008
    %9011 = vset.pattern.permute.xlu0 15
    %9012 = vperm.xlu0 %9011, %v4841
    %v9013 = vpop.permute.xlu0 %9012
    %9015 = vset.pattern.permute.xlu0 15
    %9016 = vperm.xlu0 %9015, %v4842
    %v9017 = vpop.permute.xlu0 %9016
    %9019 = vset.pattern.permute.xlu0 15
    %9020 = vperm.xlu0 %9019, %v4843
    %v9021 = vpop.permute.xlu0 %9020
    %9023 = vset.pattern.permute.xlu0 15
    %9024 = vperm.xlu0 %9023, %v4844
    %v9025 = vpop.permute.xlu0 %9024
    %9027 = vset.pattern.permute.xlu0 15
    %9028 = vperm.xlu0 %9027, %v4845
    %v9029 = vpop.permute.xlu0 %9028
    %9031 = vset.pattern.permute.xlu0 15
    %9032 = vperm.xlu0 %9031, %v4846
    %v9033 = vpop.permute.xlu0 %9032
    %9035 = vset.pattern.permute.xlu0 15
    %9036 = vperm.xlu0 %9035, %v4847
    %v9037 = vpop.permute.xlu0 %9036
    %9039 = vset.pattern.permute.xlu0 15
    %9040 = vperm.xlu0 %9039, %v4848
    %v9041 = vpop.permute.xlu0 %9040
    %9043 = vset.pattern.permute.xlu0 15
    %9044 = vperm.xlu0 %9043, %v4849
    %v9045 = vpop.permute.xlu0 %9044
    %v9047 = vperm.slane %v75, 7
    %v9048 = vmul.f32 %v8873, %v9047
    %v9049 = vmul.f32 %v8877, %v9047
    %v9050 = vmul.f32 %v8881, %v9047
    %v9051 = vmul.f32 %v8885, %v9047
    %v9052 = vmul.f32 %v8889, %v9047
    %v9053 = vmul.f32 %v8893, %v9047
    %v9054 = vmul.f32 %v8897, %v9047
    %v9055 = vmul.f32 %v8901, %v9047
    %v9056 = vmul.f32 %v8905, %v9047
    %v9057 = vmul.f32 %v8909, %v9047
    %v9058 = vmul.f32 %v8913, %v9047
    %v9059 = vmul.f32 %v8917, %v9047
    %v9060 = vmul.f32 %v8921, %v9047
    %v9061 = vmul.f32 %v8925, %v9047
    %v9062 = vmul.f32 %v8929, %v9047
    %v9063 = vmul.f32 %v8933, %v9047
    %v9064 = vmul.f32 %v8937, %v9047
    %v9065 = vmul.f32 %v8941, %v9047
    %v9066 = vmul.f32 %v8945, %v9047
    %v9067 = vmul.f32 %v8949, %v9047
    %v9068 = vmul.f32 %v8953, %v9047
    %v9069 = vmul.f32 %v8957, %v9047
    %v9070 = vmul.f32 %v8961, %v9047
    %v9071 = vmul.f32 %v8965, %v9047
    %v9072 = vmul.f32 %v8969, %v9047
    %v9073 = vmul.f32 %v8973, %v9047
    %v9074 = vmul.f32 %v8977, %v9047
    %v9075 = vmul.f32 %v8981, %v9047
    %v9076 = vmul.f32 %v8985, %v9047
    %v9077 = vmul.f32 %v8989, %v9047
    %v9078 = vmul.f32 %v8993, %v9047
    %v9079 = vmul.f32 %v8997, %v9047
    %v9080 = vmul.f32 %v9001, %v9047
    %v9081 = vmul.f32 %v9005, %v9047
    %v9082 = vmul.f32 %v9009, %v9047
    %v9083 = vmul.f32 %v9013, %v9047
    %v9084 = vmul.f32 %v9017, %v9047
    %v9085 = vmul.f32 %v9021, %v9047
    %v9086 = vmul.f32 %v9025, %v9047
    %v9087 = vmul.f32 %v9029, %v9047
    %v9088 = vmul.f32 %v9033, %v9047
    %v9089 = vmul.f32 %v9037, %v9047
    %v9090 = vmul.f32 %v9041, %v9047
    %v9091 = vmul.f32 %v9045, %v9047
    %v9092 = vadd.f32 %v8827, %v9048
    %v9093 = vadd.f32 %v8828, %v9049
    %v9094 = vadd.f32 %v8829, %v9050
    %v9095 = vadd.f32 %v8830, %v9051
    %v9096 = vadd.f32 %v8831, %v9052
    %v9097 = vadd.f32 %v8832, %v9053
    %v9098 = vadd.f32 %v8833, %v9054
    %v9099 = vadd.f32 %v8834, %v9055
    %v9100 = vadd.f32 %v8835, %v9056
    %v9101 = vadd.f32 %v8836, %v9057
    %v9102 = vadd.f32 %v8837, %v9058
    %v9103 = vadd.f32 %v8838, %v9059
    %v9104 = vadd.f32 %v8839, %v9060
    %v9105 = vadd.f32 %v8840, %v9061
    %v9106 = vadd.f32 %v8841, %v9062
    %v9107 = vadd.f32 %v8842, %v9063
    %v9108 = vadd.f32 %v8843, %v9064
    %v9109 = vadd.f32 %v8844, %v9065
    %v9110 = vadd.f32 %v8845, %v9066
    %v9111 = vadd.f32 %v8846, %v9067
    %v9112 = vadd.f32 %v8847, %v9068
    %v9113 = vadd.f32 %v8848, %v9069
    %v9114 = vadd.f32 %v8849, %v9070
    %v9115 = vadd.f32 %v8850, %v9071
    %v9116 = vadd.f32 %v8851, %v9072
    %v9117 = vadd.f32 %v8852, %v9073
    %v9118 = vadd.f32 %v8853, %v9074
    %v9119 = vadd.f32 %v8854, %v9075
    %v9120 = vadd.f32 %v8855, %v9076
    %v9121 = vadd.f32 %v8856, %v9077
    %v9122 = vadd.f32 %v8857, %v9078
    %v9123 = vadd.f32 %v8858, %v9079
    %v9124 = vadd.f32 %v8859, %v9080
    %v9125 = vadd.f32 %v8860, %v9081
    %v9126 = vadd.f32 %v8861, %v9082
    %v9127 = vadd.f32 %v8862, %v9083
    %v9128 = vadd.f32 %v8863, %v9084
    %v9129 = vadd.f32 %v8864, %v9085
    %v9130 = vadd.f32 %v8865, %v9086
    %v9131 = vadd.f32 %v8866, %v9087
    %v9132 = vadd.f32 %v8867, %v9088
    %v9133 = vadd.f32 %v8868, %v9089
    %v9134 = vadd.f32 %v8869, %v9090
    %v9135 = vadd.f32 %v8870, %v9091
    %9137 = vset.pattern.permute.xlu0 0
    %9138 = vperm.xlu0 %9137, %v4826
    %v9139 = vpop.permute.xlu0 %9138
    %9142 = vset.pattern.permute.xlu0 0
    %9143 = vperm.xlu0 %9142, %v4827
    %v9144 = vpop.permute.xlu0 %9143
    %9147 = vset.pattern.permute.xlu0 0
    %9148 = vperm.xlu0 %9147, %v4850
    %v9149 = vpop.permute.xlu0 %9148
    %9152 = vset.pattern.permute.xlu0 0
    %9153 = vperm.xlu0 %9152, %v4851
    %v9154 = vpop.permute.xlu0 %9153
    %v9156 = vperm.slane %v76, 0
    %v9157 = vmul.f32 %v4865, %v9156
    %v9158 = vmul.f32 %v4870, %v9156
    %v9159 = vmul.f32 %v4875, %v9156
    %v9160 = vmul.f32 %v4880, %v9156
    %v9161 = vmul.f32 %v4885, %v9156
    %v9162 = vmul.f32 %v4890, %v9156
    %v9163 = vmul.f32 %v4895, %v9156
    %v9164 = vmul.f32 %v4900, %v9156
    %v9165 = vmul.f32 %v4905, %v9156
    %v9166 = vmul.f32 %v4910, %v9156
    %v9167 = vmul.f32 %v4915, %v9156
    %v9168 = vmul.f32 %v4920, %v9156
    %v9169 = vmul.f32 %v4925, %v9156
    %v9170 = vmul.f32 %v4930, %v9156
    %v9171 = vmul.f32 %v4935, %v9156
    %v9172 = vmul.f32 %v4940, %v9156
    %v9173 = vmul.f32 %v4945, %v9156
    %v9174 = vmul.f32 %v4950, %v9156
    %v9175 = vmul.f32 %v4955, %v9156
    %v9176 = vmul.f32 %v4960, %v9156
    %v9177 = vmul.f32 %v9139, %v9156
    %v9178 = vmul.f32 %v9144, %v9156
    %v9179 = vmul.f32 %v4975, %v9156
    %v9180 = vmul.f32 %v4980, %v9156
    %v9181 = vmul.f32 %v4985, %v9156
    %v9182 = vmul.f32 %v4990, %v9156
    %v9183 = vmul.f32 %v4995, %v9156
    %v9184 = vmul.f32 %v5000, %v9156
    %v9185 = vmul.f32 %v5005, %v9156
    %v9186 = vmul.f32 %v5010, %v9156
    %v9187 = vmul.f32 %v5015, %v9156
    %v9188 = vmul.f32 %v5020, %v9156
    %v9189 = vmul.f32 %v5025, %v9156
    %v9190 = vmul.f32 %v5030, %v9156
    %v9191 = vmul.f32 %v5035, %v9156
    %v9192 = vmul.f32 %v5040, %v9156
    %v9193 = vmul.f32 %v5045, %v9156
    %v9194 = vmul.f32 %v5050, %v9156
    %v9195 = vmul.f32 %v5055, %v9156
    %v9196 = vmul.f32 %v5060, %v9156
    %v9197 = vmul.f32 %v5065, %v9156
    %v9198 = vmul.f32 %v5070, %v9156
    %v9199 = vmul.f32 %v9149, %v9156
    %v9200 = vmul.f32 %v9154, %v9156
    %v9201 = vadd.f32 %v9092, %v9157
    %v9202 = vadd.f32 %v9093, %v9158
    %v9203 = vadd.f32 %v9094, %v9159
    %v9204 = vadd.f32 %v9095, %v9160
    %v9205 = vadd.f32 %v9096, %v9161
    %v9206 = vadd.f32 %v9097, %v9162
    %v9207 = vadd.f32 %v9098, %v9163
    %v9208 = vadd.f32 %v9099, %v9164
    %v9209 = vadd.f32 %v9100, %v9165
    %v9210 = vadd.f32 %v9101, %v9166
    %v9211 = vadd.f32 %v9102, %v9167
    %v9212 = vadd.f32 %v9103, %v9168
    %v9213 = vadd.f32 %v9104, %v9169
    %v9214 = vadd.f32 %v9105, %v9170
    %v9215 = vadd.f32 %v9106, %v9171
    %v9216 = vadd.f32 %v9107, %v9172
    %v9217 = vadd.f32 %v9108, %v9173
    %v9218 = vadd.f32 %v9109, %v9174
    %v9219 = vadd.f32 %v9110, %v9175
    %v9220 = vadd.f32 %v9111, %v9176
    %v9221 = vadd.f32 %v9112, %v9177
    %v9222 = vadd.f32 %v9113, %v9178
    %v9223 = vadd.f32 %v9114, %v9179
    %v9224 = vadd.f32 %v9115, %v9180
    %v9225 = vadd.f32 %v9116, %v9181
    %v9226 = vadd.f32 %v9117, %v9182
    %v9227 = vadd.f32 %v9118, %v9183
    %v9228 = vadd.f32 %v9119, %v9184
    %v9229 = vadd.f32 %v9120, %v9185
    %v9230 = vadd.f32 %v9121, %v9186
    %v9231 = vadd.f32 %v9122, %v9187
    %v9232 = vadd.f32 %v9123, %v9188
    %v9233 = vadd.f32 %v9124, %v9189
    %v9234 = vadd.f32 %v9125, %v9190
    %v9235 = vadd.f32 %v9126, %v9191
    %v9236 = vadd.f32 %v9127, %v9192
    %v9237 = vadd.f32 %v9128, %v9193
    %v9238 = vadd.f32 %v9129, %v9194
    %v9239 = vadd.f32 %v9130, %v9195
    %v9240 = vadd.f32 %v9131, %v9196
    %v9241 = vadd.f32 %v9132, %v9197
    %v9242 = vadd.f32 %v9133, %v9198
    %v9243 = vadd.f32 %v9134, %v9199
    %v9244 = vadd.f32 %v9135, %v9200
    %9245 = vset.pattern.permute.xlu0 1
    %9246 = vperm.xlu0 %9245, %v4826
    %v9247 = vpop.permute.xlu0 %9246
    %9249 = vset.pattern.permute.xlu0 1
    %9250 = vperm.xlu0 %9249, %v4827
    %v9251 = vpop.permute.xlu0 %9250
    %9253 = vset.pattern.permute.xlu0 1
    %9254 = vperm.xlu0 %9253, %v4850
    %v9255 = vpop.permute.xlu0 %9254
    %9257 = vset.pattern.permute.xlu0 1
    %9258 = vperm.xlu0 %9257, %v4851
    %v9259 = vpop.permute.xlu0 %9258
    %v9261 = vperm.slane %v76, 1
    %v9262 = vmul.f32 %v5171, %v9261
    %v9263 = vmul.f32 %v5175, %v9261
    %v9264 = vmul.f32 %v5179, %v9261
    %v9265 = vmul.f32 %v5183, %v9261
    %v9266 = vmul.f32 %v5187, %v9261
    %v9267 = vmul.f32 %v5191, %v9261
    %v9268 = vmul.f32 %v5195, %v9261
    %v9269 = vmul.f32 %v5199, %v9261
    %v9270 = vmul.f32 %v5203, %v9261
    %v9271 = vmul.f32 %v5207, %v9261
    %v9272 = vmul.f32 %v5211, %v9261
    %v9273 = vmul.f32 %v5215, %v9261
    %v9274 = vmul.f32 %v5219, %v9261
    %v9275 = vmul.f32 %v5223, %v9261
    %v9276 = vmul.f32 %v5227, %v9261
    %v9277 = vmul.f32 %v5231, %v9261
    %v9278 = vmul.f32 %v5235, %v9261
    %v9279 = vmul.f32 %v5239, %v9261
    %v9280 = vmul.f32 %v5243, %v9261
    %v9281 = vmul.f32 %v5247, %v9261
    %v9282 = vmul.f32 %v9247, %v9261
    %v9283 = vmul.f32 %v9251, %v9261
    %v9284 = vmul.f32 %v5259, %v9261
    %v9285 = vmul.f32 %v5263, %v9261
    %v9286 = vmul.f32 %v5267, %v9261
    %v9287 = vmul.f32 %v5271, %v9261
    %v9288 = vmul.f32 %v5275, %v9261
    %v9289 = vmul.f32 %v5279, %v9261
    %v9290 = vmul.f32 %v5283, %v9261
    %v9291 = vmul.f32 %v5287, %v9261
    %v9292 = vmul.f32 %v5291, %v9261
    %v9293 = vmul.f32 %v5295, %v9261
    %v9294 = vmul.f32 %v5299, %v9261
    %v9295 = vmul.f32 %v5303, %v9261
    %v9296 = vmul.f32 %v5307, %v9261
    %v9297 = vmul.f32 %v5311, %v9261
    %v9298 = vmul.f32 %v5315, %v9261
    %v9299 = vmul.f32 %v5319, %v9261
    %v9300 = vmul.f32 %v5323, %v9261
    %v9301 = vmul.f32 %v5327, %v9261
    %v9302 = vmul.f32 %v5331, %v9261
    %v9303 = vmul.f32 %v5335, %v9261
    %v9304 = vmul.f32 %v9255, %v9261
    %v9305 = vmul.f32 %v9259, %v9261
    %v9306 = vadd.f32 %v9201, %v9262
    %v9307 = vadd.f32 %v9202, %v9263
    %v9308 = vadd.f32 %v9203, %v9264
    %v9309 = vadd.f32 %v9204, %v9265
    %v9310 = vadd.f32 %v9205, %v9266
    %v9311 = vadd.f32 %v9206, %v9267
    %v9312 = vadd.f32 %v9207, %v9268
    %v9313 = vadd.f32 %v9208, %v9269
    %v9314 = vadd.f32 %v9209, %v9270
    %v9315 = vadd.f32 %v9210, %v9271
    %v9316 = vadd.f32 %v9211, %v9272
    %v9317 = vadd.f32 %v9212, %v9273
    %v9318 = vadd.f32 %v9213, %v9274
    %v9319 = vadd.f32 %v9214, %v9275
    %v9320 = vadd.f32 %v9215, %v9276
    %v9321 = vadd.f32 %v9216, %v9277
    %v9322 = vadd.f32 %v9217, %v9278
    %v9323 = vadd.f32 %v9218, %v9279
    %v9324 = vadd.f32 %v9219, %v9280
    %v9325 = vadd.f32 %v9220, %v9281
    %v9326 = vadd.f32 %v9221, %v9282
    %v9327 = vadd.f32 %v9222, %v9283
    %v9328 = vadd.f32 %v9223, %v9284
    %v9329 = vadd.f32 %v9224, %v9285
    %v9330 = vadd.f32 %v9225, %v9286
    %v9331 = vadd.f32 %v9226, %v9287
    %v9332 = vadd.f32 %v9227, %v9288
    %v9333 = vadd.f32 %v9228, %v9289
    %v9334 = vadd.f32 %v9229, %v9290
    %v9335 = vadd.f32 %v9230, %v9291
    %v9336 = vadd.f32 %v9231, %v9292
    %v9337 = vadd.f32 %v9232, %v9293
    %v9338 = vadd.f32 %v9233, %v9294
    %v9339 = vadd.f32 %v9234, %v9295
    %v9340 = vadd.f32 %v9235, %v9296
    %v9341 = vadd.f32 %v9236, %v9297
    %v9342 = vadd.f32 %v9237, %v9298
    %v9343 = vadd.f32 %v9238, %v9299
    %v9344 = vadd.f32 %v9239, %v9300
    %v9345 = vadd.f32 %v9240, %v9301
    %v9346 = vadd.f32 %v9241, %v9302
    %v9347 = vadd.f32 %v9242, %v9303
    %v9348 = vadd.f32 %v9243, %v9304
    %v9349 = vadd.f32 %v9244, %v9305
    %9350 = vset.pattern.permute.xlu0 2
    %9351 = vperm.xlu0 %9350, %v4826
    %v9352 = vpop.permute.xlu0 %9351
    %9354 = vset.pattern.permute.xlu0 2
    %9355 = vperm.xlu0 %9354, %v4827
    %v9356 = vpop.permute.xlu0 %9355
    %9358 = vset.pattern.permute.xlu0 2
    %9359 = vperm.xlu0 %9358, %v4850
    %v9360 = vpop.permute.xlu0 %9359
    %9362 = vset.pattern.permute.xlu0 2
    %9363 = vperm.xlu0 %9362, %v4851
    %v9364 = vpop.permute.xlu0 %9363
    %v9366 = vperm.slane %v76, 2
    %v9367 = vmul.f32 %v5436, %v9366
    %v9368 = vmul.f32 %v5440, %v9366
    %v9369 = vmul.f32 %v5444, %v9366
    %v9370 = vmul.f32 %v5448, %v9366
    %v9371 = vmul.f32 %v5452, %v9366
    %v9372 = vmul.f32 %v5456, %v9366
    %v9373 = vmul.f32 %v5460, %v9366
    %v9374 = vmul.f32 %v5464, %v9366
    %v9375 = vmul.f32 %v5468, %v9366
    %v9376 = vmul.f32 %v5472, %v9366
    %v9377 = vmul.f32 %v5476, %v9366
    %v9378 = vmul.f32 %v5480, %v9366
    %v9379 = vmul.f32 %v5484, %v9366
    %v9380 = vmul.f32 %v5488, %v9366
    %v9381 = vmul.f32 %v5492, %v9366
    %v9382 = vmul.f32 %v5496, %v9366
    %v9383 = vmul.f32 %v5500, %v9366
    %v9384 = vmul.f32 %v5504, %v9366
    %v9385 = vmul.f32 %v5508, %v9366
    %v9386 = vmul.f32 %v5512, %v9366
    %v9387 = vmul.f32 %v9352, %v9366
    %v9388 = vmul.f32 %v9356, %v9366
    %v9389 = vmul.f32 %v5524, %v9366
    %v9390 = vmul.f32 %v5528, %v9366
    %v9391 = vmul.f32 %v5532, %v9366
    %v9392 = vmul.f32 %v5536, %v9366
    %v9393 = vmul.f32 %v5540, %v9366
    %v9394 = vmul.f32 %v5544, %v9366
    %v9395 = vmul.f32 %v5548, %v9366
    %v9396 = vmul.f32 %v5552, %v9366
    %v9397 = vmul.f32 %v5556, %v9366
    %v9398 = vmul.f32 %v5560, %v9366
    %v9399 = vmul.f32 %v5564, %v9366
    %v9400 = vmul.f32 %v5568, %v9366
    %v9401 = vmul.f32 %v5572, %v9366
    %v9402 = vmul.f32 %v5576, %v9366
    %v9403 = vmul.f32 %v5580, %v9366
    %v9404 = vmul.f32 %v5584, %v9366
    %v9405 = vmul.f32 %v5588, %v9366
    %v9406 = vmul.f32 %v5592, %v9366
    %v9407 = vmul.f32 %v5596, %v9366
    %v9408 = vmul.f32 %v5600, %v9366
    %v9409 = vmul.f32 %v9360, %v9366
    %v9410 = vmul.f32 %v9364, %v9366
    %v9411 = vadd.f32 %v9306, %v9367
    %v9412 = vadd.f32 %v9307, %v9368
    %v9413 = vadd.f32 %v9308, %v9369
    %v9414 = vadd.f32 %v9309, %v9370
    %v9415 = vadd.f32 %v9310, %v9371
    %v9416 = vadd.f32 %v9311, %v9372
    %v9417 = vadd.f32 %v9312, %v9373
    %v9418 = vadd.f32 %v9313, %v9374
    %v9419 = vadd.f32 %v9314, %v9375
    %v9420 = vadd.f32 %v9315, %v9376
    %v9421 = vadd.f32 %v9316, %v9377
    %v9422 = vadd.f32 %v9317, %v9378
    %v9423 = vadd.f32 %v9318, %v9379
    %v9424 = vadd.f32 %v9319, %v9380
    %v9425 = vadd.f32 %v9320, %v9381
    %v9426 = vadd.f32 %v9321, %v9382
    %v9427 = vadd.f32 %v9322, %v9383
    %v9428 = vadd.f32 %v9323, %v9384
    %v9429 = vadd.f32 %v9324, %v9385
    %v9430 = vadd.f32 %v9325, %v9386
    %v9431 = vadd.f32 %v9326, %v9387
    %v9432 = vadd.f32 %v9327, %v9388
    %v9433 = vadd.f32 %v9328, %v9389
    %v9434 = vadd.f32 %v9329, %v9390
    %v9435 = vadd.f32 %v9330, %v9391
    %v9436 = vadd.f32 %v9331, %v9392
    %v9437 = vadd.f32 %v9332, %v9393
    %v9438 = vadd.f32 %v9333, %v9394
    %v9439 = vadd.f32 %v9334, %v9395
    %v9440 = vadd.f32 %v9335, %v9396
    %v9441 = vadd.f32 %v9336, %v9397
    %v9442 = vadd.f32 %v9337, %v9398
    %v9443 = vadd.f32 %v9338, %v9399
    %v9444 = vadd.f32 %v9339, %v9400
    %v9445 = vadd.f32 %v9340, %v9401
    %v9446 = vadd.f32 %v9341, %v9402
    %v9447 = vadd.f32 %v9342, %v9403
    %v9448 = vadd.f32 %v9343, %v9404
    %v9449 = vadd.f32 %v9344, %v9405
    %v9450 = vadd.f32 %v9345, %v9406
    %v9451 = vadd.f32 %v9346, %v9407
    %v9452 = vadd.f32 %v9347, %v9408
    %v9453 = vadd.f32 %v9348, %v9409
    %v9454 = vadd.f32 %v9349, %v9410
    %9455 = vset.pattern.permute.xlu0 3
    %9456 = vperm.xlu0 %9455, %v4826
    %v9457 = vpop.permute.xlu0 %9456
    %9459 = vset.pattern.permute.xlu0 3
    %9460 = vperm.xlu0 %9459, %v4827
    %v9461 = vpop.permute.xlu0 %9460
    %9463 = vset.pattern.permute.xlu0 3
    %9464 = vperm.xlu0 %9463, %v4850
    %v9465 = vpop.permute.xlu0 %9464
    %9467 = vset.pattern.permute.xlu0 3
    %9468 = vperm.xlu0 %9467, %v4851
    %v9469 = vpop.permute.xlu0 %9468
    %v9471 = vperm.slane %v76, 3
    %v9472 = vmul.f32 %v5701, %v9471
    %v9473 = vmul.f32 %v5705, %v9471
    %v9474 = vmul.f32 %v5709, %v9471
    %v9475 = vmul.f32 %v5713, %v9471
    %v9476 = vmul.f32 %v5717, %v9471
    %v9477 = vmul.f32 %v5721, %v9471
    %v9478 = vmul.f32 %v5725, %v9471
    %v9479 = vmul.f32 %v5729, %v9471
    %v9480 = vmul.f32 %v5733, %v9471
    %v9481 = vmul.f32 %v5737, %v9471
    %v9482 = vmul.f32 %v5741, %v9471
    %v9483 = vmul.f32 %v5745, %v9471
    %v9484 = vmul.f32 %v5749, %v9471
    %v9485 = vmul.f32 %v5753, %v9471
    %v9486 = vmul.f32 %v5757, %v9471
    %v9487 = vmul.f32 %v5761, %v9471
    %v9488 = vmul.f32 %v5765, %v9471
    %v9489 = vmul.f32 %v5769, %v9471
    %v9490 = vmul.f32 %v5773, %v9471
    %v9491 = vmul.f32 %v5777, %v9471
    %v9492 = vmul.f32 %v9457, %v9471
    %v9493 = vmul.f32 %v9461, %v9471
    %v9494 = vmul.f32 %v5789, %v9471
    %v9495 = vmul.f32 %v5793, %v9471
    %v9496 = vmul.f32 %v5797, %v9471
    %v9497 = vmul.f32 %v5801, %v9471
    %v9498 = vmul.f32 %v5805, %v9471
    %v9499 = vmul.f32 %v5809, %v9471
    %v9500 = vmul.f32 %v5813, %v9471
    %v9501 = vmul.f32 %v5817, %v9471
    %v9502 = vmul.f32 %v5821, %v9471
    %v9503 = vmul.f32 %v5825, %v9471
    %v9504 = vmul.f32 %v5829, %v9471
    %v9505 = vmul.f32 %v5833, %v9471
    %v9506 = vmul.f32 %v5837, %v9471
    %v9507 = vmul.f32 %v5841, %v9471
    %v9508 = vmul.f32 %v5845, %v9471
    %v9509 = vmul.f32 %v5849, %v9471
    %v9510 = vmul.f32 %v5853, %v9471
    %v9511 = vmul.f32 %v5857, %v9471
    %v9512 = vmul.f32 %v5861, %v9471
    %v9513 = vmul.f32 %v5865, %v9471
    %v9514 = vmul.f32 %v9465, %v9471
    %v9515 = vmul.f32 %v9469, %v9471
    %v9516 = vadd.f32 %v9411, %v9472
    %v9517 = vadd.f32 %v9412, %v9473
    %v9518 = vadd.f32 %v9413, %v9474
    %v9519 = vadd.f32 %v9414, %v9475
    %v9520 = vadd.f32 %v9415, %v9476
    %v9521 = vadd.f32 %v9416, %v9477
    %v9522 = vadd.f32 %v9417, %v9478
    %v9523 = vadd.f32 %v9418, %v9479
    %v9524 = vadd.f32 %v9419, %v9480
    %v9525 = vadd.f32 %v9420, %v9481
    %v9526 = vadd.f32 %v9421, %v9482
    %v9527 = vadd.f32 %v9422, %v9483
    %v9528 = vadd.f32 %v9423, %v9484
    %v9529 = vadd.f32 %v9424, %v9485
    %v9530 = vadd.f32 %v9425, %v9486
    %v9531 = vadd.f32 %v9426, %v9487
    %v9532 = vadd.f32 %v9427, %v9488
    %v9533 = vadd.f32 %v9428, %v9489
    %v9534 = vadd.f32 %v9429, %v9490
    %v9535 = vadd.f32 %v9430, %v9491
    %v9536 = vadd.f32 %v9431, %v9492
    %v9537 = vadd.f32 %v9432, %v9493
    %v9538 = vadd.f32 %v9433, %v9494
    %v9539 = vadd.f32 %v9434, %v9495
    %v9540 = vadd.f32 %v9435, %v9496
    %v9541 = vadd.f32 %v9436, %v9497
    %v9542 = vadd.f32 %v9437, %v9498
    %v9543 = vadd.f32 %v9438, %v9499
    %v9544 = vadd.f32 %v9439, %v9500
    %v9545 = vadd.f32 %v9440, %v9501
    %v9546 = vadd.f32 %v9441, %v9502
    %v9547 = vadd.f32 %v9442, %v9503
    %v9548 = vadd.f32 %v9443, %v9504
    %v9549 = vadd.f32 %v9444, %v9505
    %v9550 = vadd.f32 %v9445, %v9506
    %v9551 = vadd.f32 %v9446, %v9507
    %v9552 = vadd.f32 %v9447, %v9508
    %v9553 = vadd.f32 %v9448, %v9509
    %v9554 = vadd.f32 %v9449, %v9510
    %v9555 = vadd.f32 %v9450, %v9511
    %v9556 = vadd.f32 %v9451, %v9512
    %v9557 = vadd.f32 %v9452, %v9513
    %v9558 = vadd.f32 %v9453, %v9514
    %v9559 = vadd.f32 %v9454, %v9515
    %9560 = vset.pattern.permute.xlu0 4
    %9561 = vperm.xlu0 %9560, %v4826
    %v9562 = vpop.permute.xlu0 %9561
    %9564 = vset.pattern.permute.xlu0 4
    %9565 = vperm.xlu0 %9564, %v4827
    %v9566 = vpop.permute.xlu0 %9565
    %9568 = vset.pattern.permute.xlu0 4
    %9569 = vperm.xlu0 %9568, %v4850
    %v9570 = vpop.permute.xlu0 %9569
    %9572 = vset.pattern.permute.xlu0 4
    %9573 = vperm.xlu0 %9572, %v4851
    %v9574 = vpop.permute.xlu0 %9573
    %v9576 = vperm.slane %v76, 4
    %v9577 = vmul.f32 %v5966, %v9576
    %v9578 = vmul.f32 %v5970, %v9576
    %v9579 = vmul.f32 %v5974, %v9576
    %v9580 = vmul.f32 %v5978, %v9576
    %v9581 = vmul.f32 %v5982, %v9576
    %v9582 = vmul.f32 %v5986, %v9576
    %v9583 = vmul.f32 %v5990, %v9576
    %v9584 = vmul.f32 %v5994, %v9576
    %v9585 = vmul.f32 %v5998, %v9576
    %v9586 = vmul.f32 %v6002, %v9576
    %v9587 = vmul.f32 %v6006, %v9576
    %v9588 = vmul.f32 %v6010, %v9576
    %v9589 = vmul.f32 %v6014, %v9576
    %v9590 = vmul.f32 %v6018, %v9576
    %v9591 = vmul.f32 %v6022, %v9576
    %v9592 = vmul.f32 %v6026, %v9576
    %v9593 = vmul.f32 %v6030, %v9576
    %v9594 = vmul.f32 %v6034, %v9576
    %v9595 = vmul.f32 %v6038, %v9576
    %v9596 = vmul.f32 %v6042, %v9576
    %v9597 = vmul.f32 %v9562, %v9576
    %v9598 = vmul.f32 %v9566, %v9576
    %v9599 = vmul.f32 %v6054, %v9576
    %v9600 = vmul.f32 %v6058, %v9576
    %v9601 = vmul.f32 %v6062, %v9576
    %v9602 = vmul.f32 %v6066, %v9576
    %v9603 = vmul.f32 %v6070, %v9576
    %v9604 = vmul.f32 %v6074, %v9576
    %v9605 = vmul.f32 %v6078, %v9576
    %v9606 = vmul.f32 %v6082, %v9576
    %v9607 = vmul.f32 %v6086, %v9576
    %v9608 = vmul.f32 %v6090, %v9576
    %v9609 = vmul.f32 %v6094, %v9576
    %v9610 = vmul.f32 %v6098, %v9576
    %v9611 = vmul.f32 %v6102, %v9576
    %v9612 = vmul.f32 %v6106, %v9576
    %v9613 = vmul.f32 %v6110, %v9576
    %v9614 = vmul.f32 %v6114, %v9576
    %v9615 = vmul.f32 %v6118, %v9576
    %v9616 = vmul.f32 %v6122, %v9576
    %v9617 = vmul.f32 %v6126, %v9576
    %v9618 = vmul.f32 %v6130, %v9576
    %v9619 = vmul.f32 %v9570, %v9576
    %v9620 = vmul.f32 %v9574, %v9576
    %v9621 = vadd.f32 %v9516, %v9577
    %v9622 = vadd.f32 %v9517, %v9578
    %v9623 = vadd.f32 %v9518, %v9579
    %v9624 = vadd.f32 %v9519, %v9580
    %v9625 = vadd.f32 %v9520, %v9581
    %v9626 = vadd.f32 %v9521, %v9582
    %v9627 = vadd.f32 %v9522, %v9583
    %v9628 = vadd.f32 %v9523, %v9584
    %v9629 = vadd.f32 %v9524, %v9585
    %v9630 = vadd.f32 %v9525, %v9586
    %v9631 = vadd.f32 %v9526, %v9587
    %v9632 = vadd.f32 %v9527, %v9588
    %v9633 = vadd.f32 %v9528, %v9589
    %v9634 = vadd.f32 %v9529, %v9590
    %v9635 = vadd.f32 %v9530, %v9591
    %v9636 = vadd.f32 %v9531, %v9592
    %v9637 = vadd.f32 %v9532, %v9593
    %v9638 = vadd.f32 %v9533, %v9594
    %v9639 = vadd.f32 %v9534, %v9595
    %v9640 = vadd.f32 %v9535, %v9596
    %v9641 = vadd.f32 %v9536, %v9597
    %v9642 = vadd.f32 %v9537, %v9598
    %v9643 = vadd.f32 %v9538, %v9599
    %v9644 = vadd.f32 %v9539, %v9600
    %v9645 = vadd.f32 %v9540, %v9601
    %v9646 = vadd.f32 %v9541, %v9602
    %v9647 = vadd.f32 %v9542, %v9603
    %v9648 = vadd.f32 %v9543, %v9604
    %v9649 = vadd.f32 %v9544, %v9605
    %v9650 = vadd.f32 %v9545, %v9606
    %v9651 = vadd.f32 %v9546, %v9607
    %v9652 = vadd.f32 %v9547, %v9608
    %v9653 = vadd.f32 %v9548, %v9609
    %v9654 = vadd.f32 %v9549, %v9610
    %v9655 = vadd.f32 %v9550, %v9611
    %v9656 = vadd.f32 %v9551, %v9612
    %v9657 = vadd.f32 %v9552, %v9613
    %v9658 = vadd.f32 %v9553, %v9614
    %v9659 = vadd.f32 %v9554, %v9615
    %v9660 = vadd.f32 %v9555, %v9616
    %v9661 = vadd.f32 %v9556, %v9617
    %v9662 = vadd.f32 %v9557, %v9618
    %v9663 = vadd.f32 %v9558, %v9619
    %v9664 = vadd.f32 %v9559, %v9620
    %9665 = vset.pattern.permute.xlu0 5
    %9666 = vperm.xlu0 %9665, %v4826
    %v9667 = vpop.permute.xlu0 %9666
    %9669 = vset.pattern.permute.xlu0 5
    %9670 = vperm.xlu0 %9669, %v4827
    %v9671 = vpop.permute.xlu0 %9670
    %9673 = vset.pattern.permute.xlu0 5
    %9674 = vperm.xlu0 %9673, %v4850
    %v9675 = vpop.permute.xlu0 %9674
    %9677 = vset.pattern.permute.xlu0 5
    %9678 = vperm.xlu0 %9677, %v4851
    %v9679 = vpop.permute.xlu0 %9678
    %v9681 = vperm.slane %v76, 5
    %v9682 = vmul.f32 %v6231, %v9681
    %v9683 = vmul.f32 %v6235, %v9681
    %v9684 = vmul.f32 %v6239, %v9681
    %v9685 = vmul.f32 %v6243, %v9681
    %v9686 = vmul.f32 %v6247, %v9681
    %v9687 = vmul.f32 %v6251, %v9681
    %v9688 = vmul.f32 %v6255, %v9681
    %v9689 = vmul.f32 %v6259, %v9681
    %v9690 = vmul.f32 %v6263, %v9681
    %v9691 = vmul.f32 %v6267, %v9681
    %v9692 = vmul.f32 %v6271, %v9681
    %v9693 = vmul.f32 %v6275, %v9681
    %v9694 = vmul.f32 %v6279, %v9681
    %v9695 = vmul.f32 %v6283, %v9681
    %v9696 = vmul.f32 %v6287, %v9681
    %v9697 = vmul.f32 %v6291, %v9681
    %v9698 = vmul.f32 %v6295, %v9681
    %v9699 = vmul.f32 %v6299, %v9681
    %v9700 = vmul.f32 %v6303, %v9681
    %v9701 = vmul.f32 %v6307, %v9681
    %v9702 = vmul.f32 %v9667, %v9681
    %v9703 = vmul.f32 %v9671, %v9681
    %v9704 = vmul.f32 %v6319, %v9681
    %v9705 = vmul.f32 %v6323, %v9681
    %v9706 = vmul.f32 %v6327, %v9681
    %v9707 = vmul.f32 %v6331, %v9681
    %v9708 = vmul.f32 %v6335, %v9681
    %v9709 = vmul.f32 %v6339, %v9681
    %v9710 = vmul.f32 %v6343, %v9681
    %v9711 = vmul.f32 %v6347, %v9681
    %v9712 = vmul.f32 %v6351, %v9681
    %v9713 = vmul.f32 %v6355, %v9681
    %v9714 = vmul.f32 %v6359, %v9681
    %v9715 = vmul.f32 %v6363, %v9681
    %v9716 = vmul.f32 %v6367, %v9681
    %v9717 = vmul.f32 %v6371, %v9681
    %v9718 = vmul.f32 %v6375, %v9681
    %v9719 = vmul.f32 %v6379, %v9681
    %v9720 = vmul.f32 %v6383, %v9681
    %v9721 = vmul.f32 %v6387, %v9681
    %v9722 = vmul.f32 %v6391, %v9681
    %v9723 = vmul.f32 %v6395, %v9681
    %v9724 = vmul.f32 %v9675, %v9681
    %v9725 = vmul.f32 %v9679, %v9681
    %v9726 = vadd.f32 %v9621, %v9682
    %v9727 = vadd.f32 %v9622, %v9683
    %v9728 = vadd.f32 %v9623, %v9684
    %v9729 = vadd.f32 %v9624, %v9685
    %v9730 = vadd.f32 %v9625, %v9686
    %v9731 = vadd.f32 %v9626, %v9687
    %v9732 = vadd.f32 %v9627, %v9688
    %v9733 = vadd.f32 %v9628, %v9689
    %v9734 = vadd.f32 %v9629, %v9690
    %v9735 = vadd.f32 %v9630, %v9691
    %v9736 = vadd.f32 %v9631, %v9692
    %v9737 = vadd.f32 %v9632, %v9693
    %v9738 = vadd.f32 %v9633, %v9694
    %v9739 = vadd.f32 %v9634, %v9695
    %v9740 = vadd.f32 %v9635, %v9696
    %v9741 = vadd.f32 %v9636, %v9697
    %v9742 = vadd.f32 %v9637, %v9698
    %v9743 = vadd.f32 %v9638, %v9699
    %v9744 = vadd.f32 %v9639, %v9700
    %v9745 = vadd.f32 %v9640, %v9701
    %v9746 = vadd.f32 %v9641, %v9702
    %v9747 = vadd.f32 %v9642, %v9703
    %v9748 = vadd.f32 %v9643, %v9704
    %v9749 = vadd.f32 %v9644, %v9705
    %v9750 = vadd.f32 %v9645, %v9706
    %v9751 = vadd.f32 %v9646, %v9707
    %v9752 = vadd.f32 %v9647, %v9708
    %v9753 = vadd.f32 %v9648, %v9709
    %v9754 = vadd.f32 %v9649, %v9710
    %v9755 = vadd.f32 %v9650, %v9711
    %v9756 = vadd.f32 %v9651, %v9712
    %v9757 = vadd.f32 %v9652, %v9713
    %v9758 = vadd.f32 %v9653, %v9714
    %v9759 = vadd.f32 %v9654, %v9715
    %v9760 = vadd.f32 %v9655, %v9716
    %v9761 = vadd.f32 %v9656, %v9717
    %v9762 = vadd.f32 %v9657, %v9718
    %v9763 = vadd.f32 %v9658, %v9719
    %v9764 = vadd.f32 %v9659, %v9720
    %v9765 = vadd.f32 %v9660, %v9721
    %v9766 = vadd.f32 %v9661, %v9722
    %v9767 = vadd.f32 %v9662, %v9723
    %v9768 = vadd.f32 %v9663, %v9724
    %v9769 = vadd.f32 %v9664, %v9725
    %9770 = vset.pattern.permute.xlu0 6
    %9771 = vperm.xlu0 %9770, %v4826
    %v9772 = vpop.permute.xlu0 %9771
    %9774 = vset.pattern.permute.xlu0 6
    %9775 = vperm.xlu0 %9774, %v4827
    %v9776 = vpop.permute.xlu0 %9775
    %9778 = vset.pattern.permute.xlu0 6
    %9779 = vperm.xlu0 %9778, %v4850
    %v9780 = vpop.permute.xlu0 %9779
    %9782 = vset.pattern.permute.xlu0 6
    %9783 = vperm.xlu0 %9782, %v4851
    %v9784 = vpop.permute.xlu0 %9783
    %v9786 = vperm.slane %v76, 6
    %v9787 = vmul.f32 %v6496, %v9786
    %v9788 = vmul.f32 %v6500, %v9786
    %v9789 = vmul.f32 %v6504, %v9786
    %v9790 = vmul.f32 %v6508, %v9786
    %v9791 = vmul.f32 %v6512, %v9786
    %v9792 = vmul.f32 %v6516, %v9786
    %v9793 = vmul.f32 %v6520, %v9786
    %v9794 = vmul.f32 %v6524, %v9786
    %v9795 = vmul.f32 %v6528, %v9786
    %v9796 = vmul.f32 %v6532, %v9786
    %v9797 = vmul.f32 %v6536, %v9786
    %v9798 = vmul.f32 %v6540, %v9786
    %v9799 = vmul.f32 %v6544, %v9786
    %v9800 = vmul.f32 %v6548, %v9786
    %v9801 = vmul.f32 %v6552, %v9786
    %v9802 = vmul.f32 %v6556, %v9786
    %v9803 = vmul.f32 %v6560, %v9786
    %v9804 = vmul.f32 %v6564, %v9786
    %v9805 = vmul.f32 %v6568, %v9786
    %v9806 = vmul.f32 %v6572, %v9786
    %v9807 = vmul.f32 %v9772, %v9786
    %v9808 = vmul.f32 %v9776, %v9786
    %v9809 = vmul.f32 %v6584, %v9786
    %v9810 = vmul.f32 %v6588, %v9786
    %v9811 = vmul.f32 %v6592, %v9786
    %v9812 = vmul.f32 %v6596, %v9786
    %v9813 = vmul.f32 %v6600, %v9786
    %v9814 = vmul.f32 %v6604, %v9786
    %v9815 = vmul.f32 %v6608, %v9786
    %v9816 = vmul.f32 %v6612, %v9786
    %v9817 = vmul.f32 %v6616, %v9786
    %v9818 = vmul.f32 %v6620, %v9786
    %v9819 = vmul.f32 %v6624, %v9786
    %v9820 = vmul.f32 %v6628, %v9786
    %v9821 = vmul.f32 %v6632, %v9786
    %v9822 = vmul.f32 %v6636, %v9786
    %v9823 = vmul.f32 %v6640, %v9786
    %v9824 = vmul.f32 %v6644, %v9786
    %v9825 = vmul.f32 %v6648, %v9786
    %v9826 = vmul.f32 %v6652, %v9786
    %v9827 = vmul.f32 %v6656, %v9786
    %v9828 = vmul.f32 %v6660, %v9786
    %v9829 = vmul.f32 %v9780, %v9786
    %v9830 = vmul.f32 %v9784, %v9786
    %v9831 = vadd.f32 %v9726, %v9787
    %v9832 = vadd.f32 %v9727, %v9788
    %v9833 = vadd.f32 %v9728, %v9789
    %v9834 = vadd.f32 %v9729, %v9790
    %v9835 = vadd.f32 %v9730, %v9791
    %v9836 = vadd.f32 %v9731, %v9792
    %v9837 = vadd.f32 %v9732, %v9793
    %v9838 = vadd.f32 %v9733, %v9794
    %v9839 = vadd.f32 %v9734, %v9795
    %v9840 = vadd.f32 %v9735, %v9796
    %v9841 = vadd.f32 %v9736, %v9797
    %v9842 = vadd.f32 %v9737, %v9798
    %v9843 = vadd.f32 %v9738, %v9799
    %v9844 = vadd.f32 %v9739, %v9800
    %v9845 = vadd.f32 %v9740, %v9801
    %v9846 = vadd.f32 %v9741, %v9802
    %v9847 = vadd.f32 %v9742, %v9803
    %v9848 = vadd.f32 %v9743, %v9804
    %v9849 = vadd.f32 %v9744, %v9805
    %v9850 = vadd.f32 %v9745, %v9806
    %v9851 = vadd.f32 %v9746, %v9807
    %v9852 = vadd.f32 %v9747, %v9808
    %v9853 = vadd.f32 %v9748, %v9809
    %v9854 = vadd.f32 %v9749, %v9810
    %v9855 = vadd.f32 %v9750, %v9811
    %v9856 = vadd.f32 %v9751, %v9812
    %v9857 = vadd.f32 %v9752, %v9813
    %v9858 = vadd.f32 %v9753, %v9814
    %v9859 = vadd.f32 %v9754, %v9815
    %v9860 = vadd.f32 %v9755, %v9816
    %v9861 = vadd.f32 %v9756, %v9817
    %v9862 = vadd.f32 %v9757, %v9818
    %v9863 = vadd.f32 %v9758, %v9819
    %v9864 = vadd.f32 %v9759, %v9820
    %v9865 = vadd.f32 %v9760, %v9821
    %v9866 = vadd.f32 %v9761, %v9822
    %v9867 = vadd.f32 %v9762, %v9823
    %v9868 = vadd.f32 %v9763, %v9824
    %v9869 = vadd.f32 %v9764, %v9825
    %v9870 = vadd.f32 %v9765, %v9826
    %v9871 = vadd.f32 %v9766, %v9827
    %v9872 = vadd.f32 %v9767, %v9828
    %v9873 = vadd.f32 %v9768, %v9829
    %v9874 = vadd.f32 %v9769, %v9830
    %9875 = vset.pattern.permute.xlu0 7
    %9876 = vperm.xlu0 %9875, %v4826
    %v9877 = vpop.permute.xlu0 %9876
    %9879 = vset.pattern.permute.xlu0 7
    %9880 = vperm.xlu0 %9879, %v4827
    %v9881 = vpop.permute.xlu0 %9880
    %9883 = vset.pattern.permute.xlu0 7
    %9884 = vperm.xlu0 %9883, %v4850
    %v9885 = vpop.permute.xlu0 %9884
    %9887 = vset.pattern.permute.xlu0 7
    %9888 = vperm.xlu0 %9887, %v4851
    %v9889 = vpop.permute.xlu0 %9888
    %v9891 = vperm.slane %v76, 7
    %v9892 = vmul.f32 %v6761, %v9891
    %v9893 = vmul.f32 %v6765, %v9891
    %v9894 = vmul.f32 %v6769, %v9891
    %v9895 = vmul.f32 %v6773, %v9891
    %v9896 = vmul.f32 %v6777, %v9891
    %v9897 = vmul.f32 %v6781, %v9891
    %v9898 = vmul.f32 %v6785, %v9891
    %v9899 = vmul.f32 %v6789, %v9891
    %v9900 = vmul.f32 %v6793, %v9891
    %v9901 = vmul.f32 %v6797, %v9891
    %v9902 = vmul.f32 %v6801, %v9891
    %v9903 = vmul.f32 %v6805, %v9891
    %v9904 = vmul.f32 %v6809, %v9891
    %v9905 = vmul.f32 %v6813, %v9891
    %v9906 = vmul.f32 %v6817, %v9891
    %v9907 = vmul.f32 %v6821, %v9891
    %v9908 = vmul.f32 %v6825, %v9891
    %v9909 = vmul.f32 %v6829, %v9891
    %v9910 = vmul.f32 %v6833, %v9891
    %v9911 = vmul.f32 %v6837, %v9891
    %v9912 = vmul.f32 %v9877, %v9891
    %v9913 = vmul.f32 %v9881, %v9891
    %v9914 = vmul.f32 %v6849, %v9891
    %v9915 = vmul.f32 %v6853, %v9891
    %v9916 = vmul.f32 %v6857, %v9891
    %v9917 = vmul.f32 %v6861, %v9891
    %v9918 = vmul.f32 %v6865, %v9891
    %v9919 = vmul.f32 %v6869, %v9891
    %v9920 = vmul.f32 %v6873, %v9891
    %v9921 = vmul.f32 %v6877, %v9891
    %v9922 = vmul.f32 %v6881, %v9891
    %v9923 = vmul.f32 %v6885, %v9891
    %v9924 = vmul.f32 %v6889, %v9891
    %v9925 = vmul.f32 %v6893, %v9891
    %v9926 = vmul.f32 %v6897, %v9891
    %v9927 = vmul.f32 %v6901, %v9891
    %v9928 = vmul.f32 %v6905, %v9891
    %v9929 = vmul.f32 %v6909, %v9891
    %v9930 = vmul.f32 %v6913, %v9891
    %v9931 = vmul.f32 %v6917, %v9891
    %v9932 = vmul.f32 %v6921, %v9891
    %v9933 = vmul.f32 %v6925, %v9891
    %v9934 = vmul.f32 %v9885, %v9891
    %v9935 = vmul.f32 %v9889, %v9891
    %v9936 = vadd.f32 %v9831, %v9892
    %v9937 = vadd.f32 %v9832, %v9893
    %v9938 = vadd.f32 %v9833, %v9894
    %v9939 = vadd.f32 %v9834, %v9895
    %v9940 = vadd.f32 %v9835, %v9896
    %v9941 = vadd.f32 %v9836, %v9897
    %v9942 = vadd.f32 %v9837, %v9898
    %v9943 = vadd.f32 %v9838, %v9899
    %v9944 = vadd.f32 %v9839, %v9900
    %v9945 = vadd.f32 %v9840, %v9901
    %v9946 = vadd.f32 %v9841, %v9902
    %v9947 = vadd.f32 %v9842, %v9903
    %v9948 = vadd.f32 %v9843, %v9904
    %v9949 = vadd.f32 %v9844, %v9905
    %v9950 = vadd.f32 %v9845, %v9906
    %v9951 = vadd.f32 %v9846, %v9907
    %v9952 = vadd.f32 %v9847, %v9908
    %v9953 = vadd.f32 %v9848, %v9909
    %v9954 = vadd.f32 %v9849, %v9910
    %v9955 = vadd.f32 %v9850, %v9911
    %v9956 = vadd.f32 %v9851, %v9912
    %v9957 = vadd.f32 %v9852, %v9913
    %v9958 = vadd.f32 %v9853, %v9914
    %v9959 = vadd.f32 %v9854, %v9915
    %v9960 = vadd.f32 %v9855, %v9916
    %v9961 = vadd.f32 %v9856, %v9917
    %v9962 = vadd.f32 %v9857, %v9918
    %v9963 = vadd.f32 %v9858, %v9919
    %v9964 = vadd.f32 %v9859, %v9920
    %v9965 = vadd.f32 %v9860, %v9921
    %v9966 = vadd.f32 %v9861, %v9922
    %v9967 = vadd.f32 %v9862, %v9923
    %v9968 = vadd.f32 %v9863, %v9924
    %v9969 = vadd.f32 %v9864, %v9925
    %v9970 = vadd.f32 %v9865, %v9926
    %v9971 = vadd.f32 %v9866, %v9927
    %v9972 = vadd.f32 %v9867, %v9928
    %v9973 = vadd.f32 %v9868, %v9929
    %v9974 = vadd.f32 %v9869, %v9930
    %v9975 = vadd.f32 %v9870, %v9931
    %v9976 = vadd.f32 %v9871, %v9932
    %v9977 = vadd.f32 %v9872, %v9933
    %v9978 = vadd.f32 %v9873, %v9934
    %v9979 = vadd.f32 %v9874, %v9935
    %9980 = vset.pattern.permute.xlu0 8
    %9981 = vperm.xlu0 %9980, %v4826
    %v9982 = vpop.permute.xlu0 %9981
    %9984 = vset.pattern.permute.xlu0 8
    %9985 = vperm.xlu0 %9984, %v4827
    %v9986 = vpop.permute.xlu0 %9985
    %9988 = vset.pattern.permute.xlu0 8
    %9989 = vperm.xlu0 %9988, %v4850
    %v9990 = vpop.permute.xlu0 %9989
    %9992 = vset.pattern.permute.xlu0 8
    %9993 = vperm.xlu0 %9992, %v4851
    %v9994 = vpop.permute.xlu0 %9993
    %v9996 = vperm.slane %v77, 0
    %v9997 = vmul.f32 %v7026, %v9996
    %v9998 = vmul.f32 %v7030, %v9996
    %v9999 = vmul.f32 %v7034, %v9996
    %v10000 = vmul.f32 %v7038, %v9996
    %v10001 = vmul.f32 %v7042, %v9996
    %v10002 = vmul.f32 %v7046, %v9996
    %v10003 = vmul.f32 %v7050, %v9996
    %v10004 = vmul.f32 %v7054, %v9996
    %v10005 = vmul.f32 %v7058, %v9996
    %v10006 = vmul.f32 %v7062, %v9996
    %v10007 = vmul.f32 %v7066, %v9996
    %v10008 = vmul.f32 %v7070, %v9996
    %v10009 = vmul.f32 %v7074, %v9996
    %v10010 = vmul.f32 %v7078, %v9996
    %v10011 = vmul.f32 %v7082, %v9996
    %v10012 = vmul.f32 %v7086, %v9996
    %v10013 = vmul.f32 %v7090, %v9996
    %v10014 = vmul.f32 %v7094, %v9996
    %v10015 = vmul.f32 %v7098, %v9996
    %v10016 = vmul.f32 %v7102, %v9996
    %v10017 = vmul.f32 %v9982, %v9996
    %v10018 = vmul.f32 %v9986, %v9996
    %v10019 = vmul.f32 %v7114, %v9996
    %v10020 = vmul.f32 %v7118, %v9996
    %v10021 = vmul.f32 %v7122, %v9996
    %v10022 = vmul.f32 %v7126, %v9996
    %v10023 = vmul.f32 %v7130, %v9996
    %v10024 = vmul.f32 %v7134, %v9996
    %v10025 = vmul.f32 %v7138, %v9996
    %v10026 = vmul.f32 %v7142, %v9996
    %v10027 = vmul.f32 %v7146, %v9996
    %v10028 = vmul.f32 %v7150, %v9996
    %v10029 = vmul.f32 %v7154, %v9996
    %v10030 = vmul.f32 %v7158, %v9996
    %v10031 = vmul.f32 %v7162, %v9996
    %v10032 = vmul.f32 %v7166, %v9996
    %v10033 = vmul.f32 %v7170, %v9996
    %v10034 = vmul.f32 %v7174, %v9996
    %v10035 = vmul.f32 %v7178, %v9996
    %v10036 = vmul.f32 %v7182, %v9996
    %v10037 = vmul.f32 %v7186, %v9996
    %v10038 = vmul.f32 %v7190, %v9996
    %v10039 = vmul.f32 %v9990, %v9996
    %v10040 = vmul.f32 %v9994, %v9996
    %v10041 = vadd.f32 %v9936, %v9997
    %v10042 = vadd.f32 %v9937, %v9998
    %v10043 = vadd.f32 %v9938, %v9999
    %v10044 = vadd.f32 %v9939, %v10000
    %v10045 = vadd.f32 %v9940, %v10001
    %v10046 = vadd.f32 %v9941, %v10002
    %v10047 = vadd.f32 %v9942, %v10003
    %v10048 = vadd.f32 %v9943, %v10004
    %v10049 = vadd.f32 %v9944, %v10005
    %v10050 = vadd.f32 %v9945, %v10006
    %v10051 = vadd.f32 %v9946, %v10007
    %v10052 = vadd.f32 %v9947, %v10008
    %v10053 = vadd.f32 %v9948, %v10009
    %v10054 = vadd.f32 %v9949, %v10010
    %v10055 = vadd.f32 %v9950, %v10011
    %v10056 = vadd.f32 %v9951, %v10012
    %v10057 = vadd.f32 %v9952, %v10013
    %v10058 = vadd.f32 %v9953, %v10014
    %v10059 = vadd.f32 %v9954, %v10015
    %v10060 = vadd.f32 %v9955, %v10016
    %v10061 = vadd.f32 %v9956, %v10017
    %v10062 = vadd.f32 %v9957, %v10018
    %v10063 = vadd.f32 %v9958, %v10019
    %v10064 = vadd.f32 %v9959, %v10020
    %v10065 = vadd.f32 %v9960, %v10021
    %v10066 = vadd.f32 %v9961, %v10022
    %v10067 = vadd.f32 %v9962, %v10023
    %v10068 = vadd.f32 %v9963, %v10024
    %v10069 = vadd.f32 %v9964, %v10025
    %v10070 = vadd.f32 %v9965, %v10026
    %v10071 = vadd.f32 %v9966, %v10027
    %v10072 = vadd.f32 %v9967, %v10028
    %v10073 = vadd.f32 %v9968, %v10029
    %v10074 = vadd.f32 %v9969, %v10030
    %v10075 = vadd.f32 %v9970, %v10031
    %v10076 = vadd.f32 %v9971, %v10032
    %v10077 = vadd.f32 %v9972, %v10033
    %v10078 = vadd.f32 %v9973, %v10034
    %v10079 = vadd.f32 %v9974, %v10035
    %v10080 = vadd.f32 %v9975, %v10036
    %v10081 = vadd.f32 %v9976, %v10037
    %v10082 = vadd.f32 %v9977, %v10038
    %v10083 = vadd.f32 %v9978, %v10039
    %v10084 = vadd.f32 %v9979, %v10040
    %10085 = vset.pattern.permute.xlu0 9
    %10086 = vperm.xlu0 %10085, %v4826
    %v10087 = vpop.permute.xlu0 %10086
    %10089 = vset.pattern.permute.xlu0 9
    %10090 = vperm.xlu0 %10089, %v4827
    %v10091 = vpop.permute.xlu0 %10090
    %10093 = vset.pattern.permute.xlu0 9
    %10094 = vperm.xlu0 %10093, %v4850
    %v10095 = vpop.permute.xlu0 %10094
    %10097 = vset.pattern.permute.xlu0 9
    %10098 = vperm.xlu0 %10097, %v4851
    %v10099 = vpop.permute.xlu0 %10098
    %v10101 = vperm.slane %v77, 1
    %v10102 = vmul.f32 %v7291, %v10101
    %v10103 = vmul.f32 %v7295, %v10101
    %v10104 = vmul.f32 %v7299, %v10101
    %v10105 = vmul.f32 %v7303, %v10101
    %v10106 = vmul.f32 %v7307, %v10101
    %v10107 = vmul.f32 %v7311, %v10101
    %v10108 = vmul.f32 %v7315, %v10101
    %v10109 = vmul.f32 %v7319, %v10101
    %v10110 = vmul.f32 %v7323, %v10101
    %v10111 = vmul.f32 %v7327, %v10101
    %v10112 = vmul.f32 %v7331, %v10101
    %v10113 = vmul.f32 %v7335, %v10101
    %v10114 = vmul.f32 %v7339, %v10101
    %v10115 = vmul.f32 %v7343, %v10101
    %v10116 = vmul.f32 %v7347, %v10101
    %v10117 = vmul.f32 %v7351, %v10101
    %v10118 = vmul.f32 %v7355, %v10101
    %v10119 = vmul.f32 %v7359, %v10101
    %v10120 = vmul.f32 %v7363, %v10101
    %v10121 = vmul.f32 %v7367, %v10101
    %v10122 = vmul.f32 %v10087, %v10101
    %v10123 = vmul.f32 %v10091, %v10101
    %v10124 = vmul.f32 %v7379, %v10101
    %v10125 = vmul.f32 %v7383, %v10101
    %v10126 = vmul.f32 %v7387, %v10101
    %v10127 = vmul.f32 %v7391, %v10101
    %v10128 = vmul.f32 %v7395, %v10101
    %v10129 = vmul.f32 %v7399, %v10101
    %v10130 = vmul.f32 %v7403, %v10101
    %v10131 = vmul.f32 %v7407, %v10101
    %v10132 = vmul.f32 %v7411, %v10101
    %v10133 = vmul.f32 %v7415, %v10101
    %v10134 = vmul.f32 %v7419, %v10101
    %v10135 = vmul.f32 %v7423, %v10101
    %v10136 = vmul.f32 %v7427, %v10101
    %v10137 = vmul.f32 %v7431, %v10101
    %v10138 = vmul.f32 %v7435, %v10101
    %v10139 = vmul.f32 %v7439, %v10101
    %v10140 = vmul.f32 %v7443, %v10101
    %v10141 = vmul.f32 %v7447, %v10101
    %v10142 = vmul.f32 %v7451, %v10101
    %v10143 = vmul.f32 %v7455, %v10101
    %v10144 = vmul.f32 %v10095, %v10101
    %v10145 = vmul.f32 %v10099, %v10101
    %v10146 = vadd.f32 %v10041, %v10102
    %v10147 = vadd.f32 %v10042, %v10103
    %v10148 = vadd.f32 %v10043, %v10104
    %v10149 = vadd.f32 %v10044, %v10105
    %v10150 = vadd.f32 %v10045, %v10106
    %v10151 = vadd.f32 %v10046, %v10107
    %v10152 = vadd.f32 %v10047, %v10108
    %v10153 = vadd.f32 %v10048, %v10109
    %v10154 = vadd.f32 %v10049, %v10110
    %v10155 = vadd.f32 %v10050, %v10111
    %v10156 = vadd.f32 %v10051, %v10112
    %v10157 = vadd.f32 %v10052, %v10113
    %v10158 = vadd.f32 %v10053, %v10114
    %v10159 = vadd.f32 %v10054, %v10115
    %v10160 = vadd.f32 %v10055, %v10116
    %v10161 = vadd.f32 %v10056, %v10117
    %v10162 = vadd.f32 %v10057, %v10118
    %v10163 = vadd.f32 %v10058, %v10119
    %v10164 = vadd.f32 %v10059, %v10120
    %v10165 = vadd.f32 %v10060, %v10121
    %v10166 = vadd.f32 %v10061, %v10122
    %v10167 = vadd.f32 %v10062, %v10123
    %v10168 = vadd.f32 %v10063, %v10124
    %v10169 = vadd.f32 %v10064, %v10125
    %v10170 = vadd.f32 %v10065, %v10126
    %v10171 = vadd.f32 %v10066, %v10127
    %v10172 = vadd.f32 %v10067, %v10128
    %v10173 = vadd.f32 %v10068, %v10129
    %v10174 = vadd.f32 %v10069, %v10130
    %v10175 = vadd.f32 %v10070, %v10131
    %v10176 = vadd.f32 %v10071, %v10132
    %v10177 = vadd.f32 %v10072, %v10133
    %v10178 = vadd.f32 %v10073, %v10134
    %v10179 = vadd.f32 %v10074, %v10135
    %v10180 = vadd.f32 %v10075, %v10136
    %v10181 = vadd.f32 %v10076, %v10137
    %v10182 = vadd.f32 %v10077, %v10138
    %v10183 = vadd.f32 %v10078, %v10139
    %v10184 = vadd.f32 %v10079, %v10140
    %v10185 = vadd.f32 %v10080, %v10141
    %v10186 = vadd.f32 %v10081, %v10142
    %v10187 = vadd.f32 %v10082, %v10143
    %v10188 = vadd.f32 %v10083, %v10144
    %v10189 = vadd.f32 %v10084, %v10145
    %10190 = vset.pattern.permute.xlu0 10
    %10191 = vperm.xlu0 %10190, %v4826
    %v10192 = vpop.permute.xlu0 %10191
    %10194 = vset.pattern.permute.xlu0 10
    %10195 = vperm.xlu0 %10194, %v4827
    %v10196 = vpop.permute.xlu0 %10195
    %10198 = vset.pattern.permute.xlu0 10
    %10199 = vperm.xlu0 %10198, %v4850
    %v10200 = vpop.permute.xlu0 %10199
    %10202 = vset.pattern.permute.xlu0 10
    %10203 = vperm.xlu0 %10202, %v4851
    %v10204 = vpop.permute.xlu0 %10203
    %v10206 = vperm.slane %v77, 2
    %v10207 = vmul.f32 %v7556, %v10206
    %v10208 = vmul.f32 %v7560, %v10206
    %v10209 = vmul.f32 %v7564, %v10206
    %v10210 = vmul.f32 %v7568, %v10206
    %v10211 = vmul.f32 %v7572, %v10206
    %v10212 = vmul.f32 %v7576, %v10206
    %v10213 = vmul.f32 %v7580, %v10206
    %v10214 = vmul.f32 %v7584, %v10206
    %v10215 = vmul.f32 %v7588, %v10206
    %v10216 = vmul.f32 %v7592, %v10206
    %v10217 = vmul.f32 %v7596, %v10206
    %v10218 = vmul.f32 %v7600, %v10206
    %v10219 = vmul.f32 %v7604, %v10206
    %v10220 = vmul.f32 %v7608, %v10206
    %v10221 = vmul.f32 %v7612, %v10206
    %v10222 = vmul.f32 %v7616, %v10206
    %v10223 = vmul.f32 %v7620, %v10206
    %v10224 = vmul.f32 %v7624, %v10206
    %v10225 = vmul.f32 %v7628, %v10206
    %v10226 = vmul.f32 %v7632, %v10206
    %v10227 = vmul.f32 %v10192, %v10206
    %v10228 = vmul.f32 %v10196, %v10206
    %v10229 = vmul.f32 %v7644, %v10206
    %v10230 = vmul.f32 %v7648, %v10206
    %v10231 = vmul.f32 %v7652, %v10206
    %v10232 = vmul.f32 %v7656, %v10206
    %v10233 = vmul.f32 %v7660, %v10206
    %v10234 = vmul.f32 %v7664, %v10206
    %v10235 = vmul.f32 %v7668, %v10206
    %v10236 = vmul.f32 %v7672, %v10206
    %v10237 = vmul.f32 %v7676, %v10206
    %v10238 = vmul.f32 %v7680, %v10206
    %v10239 = vmul.f32 %v7684, %v10206
    %v10240 = vmul.f32 %v7688, %v10206
    %v10241 = vmul.f32 %v7692, %v10206
    %v10242 = vmul.f32 %v7696, %v10206
    %v10243 = vmul.f32 %v7700, %v10206
    %v10244 = vmul.f32 %v7704, %v10206
    %v10245 = vmul.f32 %v7708, %v10206
    %v10246 = vmul.f32 %v7712, %v10206
    %v10247 = vmul.f32 %v7716, %v10206
    %v10248 = vmul.f32 %v7720, %v10206
    %v10249 = vmul.f32 %v10200, %v10206
    %v10250 = vmul.f32 %v10204, %v10206
    %v10251 = vadd.f32 %v10146, %v10207
    %v10252 = vadd.f32 %v10147, %v10208
    %v10253 = vadd.f32 %v10148, %v10209
    %v10254 = vadd.f32 %v10149, %v10210
    %v10255 = vadd.f32 %v10150, %v10211
    %v10256 = vadd.f32 %v10151, %v10212
    %v10257 = vadd.f32 %v10152, %v10213
    %v10258 = vadd.f32 %v10153, %v10214
    %v10259 = vadd.f32 %v10154, %v10215
    %v10260 = vadd.f32 %v10155, %v10216
    %v10261 = vadd.f32 %v10156, %v10217
    %v10262 = vadd.f32 %v10157, %v10218
    %v10263 = vadd.f32 %v10158, %v10219
    %v10264 = vadd.f32 %v10159, %v10220
    %v10265 = vadd.f32 %v10160, %v10221
    %v10266 = vadd.f32 %v10161, %v10222
    %v10267 = vadd.f32 %v10162, %v10223
    %v10268 = vadd.f32 %v10163, %v10224
    %v10269 = vadd.f32 %v10164, %v10225
    %v10270 = vadd.f32 %v10165, %v10226
    %v10271 = vadd.f32 %v10166, %v10227
    %v10272 = vadd.f32 %v10167, %v10228
    %v10273 = vadd.f32 %v10168, %v10229
    %v10274 = vadd.f32 %v10169, %v10230
    %v10275 = vadd.f32 %v10170, %v10231
    %v10276 = vadd.f32 %v10171, %v10232
    %v10277 = vadd.f32 %v10172, %v10233
    %v10278 = vadd.f32 %v10173, %v10234
    %v10279 = vadd.f32 %v10174, %v10235
    %v10280 = vadd.f32 %v10175, %v10236
    %v10281 = vadd.f32 %v10176, %v10237
    %v10282 = vadd.f32 %v10177, %v10238
    %v10283 = vadd.f32 %v10178, %v10239
    %v10284 = vadd.f32 %v10179, %v10240
    %v10285 = vadd.f32 %v10180, %v10241
    %v10286 = vadd.f32 %v10181, %v10242
    %v10287 = vadd.f32 %v10182, %v10243
    %v10288 = vadd.f32 %v10183, %v10244
    %v10289 = vadd.f32 %v10184, %v10245
    %v10290 = vadd.f32 %v10185, %v10246
    %v10291 = vadd.f32 %v10186, %v10247
    %v10292 = vadd.f32 %v10187, %v10248
    %v10293 = vadd.f32 %v10188, %v10249
    %v10294 = vadd.f32 %v10189, %v10250
    %10295 = vset.pattern.permute.xlu0 11
    %10296 = vperm.xlu0 %10295, %v4826
    %v10297 = vpop.permute.xlu0 %10296
    %10299 = vset.pattern.permute.xlu0 11
    %10300 = vperm.xlu0 %10299, %v4827
    %v10301 = vpop.permute.xlu0 %10300
    %10303 = vset.pattern.permute.xlu0 11
    %10304 = vperm.xlu0 %10303, %v4850
    %v10305 = vpop.permute.xlu0 %10304
    %10307 = vset.pattern.permute.xlu0 11
    %10308 = vperm.xlu0 %10307, %v4851
    %v10309 = vpop.permute.xlu0 %10308
    %v10311 = vperm.slane %v77, 3
    %v10312 = vmul.f32 %v7821, %v10311
    %v10313 = vmul.f32 %v7825, %v10311
    %v10314 = vmul.f32 %v7829, %v10311
    %v10315 = vmul.f32 %v7833, %v10311
    %v10316 = vmul.f32 %v7837, %v10311
    %v10317 = vmul.f32 %v7841, %v10311
    %v10318 = vmul.f32 %v7845, %v10311
    %v10319 = vmul.f32 %v7849, %v10311
    %v10320 = vmul.f32 %v7853, %v10311
    %v10321 = vmul.f32 %v7857, %v10311
    %v10322 = vmul.f32 %v7861, %v10311
    %v10323 = vmul.f32 %v7865, %v10311
    %v10324 = vmul.f32 %v7869, %v10311
    %v10325 = vmul.f32 %v7873, %v10311
    %v10326 = vmul.f32 %v7877, %v10311
    %v10327 = vmul.f32 %v7881, %v10311
    %v10328 = vmul.f32 %v7885, %v10311
    %v10329 = vmul.f32 %v7889, %v10311
    %v10330 = vmul.f32 %v7893, %v10311
    %v10331 = vmul.f32 %v7897, %v10311
    %v10332 = vmul.f32 %v10297, %v10311
    %v10333 = vmul.f32 %v10301, %v10311
    %v10334 = vmul.f32 %v7909, %v10311
    %v10335 = vmul.f32 %v7913, %v10311
    %v10336 = vmul.f32 %v7917, %v10311
    %v10337 = vmul.f32 %v7921, %v10311
    %v10338 = vmul.f32 %v7925, %v10311
    %v10339 = vmul.f32 %v7929, %v10311
    %v10340 = vmul.f32 %v7933, %v10311
    %v10341 = vmul.f32 %v7937, %v10311
    %v10342 = vmul.f32 %v7941, %v10311
    %v10343 = vmul.f32 %v7945, %v10311
    %v10344 = vmul.f32 %v7949, %v10311
    %v10345 = vmul.f32 %v7953, %v10311
    %v10346 = vmul.f32 %v7957, %v10311
    %v10347 = vmul.f32 %v7961, %v10311
    %v10348 = vmul.f32 %v7965, %v10311
    %v10349 = vmul.f32 %v7969, %v10311
    %v10350 = vmul.f32 %v7973, %v10311
    %v10351 = vmul.f32 %v7977, %v10311
    %v10352 = vmul.f32 %v7981, %v10311
    %v10353 = vmul.f32 %v7985, %v10311
    %v10354 = vmul.f32 %v10305, %v10311
    %v10355 = vmul.f32 %v10309, %v10311
    %v10356 = vadd.f32 %v10251, %v10312
    %v10357 = vadd.f32 %v10252, %v10313
    %v10358 = vadd.f32 %v10253, %v10314
    %v10359 = vadd.f32 %v10254, %v10315
    %v10360 = vadd.f32 %v10255, %v10316
    %v10361 = vadd.f32 %v10256, %v10317
    %v10362 = vadd.f32 %v10257, %v10318
    %v10363 = vadd.f32 %v10258, %v10319
    %v10364 = vadd.f32 %v10259, %v10320
    %v10365 = vadd.f32 %v10260, %v10321
    %v10366 = vadd.f32 %v10261, %v10322
    %v10367 = vadd.f32 %v10262, %v10323
    %v10368 = vadd.f32 %v10263, %v10324
    %v10369 = vadd.f32 %v10264, %v10325
    %v10370 = vadd.f32 %v10265, %v10326
    %v10371 = vadd.f32 %v10266, %v10327
    %v10372 = vadd.f32 %v10267, %v10328
    %v10373 = vadd.f32 %v10268, %v10329
    %v10374 = vadd.f32 %v10269, %v10330
    %v10375 = vadd.f32 %v10270, %v10331
    %v10376 = vadd.f32 %v10271, %v10332
    %v10377 = vadd.f32 %v10272, %v10333
    %v10378 = vadd.f32 %v10273, %v10334
    %v10379 = vadd.f32 %v10274, %v10335
    %v10380 = vadd.f32 %v10275, %v10336
    %v10381 = vadd.f32 %v10276, %v10337
    %v10382 = vadd.f32 %v10277, %v10338
    %v10383 = vadd.f32 %v10278, %v10339
    %v10384 = vadd.f32 %v10279, %v10340
    %v10385 = vadd.f32 %v10280, %v10341
    %v10386 = vadd.f32 %v10281, %v10342
    %v10387 = vadd.f32 %v10282, %v10343
    %v10388 = vadd.f32 %v10283, %v10344
    %v10389 = vadd.f32 %v10284, %v10345
    %v10390 = vadd.f32 %v10285, %v10346
    %v10391 = vadd.f32 %v10286, %v10347
    %v10392 = vadd.f32 %v10287, %v10348
    %v10393 = vadd.f32 %v10288, %v10349
    %v10394 = vadd.f32 %v10289, %v10350
    %v10395 = vadd.f32 %v10290, %v10351
    %v10396 = vadd.f32 %v10291, %v10352
    %v10397 = vadd.f32 %v10292, %v10353
    %v10398 = vadd.f32 %v10293, %v10354
    %v10399 = vadd.f32 %v10294, %v10355
    %10400 = vset.pattern.permute.xlu0 12
    %10401 = vperm.xlu0 %10400, %v4826
    %v10402 = vpop.permute.xlu0 %10401
    %10404 = vset.pattern.permute.xlu0 12
    %10405 = vperm.xlu0 %10404, %v4827
    %v10406 = vpop.permute.xlu0 %10405
    %10408 = vset.pattern.permute.xlu0 12
    %10409 = vperm.xlu0 %10408, %v4850
    %v10410 = vpop.permute.xlu0 %10409
    %10412 = vset.pattern.permute.xlu0 12
    %10413 = vperm.xlu0 %10412, %v4851
    %v10414 = vpop.permute.xlu0 %10413
    %v10416 = vperm.slane %v77, 4
    %v10417 = vmul.f32 %v8086, %v10416
    %v10418 = vmul.f32 %v8090, %v10416
    %v10419 = vmul.f32 %v8094, %v10416
    %v10420 = vmul.f32 %v8098, %v10416
    %v10421 = vmul.f32 %v8102, %v10416
    %v10422 = vmul.f32 %v8106, %v10416
    %v10423 = vmul.f32 %v8110, %v10416
    %v10424 = vmul.f32 %v8114, %v10416
    %v10425 = vmul.f32 %v8118, %v10416
    %v10426 = vmul.f32 %v8122, %v10416
    %v10427 = vmul.f32 %v8126, %v10416
    %v10428 = vmul.f32 %v8130, %v10416
    %v10429 = vmul.f32 %v8134, %v10416
    %v10430 = vmul.f32 %v8138, %v10416
    %v10431 = vmul.f32 %v8142, %v10416
    %v10432 = vmul.f32 %v8146, %v10416
    %v10433 = vmul.f32 %v8150, %v10416
    %v10434 = vmul.f32 %v8154, %v10416
    %v10435 = vmul.f32 %v8158, %v10416
    %v10436 = vmul.f32 %v8162, %v10416
    %v10437 = vmul.f32 %v10402, %v10416
    %v10438 = vmul.f32 %v10406, %v10416
    %v10439 = vmul.f32 %v8174, %v10416
    %v10440 = vmul.f32 %v8178, %v10416
    %v10441 = vmul.f32 %v8182, %v10416
    %v10442 = vmul.f32 %v8186, %v10416
    %v10443 = vmul.f32 %v8190, %v10416
    %v10444 = vmul.f32 %v8194, %v10416
    %v10445 = vmul.f32 %v8198, %v10416
    %v10446 = vmul.f32 %v8202, %v10416
    %v10447 = vmul.f32 %v8206, %v10416
    %v10448 = vmul.f32 %v8210, %v10416
    %v10449 = vmul.f32 %v8214, %v10416
    %v10450 = vmul.f32 %v8218, %v10416
    %v10451 = vmul.f32 %v8222, %v10416
    %v10452 = vmul.f32 %v8226, %v10416
    %v10453 = vmul.f32 %v8230, %v10416
    %v10454 = vmul.f32 %v8234, %v10416
    %v10455 = vmul.f32 %v8238, %v10416
    %v10456 = vmul.f32 %v8242, %v10416
    %v10457 = vmul.f32 %v8246, %v10416
    %v10458 = vmul.f32 %v8250, %v10416
    %v10459 = vmul.f32 %v10410, %v10416
    %v10460 = vmul.f32 %v10414, %v10416
    %v10461 = vadd.f32 %v10356, %v10417
    %v10462 = vadd.f32 %v10357, %v10418
    %v10463 = vadd.f32 %v10358, %v10419
    %v10464 = vadd.f32 %v10359, %v10420
    %v10465 = vadd.f32 %v10360, %v10421
    %v10466 = vadd.f32 %v10361, %v10422
    %v10467 = vadd.f32 %v10362, %v10423
    %v10468 = vadd.f32 %v10363, %v10424
    %v10469 = vadd.f32 %v10364, %v10425
    %v10470 = vadd.f32 %v10365, %v10426
    %v10471 = vadd.f32 %v10366, %v10427
    %v10472 = vadd.f32 %v10367, %v10428
    %v10473 = vadd.f32 %v10368, %v10429
    %v10474 = vadd.f32 %v10369, %v10430
    %v10475 = vadd.f32 %v10370, %v10431
    %v10476 = vadd.f32 %v10371, %v10432
    %v10477 = vadd.f32 %v10372, %v10433
    %v10478 = vadd.f32 %v10373, %v10434
    %v10479 = vadd.f32 %v10374, %v10435
    %v10480 = vadd.f32 %v10375, %v10436
    %v10481 = vadd.f32 %v10376, %v10437
    %v10482 = vadd.f32 %v10377, %v10438
    %v10483 = vadd.f32 %v10378, %v10439
    %v10484 = vadd.f32 %v10379, %v10440
    %v10485 = vadd.f32 %v10380, %v10441
    %v10486 = vadd.f32 %v10381, %v10442
    %v10487 = vadd.f32 %v10382, %v10443
    %v10488 = vadd.f32 %v10383, %v10444
    %v10489 = vadd.f32 %v10384, %v10445
    %v10490 = vadd.f32 %v10385, %v10446
    %v10491 = vadd.f32 %v10386, %v10447
    %v10492 = vadd.f32 %v10387, %v10448
    %v10493 = vadd.f32 %v10388, %v10449
    %v10494 = vadd.f32 %v10389, %v10450
    %v10495 = vadd.f32 %v10390, %v10451
    %v10496 = vadd.f32 %v10391, %v10452
    %v10497 = vadd.f32 %v10392, %v10453
    %v10498 = vadd.f32 %v10393, %v10454
    %v10499 = vadd.f32 %v10394, %v10455
    %v10500 = vadd.f32 %v10395, %v10456
    %v10501 = vadd.f32 %v10396, %v10457
    %v10502 = vadd.f32 %v10397, %v10458
    %v10503 = vadd.f32 %v10398, %v10459
    %v10504 = vadd.f32 %v10399, %v10460
    %10505 = vset.pattern.permute.xlu0 13
    %10506 = vperm.xlu0 %10505, %v4826
    %v10507 = vpop.permute.xlu0 %10506
    %10509 = vset.pattern.permute.xlu0 13
    %10510 = vperm.xlu0 %10509, %v4827
    %v10511 = vpop.permute.xlu0 %10510
    %10513 = vset.pattern.permute.xlu0 13
    %10514 = vperm.xlu0 %10513, %v4850
    %v10515 = vpop.permute.xlu0 %10514
    %10517 = vset.pattern.permute.xlu0 13
    %10518 = vperm.xlu0 %10517, %v4851
    %v10519 = vpop.permute.xlu0 %10518
    %v10521 = vperm.slane %v77, 5
    %v10522 = vmul.f32 %v8351, %v10521
    %v10523 = vmul.f32 %v8355, %v10521
    %v10524 = vmul.f32 %v8359, %v10521
    %v10525 = vmul.f32 %v8363, %v10521
    %v10526 = vmul.f32 %v8367, %v10521
    %v10527 = vmul.f32 %v8371, %v10521
    %v10528 = vmul.f32 %v8375, %v10521
    %v10529 = vmul.f32 %v8379, %v10521
    %v10530 = vmul.f32 %v8383, %v10521
    %v10531 = vmul.f32 %v8387, %v10521
    %v10532 = vmul.f32 %v8391, %v10521
    %v10533 = vmul.f32 %v8395, %v10521
    %v10534 = vmul.f32 %v8399, %v10521
    %v10535 = vmul.f32 %v8403, %v10521
    %v10536 = vmul.f32 %v8407, %v10521
    %v10537 = vmul.f32 %v8411, %v10521
    %v10538 = vmul.f32 %v8415, %v10521
    %v10539 = vmul.f32 %v8419, %v10521
    %v10540 = vmul.f32 %v8423, %v10521
    %v10541 = vmul.f32 %v8427, %v10521
    %v10542 = vmul.f32 %v10507, %v10521
    %v10543 = vmul.f32 %v10511, %v10521
    %v10544 = vmul.f32 %v8439, %v10521
    %v10545 = vmul.f32 %v8443, %v10521
    %v10546 = vmul.f32 %v8447, %v10521
    %v10547 = vmul.f32 %v8451, %v10521
    %v10548 = vmul.f32 %v8455, %v10521
    %v10549 = vmul.f32 %v8459, %v10521
    %v10550 = vmul.f32 %v8463, %v10521
    %v10551 = vmul.f32 %v8467, %v10521
    %v10552 = vmul.f32 %v8471, %v10521
    %v10553 = vmul.f32 %v8475, %v10521
    %v10554 = vmul.f32 %v8479, %v10521
    %v10555 = vmul.f32 %v8483, %v10521
    %v10556 = vmul.f32 %v8487, %v10521
    %v10557 = vmul.f32 %v8491, %v10521
    %v10558 = vmul.f32 %v8495, %v10521
    %v10559 = vmul.f32 %v8499, %v10521
    %v10560 = vmul.f32 %v8503, %v10521
    %v10561 = vmul.f32 %v8507, %v10521
    %v10562 = vmul.f32 %v8511, %v10521
    %v10563 = vmul.f32 %v8515, %v10521
    %v10564 = vmul.f32 %v10515, %v10521
    %v10565 = vmul.f32 %v10519, %v10521
    %v10566 = vadd.f32 %v10461, %v10522
    %v10567 = vadd.f32 %v10462, %v10523
    %v10568 = vadd.f32 %v10463, %v10524
    %v10569 = vadd.f32 %v10464, %v10525
    %v10570 = vadd.f32 %v10465, %v10526
    %v10571 = vadd.f32 %v10466, %v10527
    %v10572 = vadd.f32 %v10467, %v10528
    %v10573 = vadd.f32 %v10468, %v10529
    %v10574 = vadd.f32 %v10469, %v10530
    %v10575 = vadd.f32 %v10470, %v10531
    %v10576 = vadd.f32 %v10471, %v10532
    %v10577 = vadd.f32 %v10472, %v10533
    %v10578 = vadd.f32 %v10473, %v10534
    %v10579 = vadd.f32 %v10474, %v10535
    %v10580 = vadd.f32 %v10475, %v10536
    %v10581 = vadd.f32 %v10476, %v10537
    %v10582 = vadd.f32 %v10477, %v10538
    %v10583 = vadd.f32 %v10478, %v10539
    %v10584 = vadd.f32 %v10479, %v10540
    %v10585 = vadd.f32 %v10480, %v10541
    %v10586 = vadd.f32 %v10481, %v10542
    %v10587 = vadd.f32 %v10482, %v10543
    %v10588 = vadd.f32 %v10483, %v10544
    %v10589 = vadd.f32 %v10484, %v10545
    %v10590 = vadd.f32 %v10485, %v10546
    %v10591 = vadd.f32 %v10486, %v10547
    %v10592 = vadd.f32 %v10487, %v10548
    %v10593 = vadd.f32 %v10488, %v10549
    %v10594 = vadd.f32 %v10489, %v10550
    %v10595 = vadd.f32 %v10490, %v10551
    %v10596 = vadd.f32 %v10491, %v10552
    %v10597 = vadd.f32 %v10492, %v10553
    %v10598 = vadd.f32 %v10493, %v10554
    %v10599 = vadd.f32 %v10494, %v10555
    %v10600 = vadd.f32 %v10495, %v10556
    %v10601 = vadd.f32 %v10496, %v10557
    %v10602 = vadd.f32 %v10497, %v10558
    %v10603 = vadd.f32 %v10498, %v10559
    %v10604 = vadd.f32 %v10499, %v10560
    %v10605 = vadd.f32 %v10500, %v10561
    %v10606 = vadd.f32 %v10501, %v10562
    %v10607 = vadd.f32 %v10502, %v10563
    %v10608 = vadd.f32 %v10503, %v10564
    %v10609 = vadd.f32 %v10504, %v10565
    %10610 = vset.pattern.permute.xlu0 14
    %10611 = vperm.xlu0 %10610, %v4826
    %v10612 = vpop.permute.xlu0 %10611
    %10614 = vset.pattern.permute.xlu0 14
    %10615 = vperm.xlu0 %10614, %v4827
    %v10616 = vpop.permute.xlu0 %10615
    %10618 = vset.pattern.permute.xlu0 14
    %10619 = vperm.xlu0 %10618, %v4850
    %v10620 = vpop.permute.xlu0 %10619
    %10622 = vset.pattern.permute.xlu0 14
    %10623 = vperm.xlu0 %10622, %v4851
    %v10624 = vpop.permute.xlu0 %10623
    %v10626 = vperm.slane %v77, 6
    %v10627 = vmul.f32 %v8616, %v10626
    %v10628 = vmul.f32 %v8620, %v10626
    %v10629 = vmul.f32 %v8624, %v10626
    %v10630 = vmul.f32 %v8628, %v10626
    %v10631 = vmul.f32 %v8632, %v10626
    %v10632 = vmul.f32 %v8636, %v10626
    %v10633 = vmul.f32 %v8640, %v10626
    %v10634 = vmul.f32 %v8644, %v10626
    %v10635 = vmul.f32 %v8648, %v10626
    %v10636 = vmul.f32 %v8652, %v10626
    %v10637 = vmul.f32 %v8656, %v10626
    %v10638 = vmul.f32 %v8660, %v10626
    %v10639 = vmul.f32 %v8664, %v10626
    %v10640 = vmul.f32 %v8668, %v10626
    %v10641 = vmul.f32 %v8672, %v10626
    %v10642 = vmul.f32 %v8676, %v10626
    %v10643 = vmul.f32 %v8680, %v10626
    %v10644 = vmul.f32 %v8684, %v10626
    %v10645 = vmul.f32 %v8688, %v10626
    %v10646 = vmul.f32 %v8692, %v10626
    %v10647 = vmul.f32 %v10612, %v10626
    %v10648 = vmul.f32 %v10616, %v10626
    %v10649 = vmul.f32 %v8704, %v10626
    %v10650 = vmul.f32 %v8708, %v10626
    %v10651 = vmul.f32 %v8712, %v10626
    %v10652 = vmul.f32 %v8716, %v10626
    %v10653 = vmul.f32 %v8720, %v10626
    %v10654 = vmul.f32 %v8724, %v10626
    %v10655 = vmul.f32 %v8728, %v10626
    %v10656 = vmul.f32 %v8732, %v10626
    %v10657 = vmul.f32 %v8736, %v10626
    %v10658 = vmul.f32 %v8740, %v10626
    %v10659 = vmul.f32 %v8744, %v10626
    %v10660 = vmul.f32 %v8748, %v10626
    %v10661 = vmul.f32 %v8752, %v10626
    %v10662 = vmul.f32 %v8756, %v10626
    %v10663 = vmul.f32 %v8760, %v10626
    %v10664 = vmul.f32 %v8764, %v10626
    %v10665 = vmul.f32 %v8768, %v10626
    %v10666 = vmul.f32 %v8772, %v10626
    %v10667 = vmul.f32 %v8776, %v10626
    %v10668 = vmul.f32 %v8780, %v10626
    %v10669 = vmul.f32 %v10620, %v10626
    %v10670 = vmul.f32 %v10624, %v10626
    %v10671 = vadd.f32 %v10566, %v10627
    %v10672 = vadd.f32 %v10567, %v10628
    %v10673 = vadd.f32 %v10568, %v10629
    %v10674 = vadd.f32 %v10569, %v10630
    %v10675 = vadd.f32 %v10570, %v10631
    %v10676 = vadd.f32 %v10571, %v10632
    %v10677 = vadd.f32 %v10572, %v10633
    %v10678 = vadd.f32 %v10573, %v10634
    %v10679 = vadd.f32 %v10574, %v10635
    %v10680 = vadd.f32 %v10575, %v10636
    %v10681 = vadd.f32 %v10576, %v10637
    %v10682 = vadd.f32 %v10577, %v10638
    %v10683 = vadd.f32 %v10578, %v10639
    %v10684 = vadd.f32 %v10579, %v10640
    %v10685 = vadd.f32 %v10580, %v10641
    %v10686 = vadd.f32 %v10581, %v10642
    %v10687 = vadd.f32 %v10582, %v10643
    %v10688 = vadd.f32 %v10583, %v10644
    %v10689 = vadd.f32 %v10584, %v10645
    %v10690 = vadd.f32 %v10585, %v10646
    %v10691 = vadd.f32 %v10586, %v10647
    %v10692 = vadd.f32 %v10587, %v10648
    %v10693 = vadd.f32 %v10588, %v10649
    %v10694 = vadd.f32 %v10589, %v10650
    %v10695 = vadd.f32 %v10590, %v10651
    %v10696 = vadd.f32 %v10591, %v10652
    %v10697 = vadd.f32 %v10592, %v10653
    %v10698 = vadd.f32 %v10593, %v10654
    %v10699 = vadd.f32 %v10594, %v10655
    %v10700 = vadd.f32 %v10595, %v10656
    %v10701 = vadd.f32 %v10596, %v10657
    %v10702 = vadd.f32 %v10597, %v10658
    %v10703 = vadd.f32 %v10598, %v10659
    %v10704 = vadd.f32 %v10599, %v10660
    %v10705 = vadd.f32 %v10600, %v10661
    %v10706 = vadd.f32 %v10601, %v10662
    %v10707 = vadd.f32 %v10602, %v10663
    %v10708 = vadd.f32 %v10603, %v10664
    %v10709 = vadd.f32 %v10604, %v10665
    %v10710 = vadd.f32 %v10605, %v10666
    %v10711 = vadd.f32 %v10606, %v10667
    %v10712 = vadd.f32 %v10607, %v10668
    %v10713 = vadd.f32 %v10608, %v10669
    %v10714 = vadd.f32 %v10609, %v10670
    %10715 = vset.pattern.permute.xlu0 15
    %10716 = vperm.xlu0 %10715, %v4826
    %v10717 = vpop.permute.xlu0 %10716
    %10719 = vset.pattern.permute.xlu0 15
    %10720 = vperm.xlu0 %10719, %v4827
    %v10721 = vpop.permute.xlu0 %10720
    %10723 = vset.pattern.permute.xlu0 15
    %10724 = vperm.xlu0 %10723, %v4850
    %v10725 = vpop.permute.xlu0 %10724
    %10727 = vset.pattern.permute.xlu0 15
    %10728 = vperm.xlu0 %10727, %v4851
    %v10729 = vpop.permute.xlu0 %10728
    %v10731 = vperm.slane %v77, 7
    %v10732 = vmul.f32 %v8881, %v10731
    %v10733 = vmul.f32 %v8885, %v10731
    %v10734 = vmul.f32 %v8889, %v10731
    %v10735 = vmul.f32 %v8893, %v10731
    %v10736 = vmul.f32 %v8897, %v10731
    %v10737 = vmul.f32 %v8901, %v10731
    %v10738 = vmul.f32 %v8905, %v10731
    %v10739 = vmul.f32 %v8909, %v10731
    %v10740 = vmul.f32 %v8913, %v10731
    %v10741 = vmul.f32 %v8917, %v10731
    %v10742 = vmul.f32 %v8921, %v10731
    %v10743 = vmul.f32 %v8925, %v10731
    %v10744 = vmul.f32 %v8929, %v10731
    %v10745 = vmul.f32 %v8933, %v10731
    %v10746 = vmul.f32 %v8937, %v10731
    %v10747 = vmul.f32 %v8941, %v10731
    %v10748 = vmul.f32 %v8945, %v10731
    %v10749 = vmul.f32 %v8949, %v10731
    %v10750 = vmul.f32 %v8953, %v10731
    %v10751 = vmul.f32 %v8957, %v10731
    %v10752 = vmul.f32 %v10717, %v10731
    %v10753 = vmul.f32 %v10721, %v10731
    %v10754 = vmul.f32 %v8969, %v10731
    %v10755 = vmul.f32 %v8973, %v10731
    %v10756 = vmul.f32 %v8977, %v10731
    %v10757 = vmul.f32 %v8981, %v10731
    %v10758 = vmul.f32 %v8985, %v10731
    %v10759 = vmul.f32 %v8989, %v10731
    %v10760 = vmul.f32 %v8993, %v10731
    %v10761 = vmul.f32 %v8997, %v10731
    %v10762 = vmul.f32 %v9001, %v10731
    %v10763 = vmul.f32 %v9005, %v10731
    %v10764 = vmul.f32 %v9009, %v10731
    %v10765 = vmul.f32 %v9013, %v10731
    %v10766 = vmul.f32 %v9017, %v10731
    %v10767 = vmul.f32 %v9021, %v10731
    %v10768 = vmul.f32 %v9025, %v10731
    %v10769 = vmul.f32 %v9029, %v10731
    %v10770 = vmul.f32 %v9033, %v10731
    %v10771 = vmul.f32 %v9037, %v10731
    %v10772 = vmul.f32 %v9041, %v10731
    %v10773 = vmul.f32 %v9045, %v10731
    %v10774 = vmul.f32 %v10725, %v10731
    %v10775 = vmul.f32 %v10729, %v10731
    %v10776 = vadd.f32 %v10671, %v10732
    %v10777 = vadd.f32 %v10672, %v10733
    %v10778 = vadd.f32 %v10673, %v10734
    %v10779 = vadd.f32 %v10674, %v10735
    %v10780 = vadd.f32 %v10675, %v10736
    %v10781 = vadd.f32 %v10676, %v10737
    %v10782 = vadd.f32 %v10677, %v10738
    %v10783 = vadd.f32 %v10678, %v10739
    %v10784 = vadd.f32 %v10679, %v10740
    %v10785 = vadd.f32 %v10680, %v10741
    %v10786 = vadd.f32 %v10681, %v10742
    %v10787 = vadd.f32 %v10682, %v10743
    %v10788 = vadd.f32 %v10683, %v10744
    %v10789 = vadd.f32 %v10684, %v10745
    %v10790 = vadd.f32 %v10685, %v10746
    %v10791 = vadd.f32 %v10686, %v10747
    %v10792 = vadd.f32 %v10687, %v10748
    %v10793 = vadd.f32 %v10688, %v10749
    %v10794 = vadd.f32 %v10689, %v10750
    %v10795 = vadd.f32 %v10690, %v10751
    %v10796 = vadd.f32 %v10691, %v10752
    %v10797 = vadd.f32 %v10692, %v10753
    %v10798 = vadd.f32 %v10693, %v10754
    %v10799 = vadd.f32 %v10694, %v10755
    %v10800 = vadd.f32 %v10695, %v10756
    %v10801 = vadd.f32 %v10696, %v10757
    %v10802 = vadd.f32 %v10697, %v10758
    %v10803 = vadd.f32 %v10698, %v10759
    %v10804 = vadd.f32 %v10699, %v10760
    %v10805 = vadd.f32 %v10700, %v10761
    %v10806 = vadd.f32 %v10701, %v10762
    %v10807 = vadd.f32 %v10702, %v10763
    %v10808 = vadd.f32 %v10703, %v10764
    %v10809 = vadd.f32 %v10704, %v10765
    %v10810 = vadd.f32 %v10705, %v10766
    %v10811 = vadd.f32 %v10706, %v10767
    %v10812 = vadd.f32 %v10707, %v10768
    %v10813 = vadd.f32 %v10708, %v10769
    %v10814 = vadd.f32 %v10709, %v10770
    %v10815 = vadd.f32 %v10710, %v10771
    %v10816 = vadd.f32 %v10711, %v10772
    %v10817 = vadd.f32 %v10712, %v10773
    %v10818 = vadd.f32 %v10713, %v10774
    %v10819 = vadd.f32 %v10714, %v10775
    %v10821 = vperm.slane %v79, 0
    %v10823 = vadd.f32 %v10776, %v10821
    %v10824 = vadd.f32 %v10777, %v10821
    %v10825 = vadd.f32 %v10778, %v10821
    %v10826 = vadd.f32 %v10779, %v10821
    %v10827 = vadd.f32 %v10780, %v10821
    %v10828 = vadd.f32 %v10781, %v10821
    %v10829 = vadd.f32 %v10782, %v10821
    %v10830 = vadd.f32 %v10783, %v10821
    %v10831 = vadd.f32 %v10784, %v10821
    %v10832 = vadd.f32 %v10785, %v10821
    %v10833 = vadd.f32 %v10786, %v10821
    %v10834 = vadd.f32 %v10787, %v10821
    %v10835 = vadd.f32 %v10788, %v10821
    %v10836 = vadd.f32 %v10789, %v10821
    %v10837 = vadd.f32 %v10790, %v10821
    %v10838 = vadd.f32 %v10791, %v10821
    %v10839 = vadd.f32 %v10792, %v10821
    %v10840 = vadd.f32 %v10793, %v10821
    %v10841 = vadd.f32 %v10794, %v10821
    %v10842 = vadd.f32 %v10795, %v10821
    %v10843 = vadd.f32 %v10796, %v10821
    %v10844 = vadd.f32 %v10797, %v10821
    %v10845 = vadd.f32 %v10798, %v10821
    %v10846 = vadd.f32 %v10799, %v10821
    %v10847 = vadd.f32 %v10800, %v10821
    %v10848 = vadd.f32 %v10801, %v10821
    %v10849 = vadd.f32 %v10802, %v10821
    %v10850 = vadd.f32 %v10803, %v10821
    %v10851 = vadd.f32 %v10804, %v10821
    %v10852 = vadd.f32 %v10805, %v10821
    %v10853 = vadd.f32 %v10806, %v10821
    %v10854 = vadd.f32 %v10807, %v10821
    %v10855 = vadd.f32 %v10808, %v10821
    %v10856 = vadd.f32 %v10809, %v10821
    %v10857 = vadd.f32 %v10810, %v10821
    %v10858 = vadd.f32 %v10811, %v10821
    %v10859 = vadd.f32 %v10812, %v10821
    %v10860 = vadd.f32 %v10813, %v10821
    %v10861 = vadd.f32 %v10814, %v10821
    %v10862 = vadd.f32 %v10815, %v10821
    %v10863 = vadd.f32 %v10816, %v10821
    %v10864 = vadd.f32 %v10817, %v10821
    %v10865 = vadd.f32 %v10818, %v10821
    %v10866 = vadd.f32 %v10819, %v10821
    %v10911 = vrot.slane %v10823, 1
    %v10912 = vrot.slane %v10824, 1
    %v10913 = vsel %vm2561, %v10911, %v10912
    %v10914 = vrot.slane %v10825, 1
    %v10915 = vrot.slane %v10826, 1
    %v10916 = vsel %vm2561, %v10914, %v10915
    %v10917 = vrot.slane %v10827, 1
    %v10918 = vrot.slane %v10828, 1
    %v10919 = vsel %vm2561, %v10917, %v10918
    %v10920 = vrot.slane %v10829, 1
    %v10921 = vrot.slane %v10830, 1
    %v10922 = vsel %vm2561, %v10920, %v10921
    %v10923 = vrot.slane %v10831, 1
    %v10924 = vrot.slane %v10832, 1
    %v10925 = vsel %vm2561, %v10923, %v10924
    %v10926 = vrot.slane %v10833, 1
    %v10927 = vrot.slane %v10834, 1
    %v10928 = vsel %vm2561, %v10926, %v10927
    %v10929 = vrot.slane %v10835, 1
    %v10930 = vrot.slane %v10836, 1
    %v10931 = vsel %vm2561, %v10929, %v10930
    %v10932 = vrot.slane %v10837, 1
    %v10933 = vrot.slane %v10838, 1
    %v10934 = vsel %vm2561, %v10932, %v10933
    %v10935 = vrot.slane %v10839, 1
    %v10936 = vrot.slane %v10840, 1
    %v10937 = vsel %vm2561, %v10935, %v10936
    %v10938 = vrot.slane %v10841, 1
    %v10939 = vrot.slane %v10842, 1
    %v10940 = vsel %vm2561, %v10938, %v10939
    %v10941 = vrot.slane %v10843, 1
    %v10942 = vrot.slane %v10844, 1
    %v10943 = vsel %vm2561, %v10941, %v10942
    %v10944 = vrot.slane %v10845, 1
    %v10945 = vrot.slane %v10846, 1
    %v10946 = vsel %vm2561, %v10944, %v10945
    %v10947 = vrot.slane %v10847, 1
    %v10948 = vrot.slane %v10848, 1
    %v10949 = vsel %vm2561, %v10947, %v10948
    %v10950 = vrot.slane %v10849, 1
    %v10951 = vrot.slane %v10850, 1
    %v10952 = vsel %vm2561, %v10950, %v10951
    %v10953 = vrot.slane %v10851, 1
    %v10954 = vrot.slane %v10852, 1
    %v10955 = vsel %vm2561, %v10953, %v10954
    %v10956 = vrot.slane %v10853, 1
    %v10957 = vrot.slane %v10854, 1
    %v10958 = vsel %vm2561, %v10956, %v10957
    %v10959 = vrot.slane %v10855, 1
    %v10960 = vrot.slane %v10856, 1
    %v10961 = vsel %vm2561, %v10959, %v10960
    %v10962 = vrot.slane %v10857, 1
    %v10963 = vrot.slane %v10858, 1
    %v10964 = vsel %vm2561, %v10962, %v10963
    %v10965 = vrot.slane %v10859, 1
    %v10966 = vrot.slane %v10860, 1
    %v10967 = vsel %vm2561, %v10965, %v10966
    %v10968 = vrot.slane %v10861, 1
    %v10969 = vrot.slane %v10862, 1
    %v10970 = vsel %vm2561, %v10968, %v10969
    %v10971 = vrot.slane %v10863, 1
    %v10972 = vrot.slane %v10864, 1
    %v10973 = vsel %vm2561, %v10971, %v10972
    %v10974 = vrot.slane %v10865, 1
    %v10975 = vrot.slane %v10866, 1
    %v10976 = vsel %vm2561, %v10974, %v10975
    %v10999 = vmax.f32 %v10823, %v10913
    %v11000 = vmax.f32 %v10825, %v10916
    %v11001 = vmax.f32 %v10827, %v10919
    %v11002 = vmax.f32 %v10829, %v10922
    %v11003 = vmax.f32 %v10831, %v10925
    %v11004 = vmax.f32 %v10833, %v10928
    %v11005 = vmax.f32 %v10835, %v10931
    %v11006 = vmax.f32 %v10837, %v10934
    %v11007 = vmax.f32 %v10839, %v10937
    %v11008 = vmax.f32 %v10841, %v10940
    %v11009 = vmax.f32 %v10843, %v10943
    %v11010 = vmax.f32 %v10845, %v10946
    %v11011 = vmax.f32 %v10847, %v10949
    %v11012 = vmax.f32 %v10849, %v10952
    %v11013 = vmax.f32 %v10851, %v10955
    %v11014 = vmax.f32 %v10853, %v10958
    %v11015 = vmax.f32 %v10855, %v10961
    %v11016 = vmax.f32 %v10857, %v10964
    %v11017 = vmax.f32 %v10859, %v10967
    %v11018 = vmax.f32 %v10861, %v10970
    %v11019 = vmax.f32 %v10863, %v10973
    %v11020 = vmax.f32 %v10865, %v10976
    %vm11021 = vcmask 1045504
    %v11022 = vrot.slane %v10823, 2
    %v11023 = vrot.slane %v10824, 2
    %v11024 = vsel %vm11021, %v11022, %v11023
    %v11025 = vrot.slane %v10825, 2
    %v11026 = vrot.slane %v10826, 2
    %v11027 = vsel %vm11021, %v11025, %v11026
    %v11028 = vrot.slane %v10827, 2
    %v11029 = vrot.slane %v10828, 2
    %v11030 = vsel %vm11021, %v11028, %v11029
    %v11031 = vrot.slane %v10829, 2
    %v11032 = vrot.slane %v10830, 2
    %v11033 = vsel %vm11021, %v11031, %v11032
    %v11034 = vrot.slane %v10831, 2
    %v11035 = vrot.slane %v10832, 2
    %v11036 = vsel %vm11021, %v11034, %v11035
    %v11037 = vrot.slane %v10833, 2
    %v11038 = vrot.slane %v10834, 2
    %v11039 = vsel %vm11021, %v11037, %v11038
    %v11040 = vrot.slane %v10835, 2
    %v11041 = vrot.slane %v10836, 2
    %v11042 = vsel %vm11021, %v11040, %v11041
    %v11043 = vrot.slane %v10837, 2
    %v11044 = vrot.slane %v10838, 2
    %v11045 = vsel %vm11021, %v11043, %v11044
    %v11046 = vrot.slane %v10839, 2
    %v11047 = vrot.slane %v10840, 2
    %v11048 = vsel %vm11021, %v11046, %v11047
    %v11049 = vrot.slane %v10841, 2
    %v11050 = vrot.slane %v10842, 2
    %v11051 = vsel %vm11021, %v11049, %v11050
    %v11052 = vrot.slane %v10843, 2
    %v11053 = vrot.slane %v10844, 2
    %v11054 = vsel %vm11021, %v11052, %v11053
    %v11055 = vrot.slane %v10845, 2
    %v11056 = vrot.slane %v10846, 2
    %v11057 = vsel %vm11021, %v11055, %v11056
    %v11058 = vrot.slane %v10847, 2
    %v11059 = vrot.slane %v10848, 2
    %v11060 = vsel %vm11021, %v11058, %v11059
    %v11061 = vrot.slane %v10849, 2
    %v11062 = vrot.slane %v10850, 2
    %v11063 = vsel %vm11021, %v11061, %v11062
    %v11064 = vrot.slane %v10851, 2
    %v11065 = vrot.slane %v10852, 2
    %v11066 = vsel %vm11021, %v11064, %v11065
    %v11067 = vrot.slane %v10853, 2
    %v11068 = vrot.slane %v10854, 2
    %v11069 = vsel %vm11021, %v11067, %v11068
    %v11070 = vrot.slane %v10855, 2
    %v11071 = vrot.slane %v10856, 2
    %v11072 = vsel %vm11021, %v11070, %v11071
    %v11073 = vrot.slane %v10857, 2
    %v11074 = vrot.slane %v10858, 2
    %v11075 = vsel %vm11021, %v11073, %v11074
    %v11076 = vrot.slane %v10859, 2
    %v11077 = vrot.slane %v10860, 2
    %v11078 = vsel %vm11021, %v11076, %v11077
    %v11079 = vrot.slane %v10861, 2
    %v11080 = vrot.slane %v10862, 2
    %v11081 = vsel %vm11021, %v11079, %v11080
    %v11082 = vrot.slane %v10863, 2
    %v11083 = vrot.slane %v10864, 2
    %v11084 = vsel %vm11021, %v11082, %v11083
    %v11085 = vrot.slane %v10865, 2
    %v11086 = vrot.slane %v10866, 2
    %v11087 = vsel %vm11021, %v11085, %v11086
    %v11110 = vmax.f32 %v10999, %v11024
    %v11111 = vmax.f32 %v11000, %v11027
    %v11112 = vmax.f32 %v11001, %v11030
    %v11113 = vmax.f32 %v11002, %v11033
    %v11114 = vmax.f32 %v11003, %v11036
    %v11115 = vmax.f32 %v11004, %v11039
    %v11116 = vmax.f32 %v11005, %v11042
    %v11117 = vmax.f32 %v11006, %v11045
    %v11118 = vmax.f32 %v11007, %v11048
    %v11119 = vmax.f32 %v11008, %v11051
    %v11120 = vmax.f32 %v11009, %v11054
    %v11121 = vmax.f32 %v11010, %v11057
    %v11122 = vmax.f32 %v11011, %v11060
    %v11123 = vmax.f32 %v11012, %v11063
    %v11124 = vmax.f32 %v11013, %v11066
    %v11125 = vmax.f32 %v11014, %v11069
    %v11126 = vmax.f32 %v11015, %v11072
    %v11127 = vmax.f32 %v11016, %v11075
    %v11128 = vmax.f32 %v11017, %v11078
    %v11129 = vmax.f32 %v11018, %v11081
    %v11130 = vmax.f32 %v11019, %v11084
    %v11131 = vmax.f32 %v11020, %v11087
    %vm11132 = vcmask 1044480
    %v11133 = vrot.slane %v10823, 3
    %v11134 = vrot.slane %v10824, 3
    %v11135 = vsel %vm11132, %v11133, %v11134
    %v11136 = vrot.slane %v10825, 3
    %v11137 = vrot.slane %v10826, 3
    %v11138 = vsel %vm11132, %v11136, %v11137
    %v11139 = vrot.slane %v10827, 3
    %v11140 = vrot.slane %v10828, 3
    %v11141 = vsel %vm11132, %v11139, %v11140
    %v11142 = vrot.slane %v10829, 3
    %v11143 = vrot.slane %v10830, 3
    %v11144 = vsel %vm11132, %v11142, %v11143
    %v11145 = vrot.slane %v10831, 3
    %v11146 = vrot.slane %v10832, 3
    %v11147 = vsel %vm11132, %v11145, %v11146
    %v11148 = vrot.slane %v10833, 3
    %v11149 = vrot.slane %v10834, 3
    %v11150 = vsel %vm11132, %v11148, %v11149
    %v11151 = vrot.slane %v10835, 3
    %v11152 = vrot.slane %v10836, 3
    %v11153 = vsel %vm11132, %v11151, %v11152
    %v11154 = vrot.slane %v10837, 3
    %v11155 = vrot.slane %v10838, 3
    %v11156 = vsel %vm11132, %v11154, %v11155
    %v11157 = vrot.slane %v10839, 3
    %v11158 = vrot.slane %v10840, 3
    %v11159 = vsel %vm11132, %v11157, %v11158
    %v11160 = vrot.slane %v10841, 3
    %v11161 = vrot.slane %v10842, 3
    %v11162 = vsel %vm11132, %v11160, %v11161
    %v11163 = vrot.slane %v10843, 3
    %v11164 = vrot.slane %v10844, 3
    %v11165 = vsel %vm11132, %v11163, %v11164
    %v11166 = vrot.slane %v10845, 3
    %v11167 = vrot.slane %v10846, 3
    %v11168 = vsel %vm11132, %v11166, %v11167
    %v11169 = vrot.slane %v10847, 3
    %v11170 = vrot.slane %v10848, 3
    %v11171 = vsel %vm11132, %v11169, %v11170
    %v11172 = vrot.slane %v10849, 3
    %v11173 = vrot.slane %v10850, 3
    %v11174 = vsel %vm11132, %v11172, %v11173
    %v11175 = vrot.slane %v10851, 3
    %v11176 = vrot.slane %v10852, 3
    %v11177 = vsel %vm11132, %v11175, %v11176
    %v11178 = vrot.slane %v10853, 3
    %v11179 = vrot.slane %v10854, 3
    %v11180 = vsel %vm11132, %v11178, %v11179
    %v11181 = vrot.slane %v10855, 3
    %v11182 = vrot.slane %v10856, 3
    %v11183 = vsel %vm11132, %v11181, %v11182
    %v11184 = vrot.slane %v10857, 3
    %v11185 = vrot.slane %v10858, 3
    %v11186 = vsel %vm11132, %v11184, %v11185
    %v11187 = vrot.slane %v10859, 3
    %v11188 = vrot.slane %v10860, 3
    %v11189 = vsel %vm11132, %v11187, %v11188
    %v11190 = vrot.slane %v10861, 3
    %v11191 = vrot.slane %v10862, 3
    %v11192 = vsel %vm11132, %v11190, %v11191
    %v11193 = vrot.slane %v10863, 3
    %v11194 = vrot.slane %v10864, 3
    %v11195 = vsel %vm11132, %v11193, %v11194
    %v11196 = vrot.slane %v10865, 3
    %v11197 = vrot.slane %v10866, 3
    %v11198 = vsel %vm11132, %v11196, %v11197
    %v11221 = vmax.f32 %v11110, %v11135
    %v11222 = vmax.f32 %v11111, %v11138
    %v11223 = vmax.f32 %v11112, %v11141
    %v11224 = vmax.f32 %v11113, %v11144
    %v11225 = vmax.f32 %v11114, %v11147
    %v11226 = vmax.f32 %v11115, %v11150
    %v11227 = vmax.f32 %v11116, %v11153
    %v11228 = vmax.f32 %v11117, %v11156
    %v11229 = vmax.f32 %v11118, %v11159
    %v11230 = vmax.f32 %v11119, %v11162
    %v11231 = vmax.f32 %v11120, %v11165
    %v11232 = vmax.f32 %v11121, %v11168
    %v11233 = vmax.f32 %v11122, %v11171
    %v11234 = vmax.f32 %v11123, %v11174
    %v11235 = vmax.f32 %v11124, %v11177
    %v11236 = vmax.f32 %v11125, %v11180
    %v11237 = vmax.f32 %v11126, %v11183
    %v11238 = vmax.f32 %v11127, %v11186
    %v11239 = vmax.f32 %v11128, %v11189
    %v11240 = vmax.f32 %v11129, %v11192
    %v11241 = vmax.f32 %v11130, %v11195
    %v11242 = vmax.f32 %v11131, %v11198
    %v11243 = vmax.f32 %v11221, %v11222
    %v11244 = vmax.f32 %v11222, %v11223
    %v11245 = vmax.f32 %v11223, %v11224
    %v11246 = vmax.f32 %v11224, %v11225
    %v11247 = vmax.f32 %v11225, %v11226
    %v11248 = vmax.f32 %v11226, %v11227
    %v11249 = vmax.f32 %v11227, %v11228
    %v11250 = vmax.f32 %v11228, %v11229
    %v11251 = vmax.f32 %v11232, %v11233
    %v11252 = vmax.f32 %v11233, %v11234
    %v11253 = vmax.f32 %v11234, %v11235
    %v11254 = vmax.f32 %v11235, %v11236
    %v11255 = vmax.f32 %v11236, %v11237
    %v11256 = vmax.f32 %v11237, %v11238
    %v11257 = vmax.f32 %v11238, %v11239
    %v11258 = vmax.f32 %v11239, %v11240
    %v11259 = vmax.f32 %v11243, %v11223
    %v11260 = vmax.f32 %v11244, %v11224
    %v11261 = vmax.f32 %v11245, %v11225
    %v11262 = vmax.f32 %v11246, %v11226
    %v11263 = vmax.f32 %v11247, %v11227
    %v11264 = vmax.f32 %v11248, %v11228
    %v11265 = vmax.f32 %v11249, %v11229
    %v11266 = vmax.f32 %v11250, %v11230
    %v11267 = vmax.f32 %v11251, %v11234
    %v11268 = vmax.f32 %v11252, %v11235
    %v11269 = vmax.f32 %v11253, %v11236
    %v11270 = vmax.f32 %v11254, %v11237
    %v11271 = vmax.f32 %v11255, %v11238
    %v11272 = vmax.f32 %v11256, %v11239
    %v11273 = vmax.f32 %v11257, %v11240
    %v11274 = vmax.f32 %v11258, %v11241
    %v11275 = vmax.f32 %v11259, %v11224
    %v11276 = vmax.f32 %v11260, %v11225
    %v11277 = vmax.f32 %v11261, %v11226
    %v11278 = vmax.f32 %v11262, %v11227
    %v11279 = vmax.f32 %v11263, %v11228
    %v11280 = vmax.f32 %v11264, %v11229
    %v11281 = vmax.f32 %v11265, %v11230
    %v11282 = vmax.f32 %v11266, %v11231
    %v11283 = vmax.f32 %v11267, %v11235
    %v11284 = vmax.f32 %v11268, %v11236
    %v11285 = vmax.f32 %v11269, %v11237
    %v11286 = vmax.f32 %v11270, %v11238
    %v11287 = vmax.f32 %v11271, %v11239
    %v11288 = vmax.f32 %v11272, %v11240
    %v11289 = vmax.f32 %v11273, %v11241
    %v11290 = vmax.f32 %v11274, %v11242
    %v11291 = vmax.f32 %v11275, 0.0
    %v11292 = vmax.f32 %v11276, 0.0
    %v11293 = vmax.f32 %v11277, 0.0
    %v11294 = vmax.f32 %v11278, 0.0
    %v11295 = vmax.f32 %v11279, 0.0
    %v11296 = vmax.f32 %v11280, 0.0
    %v11297 = vmax.f32 %v11281, 0.0
    %v11298 = vmax.f32 %v11282, 0.0
    %v11299 = vmax.f32 %v11283, 0.0
    %v11300 = vmax.f32 %v11284, 0.0
    %v11301 = vmax.f32 %v11285, 0.0
    %v11302 = vmax.f32 %v11286, 0.0
    %v11303 = vmax.f32 %v11287, 0.0
    %v11304 = vmax.f32 %v11288, 0.0
    %v11305 = vmax.f32 %v11289, 0.0
    %v11306 = vmax.f32 %v11290, 0.0
    %vm11307 = vcmask 130048
    %11308 = vst.msk [vmem:[#allocation2] sm:$0xff] %vm11307, %v11291
    %11309 = vst.msk [vmem:[#allocation2 + $0x8] sm:$0xff] %vm11307, %v11292
    %11310 = vst.msk [vmem:[#allocation2 + $0x10] sm:$0xff] %vm11307, %v11293
    %11311 = vst.msk [vmem:[#allocation2 + $0x18] sm:$0xff] %vm11307, %v11294
    %11312 = vst.msk [vmem:[#allocation2 + $0x20] sm:$0xff] %vm11307, %v11295
    %11313 = vst.msk [vmem:[#allocation2 + $0x28] sm:$0xff] %vm11307, %v11296
    %11314 = vst.msk [vmem:[#allocation2 + $0x30] sm:$0xff] %vm11307, %v11297
    %11315 = vst.msk [vmem:[#allocation2 + $0x38] sm:$0xff] %vm11307, %v11298
    %11316 = vst.msk [vmem:[#allocation2 + $0x40] sm:$0xff] %vm11307, %v11299
    %11317 = vst.msk [vmem:[#allocation2 + $0x48] sm:$0xff] %vm11307, %v11300
    %11318 = vst.msk [vmem:[#allocation2 + $0x50] sm:$0xff] %vm11307, %v11301
    %11319 = vst.msk [vmem:[#allocation2 + $0x58] sm:$0xff] %vm11307, %v11302
    %11320 = vst.msk [vmem:[#allocation2 + $0x60] sm:$0xff] %vm11307, %v11303
    %11321 = vst.msk [vmem:[#allocation2 + $0x68] sm:$0xff] %vm11307, %v11304
    %11322 = vst.msk [vmem:[#allocation2 + $0x70] sm:$0xff] %vm11307, %v11305
    %11323 = vst.msk [vmem:[#allocation2 + $0x78] sm:$0xff] %vm11307, %v11306
    // Predicated region
    $region26: #{decoupling_block2_forward.1} parent=1 // pred_check
      _
    $region27: #{decoupling_block2_forward.1} parent=1 // pred_check_branch
      %11325 = sbr.rel (0) target = $region29
    $region28: #{decoupling_block2_forward.1} parent=1 // pred_region
      %11327 = vsyncadd [#allocation3], 0
      %s11328 = sshll.u32 [#allocation2], 4
      %s11329 = int_to_ptr.vmem [resolvable:$true] %s11328
      %s11330 = sshll.u32 %s6, 4
      %s11331 = int_to_ptr.hbm [resolvable:$true] %s11330
      %11336 = dma.vmem_to_hbm [thread:$0]  %s11329, 2048, %s11331, [#allocation3], 128, 128, 8
    $region29: #{decoupling_block2_forward.1} parent=1 // pred_fallthru
      _
    // Predicated region
    $region30: #{decoupling_block2_forward.1} parent=1 // pred_check
      _
    $region31: #{decoupling_block2_forward.1} parent=1 // pred_check_branch
      %11338 = sbr.rel (0) target = $region33
    $region32: #{decoupling_block2_forward.1} parent=1 // pred_region
      %11340 = dma.done [#allocation3], 2048
    $region33: #{decoupling_block2_forward.1} parent=1 // pred_fallthru
      _
    %11341 = vsyncpa [#allocation3], 1

</llo_original>
